<compile_context>
chip_gen: v7x
topology: tpu7x:2x2x1
jax: 0.10.0
libtpu: 0.0.40
codegen_flags: <defaults>
</compile_context>

<pallas_src>
import jax
import jax.numpy as jnp
from jax.experimental import pallas as pl
from jax.experimental.pallas import tpu as pltpu

# Real (unpadded) hidden sizes of MLP64: input -> 80 -> 160 -> 320 -> 640 -> 1280 -> output
_HIDDEN = (80, 160, 320, 640, 1280)


def _round_up(n, m):
    return ((n + m - 1) // m) * m


def mlp_kernel(x_ref,
               w1_ref, b1_ref, w2_ref, b2_ref, w3_ref, b3_ref,
               w4_ref, b4_ref, w5_ref, b5_ref, w6_ref, b6_ref,
               o_ref):
    def layer(h, w_ref, b_ref):
        # bf16 x bf16 -> f32 accumulate on the MXU, add f32 bias, ReLU.
        y = jnp.dot(h, w_ref[...], preferred_element_type=jnp.float32) + b_ref[...]
        return jnp.maximum(y, 0.0)

    h = x_ref[...]                                               # bf16 (TILE_B, Din_pad)
    h = layer(h, w1_ref, b1_ref).astype(jnp.bfloat16)            # dropout = identity (eval)
    h = layer(h, w2_ref, b2_ref).astype(jnp.bfloat16)
    h = layer(h, w3_ref, b3_ref).astype(jnp.bfloat16)
    h = layer(h, w4_ref, b4_ref).astype(jnp.bfloat16)
    h = layer(h, w5_ref, b5_ref).astype(jnp.bfloat16)
    o_ref[...] = layer(h, w6_ref, b6_ref).astype(o_ref.dtype)    # final ReLU, lane-dense store


def init_params(key, input_size, output_size):
    """PyTorch-style nn.Linear init (U(-1/sqrt(fan_in), 1/sqrt(fan_in))), f32 masters.
    Weights stored as (in_features, out_features) so the kernel computes x @ W + b."""
    dims = [input_size, *(_HIDDEN), output_size]
    params = {}
    for i in range(1, 7):
        fan_in, fan_out = dims[i - 1], dims[i]
        key, kw, kb = jax.random.split(key, 3)
        bound = 1.0 / jnp.sqrt(fan_in)
        params[f"w{i}"] = jax.random.uniform(kw, (fan_in, fan_out), jnp.float32,
                                             minval=-bound, maxval=bound)
        params[f"b{i}"] = jax.random.uniform(kb, (1, fan_out), jnp.float32,
                                             minval=-bound, maxval=bound)
    return params


def pad_params(params, input_size, output_size):
    """Cast weights to bf16 and zero-pad feature dims to TPU-friendly sizes."""
    real_dims = [input_size, *(_HIDDEN), output_size]
    pad_dims = [_round_up(input_size, 8)] + [_round_up(d, 128) for d in real_dims[1:]]
    padded = {}
    for i in range(1, 7):
        w = params[f"w{i}"]
        b = params[f"b{i}"]
        in_r, out_r = real_dims[i - 1], real_dims[i]
        in_p, out_p = pad_dims[i - 1], pad_dims[i]
        wp = jnp.zeros((in_p, out_p), jnp.bfloat16).at[:in_r, :out_r].set(
            w.astype(jnp.bfloat16))
        bp = jnp.zeros((1, out_p), jnp.float32).at[:, :out_r].set(b)
        padded[f"w{i}"] = wp
        padded[f"b{i}"] = bp
    return padded


def _pick_tile_b(B):
    """Batch tile: multiple of 16 (bf16 sublane packing), capped at 1024 (v7x-safe),
    and split into >=2 grid steps when the batch is big enough for both v7x TCs."""
    target = 1024
    b16 = _round_up(B, 16)
    if b16 <= target:
        if b16 >= 512:
            # Two grid steps so the "parallel" batch axis shards across both TCs.
            return _round_up((b16 + 1) // 2, 16)
        return b16
    return target


def mlp_forward(x, padded_params, output_size, single_buffer_resident=True):
    """x: (B, input_size) f32. padded_params: bf16 weights / f32 biases (padded)."""
    B, din = x.shape
    in_pad = padded_params["w1"].shape[0]
    out_pad = padded_params["w6"].shape[1]

    tile_b = _pick_tile_b(B)
    b_pad = _round_up(B, tile_b)

    x_p = jnp.zeros((b_pad, in_pad), jnp.bfloat16).at[:B, :din].set(
        x.astype(jnp.bfloat16))

    resident_mode = pl.Buffered(1) if single_buffer_resident else None

    operands = [x_p]
    in_specs = [pl.BlockSpec((tile_b, in_pad), lambda i: (i, 0))]
    for li in range(1, 7):
        w = padded_params[f"w{li}"]
        b = padded_params[f"b{li}"]
        operands += [w, b]
        # Constant block index across the batch grid => weights DMA'd once and kept
        # resident; single-buffered (no need for a double buffer that never flips).
        if resident_mode is not None:
            in_specs += [pl.BlockSpec(w.shape, lambda i: (0, 0), pipeline_mode=resident_mode),
                         pl.BlockSpec(b.shape, lambda i: (0, 0), pipeline_mode=resident_mode)]
        else:
            in_specs += [pl.BlockSpec(w.shape, lambda i: (0, 0)),
                         pl.BlockSpec(b.shape, lambda i: (0, 0))]

    out = pl.pallas_call(
        mlp_kernel,
        out_shape=jax.ShapeDtypeStruct((b_pad, out_pad), jnp.float32),
        grid=(b_pad // tile_b,),
        in_specs=in_specs,
        out_specs=pl.BlockSpec((tile_b, out_pad), lambda i: (i, 0)),
        compiler_params=pltpu.CompilerParams(
            dimension_semantics=("parallel",)),
    )(*operands)

    return out[:B, :output_size]


def reference_forward(x, padded_params, output_size):
    """f32 reference over the same (bf16-cast, zero-padded) weights the kernel sees."""
    B, din = x.shape
    in_pad = padded_params["w1"].shape[0]
    h = jnp.zeros((B, in_pad), jnp.float32).at[:, :din].set(x)
    for li in range(1, 7):
        w = padded_params[f"w{li}"].astype(jnp.float32)
        b = padded_params[f"b{li}"]
        h = jnp.maximum(h @ w + b, 0.0)
    return h[:, :output_size]


if __name__ == "__main__":
    key = jax.random.PRNGKey(0)
    input_size = 2     # (V, P) pair
    output_size = 64   # encoding size
    batch = 2

    key, kx = jax.random.split(key)
    x = jax.random.normal(kx, (batch, input_size), jnp.float32)

    params = init_params(key, input_size, output_size)
    padded = pad_params(params, input_size, output_size)

    try:
        out = mlp_forward(x, padded, output_size, single_buffer_resident=True)
        out = jax.block_until_ready(out)
    except Exception:
        # Fallback: default double-buffered pipelining for the resident operands.
        out = mlp_forward(x, padded, output_size, single_buffer_resident=False)
        out = jax.block_until_ready(out)

    ref = reference_forward(x, padded, output_size)
    assert out.shape == (batch, output_size)
    # bf16 activations in-kernel vs f32 reference -> relaxed tolerance
    # (intentional precision trade: bf16 weights/activations, f32 accumulation).
    assert jnp.allclose(out, ref, atol=2e-2, rtol=2e-2), "mismatch vs reference"
    print("KERNEL_OK")
</pallas_src>

<mosaic_0001>
module attributes {stable_mosaic.version = 11 : i64} {
  func.func @mlp_kernel(%arg0: i32, %arg1: memref<16x8xbf16, #tpu.memory_space<vmem>>, %arg2: memref<8x128xbf16, #tpu.memory_space<vmem>>, %arg3: memref<1x128xf32, #tpu.memory_space<vmem>>, %arg4: memref<128x256xbf16, #tpu.memory_space<vmem>>, %arg5: memref<1x256xf32, #tpu.memory_space<vmem>>, %arg6: memref<256x384xbf16, #tpu.memory_space<vmem>>, %arg7: memref<1x384xf32, #tpu.memory_space<vmem>>, %arg8: memref<384x640xbf16, #tpu.memory_space<vmem>>, %arg9: memref<1x640xf32, #tpu.memory_space<vmem>>, %arg10: memref<640x1280xbf16, #tpu.memory_space<vmem>>, %arg11: memref<1x1280xf32, #tpu.memory_space<vmem>>, %arg12: memref<1280x128xbf16, #tpu.memory_space<vmem>>, %arg13: memref<1x128xf32, #tpu.memory_space<vmem>>, %arg14: memref<16x128xf32, #tpu.memory_space<vmem>>) attributes {dimension_semantics = [#tpu.dimension_semantics<parallel>], iteration_bounds = array<i64: 1>, scalar_prefetch = 0 : i64, scratch_operands = 0 : i64, tpu.core_type = #tpu.core_type<tc>, window_params = [{transform_indices = @transform_0, window_bounds = array<i64: 16, 8>}, {pipeline_mode = #tpu.pipeline_mode<synchronous>, transform_indices = @transform_1, window_bounds = array<i64: 8, 128>}, {pipeline_mode = #tpu.pipeline_mode<synchronous>, transform_indices = @transform_2, window_bounds = array<i64: 1, 128>}, {pipeline_mode = #tpu.pipeline_mode<synchronous>, transform_indices = @transform_3, window_bounds = array<i64: 128, 256>}, {pipeline_mode = #tpu.pipeline_mode<synchronous>, transform_indices = @transform_4, window_bounds = array<i64: 1, 256>}, {pipeline_mode = #tpu.pipeline_mode<synchronous>, transform_indices = @transform_5, window_bounds = array<i64: 256, 384>}, {pipeline_mode = #tpu.pipeline_mode<synchronous>, transform_indices = @transform_6, window_bounds = array<i64: 1, 384>}, {pipeline_mode = #tpu.pipeline_mode<synchronous>, transform_indices = @transform_7, window_bounds = array<i64: 384, 640>}, {pipeline_mode = #tpu.pipeline_mode<synchronous>, transform_indices = @transform_8, window_bounds = array<i64: 1, 640>}, {pipeline_mode = #tpu.pipeline_mode<synchronous>, transform_indices = @transform_9, window_bounds = array<i64: 640, 1280>}, {pipeline_mode = #tpu.pipeline_mode<synchronous>, transform_indices = @transform_10, window_bounds = array<i64: 1, 1280>}, {pipeline_mode = #tpu.pipeline_mode<synchronous>, transform_indices = @transform_11, window_bounds = array<i64: 1280, 128>}, {pipeline_mode = #tpu.pipeline_mode<synchronous>, transform_indices = @transform_12, window_bounds = array<i64: 1, 128>}, {transform_indices = @transform_13, window_bounds = array<i64: 16, 128>}]} {
    %c0 = arith.constant 0 : index
    %c0_0 = arith.constant 0 : index
    %0 = vector.load %arg1[%c0, %c0_0] : memref<16x8xbf16, #tpu.memory_space<vmem>>, vector<16x8xbf16>
    %c0_1 = arith.constant 0 : index
    %c0_2 = arith.constant 0 : index
    %1 = vector.load %arg2[%c0_1, %c0_2] : memref<8x128xbf16, #tpu.memory_space<vmem>>, vector<8x128xbf16>
    %cst = arith.constant dense<0.000000e+00> : vector<16x128xf32>
    %2 = tpu.matmul %0, %1, %cst {dimension_numbers = #tpu.dot_dimension_numbers<[1], [0], [0], [1], [0, 0, 1, 1], [], []>} : vector<16x8xbf16>, vector<8x128xbf16>, vector<16x128xf32> -> vector<16x128xf32>
    %c0_3 = arith.constant 0 : index
    %c0_4 = arith.constant 0 : index
    %3 = vector.load %arg3[%c0_3, %c0_4] : memref<1x128xf32, #tpu.memory_space<vmem>>, vector<1x128xf32>
    %4 = vector.broadcast %3 : vector<1x128xf32> to vector<16x128xf32>
    %5 = arith.addf %2, %4 : vector<16x128xf32>
    %cst_5 = arith.constant 0.000000e+00 : f32
    %6 = vector.broadcast %cst_5 : f32 to vector<16x128xf32>
    %7 = arith.maximumf %5, %6 : vector<16x128xf32>
    %8 = arith.truncf %7 : vector<16x128xf32> to vector<16x128xbf16>
    %c0_6 = arith.constant 0 : index
    %c0_7 = arith.constant 0 : index
    %9 = vector.load %arg4[%c0_6, %c0_7] : memref<128x256xbf16, #tpu.memory_space<vmem>>, vector<128x256xbf16>
    %cst_8 = arith.constant dense<0.000000e+00> : vector<16x256xf32>
    %10 = tpu.matmul %8, %9, %cst_8 {dimension_numbers = #tpu.dot_dimension_numbers<[1], [0], [0], [1], [0, 0, 1, 1], [], []>} : vector<16x128xbf16>, vector<128x256xbf16>, vector<16x256xf32> -> vector<16x256xf32>
    %c0_9 = arith.constant 0 : index
    %c0_10 = arith.constant 0 : index
    %11 = vector.load %arg5[%c0_9, %c0_10] : memref<1x256xf32, #tpu.memory_space<vmem>>, vector<1x256xf32>
    %12 = vector.broadcast %11 : vector<1x256xf32> to vector<16x256xf32>
    %13 = arith.addf %10, %12 : vector<16x256xf32>
    %cst_11 = arith.constant 0.000000e+00 : f32
    %14 = vector.broadcast %cst_11 : f32 to vector<16x256xf32>
    %15 = arith.maximumf %13, %14 : vector<16x256xf32>
    %16 = arith.truncf %15 : vector<16x256xf32> to vector<16x256xbf16>
    %c0_12 = arith.constant 0 : index
    %c0_13 = arith.constant 0 : index
    %17 = vector.load %arg6[%c0_12, %c0_13] : memref<256x384xbf16, #tpu.memory_space<vmem>>, vector<256x384xbf16>
    %cst_14 = arith.constant dense<0.000000e+00> : vector<16x384xf32>
    %18 = tpu.matmul %16, %17, %cst_14 {dimension_numbers = #tpu.dot_dimension_numbers<[1], [0], [0], [1], [0, 0, 1, 1], [], []>} : vector<16x256xbf16>, vector<256x384xbf16>, vector<16x384xf32> -> vector<16x384xf32>
    %c0_15 = arith.constant 0 : index
    %c0_16 = arith.constant 0 : index
    %19 = vector.load %arg7[%c0_15, %c0_16] : memref<1x384xf32, #tpu.memory_space<vmem>>, vector<1x384xf32>
    %20 = vector.broadcast %19 : vector<1x384xf32> to vector<16x384xf32>
    %21 = arith.addf %18, %20 : vector<16x384xf32>
    %cst_17 = arith.constant 0.000000e+00 : f32
    %22 = vector.broadcast %cst_17 : f32 to vector<16x384xf32>
    %23 = arith.maximumf %21, %22 : vector<16x384xf32>
    %24 = arith.truncf %23 : vector<16x384xf32> to vector<16x384xbf16>
    %c0_18 = arith.constant 0 : index
    %c0_19 = arith.constant 0 : index
    %25 = vector.load %arg8[%c0_18, %c0_19] : memref<384x640xbf16, #tpu.memory_space<vmem>>, vector<384x640xbf16>
    %cst_20 = arith.constant dense<0.000000e+00> : vector<16x640xf32>
    %26 = tpu.matmul %24, %25, %cst_20 {dimension_numbers = #tpu.dot_dimension_numbers<[1], [0], [0], [1], [0, 0, 1, 1], [], []>} : vector<16x384xbf16>, vector<384x640xbf16>, vector<16x640xf32> -> vector<16x640xf32>
    %c0_21 = arith.constant 0 : index
    %c0_22 = arith.constant 0 : index
    %27 = vector.load %arg9[%c0_21, %c0_22] : memref<1x640xf32, #tpu.memory_space<vmem>>, vector<1x640xf32>
    %28 = vector.broadcast %27 : vector<1x640xf32> to vector<16x640xf32>
    %29 = arith.addf %26, %28 : vector<16x640xf32>
    %cst_23 = arith.constant 0.000000e+00 : f32
    %30 = vector.broadcast %cst_23 : f32 to vector<16x640xf32>
    %31 = arith.maximumf %29, %30 : vector<16x640xf32>
    %32 = arith.truncf %31 : vector<16x640xf32> to vector<16x640xbf16>
    %c0_24 = arith.constant 0 : index
    %c0_25 = arith.constant 0 : index
    %33 = vector.load %arg10[%c0_24, %c0_25] : memref<640x1280xbf16, #tpu.memory_space<vmem>>, vector<640x1280xbf16>
    %cst_26 = arith.constant dense<0.000000e+00> : vector<16x1280xf32>
    %34 = tpu.matmul %32, %33, %cst_26 {dimension_numbers = #tpu.dot_dimension_numbers<[1], [0], [0], [1], [0, 0, 1, 1], [], []>} : vector<16x640xbf16>, vector<640x1280xbf16>, vector<16x1280xf32> -> vector<16x1280xf32>
    %c0_27 = arith.constant 0 : index
    %c0_28 = arith.constant 0 : index
    %35 = vector.load %arg11[%c0_27, %c0_28] : memref<1x1280xf32, #tpu.memory_space<vmem>>, vector<1x1280xf32>
    %36 = vector.broadcast %35 : vector<1x1280xf32> to vector<16x1280xf32>
    %37 = arith.addf %34, %36 : vector<16x1280xf32>
    %cst_29 = arith.constant 0.000000e+00 : f32
    %38 = vector.broadcast %cst_29 : f32 to vector<16x1280xf32>
    %39 = arith.maximumf %37, %38 : vector<16x1280xf32>
    %40 = arith.truncf %39 : vector<16x1280xf32> to vector<16x1280xbf16>
    %c0_30 = arith.constant 0 : index
    %c0_31 = arith.constant 0 : index
    %41 = vector.load %arg12[%c0_30, %c0_31] : memref<1280x128xbf16, #tpu.memory_space<vmem>>, vector<1280x128xbf16>
    %cst_32 = arith.constant dense<0.000000e+00> : vector<16x128xf32>
    %42 = tpu.matmul %40, %41, %cst_32 {dimension_numbers = #tpu.dot_dimension_numbers<[1], [0], [0], [1], [0, 0, 1, 1], [], []>} : vector<16x1280xbf16>, vector<1280x128xbf16>, vector<16x128xf32> -> vector<16x128xf32>
    %c0_33 = arith.constant 0 : index
    %c0_34 = arith.constant 0 : index
    %43 = vector.load %arg13[%c0_33, %c0_34] : memref<1x128xf32, #tpu.memory_space<vmem>>, vector<1x128xf32>
    %44 = vector.broadcast %43 : vector<1x128xf32> to vector<16x128xf32>
    %45 = arith.addf %42, %44 : vector<16x128xf32>
    %cst_35 = arith.constant 0.000000e+00 : f32
    %46 = vector.broadcast %cst_35 : f32 to vector<16x128xf32>
    %47 = arith.maximumf %45, %46 : vector<16x128xf32>
    %c0_36 = arith.constant 0 : index
    %c0_37 = arith.constant 0 : index
    %48 = vector.load %arg14[%c0_36, %c0_37] : memref<16x128xf32, #tpu.memory_space<vmem>>, vector<16x128xf32>
    tpu.vector_store %arg14[%c0_36, %c0_37], %47 {strides = array<i32>} : memref<16x128xf32, #tpu.memory_space<vmem>>, vector<16x128xf32>,
    return
  }
  func.func @transform_0(%arg0: i32) -> (i32, i32) {
    %c0_i32 = arith.constant 0 : i32
    %c0_i32_0 = arith.constant 0 : i32
    return %arg0, %c0_i32 : i32, i32
  }
  func.func @transform_1(%arg0: i32) -> (i32, i32) {
    %c0_i32 = arith.constant 0 : i32
    %c0_i32_0 = arith.constant 0 : i32
    %c0_i32_1 = arith.constant 0 : i32
    return %c0_i32, %c0_i32_0 : i32, i32
  }
  func.func @transform_2(%arg0: i32) -> (i32, i32) {
    %c0_i32 = arith.constant 0 : i32
    %c0_i32_0 = arith.constant 0 : i32
    %c0_i32_1 = arith.constant 0 : i32
    return %c0_i32, %c0_i32_0 : i32, i32
  }
  func.func @transform_3(%arg0: i32) -> (i32, i32) {
    %c0_i32 = arith.constant 0 : i32
    %c0_i32_0 = arith.constant 0 : i32
    %c0_i32_1 = arith.constant 0 : i32
    return %c0_i32, %c0_i32_0 : i32, i32
  }
  func.func @transform_4(%arg0: i32) -> (i32, i32) {
    %c0_i32 = arith.constant 0 : i32
    %c0_i32_0 = arith.constant 0 : i32
    %c0_i32_1 = arith.constant 0 : i32
    return %c0_i32, %c0_i32_0 : i32, i32
  }
  func.func @transform_5(%arg0: i32) -> (i32, i32) {
    %c0_i32 = arith.constant 0 : i32
    %c0_i32_0 = arith.constant 0 : i32
    %c0_i32_1 = arith.constant 0 : i32
    return %c0_i32, %c0_i32_0 : i32, i32
  }
  func.func @transform_6(%arg0: i32) -> (i32, i32) {
    %c0_i32 = arith.constant 0 : i32
    %c0_i32_0 = arith.constant 0 : i32
    %c0_i32_1 = arith.constant 0 : i32
    return %c0_i32, %c0_i32_0 : i32, i32
  }
  func.func @transform_7(%arg0: i32) -> (i32, i32) {
    %c0_i32 = arith.constant 0 : i32
    %c0_i32_0 = arith.constant 0 : i32
    %c0_i32_1 = arith.constant 0 : i32
    return %c0_i32, %c0_i32_0 : i32, i32
  }
  func.func @transform_8(%arg0: i32) -> (i32, i32) {
    %c0_i32 = arith.constant 0 : i32
    %c0_i32_0 = arith.constant 0 : i32
    %c0_i32_1 = arith.constant 0 : i32
    return %c0_i32, %c0_i32_0 : i32, i32
  }
  func.func @transform_9(%arg0: i32) -> (i32, i32) {
    %c0_i32 = arith.constant 0 : i32
    %c0_i32_0 = arith.constant 0 : i32
    %c0_i32_1 = arith.constant 0 : i32
    return %c0_i32, %c0_i32_0 : i32, i32
  }
  func.func @transform_10(%arg0: i32) -> (i32, i32) {
    %c0_i32 = arith.constant 0 : i32
    %c0_i32_0 = arith.constant 0 : i32
    %c0_i32_1 = arith.constant 0 : i32
    return %c0_i32, %c0_i32_0 : i32, i32
  }
  func.func @transform_11(%arg0: i32) -> (i32, i32) {
    %c0_i32 = arith.constant 0 : i32
    %c0_i32_0 = arith.constant 0 : i32
    %c0_i32_1 = arith.constant 0 : i32
    return %c0_i32, %c0_i32_0 : i32, i32
  }
  func.func @transform_12(%arg0: i32) -> (i32, i32) {
    %c0_i32 = arith.constant 0 : i32
    %c0_i32_0 = arith.constant 0 : i32
    %c0_i32_1 = arith.constant 0 : i32
    return %c0_i32, %c0_i32_0 : i32, i32
  }
  func.func @transform_13(%arg0: i32) -> (i32, i32) {
    %c0_i32 = arith.constant 0 : i32
    %c0_i32_0 = arith.constant 0 : i32
    return %arg0, %c0_i32 : i32, i32
  }
}

module attributes {stable_mosaic.version = 11 : i64} {
  func.func @mlp_kernel(%arg0: i32, %arg1: memref<16x8xbf16, #tpu.memory_space<vmem>>, %arg2: memref<8x128xbf16, #tpu.memory_space<vmem>>, %arg3: memref<1x128xf32, #tpu.memory_space<vmem>>, %arg4: memref<128x256xbf16, #tpu.memory_space<vmem>>, %arg5: memref<1x256xf32, #tpu.memory_space<vmem>>, %arg6: memref<256x384xbf16, #tpu.memory_space<vmem>>, %arg7: memref<1x384xf32, #tpu.memory_space<vmem>>, %arg8: memref<384x640xbf16, #tpu.memory_space<vmem>>, %arg9: memref<1x640xf32, #tpu.memory_space<vmem>>, %arg10: memref<640x1280xbf16, #tpu.memory_space<vmem>>, %arg11: memref<1x1280xf32, #tpu.memory_space<vmem>>, %arg12: memref<1280x128xbf16, #tpu.memory_space<vmem>>, %arg13: memref<1x128xf32, #tpu.memory_space<vmem>>, %arg14: memref<16x128xf32, #tpu.memory_space<vmem>>) attributes {dimension_semantics = [#tpu.dimension_semantics<parallel>], iteration_bounds = array<i64: 1>, scalar_prefetch = 0 : i64, scratch_operands = 0 : i64, tpu.core_type = #tpu.core_type<tc>, window_params = [{transform_indices = @transform_0, window_bounds = array<i64: 16, 8>}, {pipeline_mode = #tpu.pipeline_mode<synchronous>, transform_indices = @transform_1, window_bounds = array<i64: 8, 128>}, {pipeline_mode = #tpu.pipeline_mode<synchronous>, transform_indices = @transform_2, window_bounds = array<i64: 1, 128>}, {pipeline_mode = #tpu.pipeline_mode<synchronous>, transform_indices = @transform_3, window_bounds = array<i64: 128, 256>}, {pipeline_mode = #tpu.pipeline_mode<synchronous>, transform_indices = @transform_4, window_bounds = array<i64: 1, 256>}, {pipeline_mode = #tpu.pipeline_mode<synchronous>, transform_indices = @transform_5, window_bounds = array<i64: 256, 384>}, {pipeline_mode = #tpu.pipeline_mode<synchronous>, transform_indices = @transform_6, window_bounds = array<i64: 1, 384>}, {pipeline_mode = #tpu.pipeline_mode<synchronous>, transform_indices = @transform_7, window_bounds = array<i64: 384, 640>}, {pipeline_mode = #tpu.pipeline_mode<synchronous>, transform_indices = @transform_8, window_bounds = array<i64: 1, 640>}, {pipeline_mode = #tpu.pipeline_mode<synchronous>, transform_indices = @transform_9, window_bounds = array<i64: 640, 1280>}, {pipeline_mode = #tpu.pipeline_mode<synchronous>, transform_indices = @transform_10, window_bounds = array<i64: 1, 1280>}, {pipeline_mode = #tpu.pipeline_mode<synchronous>, transform_indices = @transform_11, window_bounds = array<i64: 1280, 128>}, {pipeline_mode = #tpu.pipeline_mode<synchronous>, transform_indices = @transform_12, window_bounds = array<i64: 1, 128>}, {transform_indices = @transform_13, window_bounds = array<i64: 16, 128>}]} {
    %c0 = arith.constant 0 : index
    %c0_0 = arith.constant 0 : index
    %0 = vector.load %arg1[%c0, %c0_0] : memref<16x8xbf16, #tpu.memory_space<vmem>>, vector<16x8xbf16>
    %c0_1 = arith.constant 0 : index
    %c0_2 = arith.constant 0 : index
    %1 = vector.load %arg2[%c0_1, %c0_2] : memref<8x128xbf16, #tpu.memory_space<vmem>>, vector<8x128xbf16>
    %cst = arith.constant dense<0.000000e+00> : vector<16x128xf32>
    %2 = tpu.matmul %0, %1, %cst {dimension_numbers = #tpu.dot_dimension_numbers<[1], [0], [0], [1], [0, 0, 1, 1], [], []>} : vector<16x8xbf16>, vector<8x128xbf16>, vector<16x128xf32> -> vector<16x128xf32>
    %c0_3 = arith.constant 0 : index
    %c0_4 = arith.constant 0 : index
    %3 = vector.load %arg3[%c0_3, %c0_4] : memref<1x128xf32, #tpu.memory_space<vmem>>, vector<1x128xf32>
    %4 = vector.broadcast %3 : vector<1x128xf32> to vector<16x128xf32>
    %5 = arith.addf %2, %4 : vector<16x128xf32>
    %cst_5 = arith.constant 0.000000e+00 : f32
    %6 = vector.broadcast %cst_5 : f32 to vector<16x128xf32>
    %7 = arith.maximumf %5, %6 : vector<16x128xf32>
    %8 = arith.truncf %7 : vector<16x128xf32> to vector<16x128xbf16>
    %c0_6 = arith.constant 0 : index
    %c0_7 = arith.constant 0 : index
    %9 = vector.load %arg4[%c0_6, %c0_7] : memref<128x256xbf16, #tpu.memory_space<vmem>>, vector<128x256xbf16>
    %cst_8 = arith.constant dense<0.000000e+00> : vector<16x256xf32>
    %10 = tpu.matmul %8, %9, %cst_8 {dimension_numbers = #tpu.dot_dimension_numbers<[1], [0], [0], [1], [0, 0, 1, 1], [], []>} : vector<16x128xbf16>, vector<128x256xbf16>, vector<16x256xf32> -> vector<16x256xf32>
    %c0_9 = arith.constant 0 : index
    %c0_10 = arith.constant 0 : index
    %11 = vector.load %arg5[%c0_9, %c0_10] : memref<1x256xf32, #tpu.memory_space<vmem>>, vector<1x256xf32>
    %12 = vector.broadcast %11 : vector<1x256xf32> to vector<16x256xf32>
    %13 = arith.addf %10, %12 : vector<16x256xf32>
    %cst_11 = arith.constant 0.000000e+00 : f32
    %14 = vector.broadcast %cst_11 : f32 to vector<16x256xf32>
    %15 = arith.maximumf %13, %14 : vector<16x256xf32>
    %16 = arith.truncf %15 : vector<16x256xf32> to vector<16x256xbf16>
    %c0_12 = arith.constant 0 : index
    %c0_13 = arith.constant 0 : index
    %17 = vector.load %arg6[%c0_12, %c0_13] : memref<256x384xbf16, #tpu.memory_space<vmem>>, vector<256x384xbf16>
    %cst_14 = arith.constant dense<0.000000e+00> : vector<16x384xf32>
    %18 = tpu.matmul %16, %17, %cst_14 {dimension_numbers = #tpu.dot_dimension_numbers<[1], [0], [0], [1], [0, 0, 1, 1], [], []>} : vector<16x256xbf16>, vector<256x384xbf16>, vector<16x384xf32> -> vector<16x384xf32>
    %c0_15 = arith.constant 0 : index
    %c0_16 = arith.constant 0 : index
    %19 = vector.load %arg7[%c0_15, %c0_16] : memref<1x384xf32, #tpu.memory_space<vmem>>, vector<1x384xf32>
    %20 = vector.broadcast %19 : vector<1x384xf32> to vector<16x384xf32>
    %21 = arith.addf %18, %20 : vector<16x384xf32>
    %cst_17 = arith.constant 0.000000e+00 : f32
    %22 = vector.broadcast %cst_17 : f32 to vector<16x384xf32>
    %23 = arith.maximumf %21, %22 : vector<16x384xf32>
    %24 = arith.truncf %23 : vector<16x384xf32> to vector<16x384xbf16>
    %c0_18 = arith.constant 0 : index
    %c0_19 = arith.constant 0 : index
    %25 = vector.load %arg8[%c0_18, %c0_19] : memref<384x640xbf16, #tpu.memory_space<vmem>>, vector<384x640xbf16>
    %cst_20 = arith.constant dense<0.000000e+00> : vector<16x640xf32>
    %26 = tpu.matmul %24, %25, %cst_20 {dimension_numbers = #tpu.dot_dimension_numbers<[1], [0], [0], [1], [0, 0, 1, 1], [], []>} : vector<16x384xbf16>, vector<384x640xbf16>, vector<16x640xf32> -> vector<16x640xf32>
    %c0_21 = arith.constant 0 : index
    %c0_22 = arith.constant 0 : index
    %27 = vector.load %arg9[%c0_21, %c0_22] : memref<1x640xf32, #tpu.memory_space<vmem>>, vector<1x640xf32>
    %28 = vector.broadcast %27 : vector<1x640xf32> to vector<16x640xf32>
    %29 = arith.addf %26, %28 : vector<16x640xf32>
    %cst_23 = arith.constant 0.000000e+00 : f32
    %30 = vector.broadcast %cst_23 : f32 to vector<16x640xf32>
    %31 = arith.maximumf %29, %30 : vector<16x640xf32>
    %32 = arith.truncf %31 : vector<16x640xf32> to vector<16x640xbf16>
    %c0_24 = arith.constant 0 : index
    %c0_25 = arith.constant 0 : index
    %33 = vector.load %arg10[%c0_24, %c0_25] : memref<640x1280xbf16, #tpu.memory_space<vmem>>, vector<640x1280xbf16>
    %cst_26 = arith.constant dense<0.000000e+00> : vector<16x1280xf32>
    %34 = tpu.matmul %32, %33, %cst_26 {dimension_numbers = #tpu.dot_dimension_numbers<[1], [0], [0], [1], [0, 0, 1, 1], [], []>} : vector<16x640xbf16>, vector<640x1280xbf16>, vector<16x1280xf32> -> vector<16x1280xf32>
    %c0_27 = arith.constant 0 : index
    %c0_28 = arith.constant 0 : index
    %35 = vector.load %arg11[%c0_27, %c0_28] : memref<1x1280xf32, #tpu.memory_space<vmem>>, vector<1x1280xf32>
    %36 = vector.broadcast %35 : vector<1x1280xf32> to vector<16x1280xf32>
    %37 = arith.addf %34, %36 : vector<16x1280xf32>
    %cst_29 = arith.constant 0.000000e+00 : f32
    %38 = vector.broadcast %cst_29 : f32 to vector<16x1280xf32>
    %39 = arith.maximumf %37, %38 : vector<16x1280xf32>
    %40 = arith.truncf %39 : vector<16x1280xf32> to vector<16x1280xbf16>
    %c0_30 = arith.constant 0 : index
    %c0_31 = arith.constant 0 : index
    %41 = vector.load %arg12[%c0_30, %c0_31] : memref<1280x128xbf16, #tpu.memory_space<vmem>>, vector<1280x128xbf16>
    %cst_32 = arith.constant dense<0.000000e+00> : vector<16x128xf32>
    %42 = tpu.matmul %40, %41, %cst_32 {dimension_numbers = #tpu.dot_dimension_numbers<[1], [0], [0], [1], [0, 0, 1, 1], [], []>} : vector<16x1280xbf16>, vector<1280x128xbf16>, vector<16x128xf32> -> vector<16x128xf32>
    %c0_33 = arith.constant 0 : index
    %c0_34 = arith.constant 0 : index
    %43 = vector.load %arg13[%c0_33, %c0_34] : memref<1x128xf32, #tpu.memory_space<vmem>>, vector<1x128xf32>
    %44 = vector.broadcast %43 : vector<1x128xf32> to vector<16x128xf32>
    %45 = arith.addf %42, %44 : vector<16x128xf32>
    %cst_35 = arith.constant 0.000000e+00 : f32
    %46 = vector.broadcast %cst_35 : f32 to vector<16x128xf32>
    %47 = arith.maximumf %45, %46 : vector<16x128xf32>
    %c0_36 = arith.constant 0 : index
    %c0_37 = arith.constant 0 : index
    %48 = vector.load %arg14[%c0_36, %c0_37] : memref<16x128xf32, #tpu.memory_space<vmem>>, vector<16x128xf32>
    tpu.vector_store %arg14[%c0_36, %c0_37], %47 {strides = array<i32>} : memref<16x128xf32, #tpu.memory_space<vmem>>, vector<16x128xf32>,
    return
  }
  func.func @transform_0(%arg0: i32) -> (i32, i32) {
    %c0_i32 = arith.constant 0 : i32
    %c0_i32_0 = arith.constant 0 : i32
    return %arg0, %c0_i32 : i32, i32
  }
  func.func @transform_1(%arg0: i32) -> (i32, i32) {
    %c0_i32 = arith.constant 0 : i32
    %c0_i32_0 = arith.constant 0 : i32
    %c0_i32_1 = arith.constant 0 : i32
    return %c0_i32, %c0_i32_0 : i32, i32
  }
  func.func @transform_2(%arg0: i32) -> (i32, i32) {
    %c0_i32 = arith.constant 0 : i32
    %c0_i32_0 = arith.constant 0 : i32
    %c0_i32_1 = arith.constant 0 : i32
    return %c0_i32, %c0_i32_0 : i32, i32
  }
  func.func @transform_3(%arg0: i32) -> (i32, i32) {
    %c0_i32 = arith.constant 0 : i32
    %c0_i32_0 = arith.constant 0 : i32
    %c0_i32_1 = arith.constant 0 : i32
    return %c0_i32, %c0_i32_0 : i32, i32
  }
  func.func @transform_4(%arg0: i32) -> (i32, i32) {
    %c0_i32 = arith.constant 0 : i32
    %c0_i32_0 = arith.constant 0 : i32
    %c0_i32_1 = arith.constant 0 : i32
    return %c0_i32, %c0_i32_0 : i32, i32
  }
  func.func @transform_5(%arg0: i32) -> (i32, i32) {
    %c0_i32 = arith.constant 0 : i32
    %c0_i32_0 = arith.constant 0 : i32
    %c0_i32_1 = arith.constant 0 : i32
    return %c0_i32, %c0_i32_0 : i32, i32
  }
  func.func @transform_6(%arg0: i32) -> (i32, i32) {
    %c0_i32 = arith.constant 0 : i32
    %c0_i32_0 = arith.constant 0 : i32
    %c0_i32_1 = arith.constant 0 : i32
    return %c0_i32, %c0_i32_0 : i32, i32
  }
  func.func @transform_7(%arg0: i32) -> (i32, i32) {
    %c0_i32 = arith.constant 0 : i32
    %c0_i32_0 = arith.constant 0 : i32
    %c0_i32_1 = arith.constant 0 : i32
    return %c0_i32, %c0_i32_0 : i32, i32
  }
  func.func @transform_8(%arg0: i32) -> (i32, i32) {
    %c0_i32 = arith.constant 0 : i32
    %c0_i32_0 = arith.constant 0 : i32
    %c0_i32_1 = arith.constant 0 : i32
    return %c0_i32, %c0_i32_0 : i32, i32
  }
  func.func @transform_9(%arg0: i32) -> (i32, i32) {
    %c0_i32 = arith.constant 0 : i32
    %c0_i32_0 = arith.constant 0 : i32
    %c0_i32_1 = arith.constant 0 : i32
    return %c0_i32, %c0_i32_0 : i32, i32
  }
  func.func @transform_10(%arg0: i32) -> (i32, i32) {
    %c0_i32 = arith.constant 0 : i32
    %c0_i32_0 = arith.constant 0 : i32
    %c0_i32_1 = arith.constant 0 : i32
    return %c0_i32, %c0_i32_0 : i32, i32
  }
  func.func @transform_11(%arg0: i32) -> (i32, i32) {
    %c0_i32 = arith.constant 0 : i32
    %c0_i32_0 = arith.constant 0 : i32
    %c0_i32_1 = arith.constant 0 : i32
    return %c0_i32, %c0_i32_0 : i32, i32
  }
  func.func @transform_12(%arg0: i32) -> (i32, i32) {
    %c0_i32 = arith.constant 0 : i32
    %c0_i32_0 = arith.constant 0 : i32
    %c0_i32_1 = arith.constant 0 : i32
    return %c0_i32, %c0_i32_0 : i32, i32
  }
  func.func @transform_13(%arg0: i32) -> (i32, i32) {
    %c0_i32 = arith.constant 0 : i32
    %c0_i32_0 = arith.constant 0 : i32
    return %arg0, %c0_i32 : i32, i32
  }
}

</mosaic_0001>

<llo_original>
// kernel: tpu_custom_call.1
$region0: #{tpu_custom_call.1}
  #allocation0 [shape = 'u32[]', space=smem, size = 0x4, offset = 0x4, fixed_abs, tag = 'smem constant byte address 0x4 - core index']
  #allocation1 [shape = 'u32[144,128]{1,0:T(1,128)}', space=vmem, size = 0x12000, scoped, tag = 'internal scratch']
  %s0 = inlined_call_operand.vmem [shape: bf16[16,8], index: 0, kind: input, shape index: {}]
  %s1 = inlined_call_operand.hbm [shape: bf16[8,128], index: 1, kind: input, shape index: {}]
  %s2 = inlined_call_operand.hbm [shape: f32[1,128], index: 2, kind: input, shape index: {}]
  %s3 = inlined_call_operand.hbm [shape: bf16[128,256], index: 3, kind: input, shape index: {}]
  %s4 = inlined_call_operand.hbm [shape: f32[1,256], index: 4, kind: input, shape index: {}]
  %s5 = inlined_call_operand.hbm [shape: bf16[256,384], index: 5, kind: input, shape index: {}]
  %s6 = inlined_call_operand.hbm [shape: f32[1,384], index: 6, kind: input, shape index: {}]
  %s7 = inlined_call_operand.hbm [shape: bf16[384,640], index: 7, kind: input, shape index: {}]
  %s8 = inlined_call_operand.hbm [shape: f32[1,640], index: 8, kind: input, shape index: {}]
  %s9 = inlined_call_operand.hbm [shape: bf16[640,1280], index: 9, kind: input, shape index: {}]
  %s10 = inlined_call_operand.hbm [shape: f32[1,1280], index: 10, kind: input, shape index: {}]
  %s11 = inlined_call_operand.hbm [shape: bf16[1280,128], index: 11, kind: input, shape index: {}]
  %s12 = inlined_call_operand.hbm [shape: f32[1,128], index: 12, kind: input, shape index: {}]
  %s13 = inlined_call_operand.hbm [shape: f32[16,128], index: 13, kind: output, shape index: {}]
  %s14 = sld [smem:[#allocation0]]
  $region110: #{tpu_custom_call.1} parent=0
    _
  %s16 = ssub.s32 1, %s14
  %s17 = scalar_select 0, %s16, %s14
  $region1: #{tpu_custom_call.1} parent=0
    #allocation2 [shape = 'u8[2048]{0}', space=vmem, size = 0x800, scoped, tag = 'input window, operand 1, single buffered']
    #allocation3 [shape = 's32[1]{0}', space=sflag, size = 0x4, scoped, tag = 'scoped memory for tpu_custom_call.1']
    #allocation4 [shape = 's32[1]{0}', space=sflag, size = 0x4, scoped, tag = 'scoped memory for tpu_custom_call.1']
    #allocation5 [shape = 'u8[512]{0}', space=vmem, size = 0x400, scoped, tag = 'input window, operand 2, single buffered']
    #allocation6 [shape = 's32[1]{0}', space=sflag, size = 0x4, scoped, tag = 'scoped memory for tpu_custom_call.1']
    #allocation7 [shape = 'u8[65536]{0}', space=vmem, size = 0x10000, scoped, tag = 'input window, operand 3, single buffered']
    #allocation8 [shape = 'u8[1024]{0}', space=vmem, size = 0x400, scoped, tag = 'input window, operand 4, single buffered']
    #allocation9 [shape = 's32[1]{0}', space=sflag, size = 0x4, scoped, tag = 'scoped memory for tpu_custom_call.1']
    #allocation10 [shape = 'u8[196608]{0}', space=vmem, size = 0x30000, scoped, tag = 'input window, operand 5, single buffered']
    #allocation11 [shape = 'u8[1536]{0}', space=vmem, size = 0x800, scoped, tag = 'input window, operand 6, single buffered']
    #allocation12 [shape = 's32[1]{0}', space=sflag, size = 0x4, scoped, tag = 'scoped memory for tpu_custom_call.1']
    #allocation13 [shape = 'u8[491520]{0}', space=vmem, size = 0x78000, scoped, tag = 'input window, operand 7, single buffered']
    #allocation14 [shape = 'u8[2560]{0}', space=vmem, size = 0xc00, scoped, tag = 'input window, operand 8, single buffered']
    #allocation15 [shape = 's32[1]{0}', space=sflag, size = 0x4, scoped, tag = 'scoped memory for tpu_custom_call.1']
    #allocation16 [shape = 'u8[1638400]{0}', space=vmem, size = 0x190000, scoped, tag = 'input window, operand 9, single buffered']
    #allocation17 [shape = 'u8[5120]{0}', space=vmem, size = 0x1400, scoped, tag = 'input window, operand 10, single buffered']
    #allocation18 [shape = 's32[1]{0}', space=sflag, size = 0x4, scoped, tag = 'scoped memory for tpu_custom_call.1']
    #allocation19 [shape = 'u8[327680]{0}', space=vmem, size = 0x50000, scoped, tag = 'input window, operand 11, single buffered']
    #allocation20 [shape = 'u8[512]{0}', space=vmem, size = 0x400, scoped, tag = 'input window, operand 12, single buffered']
    #allocation21 [shape = 's32[1]{0}', space=sflag, size = 0x4, scoped, tag = 'scoped memory for tpu_custom_call.1']
    #allocation22 [shape = 'u8[8192]{0}', space=vmem, size = 0x2000, scoped, tag = 'output window, operand 0, single buffered']
    %18 = vsyncpa [#allocation3], 0
    %19 = vsyncpa [#allocation6], 0
    %20 = vsyncpa [#allocation9], 0
    %21 = vsyncpa [#allocation12], 0
    %22 = vsyncpa [#allocation15], 0
    %23 = vsyncpa [#allocation18], 0
    %24 = vsyncpa [#allocation21], 0
    %25 = vsyncpa [#allocation4], 0
    // Predicated region
    $region2: #{tpu_custom_call.1} parent=1 // pred_check
      _
    $region3: #{tpu_custom_call.1} parent=1 // pred_check_branch
      %27 = sbr.rel (0) target = $region5
    $region4: #{tpu_custom_call.1} parent=1 // pred_region
      _
    $region5: #{tpu_custom_call.1} parent=1 // pred_fallthru
      _
    // Predicated region
    $region6: #{tpu_custom_call.1} parent=1 // pred_check
      _
    $region7: #{tpu_custom_call.1} parent=1 // pred_check_branch
      %29 = sbr.rel (0) target = $region9
    $region8: #{tpu_custom_call.1} parent=1 // pred_region
      %s31 = ssub.s32 64, 64
      %32 = vsyncadd [#allocation3], %s31
      %s34 = sshll.u32 [#allocation2], 4
      %s35 = int_to_ptr.vmem [resolvable:$true] %s34
      %37 = dma.hbm_to_vmem [thread:$0]  %s1, 64, %s35, [#allocation3]
    $region9: #{tpu_custom_call.1} parent=1 // pred_fallthru
      _
    // Predicated region
    $region10: #{tpu_custom_call.1} parent=1 // pred_check
      _
    $region11: #{tpu_custom_call.1} parent=1 // pred_check_branch
      %39 = sbr.rel (0) target = $region13
    $region12: #{tpu_custom_call.1} parent=1 // pred_region
      %s41 = ssub.s32 16, 16
      %42 = vsyncadd [#allocation6], %s41
      %s44 = sshll.u32 [#allocation5], 4
      %s45 = int_to_ptr.vmem [resolvable:$true] %s44
      %47 = dma.hbm_to_vmem [thread:$0]  %s2, 16, %s45, [#allocation6]
    $region13: #{tpu_custom_call.1} parent=1 // pred_fallthru
      _
    // Predicated region
    $region14: #{tpu_custom_call.1} parent=1 // pred_check
      _
    $region15: #{tpu_custom_call.1} parent=1 // pred_check_branch
      %49 = sbr.rel (0) target = $region17
    $region16: #{tpu_custom_call.1} parent=1 // pred_region
      %s51 = ssub.s32 2048, 2048
      %52 = vsyncadd [#allocation6], %s51
      %s53 = sshll.u32 [#allocation7], 4
      %s54 = int_to_ptr.vmem [resolvable:$true] %s53
      %59 = dma.hbm_to_vmem [thread:$0]  %s3, 2048, %s54, [#allocation6], 128, 128, 8
    $region17: #{tpu_custom_call.1} parent=1 // pred_fallthru
      _
    // Predicated region
    $region18: #{tpu_custom_call.1} parent=1 // pred_check
      _
    $region19: #{tpu_custom_call.1} parent=1 // pred_check_branch
      %61 = sbr.rel (0) target = $region21
    $region20: #{tpu_custom_call.1} parent=1 // pred_region
      %s63 = ssub.s32 32, 32
      %64 = vsyncadd [#allocation9], %s63
      %s66 = sshll.u32 [#allocation8], 4
      %s67 = int_to_ptr.vmem [resolvable:$true] %s66
      %69 = dma.hbm_to_vmem [thread:$0]  %s4, 32, %s67, [#allocation9]
    $region21: #{tpu_custom_call.1} parent=1 // pred_fallthru
      _
    // Predicated region
    $region22: #{tpu_custom_call.1} parent=1 // pred_check
      _
    $region23: #{tpu_custom_call.1} parent=1 // pred_check_branch
      %71 = sbr.rel (0) target = $region25
    $region24: #{tpu_custom_call.1} parent=1 // pred_region
      %s73 = ssub.s32 6144, 6144
      %74 = vsyncadd [#allocation9], %s73
      %s75 = sshll.u32 [#allocation10], 4
      %s76 = int_to_ptr.vmem [resolvable:$true] %s75
      %81 = dma.hbm_to_vmem [thread:$0]  %s5, 6144, %s76, [#allocation9], 192, 192, 12
    $region25: #{tpu_custom_call.1} parent=1 // pred_fallthru
      _
    // Predicated region
    $region26: #{tpu_custom_call.1} parent=1 // pred_check
      _
    $region27: #{tpu_custom_call.1} parent=1 // pred_check_branch
      %83 = sbr.rel (0) target = $region29
    $region28: #{tpu_custom_call.1} parent=1 // pred_region
      %s85 = ssub.s32 48, 48
      %86 = vsyncadd [#allocation12], %s85
      %s88 = sshll.u32 [#allocation11], 4
      %s89 = int_to_ptr.vmem [resolvable:$true] %s88
      %91 = dma.hbm_to_vmem [thread:$0]  %s6, 48, %s89, [#allocation12]
    $region29: #{tpu_custom_call.1} parent=1 // pred_fallthru
      _
    // Predicated region
    $region30: #{tpu_custom_call.1} parent=1 // pred_check
      _
    $region31: #{tpu_custom_call.1} parent=1 // pred_check_branch
      %93 = sbr.rel (0) target = $region33
    $region32: #{tpu_custom_call.1} parent=1 // pred_region
      %s95 = ssub.s32 15360, 15360
      %96 = vsyncadd [#allocation12], %s95
      %s97 = sshll.u32 [#allocation13], 4
      %s98 = int_to_ptr.vmem [resolvable:$true] %s97
      %103 = dma.hbm_to_vmem [thread:$0]  %s7, 15360, %s98, [#allocation12], 320, 320, 20
    $region33: #{tpu_custom_call.1} parent=1 // pred_fallthru
      _
    // Predicated region
    $region34: #{tpu_custom_call.1} parent=1 // pred_check
      _
    $region35: #{tpu_custom_call.1} parent=1 // pred_check_branch
      %105 = sbr.rel (0) target = $region37
    $region36: #{tpu_custom_call.1} parent=1 // pred_region
      %s107 = ssub.s32 80, 80
      %108 = vsyncadd [#allocation15], %s107
      %s110 = sshll.u32 [#allocation14], 4
      %s111 = int_to_ptr.vmem [resolvable:$true] %s110
      %113 = dma.hbm_to_vmem [thread:$0]  %s8, 80, %s111, [#allocation15]
    $region37: #{tpu_custom_call.1} parent=1 // pred_fallthru
      _
    // Predicated region
    $region38: #{tpu_custom_call.1} parent=1 // pred_check
      _
    $region39: #{tpu_custom_call.1} parent=1 // pred_check_branch
      %115 = sbr.rel (0) target = $region41
    $region40: #{tpu_custom_call.1} parent=1 // pred_region
      %s117 = ssub.s32 51200, 51200
      %118 = vsyncadd [#allocation15], %s117
      %s119 = sshll.u32 [#allocation16], 4
      %s120 = int_to_ptr.vmem [resolvable:$true] %s119
      %125 = dma.hbm_to_vmem [thread:$0]  %s9, 51200, %s120, [#allocation15], 640, 640, 40
    $region41: #{tpu_custom_call.1} parent=1 // pred_fallthru
      _
    // Predicated region
    $region42: #{tpu_custom_call.1} parent=1 // pred_check
      _
    $region43: #{tpu_custom_call.1} parent=1 // pred_check_branch
      %127 = sbr.rel (0) target = $region45
    $region44: #{tpu_custom_call.1} parent=1 // pred_region
      %s129 = ssub.s32 160, 160
      %130 = vsyncadd [#allocation18], %s129
      %s132 = sshll.u32 [#allocation17], 4
      %s133 = int_to_ptr.vmem [resolvable:$true] %s132
      %135 = dma.hbm_to_vmem [thread:$0]  %s10, 160, %s133, [#allocation18]
    $region45: #{tpu_custom_call.1} parent=1 // pred_fallthru
      _
    // Predicated region
    $region46: #{tpu_custom_call.1} parent=1 // pred_check
      _
    $region47: #{tpu_custom_call.1} parent=1 // pred_check_branch
      %137 = sbr.rel (0) target = $region49
    $region48: #{tpu_custom_call.1} parent=1 // pred_region
      %s139 = ssub.s32 10240, 10240
      %140 = vsyncadd [#allocation18], %s139
      %s141 = sshll.u32 [#allocation19], 4
      %s142 = int_to_ptr.vmem [resolvable:$true] %s141
      %147 = dma.hbm_to_vmem [thread:$0]  %s11, 10240, %s142, [#allocation18], 64, 64, 4
    $region49: #{tpu_custom_call.1} parent=1 // pred_fallthru
      _
    // Predicated region
    $region50: #{tpu_custom_call.1} parent=1 // pred_check
      _
    $region51: #{tpu_custom_call.1} parent=1 // pred_check_branch
      %149 = sbr.rel (0) target = $region53
    $region52: #{tpu_custom_call.1} parent=1 // pred_region
      %s151 = ssub.s32 16, 16
      %152 = vsyncadd [#allocation21], %s151
      %s154 = sshll.u32 [#allocation20], 4
      %s155 = int_to_ptr.vmem [resolvable:$true] %s154
      %157 = dma.hbm_to_vmem [thread:$0]  %s12, 16, %s155, [#allocation21]
    $region53: #{tpu_custom_call.1} parent=1 // pred_fallthru
      _
    // Predicated region
    $region54: #{tpu_custom_call.1} parent=1 // pred_check
      _
    $region55: #{tpu_custom_call.1} parent=1 // pred_check_branch
      %159 = sbr.rel (0) target = $region57
    $region56: #{tpu_custom_call.1} parent=1 // pred_region
      %160 = dma.done [#allocation3], 64
    $region57: #{tpu_custom_call.1} parent=1 // pred_fallthru
      _
    // Predicated region
    $region58: #{tpu_custom_call.1} parent=1 // pred_check
      _
    $region59: #{tpu_custom_call.1} parent=1 // pred_check_branch
      %162 = sbr.rel (0) target = $region61
    $region60: #{tpu_custom_call.1} parent=1 // pred_region
      %163 = dma.done [#allocation6], 16
    $region61: #{tpu_custom_call.1} parent=1 // pred_fallthru
      _
    // Predicated region
    $region62: #{tpu_custom_call.1} parent=1 // pred_check
      _
    $region63: #{tpu_custom_call.1} parent=1 // pred_check_branch
      %165 = sbr.rel (0) target = $region65
    $region64: #{tpu_custom_call.1} parent=1 // pred_region
      %166 = dma.done [#allocation6], 2048
    $region65: #{tpu_custom_call.1} parent=1 // pred_fallthru
      _
    // Predicated region
    $region66: #{tpu_custom_call.1} parent=1 // pred_check
      _
    $region67: #{tpu_custom_call.1} parent=1 // pred_check_branch
      %168 = sbr.rel (0) target = $region69
    $region68: #{tpu_custom_call.1} parent=1 // pred_region
      %169 = dma.done [#allocation9], 32
    $region69: #{tpu_custom_call.1} parent=1 // pred_fallthru
      _
    // Predicated region
    $region70: #{tpu_custom_call.1} parent=1 // pred_check
      _
    $region71: #{tpu_custom_call.1} parent=1 // pred_check_branch
      %171 = sbr.rel (0) target = $region73
    $region72: #{tpu_custom_call.1} parent=1 // pred_region
      %172 = dma.done [#allocation9], 6144
    $region73: #{tpu_custom_call.1} parent=1 // pred_fallthru
      _
    // Predicated region
    $region74: #{tpu_custom_call.1} parent=1 // pred_check
      _
    $region75: #{tpu_custom_call.1} parent=1 // pred_check_branch
      %174 = sbr.rel (0) target = $region77
    $region76: #{tpu_custom_call.1} parent=1 // pred_region
      %175 = dma.done [#allocation12], 48
    $region77: #{tpu_custom_call.1} parent=1 // pred_fallthru
      _
    // Predicated region
    $region78: #{tpu_custom_call.1} parent=1 // pred_check
      _
    $region79: #{tpu_custom_call.1} parent=1 // pred_check_branch
      %177 = sbr.rel (0) target = $region81
    $region80: #{tpu_custom_call.1} parent=1 // pred_region
      %178 = dma.done [#allocation12], 15360
    $region81: #{tpu_custom_call.1} parent=1 // pred_fallthru
      _
    // Predicated region
    $region82: #{tpu_custom_call.1} parent=1 // pred_check
      _
    $region83: #{tpu_custom_call.1} parent=1 // pred_check_branch
      %180 = sbr.rel (0) target = $region85
    $region84: #{tpu_custom_call.1} parent=1 // pred_region
      %181 = dma.done [#allocation15], 80
    $region85: #{tpu_custom_call.1} parent=1 // pred_fallthru
      _
    // Predicated region
    $region86: #{tpu_custom_call.1} parent=1 // pred_check
      _
    $region87: #{tpu_custom_call.1} parent=1 // pred_check_branch
      %183 = sbr.rel (0) target = $region89
    $region88: #{tpu_custom_call.1} parent=1 // pred_region
      %184 = dma.done [#allocation15], 51200
    $region89: #{tpu_custom_call.1} parent=1 // pred_fallthru
      _
    // Predicated region
    $region90: #{tpu_custom_call.1} parent=1 // pred_check
      _
    $region91: #{tpu_custom_call.1} parent=1 // pred_check_branch
      %186 = sbr.rel (0) target = $region93
    $region92: #{tpu_custom_call.1} parent=1 // pred_region
      %187 = dma.done [#allocation18], 160
    $region93: #{tpu_custom_call.1} parent=1 // pred_fallthru
      _
    // Predicated region
    $region94: #{tpu_custom_call.1} parent=1 // pred_check
      _
    $region95: #{tpu_custom_call.1} parent=1 // pred_check_branch
      %189 = sbr.rel (0) target = $region97
    $region96: #{tpu_custom_call.1} parent=1 // pred_region
      %190 = dma.done [#allocation18], 10240
    $region97: #{tpu_custom_call.1} parent=1 // pred_fallthru
      _
    // Predicated region
    $region98: #{tpu_custom_call.1} parent=1 // pred_check
      _
    $region99: #{tpu_custom_call.1} parent=1 // pred_check_branch
      %192 = sbr.rel (0) target = $region101
    $region100: #{tpu_custom_call.1} parent=1 // pred_region
      %193 = dma.done [#allocation21], 16
    $region101: #{tpu_custom_call.1} parent=1 // pred_fallthru
      _
    %v195 = vld [vmem:[%s0] sm:$0xf]
    %v196 = vld [vmem:[%s0 + $0x4] sm:$0xf]
    %v197 = vld [vmem:[#allocation2] sm:$0xf]
    %v198 = vld [vmem:[#allocation5] sm:$0x1]
    %v200 = vlaneseq
    %v201 = vshrl.u32 %v200, 7
    %v202 = vsub.s32 0, %v201
    %v203 = vrot.slane %v198, %v202
    %v207 = vunpack.c.l.b16 %v195
    %v208 = vunpack.c.l.b16 %v196
    %v209 = vpack.c.b16 %v208, %v207
    %vm210 = vcmask 64512
    %v212 = vsel %vm210, %v209, 0
    %vm214 = vcmask 1043456
    %v216 = vsel %vm214, %v197, 0
    %218 = vmatprep.subr.bf16.mxu0 0
    %219 = vmatpush1.bf16.msra.mxu0 %v216
    %220 = vmatprep.subr.bf16.mxu0 0
    %221 = vmatpush1.bf16.msra.mxu0 0
    %222 = vmatprep.subr.bf16.mxu0 0
    %223 = vmatpush1.bf16.msra.mxu0 0
    %224 = vmatprep.subr.bf16.mxu0 0
    %225 = vmatpush1.bf16.msra.mxu0 0
    %226 = vmatprep.subr.bf16.mxu0 0
    %227 = vmatpush1.bf16.msra.mxu0 0
    %228 = vmatprep.subr.bf16.mxu0 0
    %229 = vmatpush1.bf16.msra.mxu0 0
    %230 = vmatprep.subr.bf16.mxu0 0
    %231 = vmatpush1.bf16.msra.mxu0 0
    %232 = vmatprep.subr.bf16.mxu0 0
    %233 = vmatpush1.bf16.msra.mxu0 0
    %234 = vmatprep.subr.bf16.mxu0 0
    %235 = vmatpush1.bf16.msra.mxu0 0
    %236 = vmatprep.subr.bf16.mxu0 0
    %237 = vmatpush1.bf16.msra.mxu0 0
    %238 = vmatprep.subr.bf16.mxu0 0
    %239 = vmatpush1.bf16.msra.mxu0 0
    %240 = vmatprep.subr.bf16.mxu0 0
    %241 = vmatpush1.bf16.msra.mxu0 0
    %242 = vmatprep.subr.bf16.mxu0 0
    %243 = vmatpush1.bf16.msra.mxu0 0
    %244 = vmatprep.subr.bf16.mxu0 0
    %245 = vmatpush1.bf16.msra.mxu0 0
    %246 = vmatprep.subr.bf16.mxu0 0
    %247 = vmatpush1.bf16.msra.mxu0 0
    %248 = vmatprep.subr.bf16.mxu0 0
    %249 = vmatpush1.bf16.msra.mxu0 0
    %250 = vmatprep.mubr.bf16.mxu0 0
    %251 = vmatmul.mubr.bf16.gmra.mrb[0].mxu0 %v212
    %v252 = vpop.f32.mrb[0].mxu0
    %v253 = vadd.f32 %v203, %v252
    %v254 = vpop.f32.mrb[0].mxu0
    %v255 = vpop.f32.mrb[0].mxu0
    %v256 = vadd.f32 %v203, %v255
    %v257 = vpop.f32.mrb[0].mxu0
    %258 = vdwg.mxu0
    %v259 = vmax.f32 %v253, 0.0
    %v260 = vmax.f32 %v256, 0.0
    %v261 = vpack.c.bf16 %v260, %v259
    %v262 = vld [vmem:[#allocation7] sm:$0xff]
    %v263 = vld [vmem:[#allocation7 + $0x8] sm:$0xff]
    %v264 = vld [vmem:[#allocation7 + $0x10] sm:$0xff]
    %v265 = vld [vmem:[#allocation7 + $0x18] sm:$0xff]
    %v266 = vld [vmem:[#allocation7 + $0x20] sm:$0xff]
    %v267 = vld [vmem:[#allocation7 + $0x28] sm:$0xff]
    %v268 = vld [vmem:[#allocation7 + $0x30] sm:$0xff]
    %v269 = vld [vmem:[#allocation7 + $0x38] sm:$0xff]
    %v270 = vld [vmem:[#allocation7 + $0x40] sm:$0xff]
    %v271 = vld [vmem:[#allocation7 + $0x48] sm:$0xff]
    %v272 = vld [vmem:[#allocation7 + $0x50] sm:$0xff]
    %v273 = vld [vmem:[#allocation7 + $0x58] sm:$0xff]
    %v274 = vld [vmem:[#allocation7 + $0x60] sm:$0xff]
    %v275 = vld [vmem:[#allocation7 + $0x68] sm:$0xff]
    %v276 = vld [vmem:[#allocation7 + $0x70] sm:$0xff]
    %v277 = vld [vmem:[#allocation7 + $0x78] sm:$0xff]
    %v278 = vld [vmem:[#allocation8] sm:$0x3]
    %v280 = vlaneseq
    %v281 = vshrl.u32 %v280, 7
    %v282 = vsub.s32 0, %v281
    %v283 = vrot.slane %v278, %v282
    %v284 = vlaneseq
    %v285 = vshrl.u32 %v284, 7
    %v286 = vsub.s32 1, %v285
    %v287 = vrot.slane %v278, %v286
    %v306 = vunpack.c.l.b16 %v262
    %v307 = vunpack.c.h.b16 %v262
    %v308 = vunpack.c.l.b16 %v263
    %v309 = vunpack.c.h.b16 %v263
    %v310 = vunpack.c.l.b16 %v264
    %v311 = vunpack.c.h.b16 %v264
    %v312 = vunpack.c.l.b16 %v265
    %v313 = vunpack.c.h.b16 %v265
    %v314 = vunpack.c.l.b16 %v266
    %v315 = vunpack.c.h.b16 %v266
    %v316 = vunpack.c.l.b16 %v267
    %v317 = vunpack.c.h.b16 %v267
    %v318 = vunpack.c.l.b16 %v268
    %v319 = vunpack.c.h.b16 %v268
    %v320 = vunpack.c.l.b16 %v269
    %v321 = vunpack.c.h.b16 %v269
    %v322 = vunpack.c.l.b16 %v270
    %v323 = vunpack.c.h.b16 %v270
    %v324 = vunpack.c.l.b16 %v271
    %v325 = vunpack.c.h.b16 %v271
    %v326 = vunpack.c.l.b16 %v272
    %v327 = vunpack.c.h.b16 %v272
    %v328 = vunpack.c.l.b16 %v273
    %v329 = vunpack.c.h.b16 %v273
    %v330 = vunpack.c.l.b16 %v274
    %v331 = vunpack.c.h.b16 %v274
    %v332 = vunpack.c.l.b16 %v275
    %v333 = vunpack.c.h.b16 %v275
    %v334 = vunpack.c.l.b16 %v276
    %v335 = vunpack.c.h.b16 %v276
    %v336 = vunpack.c.l.b16 %v277
    %v337 = vunpack.c.h.b16 %v277
    %v338 = vpack.c.b16 %v308, %v306
    %v339 = vpack.c.b16 %v309, %v307
    %v340 = vpack.c.b16 %v312, %v310
    %v341 = vpack.c.b16 %v313, %v311
    %v342 = vpack.c.b16 %v316, %v314
    %v343 = vpack.c.b16 %v317, %v315
    %v344 = vpack.c.b16 %v320, %v318
    %v345 = vpack.c.b16 %v321, %v319
    %v346 = vpack.c.b16 %v324, %v322
    %v347 = vpack.c.b16 %v325, %v323
    %v348 = vpack.c.b16 %v328, %v326
    %v349 = vpack.c.b16 %v329, %v327
    %v350 = vpack.c.b16 %v332, %v330
    %v351 = vpack.c.b16 %v333, %v331
    %v352 = vpack.c.b16 %v336, %v334
    %v353 = vpack.c.b16 %v337, %v335
    %370 = vmatprep.subr.bf16.mxu0 %v339
    %371 = vmatpush1.bf16.msra.mxu0 %v338
    %372 = vmatprep.subr.bf16.mxu0 %v341
    %373 = vmatpush1.bf16.msra.mxu0 %v340
    %374 = vmatprep.subr.bf16.mxu0 %v343
    %375 = vmatpush1.bf16.msra.mxu0 %v342
    %376 = vmatprep.subr.bf16.mxu0 %v345
    %377 = vmatpush1.bf16.msra.mxu0 %v344
    %378 = vmatprep.subr.bf16.mxu0 %v347
    %379 = vmatpush1.bf16.msra.mxu0 %v346
    %380 = vmatprep.subr.bf16.mxu0 %v349
    %381 = vmatpush1.bf16.msra.mxu0 %v348
    %382 = vmatprep.subr.bf16.mxu0 %v351
    %383 = vmatpush1.bf16.msra.mxu0 %v350
    %384 = vmatprep.subr.bf16.mxu0 %v353
    %385 = vmatpush1.bf16.msra.mxu0 %v352
    %386 = vmatprep.subr.bf16.mxu0 0
    %387 = vmatpush1.bf16.msra.mxu0 0
    %388 = vmatprep.subr.bf16.mxu0 0
    %389 = vmatpush1.bf16.msra.mxu0 0
    %390 = vmatprep.subr.bf16.mxu0 0
    %391 = vmatpush1.bf16.msra.mxu0 0
    %392 = vmatprep.subr.bf16.mxu0 0
    %393 = vmatpush1.bf16.msra.mxu0 0
    %394 = vmatprep.subr.bf16.mxu0 0
    %395 = vmatpush1.bf16.msra.mxu0 0
    %396 = vmatprep.subr.bf16.mxu0 0
    %397 = vmatpush1.bf16.msra.mxu0 0
    %398 = vmatprep.subr.bf16.mxu0 0
    %399 = vmatpush1.bf16.msra.mxu0 0
    %400 = vmatprep.subr.bf16.mxu0 0
    %401 = vmatpush1.bf16.msra.mxu0 0
    %402 = vmatprep.mubr.bf16.mxu0 0
    %403 = vmatmul.mubr.bf16.gmra.mrb[0].mxu0 %v261
    %v404 = vpop.f32.mrb[0].mxu0
    %v405 = vadd.f32 %v283, %v404
    %v406 = vpop.f32.mrb[0].mxu0
    %v407 = vadd.f32 %v287, %v406
    %v408 = vpop.f32.mrb[0].mxu0
    %v409 = vadd.f32 %v283, %v408
    %v410 = vpop.f32.mrb[0].mxu0
    %v411 = vadd.f32 %v287, %v410
    %412 = vdwg.mxu0
    %v413 = vmax.f32 %v405, 0.0
    %v414 = vmax.f32 %v407, 0.0
    %v415 = vmax.f32 %v409, 0.0
    %v416 = vmax.f32 %v411, 0.0
    %v417 = vpack.c.bf16 %v415, %v413
    %v418 = vpack.c.bf16 %v416, %v414
    %v419 = vld [vmem:[#allocation10] sm:$0xff]
    %v420 = vld [vmem:[#allocation10 + $0x8] sm:$0xf]
    %v421 = vld [vmem:[#allocation10 + $0xc] sm:$0xff]
    %v422 = vld [vmem:[#allocation10 + $0x14] sm:$0xf]
    %v423 = vld [vmem:[#allocation10 + $0x18] sm:$0xff]
    %v424 = vld [vmem:[#allocation10 + $0x20] sm:$0xf]
    %v425 = vld [vmem:[#allocation10 + $0x24] sm:$0xff]
    %v426 = vld [vmem:[#allocation10 + $0x2c] sm:$0xf]
    %v427 = vld [vmem:[#allocation10 + $0x30] sm:$0xff]
    %v428 = vld [vmem:[#allocation10 + $0x38] sm:$0xf]
    %v429 = vld [vmem:[#allocation10 + $0x3c] sm:$0xff]
    %v430 = vld [vmem:[#allocation10 + $0x44] sm:$0xf]
    %v431 = vld [vmem:[#allocation10 + $0x48] sm:$0xff]
    %v432 = vld [vmem:[#allocation10 + $0x50] sm:$0xf]
    %v433 = vld [vmem:[#allocation10 + $0x54] sm:$0xff]
    %v434 = vld [vmem:[#allocation10 + $0x5c] sm:$0xf]
    %v435 = vld [vmem:[#allocation10 + $0x60] sm:$0xff]
    %v436 = vld [vmem:[#allocation10 + $0x68] sm:$0xf]
    %v437 = vld [vmem:[#allocation10 + $0x6c] sm:$0xff]
    %v438 = vld [vmem:[#allocation10 + $0x74] sm:$0xf]
    %v439 = vld [vmem:[#allocation10 + $0x78] sm:$0xff]
    %v440 = vld [vmem:[#allocation10 + $0x80] sm:$0xf]
    %v441 = vld [vmem:[#allocation10 + $0x84] sm:$0xff]
    %v442 = vld [vmem:[#allocation10 + $0x8c] sm:$0xf]
    %v443 = vld [vmem:[#allocation10 + $0x90] sm:$0xff]
    %v444 = vld [vmem:[#allocation10 + $0x98] sm:$0xf]
    %v445 = vld [vmem:[#allocation10 + $0x9c] sm:$0xff]
    %v446 = vld [vmem:[#allocation10 + $0xa4] sm:$0xf]
    %v447 = vld [vmem:[#allocation10 + $0xa8] sm:$0xff]
    %v448 = vld [vmem:[#allocation10 + $0xb0] sm:$0xf]
    %v449 = vld [vmem:[#allocation10 + $0xb4] sm:$0xff]
    %v450 = vld [vmem:[#allocation10 + $0xbc] sm:$0xf]
    %v451 = vld [vmem:[#allocation10 + $0xc0] sm:$0xff]
    %v452 = vld [vmem:[#allocation10 + $0xc8] sm:$0xf]
    %v453 = vld [vmem:[#allocation10 + $0xcc] sm:$0xff]
    %v454 = vld [vmem:[#allocation10 + $0xd4] sm:$0xf]
    %v455 = vld [vmem:[#allocation10 + $0xd8] sm:$0xff]
    %v456 = vld [vmem:[#allocation10 + $0xe0] sm:$0xf]
    %v457 = vld [vmem:[#allocation10 + $0xe4] sm:$0xff]
    %v458 = vld [vmem:[#allocation10 + $0xec] sm:$0xf]
    %v459 = vld [vmem:[#allocation10 + $0xf0] sm:$0xff]
    %v460 = vld [vmem:[#allocation10 + $0xf8] sm:$0xf]
    %v461 = vld [vmem:[#allocation10 + $0xfc] sm:$0xff]
    %v462 = vld [vmem:[#allocation10 + $0x104] sm:$0xf]
    %v463 = vld [vmem:[#allocation10 + $0x108] sm:$0xff]
    %v464 = vld [vmem:[#allocation10 + $0x110] sm:$0xf]
    %v465 = vld [vmem:[#allocation10 + $0x114] sm:$0xff]
    %v466 = vld [vmem:[#allocation10 + $0x11c] sm:$0xf]
    %v467 = vld [vmem:[#allocation10 + $0x120] sm:$0xff]
    %v468 = vld [vmem:[#allocation10 + $0x128] sm:$0xf]
    %v469 = vld [vmem:[#allocation10 + $0x12c] sm:$0xff]
    %v470 = vld [vmem:[#allocation10 + $0x134] sm:$0xf]
    %v471 = vld [vmem:[#allocation10 + $0x138] sm:$0xff]
    %v472 = vld [vmem:[#allocation10 + $0x140] sm:$0xf]
    %v473 = vld [vmem:[#allocation10 + $0x144] sm:$0xff]
    %v474 = vld [vmem:[#allocation10 + $0x14c] sm:$0xf]
    %v475 = vld [vmem:[#allocation10 + $0x150] sm:$0xff]
    %v476 = vld [vmem:[#allocation10 + $0x158] sm:$0xf]
    %v477 = vld [vmem:[#allocation10 + $0x15c] sm:$0xff]
    %v478 = vld [vmem:[#allocation10 + $0x164] sm:$0xf]
    %v479 = vld [vmem:[#allocation10 + $0x168] sm:$0xff]
    %v480 = vld [vmem:[#allocation10 + $0x170] sm:$0xf]
    %v481 = vld [vmem:[#allocation10 + $0x174] sm:$0xff]
    %v482 = vld [vmem:[#allocation10 + $0x17c] sm:$0xf]
    %v483 = vld [vmem:[#allocation11] sm:$0x7]
    %v485 = vlaneseq
    %v486 = vshrl.u32 %v485, 7
    %v487 = vsub.s32 0, %v486
    %v488 = vrot.slane %v483, %v487
    %v489 = vlaneseq
    %v490 = vshrl.u32 %v489, 7
    %v491 = vsub.s32 1, %v490
    %v492 = vrot.slane %v483, %v491
    %v493 = vlaneseq
    %v494 = vshrl.u32 %v493, 7
    %v495 = vsub.s32 2, %v494
    %v496 = vrot.slane %v483, %v495
    %v564 = vunpack.c.l.b16 %v419
    %v565 = vunpack.c.h.b16 %v419
    %v566 = vunpack.c.l.b16 %v420
    %v567 = vunpack.c.l.b16 %v421
    %v568 = vunpack.c.h.b16 %v421
    %v569 = vunpack.c.l.b16 %v422
    %v570 = vunpack.c.l.b16 %v423
    %v571 = vunpack.c.h.b16 %v423
    %v572 = vunpack.c.l.b16 %v424
    %v573 = vunpack.c.l.b16 %v425
    %v574 = vunpack.c.h.b16 %v425
    %v575 = vunpack.c.l.b16 %v426
    %v576 = vunpack.c.l.b16 %v427
    %v577 = vunpack.c.h.b16 %v427
    %v578 = vunpack.c.l.b16 %v428
    %v579 = vunpack.c.l.b16 %v429
    %v580 = vunpack.c.h.b16 %v429
    %v581 = vunpack.c.l.b16 %v430
    %v582 = vunpack.c.l.b16 %v431
    %v583 = vunpack.c.h.b16 %v431
    %v584 = vunpack.c.l.b16 %v432
    %v585 = vunpack.c.l.b16 %v433
    %v586 = vunpack.c.h.b16 %v433
    %v587 = vunpack.c.l.b16 %v434
    %v588 = vunpack.c.l.b16 %v435
    %v589 = vunpack.c.h.b16 %v435
    %v590 = vunpack.c.l.b16 %v436
    %v591 = vunpack.c.l.b16 %v437
    %v592 = vunpack.c.h.b16 %v437
    %v593 = vunpack.c.l.b16 %v438
    %v594 = vunpack.c.l.b16 %v439
    %v595 = vunpack.c.h.b16 %v439
    %v596 = vunpack.c.l.b16 %v440
    %v597 = vunpack.c.l.b16 %v441
    %v598 = vunpack.c.h.b16 %v441
    %v599 = vunpack.c.l.b16 %v442
    %v600 = vunpack.c.l.b16 %v443
    %v601 = vunpack.c.h.b16 %v443
    %v602 = vunpack.c.l.b16 %v444
    %v603 = vunpack.c.l.b16 %v445
    %v604 = vunpack.c.h.b16 %v445
    %v605 = vunpack.c.l.b16 %v446
    %v606 = vunpack.c.l.b16 %v447
    %v607 = vunpack.c.h.b16 %v447
    %v608 = vunpack.c.l.b16 %v448
    %v609 = vunpack.c.l.b16 %v449
    %v610 = vunpack.c.h.b16 %v449
    %v611 = vunpack.c.l.b16 %v450
    %v612 = vunpack.c.l.b16 %v451
    %v613 = vunpack.c.h.b16 %v451
    %v614 = vunpack.c.l.b16 %v452
    %v615 = vunpack.c.l.b16 %v453
    %v616 = vunpack.c.h.b16 %v453
    %v617 = vunpack.c.l.b16 %v454
    %v618 = vunpack.c.l.b16 %v455
    %v619 = vunpack.c.h.b16 %v455
    %v620 = vunpack.c.l.b16 %v456
    %v621 = vunpack.c.l.b16 %v457
    %v622 = vunpack.c.h.b16 %v457
    %v623 = vunpack.c.l.b16 %v458
    %v624 = vunpack.c.l.b16 %v459
    %v625 = vunpack.c.h.b16 %v459
    %v626 = vunpack.c.l.b16 %v460
    %v627 = vunpack.c.l.b16 %v461
    %v628 = vunpack.c.h.b16 %v461
    %v629 = vunpack.c.l.b16 %v462
    %v630 = vunpack.c.l.b16 %v463
    %v631 = vunpack.c.h.b16 %v463
    %v632 = vunpack.c.l.b16 %v464
    %v633 = vunpack.c.l.b16 %v465
    %v634 = vunpack.c.h.b16 %v465
    %v635 = vunpack.c.l.b16 %v466
    %v636 = vunpack.c.l.b16 %v467
    %v637 = vunpack.c.h.b16 %v467
    %v638 = vunpack.c.l.b16 %v468
    %v639 = vunpack.c.l.b16 %v469
    %v640 = vunpack.c.h.b16 %v469
    %v641 = vunpack.c.l.b16 %v470
    %v642 = vunpack.c.l.b16 %v471
    %v643 = vunpack.c.h.b16 %v471
    %v644 = vunpack.c.l.b16 %v472
    %v645 = vunpack.c.l.b16 %v473
    %v646 = vunpack.c.h.b16 %v473
    %v647 = vunpack.c.l.b16 %v474
    %v648 = vunpack.c.l.b16 %v475
    %v649 = vunpack.c.h.b16 %v475
    %v650 = vunpack.c.l.b16 %v476
    %v651 = vunpack.c.l.b16 %v477
    %v652 = vunpack.c.h.b16 %v477
    %v653 = vunpack.c.l.b16 %v478
    %v654 = vunpack.c.l.b16 %v479
    %v655 = vunpack.c.h.b16 %v479
    %v656 = vunpack.c.l.b16 %v480
    %v657 = vunpack.c.l.b16 %v481
    %v658 = vunpack.c.h.b16 %v481
    %v659 = vunpack.c.l.b16 %v482
    %v660 = vpack.c.b16 %v567, %v564
    %v661 = vpack.c.b16 %v568, %v565
    %v662 = vpack.c.b16 %v569, %v566
    %v663 = vpack.c.b16 %v573, %v570
    %v664 = vpack.c.b16 %v574, %v571
    %v665 = vpack.c.b16 %v575, %v572
    %v666 = vpack.c.b16 %v579, %v576
    %v667 = vpack.c.b16 %v580, %v577
    %v668 = vpack.c.b16 %v581, %v578
    %v669 = vpack.c.b16 %v585, %v582
    %v670 = vpack.c.b16 %v586, %v583
    %v671 = vpack.c.b16 %v587, %v584
    %v672 = vpack.c.b16 %v591, %v588
    %v673 = vpack.c.b16 %v592, %v589
    %v674 = vpack.c.b16 %v593, %v590
    %v675 = vpack.c.b16 %v597, %v594
    %v676 = vpack.c.b16 %v598, %v595
    %v677 = vpack.c.b16 %v599, %v596
    %v678 = vpack.c.b16 %v603, %v600
    %v679 = vpack.c.b16 %v604, %v601
    %v680 = vpack.c.b16 %v605, %v602
    %v681 = vpack.c.b16 %v609, %v606
    %v682 = vpack.c.b16 %v610, %v607
    %v683 = vpack.c.b16 %v611, %v608
    %v684 = vpack.c.b16 %v615, %v612
    %v685 = vpack.c.b16 %v616, %v613
    %v686 = vpack.c.b16 %v617, %v614
    %v687 = vpack.c.b16 %v621, %v618
    %v688 = vpack.c.b16 %v622, %v619
    %v689 = vpack.c.b16 %v623, %v620
    %v690 = vpack.c.b16 %v627, %v624
    %v691 = vpack.c.b16 %v628, %v625
    %v692 = vpack.c.b16 %v629, %v626
    %v693 = vpack.c.b16 %v633, %v630
    %v694 = vpack.c.b16 %v634, %v631
    %v695 = vpack.c.b16 %v635, %v632
    %v696 = vpack.c.b16 %v639, %v636
    %v697 = vpack.c.b16 %v640, %v637
    %v698 = vpack.c.b16 %v641, %v638
    %v699 = vpack.c.b16 %v645, %v642
    %v700 = vpack.c.b16 %v646, %v643
    %v701 = vpack.c.b16 %v647, %v644
    %v702 = vpack.c.b16 %v651, %v648
    %v703 = vpack.c.b16 %v652, %v649
    %v704 = vpack.c.b16 %v653, %v650
    %v705 = vpack.c.b16 %v657, %v654
    %v706 = vpack.c.b16 %v658, %v655
    %v707 = vpack.c.b16 %v659, %v656
    %756 = vmatprep.subr.bf16.mxu0 %v661
    %757 = vmatpush1.bf16.msra.mxu0 %v660
    %758 = vmatprep.subr.bf16.mxu0 %v664
    %759 = vmatpush1.bf16.msra.mxu0 %v663
    %760 = vmatprep.subr.bf16.mxu0 %v667
    %761 = vmatpush1.bf16.msra.mxu0 %v666
    %762 = vmatprep.subr.bf16.mxu0 %v670
    %763 = vmatpush1.bf16.msra.mxu0 %v669
    %764 = vmatprep.subr.bf16.mxu0 %v673
    %765 = vmatpush1.bf16.msra.mxu0 %v672
    %766 = vmatprep.subr.bf16.mxu0 %v676
    %767 = vmatpush1.bf16.msra.mxu0 %v675
    %768 = vmatprep.subr.bf16.mxu0 %v679
    %769 = vmatpush1.bf16.msra.mxu0 %v678
    %770 = vmatprep.subr.bf16.mxu0 %v682
    %771 = vmatpush1.bf16.msra.mxu0 %v681
    %772 = vmatprep.subr.bf16.mxu0 %v685
    %773 = vmatpush1.bf16.msra.mxu0 %v684
    %774 = vmatprep.subr.bf16.mxu0 %v688
    %775 = vmatpush1.bf16.msra.mxu0 %v687
    %776 = vmatprep.subr.bf16.mxu0 %v691
    %777 = vmatpush1.bf16.msra.mxu0 %v690
    %778 = vmatprep.subr.bf16.mxu0 %v694
    %779 = vmatpush1.bf16.msra.mxu0 %v693
    %780 = vmatprep.subr.bf16.mxu0 %v697
    %781 = vmatpush1.bf16.msra.mxu0 %v696
    %782 = vmatprep.subr.bf16.mxu0 %v700
    %783 = vmatpush1.bf16.msra.mxu0 %v699
    %784 = vmatprep.subr.bf16.mxu0 %v703
    %785 = vmatpush1.bf16.msra.mxu0 %v702
    %786 = vmatprep.subr.bf16.mxu0 %v706
    %787 = vmatpush1.bf16.msra.mxu0 %v705
    %788 = vmatprep.mubr.bf16.mxu0 %v418
    %789 = vmatmul.mubr.bf16.gmra.mrb[0].mxu0 %v417
    %v790 = vpop.f32.mrb[0].mxu0
    %v791 = vadd.f32 %v488, %v790
    %v792 = vpop.f32.mrb[0].mxu0
    %v793 = vadd.f32 %v492, %v792
    %v794 = vpop.f32.mrb[0].mxu0
    %v795 = vadd.f32 %v488, %v794
    %v796 = vpop.f32.mrb[0].mxu0
    %v797 = vadd.f32 %v492, %v796
    %798 = vdwg.mxu0
    %799 = vmatprep.subr.bf16.mxu0 0
    %800 = vmatpush1.bf16.msra.mxu0 %v662
    %801 = vmatprep.subr.bf16.mxu0 0
    %802 = vmatpush1.bf16.msra.mxu0 %v665
    %803 = vmatprep.subr.bf16.mxu0 0
    %804 = vmatpush1.bf16.msra.mxu0 %v668
    %805 = vmatprep.subr.bf16.mxu0 0
    %806 = vmatpush1.bf16.msra.mxu0 %v671
    %807 = vmatprep.subr.bf16.mxu0 0
    %808 = vmatpush1.bf16.msra.mxu0 %v674
    %809 = vmatprep.subr.bf16.mxu0 0
    %810 = vmatpush1.bf16.msra.mxu0 %v677
    %811 = vmatprep.subr.bf16.mxu0 0
    %812 = vmatpush1.bf16.msra.mxu0 %v680
    %813 = vmatprep.subr.bf16.mxu0 0
    %814 = vmatpush1.bf16.msra.mxu0 %v683
    %815 = vmatprep.subr.bf16.mxu0 0
    %816 = vmatpush1.bf16.msra.mxu0 %v686
    %817 = vmatprep.subr.bf16.mxu0 0
    %818 = vmatpush1.bf16.msra.mxu0 %v689
    %819 = vmatprep.subr.bf16.mxu0 0
    %820 = vmatpush1.bf16.msra.mxu0 %v692
    %821 = vmatprep.subr.bf16.mxu0 0
    %822 = vmatpush1.bf16.msra.mxu0 %v695
    %823 = vmatprep.subr.bf16.mxu0 0
    %824 = vmatpush1.bf16.msra.mxu0 %v698
    %825 = vmatprep.subr.bf16.mxu0 0
    %826 = vmatpush1.bf16.msra.mxu0 %v701
    %827 = vmatprep.subr.bf16.mxu0 0
    %828 = vmatpush1.bf16.msra.mxu0 %v704
    %829 = vmatprep.subr.bf16.mxu0 0
    %830 = vmatpush1.bf16.msra.mxu0 %v707
    %831 = vmatprep.mubr.bf16.mxu0 %v418
    %832 = vmatmul.mubr.bf16.gmra.mrb[0].mxu0 %v417
    %v833 = vpop.f32.mrb[0].mxu0
    %v834 = vadd.f32 %v496, %v833
    %v835 = vpop.f32.mrb[0].mxu0
    %v836 = vpop.f32.mrb[0].mxu0
    %v837 = vadd.f32 %v496, %v836
    %v838 = vpop.f32.mrb[0].mxu0
    %839 = vdwg.mxu0
    %v840 = vmax.f32 %v791, 0.0
    %v841 = vmax.f32 %v793, 0.0
    %v842 = vmax.f32 %v834, 0.0
    %v843 = vmax.f32 %v795, 0.0
    %v844 = vmax.f32 %v797, 0.0
    %v845 = vmax.f32 %v837, 0.0
    %v846 = vpack.c.bf16 %v843, %v840
    %v847 = vpack.c.bf16 %v844, %v841
    %v848 = vpack.c.bf16 %v845, %v842
    %v849 = vld [vmem:[#allocation13] sm:$0xff]
    %v850 = vld [vmem:[#allocation13 + $0x8] sm:$0xff]
    %v851 = vld [vmem:[#allocation13 + $0x10] sm:$0xf]
    %v852 = vld [vmem:[#allocation13 + $0x14] sm:$0xff]
    %v853 = vld [vmem:[#allocation13 + $0x1c] sm:$0xff]
    %v854 = vld [vmem:[#allocation13 + $0x24] sm:$0xf]
    %v855 = vld [vmem:[#allocation13 + $0x28] sm:$0xff]
    %v856 = vld [vmem:[#allocation13 + $0x30] sm:$0xff]
    %v857 = vld [vmem:[#allocation13 + $0x38] sm:$0xf]
    %v858 = vld [vmem:[#allocation13 + $0x3c] sm:$0xff]
    %v859 = vld [vmem:[#allocation13 + $0x44] sm:$0xff]
    %v860 = vld [vmem:[#allocation13 + $0x4c] sm:$0xf]
    %v861 = vld [vmem:[#allocation13 + $0x50] sm:$0xff]
    %v862 = vld [vmem:[#allocation13 + $0x58] sm:$0xff]
    %v863 = vld [vmem:[#allocation13 + $0x60] sm:$0xf]
    %v864 = vld [vmem:[#allocation13 + $0x64] sm:$0xff]
    %v865 = vld [vmem:[#allocation13 + $0x6c] sm:$0xff]
    %v866 = vld [vmem:[#allocation13 + $0x74] sm:$0xf]
    %v867 = vld [vmem:[#allocation13 + $0x78] sm:$0xff]
    %v868 = vld [vmem:[#allocation13 + $0x80] sm:$0xff]
    %v869 = vld [vmem:[#allocation13 + $0x88] sm:$0xf]
    %v870 = vld [vmem:[#allocation13 + $0x8c] sm:$0xff]
    %v871 = vld [vmem:[#allocation13 + $0x94] sm:$0xff]
    %v872 = vld [vmem:[#allocation13 + $0x9c] sm:$0xf]
    %v873 = vld [vmem:[#allocation13 + $0xa0] sm:$0xff]
    %v874 = vld [vmem:[#allocation13 + $0xa8] sm:$0xff]
    %v875 = vld [vmem:[#allocation13 + $0xb0] sm:$0xf]
    %v876 = vld [vmem:[#allocation13 + $0xb4] sm:$0xff]
    %v877 = vld [vmem:[#allocation13 + $0xbc] sm:$0xff]
    %v878 = vld [vmem:[#allocation13 + $0xc4] sm:$0xf]
    %v879 = vld [vmem:[#allocation13 + $0xc8] sm:$0xff]
    %v880 = vld [vmem:[#allocation13 + $0xd0] sm:$0xff]
    %v881 = vld [vmem:[#allocation13 + $0xd8] sm:$0xf]
    %v882 = vld [vmem:[#allocation13 + $0xdc] sm:$0xff]
    %v883 = vld [vmem:[#allocation13 + $0xe4] sm:$0xff]
    %v884 = vld [vmem:[#allocation13 + $0xec] sm:$0xf]
    %v885 = vld [vmem:[#allocation13 + $0xf0] sm:$0xff]
    %v886 = vld [vmem:[#allocation13 + $0xf8] sm:$0xff]
    %v887 = vld [vmem:[#allocation13 + $0x100] sm:$0xf]
    %v888 = vld [vmem:[#allocation13 + $0x104] sm:$0xff]
    %v889 = vld [vmem:[#allocation13 + $0x10c] sm:$0xff]
    %v890 = vld [vmem:[#allocation13 + $0x114] sm:$0xf]
    %v891 = vld [vmem:[#allocation13 + $0x118] sm:$0xff]
    %v892 = vld [vmem:[#allocation13 + $0x120] sm:$0xff]
    %v893 = vld [vmem:[#allocation13 + $0x128] sm:$0xf]
    %v894 = vld [vmem:[#allocation13 + $0x12c] sm:$0xff]
    %v895 = vld [vmem:[#allocation13 + $0x134] sm:$0xff]
    %v896 = vld [vmem:[#allocation13 + $0x13c] sm:$0xf]
    %v897 = vld [vmem:[#allocation13 + $0x140] sm:$0xff]
    %v898 = vld [vmem:[#allocation13 + $0x148] sm:$0xff]
    %v899 = vld [vmem:[#allocation13 + $0x150] sm:$0xf]
    %v900 = vld [vmem:[#allocation13 + $0x154] sm:$0xff]
    %v901 = vld [vmem:[#allocation13 + $0x15c] sm:$0xff]
    %v902 = vld [vmem:[#allocation13 + $0x164] sm:$0xf]
    %v903 = vld [vmem:[#allocation13 + $0x168] sm:$0xff]
    %v904 = vld [vmem:[#allocation13 + $0x170] sm:$0xff]
    %v905 = vld [vmem:[#allocation13 + $0x178] sm:$0xf]
    %v906 = vld [vmem:[#allocation13 + $0x17c] sm:$0xff]
    %v907 = vld [vmem:[#allocation13 + $0x184] sm:$0xff]
    %v908 = vld [vmem:[#allocation13 + $0x18c] sm:$0xf]
    %v909 = vld [vmem:[#allocation13 + $0x190] sm:$0xff]
    %v910 = vld [vmem:[#allocation13 + $0x198] sm:$0xff]
    %v911 = vld [vmem:[#allocation13 + $0x1a0] sm:$0xf]
    %v912 = vld [vmem:[#allocation13 + $0x1a4] sm:$0xff]
    %v913 = vld [vmem:[#allocation13 + $0x1ac] sm:$0xff]
    %v914 = vld [vmem:[#allocation13 + $0x1b4] sm:$0xf]
    %v915 = vld [vmem:[#allocation13 + $0x1b8] sm:$0xff]
    %v916 = vld [vmem:[#allocation13 + $0x1c0] sm:$0xff]
    %v917 = vld [vmem:[#allocation13 + $0x1c8] sm:$0xf]
    %v918 = vld [vmem:[#allocation13 + $0x1cc] sm:$0xff]
    %v919 = vld [vmem:[#allocation13 + $0x1d4] sm:$0xff]
    %v920 = vld [vmem:[#allocation13 + $0x1dc] sm:$0xf]
    %v921 = vld [vmem:[#allocation13 + $0x1e0] sm:$0xff]
    %v922 = vld [vmem:[#allocation13 + $0x1e8] sm:$0xff]
    %v923 = vld [vmem:[#allocation13 + $0x1f0] sm:$0xf]
    %v924 = vld [vmem:[#allocation13 + $0x1f4] sm:$0xff]
    %v925 = vld [vmem:[#allocation13 + $0x1fc] sm:$0xff]
    %v926 = vld [vmem:[#allocation13 + $0x204] sm:$0xf]
    %v927 = vld [vmem:[#allocation13 + $0x208] sm:$0xff]
    %v928 = vld [vmem:[#allocation13 + $0x210] sm:$0xff]
    %v929 = vld [vmem:[#allocation13 + $0x218] sm:$0xf]
    %v930 = vld [vmem:[#allocation13 + $0x21c] sm:$0xff]
    %v931 = vld [vmem:[#allocation13 + $0x224] sm:$0xff]
    %v932 = vld [vmem:[#allocation13 + $0x22c] sm:$0xf]
    %v933 = vld [vmem:[#allocation13 + $0x230] sm:$0xff]
    %v934 = vld [vmem:[#allocation13 + $0x238] sm:$0xff]
    %v935 = vld [vmem:[#allocation13 + $0x240] sm:$0xf]
    %v936 = vld [vmem:[#allocation13 + $0x244] sm:$0xff]
    %v937 = vld [vmem:[#allocation13 + $0x24c] sm:$0xff]
    %v938 = vld [vmem:[#allocation13 + $0x254] sm:$0xf]
    %v939 = vld [vmem:[#allocation13 + $0x258] sm:$0xff]
    %v940 = vld [vmem:[#allocation13 + $0x260] sm:$0xff]
    %v941 = vld [vmem:[#allocation13 + $0x268] sm:$0xf]
    %v942 = vld [vmem:[#allocation13 + $0x26c] sm:$0xff]
    %v943 = vld [vmem:[#allocation13 + $0x274] sm:$0xff]
    %v944 = vld [vmem:[#allocation13 + $0x27c] sm:$0xf]
    %v945 = vld [vmem:[#allocation13 + $0x280] sm:$0xff]
    %v946 = vld [vmem:[#allocation13 + $0x288] sm:$0xff]
    %v947 = vld [vmem:[#allocation13 + $0x290] sm:$0xf]
    %v948 = vld [vmem:[#allocation13 + $0x294] sm:$0xff]
    %v949 = vld [vmem:[#allocation13 + $0x29c] sm:$0xff]
    %v950 = vld [vmem:[#allocation13 + $0x2a4] sm:$0xf]
    %v951 = vld [vmem:[#allocation13 + $0x2a8] sm:$0xff]
    %v952 = vld [vmem:[#allocation13 + $0x2b0] sm:$0xff]
    %v953 = vld [vmem:[#allocation13 + $0x2b8] sm:$0xf]
    %v954 = vld [vmem:[#allocation13 + $0x2bc] sm:$0xff]
    %v955 = vld [vmem:[#allocation13 + $0x2c4] sm:$0xff]
    %v956 = vld [vmem:[#allocation13 + $0x2cc] sm:$0xf]
    %v957 = vld [vmem:[#allocation13 + $0x2d0] sm:$0xff]
    %v958 = vld [vmem:[#allocation13 + $0x2d8] sm:$0xff]
    %v959 = vld [vmem:[#allocation13 + $0x2e0] sm:$0xf]
    %v960 = vld [vmem:[#allocation13 + $0x2e4] sm:$0xff]
    %v961 = vld [vmem:[#allocation13 + $0x2ec] sm:$0xff]
    %v962 = vld [vmem:[#allocation13 + $0x2f4] sm:$0xf]
    %v963 = vld [vmem:[#allocation13 + $0x2f8] sm:$0xff]
    %v964 = vld [vmem:[#allocation13 + $0x300] sm:$0xff]
    %v965 = vld [vmem:[#allocation13 + $0x308] sm:$0xf]
    %v966 = vld [vmem:[#allocation13 + $0x30c] sm:$0xff]
    %v967 = vld [vmem:[#allocation13 + $0x314] sm:$0xff]
    %v968 = vld [vmem:[#allocation13 + $0x31c] sm:$0xf]
    %v969 = vld [vmem:[#allocation13 + $0x320] sm:$0xff]
    %v970 = vld [vmem:[#allocation13 + $0x328] sm:$0xff]
    %v971 = vld [vmem:[#allocation13 + $0x330] sm:$0xf]
    %v972 = vld [vmem:[#allocation13 + $0x334] sm:$0xff]
    %v973 = vld [vmem:[#allocation13 + $0x33c] sm:$0xff]
    %v974 = vld [vmem:[#allocation13 + $0x344] sm:$0xf]
    %v975 = vld [vmem:[#allocation13 + $0x348] sm:$0xff]
    %v976 = vld [vmem:[#allocation13 + $0x350] sm:$0xff]
    %v977 = vld [vmem:[#allocation13 + $0x358] sm:$0xf]
    %v978 = vld [vmem:[#allocation13 + $0x35c] sm:$0xff]
    %v979 = vld [vmem:[#allocation13 + $0x364] sm:$0xff]
    %v980 = vld [vmem:[#allocation13 + $0x36c] sm:$0xf]
    %v981 = vld [vmem:[#allocation13 + $0x370] sm:$0xff]
    %v982 = vld [vmem:[#allocation13 + $0x378] sm:$0xff]
    %v983 = vld [vmem:[#allocation13 + $0x380] sm:$0xf]
    %v984 = vld [vmem:[#allocation13 + $0x384] sm:$0xff]
    %v985 = vld [vmem:[#allocation13 + $0x38c] sm:$0xff]
    %v986 = vld [vmem:[#allocation13 + $0x394] sm:$0xf]
    %v987 = vld [vmem:[#allocation13 + $0x398] sm:$0xff]
    %v988 = vld [vmem:[#allocation13 + $0x3a0] sm:$0xff]
    %v989 = vld [vmem:[#allocation13 + $0x3a8] sm:$0xf]
    %v990 = vld [vmem:[#allocation13 + $0x3ac] sm:$0xff]
    %v991 = vld [vmem:[#allocation13 + $0x3b4] sm:$0xff]
    %v992 = vld [vmem:[#allocation13 + $0x3bc] sm:$0xf]
    %v993 = vld [vmem:[#allocation14] sm:$0x1f]
    %v995 = vlaneseq
    %v996 = vshrl.u32 %v995, 7
    %v997 = vsub.s32 0, %v996
    %v998 = vrot.slane %v993, %v997
    %v999 = vlaneseq
    %v1000 = vshrl.u32 %v999, 7
    %v1001 = vsub.s32 1, %v1000
    %v1002 = vrot.slane %v993, %v1001
    %v1003 = vlaneseq
    %v1004 = vshrl.u32 %v1003, 7
    %v1005 = vsub.s32 2, %v1004
    %v1006 = vrot.slane %v993, %v1005
    %v1007 = vlaneseq
    %v1008 = vshrl.u32 %v1007, 7
    %v1009 = vsub.s32 3, %v1008
    %v1010 = vrot.slane %v993, %v1009
    %v1011 = vlaneseq
    %v1012 = vshrl.u32 %v1011, 7
    %v1013 = vsub.s32 4, %v1012
    %v1014 = vrot.slane %v993, %v1013
    %v1164 = vunpack.c.l.b16 %v849
    %v1165 = vunpack.c.h.b16 %v849
    %v1166 = vunpack.c.l.b16 %v850
    %v1167 = vunpack.c.h.b16 %v850
    %v1168 = vunpack.c.l.b16 %v851
    %v1169 = vunpack.c.l.b16 %v852
    %v1170 = vunpack.c.h.b16 %v852
    %v1171 = vunpack.c.l.b16 %v853
    %v1172 = vunpack.c.h.b16 %v853
    %v1173 = vunpack.c.l.b16 %v854
    %v1174 = vunpack.c.l.b16 %v855
    %v1175 = vunpack.c.h.b16 %v855
    %v1176 = vunpack.c.l.b16 %v856
    %v1177 = vunpack.c.h.b16 %v856
    %v1178 = vunpack.c.l.b16 %v857
    %v1179 = vunpack.c.l.b16 %v858
    %v1180 = vunpack.c.h.b16 %v858
    %v1181 = vunpack.c.l.b16 %v859
    %v1182 = vunpack.c.h.b16 %v859
    %v1183 = vunpack.c.l.b16 %v860
    %v1184 = vunpack.c.l.b16 %v861
    %v1185 = vunpack.c.h.b16 %v861
    %v1186 = vunpack.c.l.b16 %v862
    %v1187 = vunpack.c.h.b16 %v862
    %v1188 = vunpack.c.l.b16 %v863
    %v1189 = vunpack.c.l.b16 %v864
    %v1190 = vunpack.c.h.b16 %v864
    %v1191 = vunpack.c.l.b16 %v865
    %v1192 = vunpack.c.h.b16 %v865
    %v1193 = vunpack.c.l.b16 %v866
    %v1194 = vunpack.c.l.b16 %v867
    %v1195 = vunpack.c.h.b16 %v867
    %v1196 = vunpack.c.l.b16 %v868
    %v1197 = vunpack.c.h.b16 %v868
    %v1198 = vunpack.c.l.b16 %v869
    %v1199 = vunpack.c.l.b16 %v870
    %v1200 = vunpack.c.h.b16 %v870
    %v1201 = vunpack.c.l.b16 %v871
    %v1202 = vunpack.c.h.b16 %v871
    %v1203 = vunpack.c.l.b16 %v872
    %v1204 = vunpack.c.l.b16 %v873
    %v1205 = vunpack.c.h.b16 %v873
    %v1206 = vunpack.c.l.b16 %v874
    %v1207 = vunpack.c.h.b16 %v874
    %v1208 = vunpack.c.l.b16 %v875
    %v1209 = vunpack.c.l.b16 %v876
    %v1210 = vunpack.c.h.b16 %v876
    %v1211 = vunpack.c.l.b16 %v877
    %v1212 = vunpack.c.h.b16 %v877
    %v1213 = vunpack.c.l.b16 %v878
    %v1214 = vunpack.c.l.b16 %v879
    %v1215 = vunpack.c.h.b16 %v879
    %v1216 = vunpack.c.l.b16 %v880
    %v1217 = vunpack.c.h.b16 %v880
    %v1218 = vunpack.c.l.b16 %v881
    %v1219 = vunpack.c.l.b16 %v882
    %v1220 = vunpack.c.h.b16 %v882
    %v1221 = vunpack.c.l.b16 %v883
    %v1222 = vunpack.c.h.b16 %v883
    %v1223 = vunpack.c.l.b16 %v884
    %v1224 = vunpack.c.l.b16 %v885
    %v1225 = vunpack.c.h.b16 %v885
    %v1226 = vunpack.c.l.b16 %v886
    %v1227 = vunpack.c.h.b16 %v886
    %v1228 = vunpack.c.l.b16 %v887
    %v1229 = vunpack.c.l.b16 %v888
    %v1230 = vunpack.c.h.b16 %v888
    %v1231 = vunpack.c.l.b16 %v889
    %v1232 = vunpack.c.h.b16 %v889
    %v1233 = vunpack.c.l.b16 %v890
    %v1234 = vunpack.c.l.b16 %v891
    %v1235 = vunpack.c.h.b16 %v891
    %v1236 = vunpack.c.l.b16 %v892
    %v1237 = vunpack.c.h.b16 %v892
    %v1238 = vunpack.c.l.b16 %v893
    %v1239 = vunpack.c.l.b16 %v894
    %v1240 = vunpack.c.h.b16 %v894
    %v1241 = vunpack.c.l.b16 %v895
    %v1242 = vunpack.c.h.b16 %v895
    %v1243 = vunpack.c.l.b16 %v896
    %v1244 = vunpack.c.l.b16 %v897
    %v1245 = vunpack.c.h.b16 %v897
    %v1246 = vunpack.c.l.b16 %v898
    %v1247 = vunpack.c.h.b16 %v898
    %v1248 = vunpack.c.l.b16 %v899
    %v1249 = vunpack.c.l.b16 %v900
    %v1250 = vunpack.c.h.b16 %v900
    %v1251 = vunpack.c.l.b16 %v901
    %v1252 = vunpack.c.h.b16 %v901
    %v1253 = vunpack.c.l.b16 %v902
    %v1254 = vunpack.c.l.b16 %v903
    %v1255 = vunpack.c.h.b16 %v903
    %v1256 = vunpack.c.l.b16 %v904
    %v1257 = vunpack.c.h.b16 %v904
    %v1258 = vunpack.c.l.b16 %v905
    %v1259 = vunpack.c.l.b16 %v906
    %v1260 = vunpack.c.h.b16 %v906
    %v1261 = vunpack.c.l.b16 %v907
    %v1262 = vunpack.c.h.b16 %v907
    %v1263 = vunpack.c.l.b16 %v908
    %v1264 = vunpack.c.l.b16 %v909
    %v1265 = vunpack.c.h.b16 %v909
    %v1266 = vunpack.c.l.b16 %v910
    %v1267 = vunpack.c.h.b16 %v910
    %v1268 = vunpack.c.l.b16 %v911
    %v1269 = vunpack.c.l.b16 %v912
    %v1270 = vunpack.c.h.b16 %v912
    %v1271 = vunpack.c.l.b16 %v913
    %v1272 = vunpack.c.h.b16 %v913
    %v1273 = vunpack.c.l.b16 %v914
    %v1274 = vunpack.c.l.b16 %v915
    %v1275 = vunpack.c.h.b16 %v915
    %v1276 = vunpack.c.l.b16 %v916
    %v1277 = vunpack.c.h.b16 %v916
    %v1278 = vunpack.c.l.b16 %v917
    %v1279 = vunpack.c.l.b16 %v918
    %v1280 = vunpack.c.h.b16 %v918
    %v1281 = vunpack.c.l.b16 %v919
    %v1282 = vunpack.c.h.b16 %v919
    %v1283 = vunpack.c.l.b16 %v920
    %v1284 = vunpack.c.l.b16 %v921
    %v1285 = vunpack.c.h.b16 %v921
    %v1286 = vunpack.c.l.b16 %v922
    %v1287 = vunpack.c.h.b16 %v922
    %v1288 = vunpack.c.l.b16 %v923
    %v1289 = vunpack.c.l.b16 %v924
    %v1290 = vunpack.c.h.b16 %v924
    %v1291 = vunpack.c.l.b16 %v925
    %v1292 = vunpack.c.h.b16 %v925
    %v1293 = vunpack.c.l.b16 %v926
    %v1294 = vunpack.c.l.b16 %v927
    %v1295 = vunpack.c.h.b16 %v927
    %v1296 = vunpack.c.l.b16 %v928
    %v1297 = vunpack.c.h.b16 %v928
    %v1298 = vunpack.c.l.b16 %v929
    %v1299 = vunpack.c.l.b16 %v930
    %v1300 = vunpack.c.h.b16 %v930
    %v1301 = vunpack.c.l.b16 %v931
    %v1302 = vunpack.c.h.b16 %v931
    %v1303 = vunpack.c.l.b16 %v932
    %v1304 = vunpack.c.l.b16 %v933
    %v1305 = vunpack.c.h.b16 %v933
    %v1306 = vunpack.c.l.b16 %v934
    %v1307 = vunpack.c.h.b16 %v934
    %v1308 = vunpack.c.l.b16 %v935
    %v1309 = vunpack.c.l.b16 %v936
    %v1310 = vunpack.c.h.b16 %v936
    %v1311 = vunpack.c.l.b16 %v937
    %v1312 = vunpack.c.h.b16 %v937
    %v1313 = vunpack.c.l.b16 %v938
    %v1314 = vunpack.c.l.b16 %v939
    %v1315 = vunpack.c.h.b16 %v939
    %v1316 = vunpack.c.l.b16 %v940
    %v1317 = vunpack.c.h.b16 %v940
    %v1318 = vunpack.c.l.b16 %v941
    %v1319 = vunpack.c.l.b16 %v942
    %v1320 = vunpack.c.h.b16 %v942
    %v1321 = vunpack.c.l.b16 %v943
    %v1322 = vunpack.c.h.b16 %v943
    %v1323 = vunpack.c.l.b16 %v944
    %v1324 = vunpack.c.l.b16 %v945
    %v1325 = vunpack.c.h.b16 %v945
    %v1326 = vunpack.c.l.b16 %v946
    %v1327 = vunpack.c.h.b16 %v946
    %v1328 = vunpack.c.l.b16 %v947
    %v1329 = vunpack.c.l.b16 %v948
    %v1330 = vunpack.c.h.b16 %v948
    %v1331 = vunpack.c.l.b16 %v949
    %v1332 = vunpack.c.h.b16 %v949
    %v1333 = vunpack.c.l.b16 %v950
    %v1334 = vunpack.c.l.b16 %v951
    %v1335 = vunpack.c.h.b16 %v951
    %v1336 = vunpack.c.l.b16 %v952
    %v1337 = vunpack.c.h.b16 %v952
    %v1338 = vunpack.c.l.b16 %v953
    %v1339 = vunpack.c.l.b16 %v954
    %v1340 = vunpack.c.h.b16 %v954
    %v1341 = vunpack.c.l.b16 %v955
    %v1342 = vunpack.c.h.b16 %v955
    %v1343 = vunpack.c.l.b16 %v956
    %v1344 = vunpack.c.l.b16 %v957
    %v1345 = vunpack.c.h.b16 %v957
    %v1346 = vunpack.c.l.b16 %v958
    %v1347 = vunpack.c.h.b16 %v958
    %v1348 = vunpack.c.l.b16 %v959
    %v1349 = vunpack.c.l.b16 %v960
    %v1350 = vunpack.c.h.b16 %v960
    %v1351 = vunpack.c.l.b16 %v961
    %v1352 = vunpack.c.h.b16 %v961
    %v1353 = vunpack.c.l.b16 %v962
    %v1354 = vunpack.c.l.b16 %v963
    %v1355 = vunpack.c.h.b16 %v963
    %v1356 = vunpack.c.l.b16 %v964
    %v1357 = vunpack.c.h.b16 %v964
    %v1358 = vunpack.c.l.b16 %v965
    %v1359 = vunpack.c.l.b16 %v966
    %v1360 = vunpack.c.h.b16 %v966
    %v1361 = vunpack.c.l.b16 %v967
    %v1362 = vunpack.c.h.b16 %v967
    %v1363 = vunpack.c.l.b16 %v968
    %v1364 = vunpack.c.l.b16 %v969
    %v1365 = vunpack.c.h.b16 %v969
    %v1366 = vunpack.c.l.b16 %v970
    %v1367 = vunpack.c.h.b16 %v970
    %v1368 = vunpack.c.l.b16 %v971
    %v1369 = vunpack.c.l.b16 %v972
    %v1370 = vunpack.c.h.b16 %v972
    %v1371 = vunpack.c.l.b16 %v973
    %v1372 = vunpack.c.h.b16 %v973
    %v1373 = vunpack.c.l.b16 %v974
    %v1374 = vunpack.c.l.b16 %v975
    %v1375 = vunpack.c.h.b16 %v975
    %v1376 = vunpack.c.l.b16 %v976
    %v1377 = vunpack.c.h.b16 %v976
    %v1378 = vunpack.c.l.b16 %v977
    %v1379 = vunpack.c.l.b16 %v978
    %v1380 = vunpack.c.h.b16 %v978
    %v1381 = vunpack.c.l.b16 %v979
    %v1382 = vunpack.c.h.b16 %v979
    %v1383 = vunpack.c.l.b16 %v980
    %v1384 = vunpack.c.l.b16 %v981
    %v1385 = vunpack.c.h.b16 %v981
    %v1386 = vunpack.c.l.b16 %v982
    %v1387 = vunpack.c.h.b16 %v982
    %v1388 = vunpack.c.l.b16 %v983
    %v1389 = vunpack.c.l.b16 %v984
    %v1390 = vunpack.c.h.b16 %v984
    %v1391 = vunpack.c.l.b16 %v985
    %v1392 = vunpack.c.h.b16 %v985
    %v1393 = vunpack.c.l.b16 %v986
    %v1394 = vunpack.c.l.b16 %v987
    %v1395 = vunpack.c.h.b16 %v987
    %v1396 = vunpack.c.l.b16 %v988
    %v1397 = vunpack.c.h.b16 %v988
    %v1398 = vunpack.c.l.b16 %v989
    %v1399 = vunpack.c.l.b16 %v990
    %v1400 = vunpack.c.h.b16 %v990
    %v1401 = vunpack.c.l.b16 %v991
    %v1402 = vunpack.c.h.b16 %v991
    %v1403 = vunpack.c.l.b16 %v992
    %v1404 = vpack.c.b16 %v1169, %v1164
    %v1405 = vpack.c.b16 %v1170, %v1165
    %v1406 = vpack.c.b16 %v1171, %v1166
    %v1407 = vpack.c.b16 %v1172, %v1167
    %v1408 = vpack.c.b16 %v1173, %v1168
    %v1409 = vpack.c.b16 %v1179, %v1174
    %v1410 = vpack.c.b16 %v1180, %v1175
    %v1411 = vpack.c.b16 %v1181, %v1176
    %v1412 = vpack.c.b16 %v1182, %v1177
    %v1413 = vpack.c.b16 %v1183, %v1178
    %v1414 = vpack.c.b16 %v1189, %v1184
    %v1415 = vpack.c.b16 %v1190, %v1185
    %v1416 = vpack.c.b16 %v1191, %v1186
    %v1417 = vpack.c.b16 %v1192, %v1187
    %v1418 = vpack.c.b16 %v1193, %v1188
    %v1419 = vpack.c.b16 %v1199, %v1194
    %v1420 = vpack.c.b16 %v1200, %v1195
    %v1421 = vpack.c.b16 %v1201, %v1196
    %v1422 = vpack.c.b16 %v1202, %v1197
    %v1423 = vpack.c.b16 %v1203, %v1198
    %v1424 = vpack.c.b16 %v1209, %v1204
    %v1425 = vpack.c.b16 %v1210, %v1205
    %v1426 = vpack.c.b16 %v1211, %v1206
    %v1427 = vpack.c.b16 %v1212, %v1207
    %v1428 = vpack.c.b16 %v1213, %v1208
    %v1429 = vpack.c.b16 %v1219, %v1214
    %v1430 = vpack.c.b16 %v1220, %v1215
    %v1431 = vpack.c.b16 %v1221, %v1216
    %v1432 = vpack.c.b16 %v1222, %v1217
    %v1433 = vpack.c.b16 %v1223, %v1218
    %v1434 = vpack.c.b16 %v1229, %v1224
    %v1435 = vpack.c.b16 %v1230, %v1225
    %v1436 = vpack.c.b16 %v1231, %v1226
    %v1437 = vpack.c.b16 %v1232, %v1227
    %v1438 = vpack.c.b16 %v1233, %v1228
    %v1439 = vpack.c.b16 %v1239, %v1234
    %v1440 = vpack.c.b16 %v1240, %v1235
    %v1441 = vpack.c.b16 %v1241, %v1236
    %v1442 = vpack.c.b16 %v1242, %v1237
    %v1443 = vpack.c.b16 %v1243, %v1238
    %v1444 = vpack.c.b16 %v1249, %v1244
    %v1445 = vpack.c.b16 %v1250, %v1245
    %v1446 = vpack.c.b16 %v1251, %v1246
    %v1447 = vpack.c.b16 %v1252, %v1247
    %v1448 = vpack.c.b16 %v1253, %v1248
    %v1449 = vpack.c.b16 %v1259, %v1254
    %v1450 = vpack.c.b16 %v1260, %v1255
    %v1451 = vpack.c.b16 %v1261, %v1256
    %v1452 = vpack.c.b16 %v1262, %v1257
    %v1453 = vpack.c.b16 %v1263, %v1258
    %v1454 = vpack.c.b16 %v1269, %v1264
    %v1455 = vpack.c.b16 %v1270, %v1265
    %v1456 = vpack.c.b16 %v1271, %v1266
    %v1457 = vpack.c.b16 %v1272, %v1267
    %v1458 = vpack.c.b16 %v1273, %v1268
    %v1459 = vpack.c.b16 %v1279, %v1274
    %v1460 = vpack.c.b16 %v1280, %v1275
    %v1461 = vpack.c.b16 %v1281, %v1276
    %v1462 = vpack.c.b16 %v1282, %v1277
    %v1463 = vpack.c.b16 %v1283, %v1278
    %v1464 = vpack.c.b16 %v1289, %v1284
    %v1465 = vpack.c.b16 %v1290, %v1285
    %v1466 = vpack.c.b16 %v1291, %v1286
    %v1467 = vpack.c.b16 %v1292, %v1287
    %v1468 = vpack.c.b16 %v1293, %v1288
    %v1469 = vpack.c.b16 %v1299, %v1294
    %v1470 = vpack.c.b16 %v1300, %v1295
    %v1471 = vpack.c.b16 %v1301, %v1296
    %v1472 = vpack.c.b16 %v1302, %v1297
    %v1473 = vpack.c.b16 %v1303, %v1298
    %v1474 = vpack.c.b16 %v1309, %v1304
    %v1475 = vpack.c.b16 %v1310, %v1305
    %v1476 = vpack.c.b16 %v1311, %v1306
    %v1477 = vpack.c.b16 %v1312, %v1307
    %v1478 = vpack.c.b16 %v1313, %v1308
    %v1479 = vpack.c.b16 %v1319, %v1314
    %v1480 = vpack.c.b16 %v1320, %v1315
    %v1481 = vpack.c.b16 %v1321, %v1316
    %v1482 = vpack.c.b16 %v1322, %v1317
    %v1483 = vpack.c.b16 %v1323, %v1318
    %v1484 = vpack.c.b16 %v1329, %v1324
    %v1485 = vpack.c.b16 %v1330, %v1325
    %v1486 = vpack.c.b16 %v1331, %v1326
    %v1487 = vpack.c.b16 %v1332, %v1327
    %v1488 = vpack.c.b16 %v1333, %v1328
    %v1489 = vpack.c.b16 %v1339, %v1334
    %v1490 = vpack.c.b16 %v1340, %v1335
    %v1491 = vpack.c.b16 %v1341, %v1336
    %v1492 = vpack.c.b16 %v1342, %v1337
    %v1493 = vpack.c.b16 %v1343, %v1338
    %v1494 = vpack.c.b16 %v1349, %v1344
    %v1495 = vpack.c.b16 %v1350, %v1345
    %v1496 = vpack.c.b16 %v1351, %v1346
    %v1497 = vpack.c.b16 %v1352, %v1347
    %v1498 = vpack.c.b16 %v1353, %v1348
    %v1499 = vpack.c.b16 %v1359, %v1354
    %v1500 = vpack.c.b16 %v1360, %v1355
    %v1501 = vpack.c.b16 %v1361, %v1356
    %v1502 = vpack.c.b16 %v1362, %v1357
    %v1503 = vpack.c.b16 %v1363, %v1358
    %v1504 = vpack.c.b16 %v1369, %v1364
    %v1505 = vpack.c.b16 %v1370, %v1365
    %v1506 = vpack.c.b16 %v1371, %v1366
    %v1507 = vpack.c.b16 %v1372, %v1367
    %v1508 = vpack.c.b16 %v1373, %v1368
    %v1509 = vpack.c.b16 %v1379, %v1374
    %v1510 = vpack.c.b16 %v1380, %v1375
    %v1511 = vpack.c.b16 %v1381, %v1376
    %v1512 = vpack.c.b16 %v1382, %v1377
    %v1513 = vpack.c.b16 %v1383, %v1378
    %v1514 = vpack.c.b16 %v1389, %v1384
    %v1515 = vpack.c.b16 %v1390, %v1385
    %v1516 = vpack.c.b16 %v1391, %v1386
    %v1517 = vpack.c.b16 %v1392, %v1387
    %v1518 = vpack.c.b16 %v1393, %v1388
    %v1519 = vpack.c.b16 %v1399, %v1394
    %v1520 = vpack.c.b16 %v1400, %v1395
    %v1521 = vpack.c.b16 %v1401, %v1396
    %v1522 = vpack.c.b16 %v1402, %v1397
    %v1523 = vpack.c.b16 %v1403, %v1398
    %1644 = vmatprep.subr.bf16.mxu0 %v1405
    %1645 = vmatpush1.bf16.msra.mxu0 %v1404
    %1646 = vmatprep.subr.bf16.mxu0 %v1410
    %1647 = vmatpush1.bf16.msra.mxu0 %v1409
    %1648 = vmatprep.subr.bf16.mxu0 %v1415
    %1649 = vmatpush1.bf16.msra.mxu0 %v1414
    %1650 = vmatprep.subr.bf16.mxu0 %v1420
    %1651 = vmatpush1.bf16.msra.mxu0 %v1419
    %1652 = vmatprep.subr.bf16.mxu0 %v1425
    %1653 = vmatpush1.bf16.msra.mxu0 %v1424
    %1654 = vmatprep.subr.bf16.mxu0 %v1430
    %1655 = vmatpush1.bf16.msra.mxu0 %v1429
    %1656 = vmatprep.subr.bf16.mxu0 %v1435
    %1657 = vmatpush1.bf16.msra.mxu0 %v1434
    %1658 = vmatprep.subr.bf16.mxu0 %v1440
    %1659 = vmatpush1.bf16.msra.mxu0 %v1439
    %1660 = vmatprep.subr.bf16.mxu0 %v1445
    %1661 = vmatpush1.bf16.msra.mxu0 %v1444
    %1662 = vmatprep.subr.bf16.mxu0 %v1450
    %1663 = vmatpush1.bf16.msra.mxu0 %v1449
    %1664 = vmatprep.subr.bf16.mxu0 %v1455
    %1665 = vmatpush1.bf16.msra.mxu0 %v1454
    %1666 = vmatprep.subr.bf16.mxu0 %v1460
    %1667 = vmatpush1.bf16.msra.mxu0 %v1459
    %1668 = vmatprep.subr.bf16.mxu0 %v1465
    %1669 = vmatpush1.bf16.msra.mxu0 %v1464
    %1670 = vmatprep.subr.bf16.mxu0 %v1470
    %1671 = vmatpush1.bf16.msra.mxu0 %v1469
    %1672 = vmatprep.subr.bf16.mxu0 %v1475
    %1673 = vmatpush1.bf16.msra.mxu0 %v1474
    %1674 = vmatprep.subr.bf16.mxu0 %v1480
    %1675 = vmatpush1.bf16.msra.mxu0 %v1479
    %1676 = vmatprep.mubr.bf16.mxu0 %v847
    %1677 = vmatmul.mubr.bf16.gmra.mrb[0].mxu0 %v846
    %v1678 = vpop.f32.mrb[0].mxu0
    %v1679 = vadd.f32 %v998, %v1678
    %v1680 = vpop.f32.mrb[0].mxu0
    %v1681 = vadd.f32 %v1002, %v1680
    %v1682 = vpop.f32.mrb[0].mxu0
    %v1683 = vadd.f32 %v998, %v1682
    %v1684 = vpop.f32.mrb[0].mxu0
    %v1685 = vadd.f32 %v1002, %v1684
    %1686 = vdwg.mxu0
    %1687 = vmatprep.subr.bf16.mxu0 %v1485
    %1688 = vmatpush1.bf16.msra.mxu0 %v1484
    %1689 = vmatprep.subr.bf16.mxu0 %v1490
    %1690 = vmatpush1.bf16.msra.mxu0 %v1489
    %1691 = vmatprep.subr.bf16.mxu0 %v1495
    %1692 = vmatpush1.bf16.msra.mxu0 %v1494
    %1693 = vmatprep.subr.bf16.mxu0 %v1500
    %1694 = vmatpush1.bf16.msra.mxu0 %v1499
    %1695 = vmatprep.subr.bf16.mxu0 %v1505
    %1696 = vmatpush1.bf16.msra.mxu0 %v1504
    %1697 = vmatprep.subr.bf16.mxu0 %v1510
    %1698 = vmatpush1.bf16.msra.mxu0 %v1509
    %1699 = vmatprep.subr.bf16.mxu0 %v1515
    %1700 = vmatpush1.bf16.msra.mxu0 %v1514
    %1701 = vmatprep.subr.bf16.mxu0 %v1520
    %1702 = vmatpush1.bf16.msra.mxu0 %v1519
    %1703 = vmatprep.subr.bf16.mxu0 0
    %1704 = vmatpush1.bf16.msra.mxu0 0
    %1705 = vmatprep.subr.bf16.mxu0 0
    %1706 = vmatpush1.bf16.msra.mxu0 0
    %1707 = vmatprep.subr.bf16.mxu0 0
    %1708 = vmatpush1.bf16.msra.mxu0 0
    %1709 = vmatprep.subr.bf16.mxu0 0
    %1710 = vmatpush1.bf16.msra.mxu0 0
    %1711 = vmatprep.subr.bf16.mxu0 0
    %1712 = vmatpush1.bf16.msra.mxu0 0
    %1713 = vmatprep.subr.bf16.mxu0 0
    %1714 = vmatpush1.bf16.msra.mxu0 0
    %1715 = vmatprep.subr.bf16.mxu0 0
    %1716 = vmatpush1.bf16.msra.mxu0 0
    %1717 = vmatprep.subr.bf16.mxu0 0
    %1718 = vmatpush1.bf16.msra.mxu0 0
    %1719 = vmatprep.mubr.bf16.mxu0 0
    %1720 = vmatmul.mubr.bf16.gmra.mrb[0].mxu0 %v848
    %v1721 = vpop.f32.mrb[0].mxu0
    %v1722 = vadd.f32 %v1679, %v1721
    %v1723 = vpop.f32.mrb[0].mxu0
    %v1724 = vadd.f32 %v1681, %v1723
    %v1725 = vpop.f32.mrb[0].mxu0
    %v1726 = vadd.f32 %v1683, %v1725
    %v1727 = vpop.f32.mrb[0].mxu0
    %v1728 = vadd.f32 %v1685, %v1727
    %1729 = vdwg.mxu0
    %1730 = vmatprep.subr.bf16.mxu0 %v1407
    %1731 = vmatpush1.bf16.msra.mxu0 %v1406
    %1732 = vmatprep.subr.bf16.mxu0 %v1412
    %1733 = vmatpush1.bf16.msra.mxu0 %v1411
    %1734 = vmatprep.subr.bf16.mxu0 %v1417
    %1735 = vmatpush1.bf16.msra.mxu0 %v1416
    %1736 = vmatprep.subr.bf16.mxu0 %v1422
    %1737 = vmatpush1.bf16.msra.mxu0 %v1421
    %1738 = vmatprep.subr.bf16.mxu0 %v1427
    %1739 = vmatpush1.bf16.msra.mxu0 %v1426
    %1740 = vmatprep.subr.bf16.mxu0 %v1432
    %1741 = vmatpush1.bf16.msra.mxu0 %v1431
    %1742 = vmatprep.subr.bf16.mxu0 %v1437
    %1743 = vmatpush1.bf16.msra.mxu0 %v1436
    %1744 = vmatprep.subr.bf16.mxu0 %v1442
    %1745 = vmatpush1.bf16.msra.mxu0 %v1441
    %1746 = vmatprep.subr.bf16.mxu0 %v1447
    %1747 = vmatpush1.bf16.msra.mxu0 %v1446
    %1748 = vmatprep.subr.bf16.mxu0 %v1452
    %1749 = vmatpush1.bf16.msra.mxu0 %v1451
    %1750 = vmatprep.subr.bf16.mxu0 %v1457
    %1751 = vmatpush1.bf16.msra.mxu0 %v1456
    %1752 = vmatprep.subr.bf16.mxu0 %v1462
    %1753 = vmatpush1.bf16.msra.mxu0 %v1461
    %1754 = vmatprep.subr.bf16.mxu0 %v1467
    %1755 = vmatpush1.bf16.msra.mxu0 %v1466
    %1756 = vmatprep.subr.bf16.mxu0 %v1472
    %1757 = vmatpush1.bf16.msra.mxu0 %v1471
    %1758 = vmatprep.subr.bf16.mxu0 %v1477
    %1759 = vmatpush1.bf16.msra.mxu0 %v1476
    %1760 = vmatprep.subr.bf16.mxu0 %v1482
    %1761 = vmatpush1.bf16.msra.mxu0 %v1481
    %1762 = vmatprep.mubr.bf16.mxu0 %v847
    %1763 = vmatmul.mubr.bf16.gmra.mrb[0].mxu0 %v846
    %v1764 = vpop.f32.mrb[0].mxu0
    %v1765 = vadd.f32 %v1006, %v1764
    %v1766 = vpop.f32.mrb[0].mxu0
    %v1767 = vadd.f32 %v1010, %v1766
    %v1768 = vpop.f32.mrb[0].mxu0
    %v1769 = vadd.f32 %v1006, %v1768
    %v1770 = vpop.f32.mrb[0].mxu0
    %v1771 = vadd.f32 %v1010, %v1770
    %1772 = vdwg.mxu0
    %1773 = vmatprep.subr.bf16.mxu0 %v1487
    %1774 = vmatpush1.bf16.msra.mxu0 %v1486
    %1775 = vmatprep.subr.bf16.mxu0 %v1492
    %1776 = vmatpush1.bf16.msra.mxu0 %v1491
    %1777 = vmatprep.subr.bf16.mxu0 %v1497
    %1778 = vmatpush1.bf16.msra.mxu0 %v1496
    %1779 = vmatprep.subr.bf16.mxu0 %v1502
    %1780 = vmatpush1.bf16.msra.mxu0 %v1501
    %1781 = vmatprep.subr.bf16.mxu0 %v1507
    %1782 = vmatpush1.bf16.msra.mxu0 %v1506
    %1783 = vmatprep.subr.bf16.mxu0 %v1512
    %1784 = vmatpush1.bf16.msra.mxu0 %v1511
    %1785 = vmatprep.subr.bf16.mxu0 %v1517
    %1786 = vmatpush1.bf16.msra.mxu0 %v1516
    %1787 = vmatprep.subr.bf16.mxu0 %v1522
    %1788 = vmatpush1.bf16.msra.mxu0 %v1521
    %1789 = vmatprep.subr.bf16.mxu0 0
    %1790 = vmatpush1.bf16.msra.mxu0 0
    %1791 = vmatprep.subr.bf16.mxu0 0
    %1792 = vmatpush1.bf16.msra.mxu0 0
    %1793 = vmatprep.subr.bf16.mxu0 0
    %1794 = vmatpush1.bf16.msra.mxu0 0
    %1795 = vmatprep.subr.bf16.mxu0 0
    %1796 = vmatpush1.bf16.msra.mxu0 0
    %1797 = vmatprep.subr.bf16.mxu0 0
    %1798 = vmatpush1.bf16.msra.mxu0 0
    %1799 = vmatprep.subr.bf16.mxu0 0
    %1800 = vmatpush1.bf16.msra.mxu0 0
    %1801 = vmatprep.subr.bf16.mxu0 0
    %1802 = vmatpush1.bf16.msra.mxu0 0
    %1803 = vmatprep.subr.bf16.mxu0 0
    %1804 = vmatpush1.bf16.msra.mxu0 0
    %1805 = vmatprep.mubr.bf16.mxu0 0
    %1806 = vmatmul.mubr.bf16.gmra.mrb[0].mxu0 %v848
    %v1807 = vpop.f32.mrb[0].mxu0
    %v1808 = vadd.f32 %v1765, %v1807
    %v1809 = vpop.f32.mrb[0].mxu0
    %v1810 = vadd.f32 %v1767, %v1809
    %v1811 = vpop.f32.mrb[0].mxu0
    %v1812 = vadd.f32 %v1769, %v1811
    %v1813 = vpop.f32.mrb[0].mxu0
    %v1814 = vadd.f32 %v1771, %v1813
    %1815 = vdwg.mxu0
    %1816 = vmatprep.subr.bf16.mxu0 0
    %1817 = vmatpush1.bf16.msra.mxu0 %v1408
    %1818 = vmatprep.subr.bf16.mxu0 0
    %1819 = vmatpush1.bf16.msra.mxu0 %v1413
    %1820 = vmatprep.subr.bf16.mxu0 0
    %1821 = vmatpush1.bf16.msra.mxu0 %v1418
    %1822 = vmatprep.subr.bf16.mxu0 0
    %1823 = vmatpush1.bf16.msra.mxu0 %v1423
    %1824 = vmatprep.subr.bf16.mxu0 0
    %1825 = vmatpush1.bf16.msra.mxu0 %v1428
    %1826 = vmatprep.subr.bf16.mxu0 0
    %1827 = vmatpush1.bf16.msra.mxu0 %v1433
    %1828 = vmatprep.subr.bf16.mxu0 0
    %1829 = vmatpush1.bf16.msra.mxu0 %v1438
    %1830 = vmatprep.subr.bf16.mxu0 0
    %1831 = vmatpush1.bf16.msra.mxu0 %v1443
    %1832 = vmatprep.subr.bf16.mxu0 0
    %1833 = vmatpush1.bf16.msra.mxu0 %v1448
    %1834 = vmatprep.subr.bf16.mxu0 0
    %1835 = vmatpush1.bf16.msra.mxu0 %v1453
    %1836 = vmatprep.subr.bf16.mxu0 0
    %1837 = vmatpush1.bf16.msra.mxu0 %v1458
    %1838 = vmatprep.subr.bf16.mxu0 0
    %1839 = vmatpush1.bf16.msra.mxu0 %v1463
    %1840 = vmatprep.subr.bf16.mxu0 0
    %1841 = vmatpush1.bf16.msra.mxu0 %v1468
    %1842 = vmatprep.subr.bf16.mxu0 0
    %1843 = vmatpush1.bf16.msra.mxu0 %v1473
    %1844 = vmatprep.subr.bf16.mxu0 0
    %1845 = vmatpush1.bf16.msra.mxu0 %v1478
    %1846 = vmatprep.subr.bf16.mxu0 0
    %1847 = vmatpush1.bf16.msra.mxu0 %v1483
    %1848 = vmatprep.mubr.bf16.mxu0 %v847
    %1849 = vmatmul.mubr.bf16.gmra.mrb[0].mxu0 %v846
    %v1850 = vpop.f32.mrb[0].mxu0
    %v1851 = vadd.f32 %v1014, %v1850
    %v1852 = vpop.f32.mrb[0].mxu0
    %v1853 = vpop.f32.mrb[0].mxu0
    %v1854 = vadd.f32 %v1014, %v1853
    %v1855 = vpop.f32.mrb[0].mxu0
    %1856 = vdwg.mxu0
    %1857 = vmatprep.subr.bf16.mxu0 0
    %1858 = vmatpush1.bf16.msra.mxu0 %v1488
    %1859 = vmatprep.subr.bf16.mxu0 0
    %1860 = vmatpush1.bf16.msra.mxu0 %v1493
    %1861 = vmatprep.subr.bf16.mxu0 0
    %1862 = vmatpush1.bf16.msra.mxu0 %v1498
    %1863 = vmatprep.subr.bf16.mxu0 0
    %1864 = vmatpush1.bf16.msra.mxu0 %v1503
    %1865 = vmatprep.subr.bf16.mxu0 0
    %1866 = vmatpush1.bf16.msra.mxu0 %v1508
    %1867 = vmatprep.subr.bf16.mxu0 0
    %1868 = vmatpush1.bf16.msra.mxu0 %v1513
    %1869 = vmatprep.subr.bf16.mxu0 0
    %1870 = vmatpush1.bf16.msra.mxu0 %v1518
    %1871 = vmatprep.subr.bf16.mxu0 0
    %1872 = vmatpush1.bf16.msra.mxu0 %v1523
    %1873 = vmatprep.subr.bf16.mxu0 0
    %1874 = vmatpush1.bf16.msra.mxu0 0
    %1875 = vmatprep.subr.bf16.mxu0 0
    %1876 = vmatpush1.bf16.msra.mxu0 0
    %1877 = vmatprep.subr.bf16.mxu0 0
    %1878 = vmatpush1.bf16.msra.mxu0 0
    %1879 = vmatprep.subr.bf16.mxu0 0
    %1880 = vmatpush1.bf16.msra.mxu0 0
    %1881 = vmatprep.subr.bf16.mxu0 0
    %1882 = vmatpush1.bf16.msra.mxu0 0
    %1883 = vmatprep.subr.bf16.mxu0 0
    %1884 = vmatpush1.bf16.msra.mxu0 0
    %1885 = vmatprep.subr.bf16.mxu0 0
    %1886 = vmatpush1.bf16.msra.mxu0 0
    %1887 = vmatprep.subr.bf16.mxu0 0
    %1888 = vmatpush1.bf16.msra.mxu0 0
    %1889 = vmatprep.mubr.bf16.mxu0 0
    %1890 = vmatmul.mubr.bf16.gmra.mrb[0].mxu0 %v848
    %v1891 = vpop.f32.mrb[0].mxu0
    %v1892 = vadd.f32 %v1851, %v1891
    %v1893 = vpop.f32.mrb[0].mxu0
    %v1894 = vpop.f32.mrb[0].mxu0
    %v1895 = vadd.f32 %v1854, %v1894
    %v1896 = vpop.f32.mrb[0].mxu0
    %1897 = vdwg.mxu0
    %v1898 = vmax.f32 %v1722, 0.0
    %v1899 = vmax.f32 %v1724, 0.0
    %v1900 = vmax.f32 %v1808, 0.0
    %v1901 = vmax.f32 %v1810, 0.0
    %v1902 = vmax.f32 %v1892, 0.0
    %v1903 = vmax.f32 %v1726, 0.0
    %v1904 = vmax.f32 %v1728, 0.0
    %v1905 = vmax.f32 %v1812, 0.0
    %v1906 = vmax.f32 %v1814, 0.0
    %v1907 = vmax.f32 %v1895, 0.0
    %v1908 = vpack.c.bf16 %v1903, %v1898
    %v1909 = vpack.c.bf16 %v1904, %v1899
    %v1910 = vpack.c.bf16 %v1905, %v1900
    %v1911 = vpack.c.bf16 %v1906, %v1901
    %v1912 = vpack.c.bf16 %v1907, %v1902
    %v1913 = vld [vmem:[#allocation16] sm:$0xff]
    %v1914 = vld [vmem:[#allocation16 + $0x8] sm:$0xff]
    %v1915 = vld [vmem:[#allocation16 + $0x10] sm:$0xff]
    %v1916 = vld [vmem:[#allocation16 + $0x18] sm:$0xff]
    %v1917 = vld [vmem:[#allocation16 + $0x20] sm:$0xff]
    %v1918 = vld [vmem:[#allocation16 + $0x28] sm:$0xff]
    %v1919 = vld [vmem:[#allocation16 + $0x30] sm:$0xff]
    %v1920 = vld [vmem:[#allocation16 + $0x38] sm:$0xff]
    %v1921 = vld [vmem:[#allocation16 + $0x40] sm:$0xff]
    %v1922 = vld [vmem:[#allocation16 + $0x48] sm:$0xff]
    %v1923 = vld [vmem:[#allocation16 + $0x50] sm:$0xff]
    %v1924 = vld [vmem:[#allocation16 + $0x58] sm:$0xff]
    %v1925 = vld [vmem:[#allocation16 + $0x60] sm:$0xff]
    %v1926 = vld [vmem:[#allocation16 + $0x68] sm:$0xff]
    %v1927 = vld [vmem:[#allocation16 + $0x70] sm:$0xff]
    %v1928 = vld [vmem:[#allocation16 + $0x78] sm:$0xff]
    %v1929 = vld [vmem:[#allocation16 + $0x80] sm:$0xff]
    %v1930 = vld [vmem:[#allocation16 + $0x88] sm:$0xff]
    %v1931 = vld [vmem:[#allocation16 + $0x90] sm:$0xff]
    %v1932 = vld [vmem:[#allocation16 + $0x98] sm:$0xff]
    %v1933 = vld [vmem:[#allocation16 + $0xa0] sm:$0xff]
    %v1934 = vld [vmem:[#allocation16 + $0xa8] sm:$0xff]
    %v1935 = vld [vmem:[#allocation16 + $0xb0] sm:$0xff]
    %v1936 = vld [vmem:[#allocation16 + $0xb8] sm:$0xff]
    %v1937 = vld [vmem:[#allocation16 + $0xc0] sm:$0xff]
    %v1938 = vld [vmem:[#allocation16 + $0xc8] sm:$0xff]
    %v1939 = vld [vmem:[#allocation16 + $0xd0] sm:$0xff]
    %v1940 = vld [vmem:[#allocation16 + $0xd8] sm:$0xff]
    %v1941 = vld [vmem:[#allocation16 + $0xe0] sm:$0xff]
    %v1942 = vld [vmem:[#allocation16 + $0xe8] sm:$0xff]
    %v1943 = vld [vmem:[#allocation16 + $0xf0] sm:$0xff]
    %v1944 = vld [vmem:[#allocation16 + $0xf8] sm:$0xff]
    %v1945 = vld [vmem:[#allocation16 + $0x100] sm:$0xff]
    %v1946 = vld [vmem:[#allocation16 + $0x108] sm:$0xff]
    %v1947 = vld [vmem:[#allocation16 + $0x110] sm:$0xff]
    %v1948 = vld [vmem:[#allocation16 + $0x118] sm:$0xff]
    %v1949 = vld [vmem:[#allocation16 + $0x120] sm:$0xff]
    %v1950 = vld [vmem:[#allocation16 + $0x128] sm:$0xff]
    %v1951 = vld [vmem:[#allocation16 + $0x130] sm:$0xff]
    %v1952 = vld [vmem:[#allocation16 + $0x138] sm:$0xff]
    %v1953 = vld [vmem:[#allocation16 + $0x140] sm:$0xff]
    %v1954 = vld [vmem:[#allocation16 + $0x148] sm:$0xff]
    %v1955 = vld [vmem:[#allocation16 + $0x150] sm:$0xff]
    %v1956 = vld [vmem:[#allocation16 + $0x158] sm:$0xff]
    %v1957 = vld [vmem:[#allocation16 + $0x160] sm:$0xff]
    %v1958 = vld [vmem:[#allocation16 + $0x168] sm:$0xff]
    %v1959 = vld [vmem:[#allocation16 + $0x170] sm:$0xff]
    %v1960 = vld [vmem:[#allocation16 + $0x178] sm:$0xff]
    %v1961 = vld [vmem:[#allocation16 + $0x180] sm:$0xff]
    %v1962 = vld [vmem:[#allocation16 + $0x188] sm:$0xff]
    %v1963 = vld [vmem:[#allocation16 + $0x190] sm:$0xff]
    %v1964 = vld [vmem:[#allocation16 + $0x198] sm:$0xff]
    %v1965 = vld [vmem:[#allocation16 + $0x1a0] sm:$0xff]
    %v1966 = vld [vmem:[#allocation16 + $0x1a8] sm:$0xff]
    %v1967 = vld [vmem:[#allocation16 + $0x1b0] sm:$0xff]
    %v1968 = vld [vmem:[#allocation16 + $0x1b8] sm:$0xff]
    %v1969 = vld [vmem:[#allocation16 + $0x1c0] sm:$0xff]
    %v1970 = vld [vmem:[#allocation16 + $0x1c8] sm:$0xff]
    %v1971 = vld [vmem:[#allocation16 + $0x1d0] sm:$0xff]
    %v1972 = vld [vmem:[#allocation16 + $0x1d8] sm:$0xff]
    %v1973 = vld [vmem:[#allocation16 + $0x1e0] sm:$0xff]
    %v1974 = vld [vmem:[#allocation16 + $0x1e8] sm:$0xff]
    %v1975 = vld [vmem:[#allocation16 + $0x1f0] sm:$0xff]
    %v1976 = vld [vmem:[#allocation16 + $0x1f8] sm:$0xff]
    %v1977 = vld [vmem:[#allocation16 + $0x200] sm:$0xff]
    %v1978 = vld [vmem:[#allocation16 + $0x208] sm:$0xff]
    %v1979 = vld [vmem:[#allocation16 + $0x210] sm:$0xff]
    %v1980 = vld [vmem:[#allocation16 + $0x218] sm:$0xff]
    %v1981 = vld [vmem:[#allocation16 + $0x220] sm:$0xff]
    %v1982 = vld [vmem:[#allocation16 + $0x228] sm:$0xff]
    %v1983 = vld [vmem:[#allocation16 + $0x230] sm:$0xff]
    %v1984 = vld [vmem:[#allocation16 + $0x238] sm:$0xff]
    %v1985 = vld [vmem:[#allocation16 + $0x240] sm:$0xff]
    %v1986 = vld [vmem:[#allocation16 + $0x248] sm:$0xff]
    %v1987 = vld [vmem:[#allocation16 + $0x250] sm:$0xff]
    %v1988 = vld [vmem:[#allocation16 + $0x258] sm:$0xff]
    %v1989 = vld [vmem:[#allocation16 + $0x260] sm:$0xff]
    %v1990 = vld [vmem:[#allocation16 + $0x268] sm:$0xff]
    %v1991 = vld [vmem:[#allocation16 + $0x270] sm:$0xff]
    %v1992 = vld [vmem:[#allocation16 + $0x278] sm:$0xff]
    %v1993 = vld [vmem:[#allocation16 + $0x280] sm:$0xff]
    %v1994 = vld [vmem:[#allocation16 + $0x288] sm:$0xff]
    %v1995 = vld [vmem:[#allocation16 + $0x290] sm:$0xff]
    %v1996 = vld [vmem:[#allocation16 + $0x298] sm:$0xff]
    %v1997 = vld [vmem:[#allocation16 + $0x2a0] sm:$0xff]
    %v1998 = vld [vmem:[#allocation16 + $0x2a8] sm:$0xff]
    %v1999 = vld [vmem:[#allocation16 + $0x2b0] sm:$0xff]
    %v2000 = vld [vmem:[#allocation16 + $0x2b8] sm:$0xff]
    %v2001 = vld [vmem:[#allocation16 + $0x2c0] sm:$0xff]
    %v2002 = vld [vmem:[#allocation16 + $0x2c8] sm:$0xff]
    %v2003 = vld [vmem:[#allocation16 + $0x2d0] sm:$0xff]
    %v2004 = vld [vmem:[#allocation16 + $0x2d8] sm:$0xff]
    %v2005 = vld [vmem:[#allocation16 + $0x2e0] sm:$0xff]
    %v2006 = vld [vmem:[#allocation16 + $0x2e8] sm:$0xff]
    %v2007 = vld [vmem:[#allocation16 + $0x2f0] sm:$0xff]
    %v2008 = vld [vmem:[#allocation16 + $0x2f8] sm:$0xff]
    %v2009 = vld [vmem:[#allocation16 + $0x300] sm:$0xff]
    %v2010 = vld [vmem:[#allocation16 + $0x308] sm:$0xff]
    %v2011 = vld [vmem:[#allocation16 + $0x310] sm:$0xff]
    %v2012 = vld [vmem:[#allocation16 + $0x318] sm:$0xff]
    %v2013 = vld [vmem:[#allocation16 + $0x320] sm:$0xff]
    %v2014 = vld [vmem:[#allocation16 + $0x328] sm:$0xff]
    %v2015 = vld [vmem:[#allocation16 + $0x330] sm:$0xff]
    %v2016 = vld [vmem:[#allocation16 + $0x338] sm:$0xff]
    %v2017 = vld [vmem:[#allocation16 + $0x340] sm:$0xff]
    %v2018 = vld [vmem:[#allocation16 + $0x348] sm:$0xff]
    %v2019 = vld [vmem:[#allocation16 + $0x350] sm:$0xff]
    %v2020 = vld [vmem:[#allocation16 + $0x358] sm:$0xff]
    %v2021 = vld [vmem:[#allocation16 + $0x360] sm:$0xff]
    %v2022 = vld [vmem:[#allocation16 + $0x368] sm:$0xff]
    %v2023 = vld [vmem:[#allocation16 + $0x370] sm:$0xff]
    %v2024 = vld [vmem:[#allocation16 + $0x378] sm:$0xff]
    %v2025 = vld [vmem:[#allocation16 + $0x380] sm:$0xff]
    %v2026 = vld [vmem:[#allocation16 + $0x388] sm:$0xff]
    %v2027 = vld [vmem:[#allocation16 + $0x390] sm:$0xff]
    %v2028 = vld [vmem:[#allocation16 + $0x398] sm:$0xff]
    %v2029 = vld [vmem:[#allocation16 + $0x3a0] sm:$0xff]
    %v2030 = vld [vmem:[#allocation16 + $0x3a8] sm:$0xff]
    %v2031 = vld [vmem:[#allocation16 + $0x3b0] sm:$0xff]
    %v2032 = vld [vmem:[#allocation16 + $0x3b8] sm:$0xff]
    %v2033 = vld [vmem:[#allocation16 + $0x3c0] sm:$0xff]
    %v2034 = vld [vmem:[#allocation16 + $0x3c8] sm:$0xff]
    %v2035 = vld [vmem:[#allocation16 + $0x3d0] sm:$0xff]
    %v2036 = vld [vmem:[#allocation16 + $0x3d8] sm:$0xff]
    %v2037 = vld [vmem:[#allocation16 + $0x3e0] sm:$0xff]
    %v2038 = vld [vmem:[#allocation16 + $0x3e8] sm:$0xff]
    %v2039 = vld [vmem:[#allocation16 + $0x3f0] sm:$0xff]
    %v2040 = vld [vmem:[#allocation16 + $0x3f8] sm:$0xff]
    %v2041 = vld [vmem:[#allocation16 + $0x400] sm:$0xff]
    %v2042 = vld [vmem:[#allocation16 + $0x408] sm:$0xff]
    %v2043 = vld [vmem:[#allocation16 + $0x410] sm:$0xff]
    %v2044 = vld [vmem:[#allocation16 + $0x418] sm:$0xff]
    %v2045 = vld [vmem:[#allocation16 + $0x420] sm:$0xff]
    %v2046 = vld [vmem:[#allocation16 + $0x428] sm:$0xff]
    %v2047 = vld [vmem:[#allocation16 + $0x430] sm:$0xff]
    %v2048 = vld [vmem:[#allocation16 + $0x438] sm:$0xff]
    %v2049 = vld [vmem:[#allocation16 + $0x440] sm:$0xff]
    %v2050 = vld [vmem:[#allocation16 + $0x448] sm:$0xff]
    %v2051 = vld [vmem:[#allocation16 + $0x450] sm:$0xff]
    %v2052 = vld [vmem:[#allocation16 + $0x458] sm:$0xff]
    %v2053 = vld [vmem:[#allocation16 + $0x460] sm:$0xff]
    %v2054 = vld [vmem:[#allocation16 + $0x468] sm:$0xff]
    %v2055 = vld [vmem:[#allocation16 + $0x470] sm:$0xff]
    %v2056 = vld [vmem:[#allocation16 + $0x478] sm:$0xff]
    %v2057 = vld [vmem:[#allocation16 + $0x480] sm:$0xff]
    %v2058 = vld [vmem:[#allocation16 + $0x488] sm:$0xff]
    %v2059 = vld [vmem:[#allocation16 + $0x490] sm:$0xff]
    %v2060 = vld [vmem:[#allocation16 + $0x498] sm:$0xff]
    %v2061 = vld [vmem:[#allocation16 + $0x4a0] sm:$0xff]
    %v2062 = vld [vmem:[#allocation16 + $0x4a8] sm:$0xff]
    %v2063 = vld [vmem:[#allocation16 + $0x4b0] sm:$0xff]
    %v2064 = vld [vmem:[#allocation16 + $0x4b8] sm:$0xff]
    %v2065 = vld [vmem:[#allocation16 + $0x4c0] sm:$0xff]
    %v2066 = vld [vmem:[#allocation16 + $0x4c8] sm:$0xff]
    %v2067 = vld [vmem:[#allocation16 + $0x4d0] sm:$0xff]
    %v2068 = vld [vmem:[#allocation16 + $0x4d8] sm:$0xff]
    %v2069 = vld [vmem:[#allocation16 + $0x4e0] sm:$0xff]
    %v2070 = vld [vmem:[#allocation16 + $0x4e8] sm:$0xff]
    %v2071 = vld [vmem:[#allocation16 + $0x4f0] sm:$0xff]
    %v2072 = vld [vmem:[#allocation16 + $0x4f8] sm:$0xff]
    %v2073 = vld [vmem:[#allocation16 + $0x500] sm:$0xff]
    %v2074 = vld [vmem:[#allocation16 + $0x508] sm:$0xff]
    %v2075 = vld [vmem:[#allocation16 + $0x510] sm:$0xff]
    %v2076 = vld [vmem:[#allocation16 + $0x518] sm:$0xff]
    %v2077 = vld [vmem:[#allocation16 + $0x520] sm:$0xff]
    %v2078 = vld [vmem:[#allocation16 + $0x528] sm:$0xff]
    %v2079 = vld [vmem:[#allocation16 + $0x530] sm:$0xff]
    %v2080 = vld [vmem:[#allocation16 + $0x538] sm:$0xff]
    %v2081 = vld [vmem:[#allocation16 + $0x540] sm:$0xff]
    %v2082 = vld [vmem:[#allocation16 + $0x548] sm:$0xff]
    %v2083 = vld [vmem:[#allocation16 + $0x550] sm:$0xff]
    %v2084 = vld [vmem:[#allocation16 + $0x558] sm:$0xff]
    %v2085 = vld [vmem:[#allocation16 + $0x560] sm:$0xff]
    %v2086 = vld [vmem:[#allocation16 + $0x568] sm:$0xff]
    %v2087 = vld [vmem:[#allocation16 + $0x570] sm:$0xff]
    %v2088 = vld [vmem:[#allocation16 + $0x578] sm:$0xff]
    %v2089 = vld [vmem:[#allocation16 + $0x580] sm:$0xff]
    %v2090 = vld [vmem:[#allocation16 + $0x588] sm:$0xff]
    %v2091 = vld [vmem:[#allocation16 + $0x590] sm:$0xff]
    %v2092 = vld [vmem:[#allocation16 + $0x598] sm:$0xff]
    %v2093 = vld [vmem:[#allocation16 + $0x5a0] sm:$0xff]
    %v2094 = vld [vmem:[#allocation16 + $0x5a8] sm:$0xff]
    %v2095 = vld [vmem:[#allocation16 + $0x5b0] sm:$0xff]
    %v2096 = vld [vmem:[#allocation16 + $0x5b8] sm:$0xff]
    %v2097 = vld [vmem:[#allocation16 + $0x5c0] sm:$0xff]
    %v2098 = vld [vmem:[#allocation16 + $0x5c8] sm:$0xff]
    %v2099 = vld [vmem:[#allocation16 + $0x5d0] sm:$0xff]
    %v2100 = vld [vmem:[#allocation16 + $0x5d8] sm:$0xff]
    %v2101 = vld [vmem:[#allocation16 + $0x5e0] sm:$0xff]
    %v2102 = vld [vmem:[#allocation16 + $0x5e8] sm:$0xff]
    %v2103 = vld [vmem:[#allocation16 + $0x5f0] sm:$0xff]
    %v2104 = vld [vmem:[#allocation16 + $0x5f8] sm:$0xff]
    %v2105 = vld [vmem:[#allocation16 + $0x600] sm:$0xff]
    %v2106 = vld [vmem:[#allocation16 + $0x608] sm:$0xff]
    %v2107 = vld [vmem:[#allocation16 + $0x610] sm:$0xff]
    %v2108 = vld [vmem:[#allocation16 + $0x618] sm:$0xff]
    %v2109 = vld [vmem:[#allocation16 + $0x620] sm:$0xff]
    %v2110 = vld [vmem:[#allocation16 + $0x628] sm:$0xff]
    %v2111 = vld [vmem:[#allocation16 + $0x630] sm:$0xff]
    %v2112 = vld [vmem:[#allocation16 + $0x638] sm:$0xff]
    %v2113 = vld [vmem:[#allocation16 + $0x640] sm:$0xff]
    %v2114 = vld [vmem:[#allocation16 + $0x648] sm:$0xff]
    %v2115 = vld [vmem:[#allocation16 + $0x650] sm:$0xff]
    %v2116 = vld [vmem:[#allocation16 + $0x658] sm:$0xff]
    %v2117 = vld [vmem:[#allocation16 + $0x660] sm:$0xff]
    %v2118 = vld [vmem:[#allocation16 + $0x668] sm:$0xff]
    %v2119 = vld [vmem:[#allocation16 + $0x670] sm:$0xff]
    %v2120 = vld [vmem:[#allocation16 + $0x678] sm:$0xff]
    %v2121 = vld [vmem:[#allocation16 + $0x680] sm:$0xff]
    %v2122 = vld [vmem:[#allocation16 + $0x688] sm:$0xff]
    %v2123 = vld [vmem:[#allocation16 + $0x690] sm:$0xff]
    %v2124 = vld [vmem:[#allocation16 + $0x698] sm:$0xff]
    %v2125 = vld [vmem:[#allocation16 + $0x6a0] sm:$0xff]
    %v2126 = vld [vmem:[#allocation16 + $0x6a8] sm:$0xff]
    %v2127 = vld [vmem:[#allocation16 + $0x6b0] sm:$0xff]
    %v2128 = vld [vmem:[#allocation16 + $0x6b8] sm:$0xff]
    %v2129 = vld [vmem:[#allocation16 + $0x6c0] sm:$0xff]
    %v2130 = vld [vmem:[#allocation16 + $0x6c8] sm:$0xff]
    %v2131 = vld [vmem:[#allocation16 + $0x6d0] sm:$0xff]
    %v2132 = vld [vmem:[#allocation16 + $0x6d8] sm:$0xff]
    %v2133 = vld [vmem:[#allocation16 + $0x6e0] sm:$0xff]
    %v2134 = vld [vmem:[#allocation16 + $0x6e8] sm:$0xff]
    %v2135 = vld [vmem:[#allocation16 + $0x6f0] sm:$0xff]
    %v2136 = vld [vmem:[#allocation16 + $0x6f8] sm:$0xff]
    %v2137 = vld [vmem:[#allocation16 + $0x700] sm:$0xff]
    %v2138 = vld [vmem:[#allocation16 + $0x708] sm:$0xff]
    %v2139 = vld [vmem:[#allocation16 + $0x710] sm:$0xff]
    %v2140 = vld [vmem:[#allocation16 + $0x718] sm:$0xff]
    %v2141 = vld [vmem:[#allocation16 + $0x720] sm:$0xff]
    %v2142 = vld [vmem:[#allocation16 + $0x728] sm:$0xff]
    %v2143 = vld [vmem:[#allocation16 + $0x730] sm:$0xff]
    %v2144 = vld [vmem:[#allocation16 + $0x738] sm:$0xff]
    %v2145 = vld [vmem:[#allocation16 + $0x740] sm:$0xff]
    %v2146 = vld [vmem:[#allocation16 + $0x748] sm:$0xff]
    %v2147 = vld [vmem:[#allocation16 + $0x750] sm:$0xff]
    %v2148 = vld [vmem:[#allocation16 + $0x758] sm:$0xff]
    %v2149 = vld [vmem:[#allocation16 + $0x760] sm:$0xff]
    %v2150 = vld [vmem:[#allocation16 + $0x768] sm:$0xff]
    %v2151 = vld [vmem:[#allocation16 + $0x770] sm:$0xff]
    %v2152 = vld [vmem:[#allocation16 + $0x778] sm:$0xff]
    %v2153 = vld [vmem:[#allocation16 + $0x780] sm:$0xff]
    %v2154 = vld [vmem:[#allocation16 + $0x788] sm:$0xff]
    %v2155 = vld [vmem:[#allocation16 + $0x790] sm:$0xff]
    %v2156 = vld [vmem:[#allocation16 + $0x798] sm:$0xff]
    %v2157 = vld [vmem:[#allocation16 + $0x7a0] sm:$0xff]
    %v2158 = vld [vmem:[#allocation16 + $0x7a8] sm:$0xff]
    %v2159 = vld [vmem:[#allocation16 + $0x7b0] sm:$0xff]
    %v2160 = vld [vmem:[#allocation16 + $0x7b8] sm:$0xff]
    %v2161 = vld [vmem:[#allocation16 + $0x7c0] sm:$0xff]
    %v2162 = vld [vmem:[#allocation16 + $0x7c8] sm:$0xff]
    %v2163 = vld [vmem:[#allocation16 + $0x7d0] sm:$0xff]
    %v2164 = vld [vmem:[#allocation16 + $0x7d8] sm:$0xff]
    %v2165 = vld [vmem:[#allocation16 + $0x7e0] sm:$0xff]
    %v2166 = vld [vmem:[#allocation16 + $0x7e8] sm:$0xff]
    %v2167 = vld [vmem:[#allocation16 + $0x7f0] sm:$0xff]
    %v2168 = vld [vmem:[#allocation16 + $0x7f8] sm:$0xff]
    %v2169 = vld [vmem:[#allocation16 + $0x800] sm:$0xff]
    %v2170 = vld [vmem:[#allocation16 + $0x808] sm:$0xff]
    %v2171 = vld [vmem:[#allocation16 + $0x810] sm:$0xff]
    %v2172 = vld [vmem:[#allocation16 + $0x818] sm:$0xff]
    %v2173 = vld [vmem:[#allocation16 + $0x820] sm:$0xff]
    %v2174 = vld [vmem:[#allocation16 + $0x828] sm:$0xff]
    %v2175 = vld [vmem:[#allocation16 + $0x830] sm:$0xff]
    %v2176 = vld [vmem:[#allocation16 + $0x838] sm:$0xff]
    %v2177 = vld [vmem:[#allocation16 + $0x840] sm:$0xff]
    %v2178 = vld [vmem:[#allocation16 + $0x848] sm:$0xff]
    %v2179 = vld [vmem:[#allocation16 + $0x850] sm:$0xff]
    %v2180 = vld [vmem:[#allocation16 + $0x858] sm:$0xff]
    %v2181 = vld [vmem:[#allocation16 + $0x860] sm:$0xff]
    %v2182 = vld [vmem:[#allocation16 + $0x868] sm:$0xff]
    %v2183 = vld [vmem:[#allocation16 + $0x870] sm:$0xff]
    %v2184 = vld [vmem:[#allocation16 + $0x878] sm:$0xff]
    %v2185 = vld [vmem:[#allocation16 + $0x880] sm:$0xff]
    %v2186 = vld [vmem:[#allocation16 + $0x888] sm:$0xff]
    %v2187 = vld [vmem:[#allocation16 + $0x890] sm:$0xff]
    %v2188 = vld [vmem:[#allocation16 + $0x898] sm:$0xff]
    %v2189 = vld [vmem:[#allocation16 + $0x8a0] sm:$0xff]
    %v2190 = vld [vmem:[#allocation16 + $0x8a8] sm:$0xff]
    %v2191 = vld [vmem:[#allocation16 + $0x8b0] sm:$0xff]
    %v2192 = vld [vmem:[#allocation16 + $0x8b8] sm:$0xff]
    %v2193 = vld [vmem:[#allocation16 + $0x8c0] sm:$0xff]
    %v2194 = vld [vmem:[#allocation16 + $0x8c8] sm:$0xff]
    %v2195 = vld [vmem:[#allocation16 + $0x8d0] sm:$0xff]
    %v2196 = vld [vmem:[#allocation16 + $0x8d8] sm:$0xff]
    %v2197 = vld [vmem:[#allocation16 + $0x8e0] sm:$0xff]
    %v2198 = vld [vmem:[#allocation16 + $0x8e8] sm:$0xff]
    %v2199 = vld [vmem:[#allocation16 + $0x8f0] sm:$0xff]
    %v2200 = vld [vmem:[#allocation16 + $0x8f8] sm:$0xff]
    %v2201 = vld [vmem:[#allocation16 + $0x900] sm:$0xff]
    %v2202 = vld [vmem:[#allocation16 + $0x908] sm:$0xff]
    %v2203 = vld [vmem:[#allocation16 + $0x910] sm:$0xff]
    %v2204 = vld [vmem:[#allocation16 + $0x918] sm:$0xff]
    %v2205 = vld [vmem:[#allocation16 + $0x920] sm:$0xff]
    %v2206 = vld [vmem:[#allocation16 + $0x928] sm:$0xff]
    %v2207 = vld [vmem:[#allocation16 + $0x930] sm:$0xff]
    %v2208 = vld [vmem:[#allocation16 + $0x938] sm:$0xff]
    %v2209 = vld [vmem:[#allocation16 + $0x940] sm:$0xff]
    %v2210 = vld [vmem:[#allocation16 + $0x948] sm:$0xff]
    %v2211 = vld [vmem:[#allocation16 + $0x950] sm:$0xff]
    %v2212 = vld [vmem:[#allocation16 + $0x958] sm:$0xff]
    %v2213 = vld [vmem:[#allocation16 + $0x960] sm:$0xff]
    %v2214 = vld [vmem:[#allocation16 + $0x968] sm:$0xff]
    %v2215 = vld [vmem:[#allocation16 + $0x970] sm:$0xff]
    %v2216 = vld [vmem:[#allocation16 + $0x978] sm:$0xff]
    %v2217 = vld [vmem:[#allocation16 + $0x980] sm:$0xff]
    %v2218 = vld [vmem:[#allocation16 + $0x988] sm:$0xff]
    %v2219 = vld [vmem:[#allocation16 + $0x990] sm:$0xff]
    %v2220 = vld [vmem:[#allocation16 + $0x998] sm:$0xff]
    %v2221 = vld [vmem:[#allocation16 + $0x9a0] sm:$0xff]
    %v2222 = vld [vmem:[#allocation16 + $0x9a8] sm:$0xff]
    %v2223 = vld [vmem:[#allocation16 + $0x9b0] sm:$0xff]
    %v2224 = vld [vmem:[#allocation16 + $0x9b8] sm:$0xff]
    %v2225 = vld [vmem:[#allocation16 + $0x9c0] sm:$0xff]
    %v2226 = vld [vmem:[#allocation16 + $0x9c8] sm:$0xff]
    %v2227 = vld [vmem:[#allocation16 + $0x9d0] sm:$0xff]
    %v2228 = vld [vmem:[#allocation16 + $0x9d8] sm:$0xff]
    %v2229 = vld [vmem:[#allocation16 + $0x9e0] sm:$0xff]
    %v2230 = vld [vmem:[#allocation16 + $0x9e8] sm:$0xff]
    %v2231 = vld [vmem:[#allocation16 + $0x9f0] sm:$0xff]
    %v2232 = vld [vmem:[#allocation16 + $0x9f8] sm:$0xff]
    %v2233 = vld [vmem:[#allocation16 + $0xa00] sm:$0xff]
    %v2234 = vld [vmem:[#allocation16 + $0xa08] sm:$0xff]
    %v2235 = vld [vmem:[#allocation16 + $0xa10] sm:$0xff]
    %v2236 = vld [vmem:[#allocation16 + $0xa18] sm:$0xff]
    %v2237 = vld [vmem:[#allocation16 + $0xa20] sm:$0xff]
    %v2238 = vld [vmem:[#allocation16 + $0xa28] sm:$0xff]
    %v2239 = vld [vmem:[#allocation16 + $0xa30] sm:$0xff]
    %v2240 = vld [vmem:[#allocation16 + $0xa38] sm:$0xff]
    %v2241 = vld [vmem:[#allocation16 + $0xa40] sm:$0xff]
    %v2242 = vld [vmem:[#allocation16 + $0xa48] sm:$0xff]
    %v2243 = vld [vmem:[#allocation16 + $0xa50] sm:$0xff]
    %v2244 = vld [vmem:[#allocation16 + $0xa58] sm:$0xff]
    %v2245 = vld [vmem:[#allocation16 + $0xa60] sm:$0xff]
    %v2246 = vld [vmem:[#allocation16 + $0xa68] sm:$0xff]
    %v2247 = vld [vmem:[#allocation16 + $0xa70] sm:$0xff]
    %v2248 = vld [vmem:[#allocation16 + $0xa78] sm:$0xff]
    %v2249 = vld [vmem:[#allocation16 + $0xa80] sm:$0xff]
    %v2250 = vld [vmem:[#allocation16 + $0xa88] sm:$0xff]
    %v2251 = vld [vmem:[#allocation16 + $0xa90] sm:$0xff]
    %v2252 = vld [vmem:[#allocation16 + $0xa98] sm:$0xff]
    %v2253 = vld [vmem:[#allocation16 + $0xaa0] sm:$0xff]
    %v2254 = vld [vmem:[#allocation16 + $0xaa8] sm:$0xff]
    %v2255 = vld [vmem:[#allocation16 + $0xab0] sm:$0xff]
    %v2256 = vld [vmem:[#allocation16 + $0xab8] sm:$0xff]
    %v2257 = vld [vmem:[#allocation16 + $0xac0] sm:$0xff]
    %v2258 = vld [vmem:[#allocation16 + $0xac8] sm:$0xff]
    %v2259 = vld [vmem:[#allocation16 + $0xad0] sm:$0xff]
    %v2260 = vld [vmem:[#allocation16 + $0xad8] sm:$0xff]
    %v2261 = vld [vmem:[#allocation16 + $0xae0] sm:$0xff]
    %v2262 = vld [vmem:[#allocation16 + $0xae8] sm:$0xff]
    %v2263 = vld [vmem:[#allocation16 + $0xaf0] sm:$0xff]
    %v2264 = vld [vmem:[#allocation16 + $0xaf8] sm:$0xff]
    %v2265 = vld [vmem:[#allocation16 + $0xb00] sm:$0xff]
    %v2266 = vld [vmem:[#allocation16 + $0xb08] sm:$0xff]
    %v2267 = vld [vmem:[#allocation16 + $0xb10] sm:$0xff]
    %v2268 = vld [vmem:[#allocation16 + $0xb18] sm:$0xff]
    %v2269 = vld [vmem:[#allocation16 + $0xb20] sm:$0xff]
    %v2270 = vld [vmem:[#allocation16 + $0xb28] sm:$0xff]
    %v2271 = vld [vmem:[#allocation16 + $0xb30] sm:$0xff]
    %v2272 = vld [vmem:[#allocation16 + $0xb38] sm:$0xff]
    %v2273 = vld [vmem:[#allocation16 + $0xb40] sm:$0xff]
    %v2274 = vld [vmem:[#allocation16 + $0xb48] sm:$0xff]
    %v2275 = vld [vmem:[#allocation16 + $0xb50] sm:$0xff]
    %v2276 = vld [vmem:[#allocation16 + $0xb58] sm:$0xff]
    %v2277 = vld [vmem:[#allocation16 + $0xb60] sm:$0xff]
    %v2278 = vld [vmem:[#allocation16 + $0xb68] sm:$0xff]
    %v2279 = vld [vmem:[#allocation16 + $0xb70] sm:$0xff]
    %v2280 = vld [vmem:[#allocation16 + $0xb78] sm:$0xff]
    %v2281 = vld [vmem:[#allocation16 + $0xb80] sm:$0xff]
    %v2282 = vld [vmem:[#allocation16 + $0xb88] sm:$0xff]
    %v2283 = vld [vmem:[#allocation16 + $0xb90] sm:$0xff]
    %v2284 = vld [vmem:[#allocation16 + $0xb98] sm:$0xff]
    %v2285 = vld [vmem:[#allocation16 + $0xba0] sm:$0xff]
    %v2286 = vld [vmem:[#allocation16 + $0xba8] sm:$0xff]
    %v2287 = vld [vmem:[#allocation16 + $0xbb0] sm:$0xff]
    %v2288 = vld [vmem:[#allocation16 + $0xbb8] sm:$0xff]
    %v2289 = vld [vmem:[#allocation16 + $0xbc0] sm:$0xff]
    %v2290 = vld [vmem:[#allocation16 + $0xbc8] sm:$0xff]
    %v2291 = vld [vmem:[#allocation16 + $0xbd0] sm:$0xff]
    %v2292 = vld [vmem:[#allocation16 + $0xbd8] sm:$0xff]
    %v2293 = vld [vmem:[#allocation16 + $0xbe0] sm:$0xff]
    %v2294 = vld [vmem:[#allocation16 + $0xbe8] sm:$0xff]
    %v2295 = vld [vmem:[#allocation16 + $0xbf0] sm:$0xff]
    %v2296 = vld [vmem:[#allocation16 + $0xbf8] sm:$0xff]
    %v2297 = vld [vmem:[#allocation16 + $0xc00] sm:$0xff]
    %v2298 = vld [vmem:[#allocation16 + $0xc08] sm:$0xff]
    %v2299 = vld [vmem:[#allocation16 + $0xc10] sm:$0xff]
    %v2300 = vld [vmem:[#allocation16 + $0xc18] sm:$0xff]
    %v2301 = vld [vmem:[#allocation16 + $0xc20] sm:$0xff]
    %v2302 = vld [vmem:[#allocation16 + $0xc28] sm:$0xff]
    %v2303 = vld [vmem:[#allocation16 + $0xc30] sm:$0xff]
    %v2304 = vld [vmem:[#allocation16 + $0xc38] sm:$0xff]
    %v2305 = vld [vmem:[#allocation16 + $0xc40] sm:$0xff]
    %v2306 = vld [vmem:[#allocation16 + $0xc48] sm:$0xff]
    %v2307 = vld [vmem:[#allocation16 + $0xc50] sm:$0xff]
    %v2308 = vld [vmem:[#allocation16 + $0xc58] sm:$0xff]
    %v2309 = vld [vmem:[#allocation16 + $0xc60] sm:$0xff]
    %v2310 = vld [vmem:[#allocation16 + $0xc68] sm:$0xff]
    %v2311 = vld [vmem:[#allocation16 + $0xc70] sm:$0xff]
    %v2312 = vld [vmem:[#allocation16 + $0xc78] sm:$0xff]
    %v2313 = vld [vmem:[#allocation17] sm:$0xff]
    %v2314 = vld [vmem:[#allocation17 + $0x8] sm:$0x3]
    %v2317 = vlaneseq
    %v2318 = vshrl.u32 %v2317, 7
    %v2319 = vsub.s32 0, %v2318
    %v2320 = vrot.slane %v2313, %v2319
    %v2321 = vlaneseq
    %v2322 = vshrl.u32 %v2321, 7
    %v2323 = vsub.s32 1, %v2322
    %v2324 = vrot.slane %v2313, %v2323
    %v2325 = vlaneseq
    %v2326 = vshrl.u32 %v2325, 7
    %v2327 = vsub.s32 2, %v2326
    %v2328 = vrot.slane %v2313, %v2327
    %v2329 = vlaneseq
    %v2330 = vshrl.u32 %v2329, 7
    %v2331 = vsub.s32 3, %v2330
    %v2332 = vrot.slane %v2313, %v2331
    %v2333 = vlaneseq
    %v2334 = vshrl.u32 %v2333, 7
    %v2335 = vsub.s32 4, %v2334
    %v2336 = vrot.slane %v2313, %v2335
    %v2337 = vlaneseq
    %v2338 = vshrl.u32 %v2337, 7
    %v2339 = vsub.s32 5, %v2338
    %v2340 = vrot.slane %v2313, %v2339
    %v2341 = vlaneseq
    %v2342 = vshrl.u32 %v2341, 7
    %v2343 = vsub.s32 6, %v2342
    %v2344 = vrot.slane %v2313, %v2343
    %v2345 = vlaneseq
    %v2346 = vshrl.u32 %v2345, 7
    %v2347 = vsub.s32 7, %v2346
    %v2348 = vrot.slane %v2313, %v2347
    %v2349 = vlaneseq
    %v2350 = vshrl.u32 %v2349, 7
    %v2351 = vsub.s32 0, %v2350
    %v2352 = vrot.slane %v2314, %v2351
    %v2353 = vlaneseq
    %v2354 = vshrl.u32 %v2353, 7
    %v2355 = vsub.s32 1, %v2354
    %v2356 = vrot.slane %v2314, %v2355
    %v2767 = vunpack.c.l.b16 %v1913
    %v2768 = vunpack.c.h.b16 %v1913
    %v2769 = vunpack.c.l.b16 %v1914
    %v2770 = vunpack.c.h.b16 %v1914
    %v2771 = vunpack.c.l.b16 %v1915
    %v2772 = vunpack.c.h.b16 %v1915
    %v2773 = vunpack.c.l.b16 %v1916
    %v2774 = vunpack.c.h.b16 %v1916
    %v2775 = vunpack.c.l.b16 %v1917
    %v2776 = vunpack.c.h.b16 %v1917
    %v2777 = vunpack.c.l.b16 %v1918
    %v2778 = vunpack.c.h.b16 %v1918
    %v2779 = vunpack.c.l.b16 %v1919
    %v2780 = vunpack.c.h.b16 %v1919
    %v2781 = vunpack.c.l.b16 %v1920
    %v2782 = vunpack.c.h.b16 %v1920
    %v2783 = vunpack.c.l.b16 %v1921
    %v2784 = vunpack.c.h.b16 %v1921
    %v2785 = vunpack.c.l.b16 %v1922
    %v2786 = vunpack.c.h.b16 %v1922
    %v2787 = vunpack.c.l.b16 %v1923
    %v2788 = vunpack.c.h.b16 %v1923
    %v2789 = vunpack.c.l.b16 %v1924
    %v2790 = vunpack.c.h.b16 %v1924
    %v2791 = vunpack.c.l.b16 %v1925
    %v2792 = vunpack.c.h.b16 %v1925
    %v2793 = vunpack.c.l.b16 %v1926
    %v2794 = vunpack.c.h.b16 %v1926
    %v2795 = vunpack.c.l.b16 %v1927
    %v2796 = vunpack.c.h.b16 %v1927
    %v2797 = vunpack.c.l.b16 %v1928
    %v2798 = vunpack.c.h.b16 %v1928
    %v2799 = vunpack.c.l.b16 %v1929
    %v2800 = vunpack.c.h.b16 %v1929
    %v2801 = vunpack.c.l.b16 %v1930
    %v2802 = vunpack.c.h.b16 %v1930
    %v2803 = vunpack.c.l.b16 %v1931
    %v2804 = vunpack.c.h.b16 %v1931
    %v2805 = vunpack.c.l.b16 %v1932
    %v2806 = vunpack.c.h.b16 %v1932
    %v2807 = vunpack.c.l.b16 %v1933
    %v2808 = vunpack.c.h.b16 %v1933
    %v2809 = vunpack.c.l.b16 %v1934
    %v2810 = vunpack.c.h.b16 %v1934
    %v2811 = vunpack.c.l.b16 %v1935
    %v2812 = vunpack.c.h.b16 %v1935
    %v2813 = vunpack.c.l.b16 %v1936
    %v2814 = vunpack.c.h.b16 %v1936
    %v2815 = vunpack.c.l.b16 %v1937
    %v2816 = vunpack.c.h.b16 %v1937
    %v2817 = vunpack.c.l.b16 %v1938
    %v2818 = vunpack.c.h.b16 %v1938
    %v2819 = vunpack.c.l.b16 %v1939
    %v2820 = vunpack.c.h.b16 %v1939
    %v2821 = vunpack.c.l.b16 %v1940
    %v2822 = vunpack.c.h.b16 %v1940
    %v2823 = vunpack.c.l.b16 %v1941
    %v2824 = vunpack.c.h.b16 %v1941
    %v2825 = vunpack.c.l.b16 %v1942
    %v2826 = vunpack.c.h.b16 %v1942
    %v2827 = vunpack.c.l.b16 %v1943
    %v2828 = vunpack.c.h.b16 %v1943
    %v2829 = vunpack.c.l.b16 %v1944
    %v2830 = vunpack.c.h.b16 %v1944
    %v2831 = vunpack.c.l.b16 %v1945
    %v2832 = vunpack.c.h.b16 %v1945
    %v2833 = vunpack.c.l.b16 %v1946
    %v2834 = vunpack.c.h.b16 %v1946
    %v2835 = vunpack.c.l.b16 %v1947
    %v2836 = vunpack.c.h.b16 %v1947
    %v2837 = vunpack.c.l.b16 %v1948
    %v2838 = vunpack.c.h.b16 %v1948
    %v2839 = vunpack.c.l.b16 %v1949
    %v2840 = vunpack.c.h.b16 %v1949
    %v2841 = vunpack.c.l.b16 %v1950
    %v2842 = vunpack.c.h.b16 %v1950
    %v2843 = vunpack.c.l.b16 %v1951
    %v2844 = vunpack.c.h.b16 %v1951
    %v2845 = vunpack.c.l.b16 %v1952
    %v2846 = vunpack.c.h.b16 %v1952
    %v2847 = vunpack.c.l.b16 %v1953
    %v2848 = vunpack.c.h.b16 %v1953
    %v2849 = vunpack.c.l.b16 %v1954
    %v2850 = vunpack.c.h.b16 %v1954
    %v2851 = vunpack.c.l.b16 %v1955
    %v2852 = vunpack.c.h.b16 %v1955
    %v2853 = vunpack.c.l.b16 %v1956
    %v2854 = vunpack.c.h.b16 %v1956
    %v2855 = vunpack.c.l.b16 %v1957
    %v2856 = vunpack.c.h.b16 %v1957
    %v2857 = vunpack.c.l.b16 %v1958
    %v2858 = vunpack.c.h.b16 %v1958
    %v2859 = vunpack.c.l.b16 %v1959
    %v2860 = vunpack.c.h.b16 %v1959
    %v2861 = vunpack.c.l.b16 %v1960
    %v2862 = vunpack.c.h.b16 %v1960
    %v2863 = vunpack.c.l.b16 %v1961
    %v2864 = vunpack.c.h.b16 %v1961
    %v2865 = vunpack.c.l.b16 %v1962
    %v2866 = vunpack.c.h.b16 %v1962
    %v2867 = vunpack.c.l.b16 %v1963
    %v2868 = vunpack.c.h.b16 %v1963
    %v2869 = vunpack.c.l.b16 %v1964
    %v2870 = vunpack.c.h.b16 %v1964
    %v2871 = vunpack.c.l.b16 %v1965
    %v2872 = vunpack.c.h.b16 %v1965
    %v2873 = vunpack.c.l.b16 %v1966
    %v2874 = vunpack.c.h.b16 %v1966
    %v2875 = vunpack.c.l.b16 %v1967
    %v2876 = vunpack.c.h.b16 %v1967
    %v2877 = vunpack.c.l.b16 %v1968
    %v2878 = vunpack.c.h.b16 %v1968
    %v2879 = vunpack.c.l.b16 %v1969
    %v2880 = vunpack.c.h.b16 %v1969
    %v2881 = vunpack.c.l.b16 %v1970
    %v2882 = vunpack.c.h.b16 %v1970
    %v2883 = vunpack.c.l.b16 %v1971
    %v2884 = vunpack.c.h.b16 %v1971
    %v2885 = vunpack.c.l.b16 %v1972
    %v2886 = vunpack.c.h.b16 %v1972
    %v2887 = vunpack.c.l.b16 %v1973
    %v2888 = vunpack.c.h.b16 %v1973
    %v2889 = vunpack.c.l.b16 %v1974
    %v2890 = vunpack.c.h.b16 %v1974
    %v2891 = vunpack.c.l.b16 %v1975
    %v2892 = vunpack.c.h.b16 %v1975
    %v2893 = vunpack.c.l.b16 %v1976
    %v2894 = vunpack.c.h.b16 %v1976
    %v2895 = vunpack.c.l.b16 %v1977
    %v2896 = vunpack.c.h.b16 %v1977
    %v2897 = vunpack.c.l.b16 %v1978
    %v2898 = vunpack.c.h.b16 %v1978
    %v2899 = vunpack.c.l.b16 %v1979
    %v2900 = vunpack.c.h.b16 %v1979
    %v2901 = vunpack.c.l.b16 %v1980
    %v2902 = vunpack.c.h.b16 %v1980
    %v2903 = vunpack.c.l.b16 %v1981
    %v2904 = vunpack.c.h.b16 %v1981
    %v2905 = vunpack.c.l.b16 %v1982
    %v2906 = vunpack.c.h.b16 %v1982
    %v2907 = vunpack.c.l.b16 %v1983
    %v2908 = vunpack.c.h.b16 %v1983
    %v2909 = vunpack.c.l.b16 %v1984
    %v2910 = vunpack.c.h.b16 %v1984
    %v2911 = vunpack.c.l.b16 %v1985
    %v2912 = vunpack.c.h.b16 %v1985
    %v2913 = vunpack.c.l.b16 %v1986
    %v2914 = vunpack.c.h.b16 %v1986
    %v2915 = vunpack.c.l.b16 %v1987
    %v2916 = vunpack.c.h.b16 %v1987
    %v2917 = vunpack.c.l.b16 %v1988
    %v2918 = vunpack.c.h.b16 %v1988
    %v2919 = vunpack.c.l.b16 %v1989
    %v2920 = vunpack.c.h.b16 %v1989
    %v2921 = vunpack.c.l.b16 %v1990
    %v2922 = vunpack.c.h.b16 %v1990
    %v2923 = vunpack.c.l.b16 %v1991
    %v2924 = vunpack.c.h.b16 %v1991
    %v2925 = vunpack.c.l.b16 %v1992
    %v2926 = vunpack.c.h.b16 %v1992
    %v2927 = vunpack.c.l.b16 %v1993
    %v2928 = vunpack.c.h.b16 %v1993
    %v2929 = vunpack.c.l.b16 %v1994
    %v2930 = vunpack.c.h.b16 %v1994
    %v2931 = vunpack.c.l.b16 %v1995
    %v2932 = vunpack.c.h.b16 %v1995
    %v2933 = vunpack.c.l.b16 %v1996
    %v2934 = vunpack.c.h.b16 %v1996
    %v2935 = vunpack.c.l.b16 %v1997
    %v2936 = vunpack.c.h.b16 %v1997
    %v2937 = vunpack.c.l.b16 %v1998
    %v2938 = vunpack.c.h.b16 %v1998
    %v2939 = vunpack.c.l.b16 %v1999
    %v2940 = vunpack.c.h.b16 %v1999
    %v2941 = vunpack.c.l.b16 %v2000
    %v2942 = vunpack.c.h.b16 %v2000
    %v2943 = vunpack.c.l.b16 %v2001
    %v2944 = vunpack.c.h.b16 %v2001
    %v2945 = vunpack.c.l.b16 %v2002
    %v2946 = vunpack.c.h.b16 %v2002
    %v2947 = vunpack.c.l.b16 %v2003
    %v2948 = vunpack.c.h.b16 %v2003
    %v2949 = vunpack.c.l.b16 %v2004
    %v2950 = vunpack.c.h.b16 %v2004
    %v2951 = vunpack.c.l.b16 %v2005
    %v2952 = vunpack.c.h.b16 %v2005
    %v2953 = vunpack.c.l.b16 %v2006
    %v2954 = vunpack.c.h.b16 %v2006
    %v2955 = vunpack.c.l.b16 %v2007
    %v2956 = vunpack.c.h.b16 %v2007
    %v2957 = vunpack.c.l.b16 %v2008
    %v2958 = vunpack.c.h.b16 %v2008
    %v2959 = vunpack.c.l.b16 %v2009
    %v2960 = vunpack.c.h.b16 %v2009
    %v2961 = vunpack.c.l.b16 %v2010
    %v2962 = vunpack.c.h.b16 %v2010
    %v2963 = vunpack.c.l.b16 %v2011
    %v2964 = vunpack.c.h.b16 %v2011
    %v2965 = vunpack.c.l.b16 %v2012
    %v2966 = vunpack.c.h.b16 %v2012
    %v2967 = vunpack.c.l.b16 %v2013
    %v2968 = vunpack.c.h.b16 %v2013
    %v2969 = vunpack.c.l.b16 %v2014
    %v2970 = vunpack.c.h.b16 %v2014
    %v2971 = vunpack.c.l.b16 %v2015
    %v2972 = vunpack.c.h.b16 %v2015
    %v2973 = vunpack.c.l.b16 %v2016
    %v2974 = vunpack.c.h.b16 %v2016
    %v2975 = vunpack.c.l.b16 %v2017
    %v2976 = vunpack.c.h.b16 %v2017
    %v2977 = vunpack.c.l.b16 %v2018
    %v2978 = vunpack.c.h.b16 %v2018
    %v2979 = vunpack.c.l.b16 %v2019
    %v2980 = vunpack.c.h.b16 %v2019
    %v2981 = vunpack.c.l.b16 %v2020
    %v2982 = vunpack.c.h.b16 %v2020
    %v2983 = vunpack.c.l.b16 %v2021
    %v2984 = vunpack.c.h.b16 %v2021
    %v2985 = vunpack.c.l.b16 %v2022
    %v2986 = vunpack.c.h.b16 %v2022
    %v2987 = vunpack.c.l.b16 %v2023
    %v2988 = vunpack.c.h.b16 %v2023
    %v2989 = vunpack.c.l.b16 %v2024
    %v2990 = vunpack.c.h.b16 %v2024
    %v2991 = vunpack.c.l.b16 %v2025
    %v2992 = vunpack.c.h.b16 %v2025
    %v2993 = vunpack.c.l.b16 %v2026
    %v2994 = vunpack.c.h.b16 %v2026
    %v2995 = vunpack.c.l.b16 %v2027
    %v2996 = vunpack.c.h.b16 %v2027
    %v2997 = vunpack.c.l.b16 %v2028
    %v2998 = vunpack.c.h.b16 %v2028
    %v2999 = vunpack.c.l.b16 %v2029
    %v3000 = vunpack.c.h.b16 %v2029
    %v3001 = vunpack.c.l.b16 %v2030
    %v3002 = vunpack.c.h.b16 %v2030
    %v3003 = vunpack.c.l.b16 %v2031
    %v3004 = vunpack.c.h.b16 %v2031
    %v3005 = vunpack.c.l.b16 %v2032
    %v3006 = vunpack.c.h.b16 %v2032
    %v3007 = vunpack.c.l.b16 %v2033
    %v3008 = vunpack.c.h.b16 %v2033
    %v3009 = vunpack.c.l.b16 %v2034
    %v3010 = vunpack.c.h.b16 %v2034
    %v3011 = vunpack.c.l.b16 %v2035
    %v3012 = vunpack.c.h.b16 %v2035
    %v3013 = vunpack.c.l.b16 %v2036
    %v3014 = vunpack.c.h.b16 %v2036
    %v3015 = vunpack.c.l.b16 %v2037
    %v3016 = vunpack.c.h.b16 %v2037
    %v3017 = vunpack.c.l.b16 %v2038
    %v3018 = vunpack.c.h.b16 %v2038
    %v3019 = vunpack.c.l.b16 %v2039
    %v3020 = vunpack.c.h.b16 %v2039
    %v3021 = vunpack.c.l.b16 %v2040
    %v3022 = vunpack.c.h.b16 %v2040
    %v3023 = vunpack.c.l.b16 %v2041
    %v3024 = vunpack.c.h.b16 %v2041
    %v3025 = vunpack.c.l.b16 %v2042
    %v3026 = vunpack.c.h.b16 %v2042
    %v3027 = vunpack.c.l.b16 %v2043
    %v3028 = vunpack.c.h.b16 %v2043
    %v3029 = vunpack.c.l.b16 %v2044
    %v3030 = vunpack.c.h.b16 %v2044
    %v3031 = vunpack.c.l.b16 %v2045
    %v3032 = vunpack.c.h.b16 %v2045
    %v3033 = vunpack.c.l.b16 %v2046
    %v3034 = vunpack.c.h.b16 %v2046
    %v3035 = vunpack.c.l.b16 %v2047
    %v3036 = vunpack.c.h.b16 %v2047
    %v3037 = vunpack.c.l.b16 %v2048
    %v3038 = vunpack.c.h.b16 %v2048
    %v3039 = vunpack.c.l.b16 %v2049
    %v3040 = vunpack.c.h.b16 %v2049
    %v3041 = vunpack.c.l.b16 %v2050
    %v3042 = vunpack.c.h.b16 %v2050
    %v3043 = vunpack.c.l.b16 %v2051
    %v3044 = vunpack.c.h.b16 %v2051
    %v3045 = vunpack.c.l.b16 %v2052
    %v3046 = vunpack.c.h.b16 %v2052
    %v3047 = vunpack.c.l.b16 %v2053
    %v3048 = vunpack.c.h.b16 %v2053
    %v3049 = vunpack.c.l.b16 %v2054
    %v3050 = vunpack.c.h.b16 %v2054
    %v3051 = vunpack.c.l.b16 %v2055
    %v3052 = vunpack.c.h.b16 %v2055
    %v3053 = vunpack.c.l.b16 %v2056
    %v3054 = vunpack.c.h.b16 %v2056
    %v3055 = vunpack.c.l.b16 %v2057
    %v3056 = vunpack.c.h.b16 %v2057
    %v3057 = vunpack.c.l.b16 %v2058
    %v3058 = vunpack.c.h.b16 %v2058
    %v3059 = vunpack.c.l.b16 %v2059
    %v3060 = vunpack.c.h.b16 %v2059
    %v3061 = vunpack.c.l.b16 %v2060
    %v3062 = vunpack.c.h.b16 %v2060
    %v3063 = vunpack.c.l.b16 %v2061
    %v3064 = vunpack.c.h.b16 %v2061
    %v3065 = vunpack.c.l.b16 %v2062
    %v3066 = vunpack.c.h.b16 %v2062
    %v3067 = vunpack.c.l.b16 %v2063
    %v3068 = vunpack.c.h.b16 %v2063
    %v3069 = vunpack.c.l.b16 %v2064
    %v3070 = vunpack.c.h.b16 %v2064
    %v3071 = vunpack.c.l.b16 %v2065
    %v3072 = vunpack.c.h.b16 %v2065
    %v3073 = vunpack.c.l.b16 %v2066
    %v3074 = vunpack.c.h.b16 %v2066
    %v3075 = vunpack.c.l.b16 %v2067
    %v3076 = vunpack.c.h.b16 %v2067
    %v3077 = vunpack.c.l.b16 %v2068
    %v3078 = vunpack.c.h.b16 %v2068
    %v3079 = vunpack.c.l.b16 %v2069
    %v3080 = vunpack.c.h.b16 %v2069
    %v3081 = vunpack.c.l.b16 %v2070
    %v3082 = vunpack.c.h.b16 %v2070
    %v3083 = vunpack.c.l.b16 %v2071
    %v3084 = vunpack.c.h.b16 %v2071
    %v3085 = vunpack.c.l.b16 %v2072
    %v3086 = vunpack.c.h.b16 %v2072
    %v3087 = vunpack.c.l.b16 %v2073
    %v3088 = vunpack.c.h.b16 %v2073
    %v3089 = vunpack.c.l.b16 %v2074
    %v3090 = vunpack.c.h.b16 %v2074
    %v3091 = vunpack.c.l.b16 %v2075
    %v3092 = vunpack.c.h.b16 %v2075
    %v3093 = vunpack.c.l.b16 %v2076
    %v3094 = vunpack.c.h.b16 %v2076
    %v3095 = vunpack.c.l.b16 %v2077
    %v3096 = vunpack.c.h.b16 %v2077
    %v3097 = vunpack.c.l.b16 %v2078
    %v3098 = vunpack.c.h.b16 %v2078
    %v3099 = vunpack.c.l.b16 %v2079
    %v3100 = vunpack.c.h.b16 %v2079
    %v3101 = vunpack.c.l.b16 %v2080
    %v3102 = vunpack.c.h.b16 %v2080
    %v3103 = vunpack.c.l.b16 %v2081
    %v3104 = vunpack.c.h.b16 %v2081
    %v3105 = vunpack.c.l.b16 %v2082
    %v3106 = vunpack.c.h.b16 %v2082
    %v3107 = vunpack.c.l.b16 %v2083
    %v3108 = vunpack.c.h.b16 %v2083
    %v3109 = vunpack.c.l.b16 %v2084
    %v3110 = vunpack.c.h.b16 %v2084
    %v3111 = vunpack.c.l.b16 %v2085
    %v3112 = vunpack.c.h.b16 %v2085
    %v3113 = vunpack.c.l.b16 %v2086
    %v3114 = vunpack.c.h.b16 %v2086
    %v3115 = vunpack.c.l.b16 %v2087
    %v3116 = vunpack.c.h.b16 %v2087
    %v3117 = vunpack.c.l.b16 %v2088
    %v3118 = vunpack.c.h.b16 %v2088
    %v3119 = vunpack.c.l.b16 %v2089
    %v3120 = vunpack.c.h.b16 %v2089
    %v3121 = vunpack.c.l.b16 %v2090
    %v3122 = vunpack.c.h.b16 %v2090
    %v3123 = vunpack.c.l.b16 %v2091
    %v3124 = vunpack.c.h.b16 %v2091
    %v3125 = vunpack.c.l.b16 %v2092
    %v3126 = vunpack.c.h.b16 %v2092
    %v3127 = vunpack.c.l.b16 %v2093
    %v3128 = vunpack.c.h.b16 %v2093
    %v3129 = vunpack.c.l.b16 %v2094
    %v3130 = vunpack.c.h.b16 %v2094
    %v3131 = vunpack.c.l.b16 %v2095
    %v3132 = vunpack.c.h.b16 %v2095
    %v3133 = vunpack.c.l.b16 %v2096
    %v3134 = vunpack.c.h.b16 %v2096
    %v3135 = vunpack.c.l.b16 %v2097
    %v3136 = vunpack.c.h.b16 %v2097
    %v3137 = vunpack.c.l.b16 %v2098
    %v3138 = vunpack.c.h.b16 %v2098
    %v3139 = vunpack.c.l.b16 %v2099
    %v3140 = vunpack.c.h.b16 %v2099
    %v3141 = vunpack.c.l.b16 %v2100
    %v3142 = vunpack.c.h.b16 %v2100
    %v3143 = vunpack.c.l.b16 %v2101
    %v3144 = vunpack.c.h.b16 %v2101
    %v3145 = vunpack.c.l.b16 %v2102
    %v3146 = vunpack.c.h.b16 %v2102
    %v3147 = vunpack.c.l.b16 %v2103
    %v3148 = vunpack.c.h.b16 %v2103
    %v3149 = vunpack.c.l.b16 %v2104
    %v3150 = vunpack.c.h.b16 %v2104
    %v3151 = vunpack.c.l.b16 %v2105
    %v3152 = vunpack.c.h.b16 %v2105
    %v3153 = vunpack.c.l.b16 %v2106
    %v3154 = vunpack.c.h.b16 %v2106
    %v3155 = vunpack.c.l.b16 %v2107
    %v3156 = vunpack.c.h.b16 %v2107
    %v3157 = vunpack.c.l.b16 %v2108
    %v3158 = vunpack.c.h.b16 %v2108
    %v3159 = vunpack.c.l.b16 %v2109
    %v3160 = vunpack.c.h.b16 %v2109
    %v3161 = vunpack.c.l.b16 %v2110
    %v3162 = vunpack.c.h.b16 %v2110
    %v3163 = vunpack.c.l.b16 %v2111
    %v3164 = vunpack.c.h.b16 %v2111
    %v3165 = vunpack.c.l.b16 %v2112
    %v3166 = vunpack.c.h.b16 %v2112
    %v3167 = vunpack.c.l.b16 %v2113
    %v3168 = vunpack.c.h.b16 %v2113
    %v3169 = vunpack.c.l.b16 %v2114
    %v3170 = vunpack.c.h.b16 %v2114
    %v3171 = vunpack.c.l.b16 %v2115
    %v3172 = vunpack.c.h.b16 %v2115
    %v3173 = vunpack.c.l.b16 %v2116
    %v3174 = vunpack.c.h.b16 %v2116
    %v3175 = vunpack.c.l.b16 %v2117
    %v3176 = vunpack.c.h.b16 %v2117
    %v3177 = vunpack.c.l.b16 %v2118
    %v3178 = vunpack.c.h.b16 %v2118
    %v3179 = vunpack.c.l.b16 %v2119
    %v3180 = vunpack.c.h.b16 %v2119
    %v3181 = vunpack.c.l.b16 %v2120
    %v3182 = vunpack.c.h.b16 %v2120
    %v3183 = vunpack.c.l.b16 %v2121
    %v3184 = vunpack.c.h.b16 %v2121
    %v3185 = vunpack.c.l.b16 %v2122
    %v3186 = vunpack.c.h.b16 %v2122
    %v3187 = vunpack.c.l.b16 %v2123
    %v3188 = vunpack.c.h.b16 %v2123
    %v3189 = vunpack.c.l.b16 %v2124
    %v3190 = vunpack.c.h.b16 %v2124
    %v3191 = vunpack.c.l.b16 %v2125
    %v3192 = vunpack.c.h.b16 %v2125
    %v3193 = vunpack.c.l.b16 %v2126
    %v3194 = vunpack.c.h.b16 %v2126
    %v3195 = vunpack.c.l.b16 %v2127
    %v3196 = vunpack.c.h.b16 %v2127
    %v3197 = vunpack.c.l.b16 %v2128
    %v3198 = vunpack.c.h.b16 %v2128
    %v3199 = vunpack.c.l.b16 %v2129
    %v3200 = vunpack.c.h.b16 %v2129
    %v3201 = vunpack.c.l.b16 %v2130
    %v3202 = vunpack.c.h.b16 %v2130
    %v3203 = vunpack.c.l.b16 %v2131
    %v3204 = vunpack.c.h.b16 %v2131
    %v3205 = vunpack.c.l.b16 %v2132
    %v3206 = vunpack.c.h.b16 %v2132
    %v3207 = vunpack.c.l.b16 %v2133
    %v3208 = vunpack.c.h.b16 %v2133
    %v3209 = vunpack.c.l.b16 %v2134
    %v3210 = vunpack.c.h.b16 %v2134
    %v3211 = vunpack.c.l.b16 %v2135
    %v3212 = vunpack.c.h.b16 %v2135
    %v3213 = vunpack.c.l.b16 %v2136
    %v3214 = vunpack.c.h.b16 %v2136
    %v3215 = vunpack.c.l.b16 %v2137
    %v3216 = vunpack.c.h.b16 %v2137
    %v3217 = vunpack.c.l.b16 %v2138
    %v3218 = vunpack.c.h.b16 %v2138
    %v3219 = vunpack.c.l.b16 %v2139
    %v3220 = vunpack.c.h.b16 %v2139
    %v3221 = vunpack.c.l.b16 %v2140
    %v3222 = vunpack.c.h.b16 %v2140
    %v3223 = vunpack.c.l.b16 %v2141
    %v3224 = vunpack.c.h.b16 %v2141
    %v3225 = vunpack.c.l.b16 %v2142
    %v3226 = vunpack.c.h.b16 %v2142
    %v3227 = vunpack.c.l.b16 %v2143
    %v3228 = vunpack.c.h.b16 %v2143
    %v3229 = vunpack.c.l.b16 %v2144
    %v3230 = vunpack.c.h.b16 %v2144
    %v3231 = vunpack.c.l.b16 %v2145
    %v3232 = vunpack.c.h.b16 %v2145
    %v3233 = vunpack.c.l.b16 %v2146
    %v3234 = vunpack.c.h.b16 %v2146
    %v3235 = vunpack.c.l.b16 %v2147
    %v3236 = vunpack.c.h.b16 %v2147
    %v3237 = vunpack.c.l.b16 %v2148
    %v3238 = vunpack.c.h.b16 %v2148
    %v3239 = vunpack.c.l.b16 %v2149
    %v3240 = vunpack.c.h.b16 %v2149
    %v3241 = vunpack.c.l.b16 %v2150
    %v3242 = vunpack.c.h.b16 %v2150
    %v3243 = vunpack.c.l.b16 %v2151
    %v3244 = vunpack.c.h.b16 %v2151
    %v3245 = vunpack.c.l.b16 %v2152
    %v3246 = vunpack.c.h.b16 %v2152
    %v3247 = vunpack.c.l.b16 %v2153
    %v3248 = vunpack.c.h.b16 %v2153
    %v3249 = vunpack.c.l.b16 %v2154
    %v3250 = vunpack.c.h.b16 %v2154
    %v3251 = vunpack.c.l.b16 %v2155
    %v3252 = vunpack.c.h.b16 %v2155
    %v3253 = vunpack.c.l.b16 %v2156
    %v3254 = vunpack.c.h.b16 %v2156
    %v3255 = vunpack.c.l.b16 %v2157
    %v3256 = vunpack.c.h.b16 %v2157
    %v3257 = vunpack.c.l.b16 %v2158
    %v3258 = vunpack.c.h.b16 %v2158
    %v3259 = vunpack.c.l.b16 %v2159
    %v3260 = vunpack.c.h.b16 %v2159
    %v3261 = vunpack.c.l.b16 %v2160
    %v3262 = vunpack.c.h.b16 %v2160
    %v3263 = vunpack.c.l.b16 %v2161
    %v3264 = vunpack.c.h.b16 %v2161
    %v3265 = vunpack.c.l.b16 %v2162
    %v3266 = vunpack.c.h.b16 %v2162
    %v3267 = vunpack.c.l.b16 %v2163
    %v3268 = vunpack.c.h.b16 %v2163
    %v3269 = vunpack.c.l.b16 %v2164
    %v3270 = vunpack.c.h.b16 %v2164
    %v3271 = vunpack.c.l.b16 %v2165
    %v3272 = vunpack.c.h.b16 %v2165
    %v3273 = vunpack.c.l.b16 %v2166
    %v3274 = vunpack.c.h.b16 %v2166
    %v3275 = vunpack.c.l.b16 %v2167
    %v3276 = vunpack.c.h.b16 %v2167
    %v3277 = vunpack.c.l.b16 %v2168
    %v3278 = vunpack.c.h.b16 %v2168
    %v3279 = vunpack.c.l.b16 %v2169
    %v3280 = vunpack.c.h.b16 %v2169
    %v3281 = vunpack.c.l.b16 %v2170
    %v3282 = vunpack.c.h.b16 %v2170
    %v3283 = vunpack.c.l.b16 %v2171
    %v3284 = vunpack.c.h.b16 %v2171
    %v3285 = vunpack.c.l.b16 %v2172
    %v3286 = vunpack.c.h.b16 %v2172
    %v3287 = vunpack.c.l.b16 %v2173
    %v3288 = vunpack.c.h.b16 %v2173
    %v3289 = vunpack.c.l.b16 %v2174
    %v3290 = vunpack.c.h.b16 %v2174
    %v3291 = vunpack.c.l.b16 %v2175
    %v3292 = vunpack.c.h.b16 %v2175
    %v3293 = vunpack.c.l.b16 %v2176
    %v3294 = vunpack.c.h.b16 %v2176
    %v3295 = vunpack.c.l.b16 %v2177
    %v3296 = vunpack.c.h.b16 %v2177
    %v3297 = vunpack.c.l.b16 %v2178
    %v3298 = vunpack.c.h.b16 %v2178
    %v3299 = vunpack.c.l.b16 %v2179
    %v3300 = vunpack.c.h.b16 %v2179
    %v3301 = vunpack.c.l.b16 %v2180
    %v3302 = vunpack.c.h.b16 %v2180
    %v3303 = vunpack.c.l.b16 %v2181
    %v3304 = vunpack.c.h.b16 %v2181
    %v3305 = vunpack.c.l.b16 %v2182
    %v3306 = vunpack.c.h.b16 %v2182
    %v3307 = vunpack.c.l.b16 %v2183
    %v3308 = vunpack.c.h.b16 %v2183
    %v3309 = vunpack.c.l.b16 %v2184
    %v3310 = vunpack.c.h.b16 %v2184
    %v3311 = vunpack.c.l.b16 %v2185
    %v3312 = vunpack.c.h.b16 %v2185
    %v3313 = vunpack.c.l.b16 %v2186
    %v3314 = vunpack.c.h.b16 %v2186
    %v3315 = vunpack.c.l.b16 %v2187
    %v3316 = vunpack.c.h.b16 %v2187
    %v3317 = vunpack.c.l.b16 %v2188
    %v3318 = vunpack.c.h.b16 %v2188
    %v3319 = vunpack.c.l.b16 %v2189
    %v3320 = vunpack.c.h.b16 %v2189
    %v3321 = vunpack.c.l.b16 %v2190
    %v3322 = vunpack.c.h.b16 %v2190
    %v3323 = vunpack.c.l.b16 %v2191
    %v3324 = vunpack.c.h.b16 %v2191
    %v3325 = vunpack.c.l.b16 %v2192
    %v3326 = vunpack.c.h.b16 %v2192
    %v3327 = vunpack.c.l.b16 %v2193
    %v3328 = vunpack.c.h.b16 %v2193
    %v3329 = vunpack.c.l.b16 %v2194
    %v3330 = vunpack.c.h.b16 %v2194
    %v3331 = vunpack.c.l.b16 %v2195
    %v3332 = vunpack.c.h.b16 %v2195
    %v3333 = vunpack.c.l.b16 %v2196
    %v3334 = vunpack.c.h.b16 %v2196
    %v3335 = vunpack.c.l.b16 %v2197
    %v3336 = vunpack.c.h.b16 %v2197
    %v3337 = vunpack.c.l.b16 %v2198
    %v3338 = vunpack.c.h.b16 %v2198
    %v3339 = vunpack.c.l.b16 %v2199
    %v3340 = vunpack.c.h.b16 %v2199
    %v3341 = vunpack.c.l.b16 %v2200
    %v3342 = vunpack.c.h.b16 %v2200
    %v3343 = vunpack.c.l.b16 %v2201
    %v3344 = vunpack.c.h.b16 %v2201
    %v3345 = vunpack.c.l.b16 %v2202
    %v3346 = vunpack.c.h.b16 %v2202
    %v3347 = vunpack.c.l.b16 %v2203
    %v3348 = vunpack.c.h.b16 %v2203
    %v3349 = vunpack.c.l.b16 %v2204
    %v3350 = vunpack.c.h.b16 %v2204
    %v3351 = vunpack.c.l.b16 %v2205
    %v3352 = vunpack.c.h.b16 %v2205
    %v3353 = vunpack.c.l.b16 %v2206
    %v3354 = vunpack.c.h.b16 %v2206
    %v3355 = vunpack.c.l.b16 %v2207
    %v3356 = vunpack.c.h.b16 %v2207
    %v3357 = vunpack.c.l.b16 %v2208
    %v3358 = vunpack.c.h.b16 %v2208
    %v3359 = vunpack.c.l.b16 %v2209
    %v3360 = vunpack.c.h.b16 %v2209
    %v3361 = vunpack.c.l.b16 %v2210
    %v3362 = vunpack.c.h.b16 %v2210
    %v3363 = vunpack.c.l.b16 %v2211
    %v3364 = vunpack.c.h.b16 %v2211
    %v3365 = vunpack.c.l.b16 %v2212
    %v3366 = vunpack.c.h.b16 %v2212
    %v3367 = vunpack.c.l.b16 %v2213
    %v3368 = vunpack.c.h.b16 %v2213
    %v3369 = vunpack.c.l.b16 %v2214
    %v3370 = vunpack.c.h.b16 %v2214
    %v3371 = vunpack.c.l.b16 %v2215
    %v3372 = vunpack.c.h.b16 %v2215
    %v3373 = vunpack.c.l.b16 %v2216
    %v3374 = vunpack.c.h.b16 %v2216
    %v3375 = vunpack.c.l.b16 %v2217
    %v3376 = vunpack.c.h.b16 %v2217
    %v3377 = vunpack.c.l.b16 %v2218
    %v3378 = vunpack.c.h.b16 %v2218
    %v3379 = vunpack.c.l.b16 %v2219
    %v3380 = vunpack.c.h.b16 %v2219
    %v3381 = vunpack.c.l.b16 %v2220
    %v3382 = vunpack.c.h.b16 %v2220
    %v3383 = vunpack.c.l.b16 %v2221
    %v3384 = vunpack.c.h.b16 %v2221
    %v3385 = vunpack.c.l.b16 %v2222
    %v3386 = vunpack.c.h.b16 %v2222
    %v3387 = vunpack.c.l.b16 %v2223
    %v3388 = vunpack.c.h.b16 %v2223
    %v3389 = vunpack.c.l.b16 %v2224
    %v3390 = vunpack.c.h.b16 %v2224
    %v3391 = vunpack.c.l.b16 %v2225
    %v3392 = vunpack.c.h.b16 %v2225
    %v3393 = vunpack.c.l.b16 %v2226
    %v3394 = vunpack.c.h.b16 %v2226
    %v3395 = vunpack.c.l.b16 %v2227
    %v3396 = vunpack.c.h.b16 %v2227
    %v3397 = vunpack.c.l.b16 %v2228
    %v3398 = vunpack.c.h.b16 %v2228
    %v3399 = vunpack.c.l.b16 %v2229
    %v3400 = vunpack.c.h.b16 %v2229
    %v3401 = vunpack.c.l.b16 %v2230
    %v3402 = vunpack.c.h.b16 %v2230
    %v3403 = vunpack.c.l.b16 %v2231
    %v3404 = vunpack.c.h.b16 %v2231
    %v3405 = vunpack.c.l.b16 %v2232
    %v3406 = vunpack.c.h.b16 %v2232
    %v3407 = vunpack.c.l.b16 %v2233
    %v3408 = vunpack.c.h.b16 %v2233
    %v3409 = vunpack.c.l.b16 %v2234
    %v3410 = vunpack.c.h.b16 %v2234
    %v3411 = vunpack.c.l.b16 %v2235
    %v3412 = vunpack.c.h.b16 %v2235
    %v3413 = vunpack.c.l.b16 %v2236
    %v3414 = vunpack.c.h.b16 %v2236
    %v3415 = vunpack.c.l.b16 %v2237
    %v3416 = vunpack.c.h.b16 %v2237
    %v3417 = vunpack.c.l.b16 %v2238
    %v3418 = vunpack.c.h.b16 %v2238
    %v3419 = vunpack.c.l.b16 %v2239
    %v3420 = vunpack.c.h.b16 %v2239
    %v3421 = vunpack.c.l.b16 %v2240
    %v3422 = vunpack.c.h.b16 %v2240
    %v3423 = vunpack.c.l.b16 %v2241
    %v3424 = vunpack.c.h.b16 %v2241
    %v3425 = vunpack.c.l.b16 %v2242
    %v3426 = vunpack.c.h.b16 %v2242
    %v3427 = vunpack.c.l.b16 %v2243
    %v3428 = vunpack.c.h.b16 %v2243
    %v3429 = vunpack.c.l.b16 %v2244
    %v3430 = vunpack.c.h.b16 %v2244
    %v3431 = vunpack.c.l.b16 %v2245
    %v3432 = vunpack.c.h.b16 %v2245
    %v3433 = vunpack.c.l.b16 %v2246
    %v3434 = vunpack.c.h.b16 %v2246
    %v3435 = vunpack.c.l.b16 %v2247
    %v3436 = vunpack.c.h.b16 %v2247
    %v3437 = vunpack.c.l.b16 %v2248
    %v3438 = vunpack.c.h.b16 %v2248
    %v3439 = vunpack.c.l.b16 %v2249
    %v3440 = vunpack.c.h.b16 %v2249
    %v3441 = vunpack.c.l.b16 %v2250
    %v3442 = vunpack.c.h.b16 %v2250
    %v3443 = vunpack.c.l.b16 %v2251
    %v3444 = vunpack.c.h.b16 %v2251
    %v3445 = vunpack.c.l.b16 %v2252
    %v3446 = vunpack.c.h.b16 %v2252
    %v3447 = vunpack.c.l.b16 %v2253
    %v3448 = vunpack.c.h.b16 %v2253
    %v3449 = vunpack.c.l.b16 %v2254
    %v3450 = vunpack.c.h.b16 %v2254
    %v3451 = vunpack.c.l.b16 %v2255
    %v3452 = vunpack.c.h.b16 %v2255
    %v3453 = vunpack.c.l.b16 %v2256
    %v3454 = vunpack.c.h.b16 %v2256
    %v3455 = vunpack.c.l.b16 %v2257
    %v3456 = vunpack.c.h.b16 %v2257
    %v3457 = vunpack.c.l.b16 %v2258
    %v3458 = vunpack.c.h.b16 %v2258
    %v3459 = vunpack.c.l.b16 %v2259
    %v3460 = vunpack.c.h.b16 %v2259
    %v3461 = vunpack.c.l.b16 %v2260
    %v3462 = vunpack.c.h.b16 %v2260
    %v3463 = vunpack.c.l.b16 %v2261
    %v3464 = vunpack.c.h.b16 %v2261
    %v3465 = vunpack.c.l.b16 %v2262
    %v3466 = vunpack.c.h.b16 %v2262
    %v3467 = vunpack.c.l.b16 %v2263
    %v3468 = vunpack.c.h.b16 %v2263
    %v3469 = vunpack.c.l.b16 %v2264
    %v3470 = vunpack.c.h.b16 %v2264
    %v3471 = vunpack.c.l.b16 %v2265
    %v3472 = vunpack.c.h.b16 %v2265
    %v3473 = vunpack.c.l.b16 %v2266
    %v3474 = vunpack.c.h.b16 %v2266
    %v3475 = vunpack.c.l.b16 %v2267
    %v3476 = vunpack.c.h.b16 %v2267
    %v3477 = vunpack.c.l.b16 %v2268
    %v3478 = vunpack.c.h.b16 %v2268
    %v3479 = vunpack.c.l.b16 %v2269
    %v3480 = vunpack.c.h.b16 %v2269
    %v3481 = vunpack.c.l.b16 %v2270
    %v3482 = vunpack.c.h.b16 %v2270
    %v3483 = vunpack.c.l.b16 %v2271
    %v3484 = vunpack.c.h.b16 %v2271
    %v3485 = vunpack.c.l.b16 %v2272
    %v3486 = vunpack.c.h.b16 %v2272
    %v3487 = vunpack.c.l.b16 %v2273
    %v3488 = vunpack.c.h.b16 %v2273
    %v3489 = vunpack.c.l.b16 %v2274
    %v3490 = vunpack.c.h.b16 %v2274
    %v3491 = vunpack.c.l.b16 %v2275
    %v3492 = vunpack.c.h.b16 %v2275
    %v3493 = vunpack.c.l.b16 %v2276
    %v3494 = vunpack.c.h.b16 %v2276
    %v3495 = vunpack.c.l.b16 %v2277
    %v3496 = vunpack.c.h.b16 %v2277
    %v3497 = vunpack.c.l.b16 %v2278
    %v3498 = vunpack.c.h.b16 %v2278
    %v3499 = vunpack.c.l.b16 %v2279
    %v3500 = vunpack.c.h.b16 %v2279
    %v3501 = vunpack.c.l.b16 %v2280
    %v3502 = vunpack.c.h.b16 %v2280
    %v3503 = vunpack.c.l.b16 %v2281
    %v3504 = vunpack.c.h.b16 %v2281
    %v3505 = vunpack.c.l.b16 %v2282
    %v3506 = vunpack.c.h.b16 %v2282
    %v3507 = vunpack.c.l.b16 %v2283
    %v3508 = vunpack.c.h.b16 %v2283
    %v3509 = vunpack.c.l.b16 %v2284
    %v3510 = vunpack.c.h.b16 %v2284
    %v3511 = vunpack.c.l.b16 %v2285
    %v3512 = vunpack.c.h.b16 %v2285
    %v3513 = vunpack.c.l.b16 %v2286
    %v3514 = vunpack.c.h.b16 %v2286
    %v3515 = vunpack.c.l.b16 %v2287
    %v3516 = vunpack.c.h.b16 %v2287
    %v3517 = vunpack.c.l.b16 %v2288
    %v3518 = vunpack.c.h.b16 %v2288
    %v3519 = vunpack.c.l.b16 %v2289
    %v3520 = vunpack.c.h.b16 %v2289
    %v3521 = vunpack.c.l.b16 %v2290
    %v3522 = vunpack.c.h.b16 %v2290
    %v3523 = vunpack.c.l.b16 %v2291
    %v3524 = vunpack.c.h.b16 %v2291
    %v3525 = vunpack.c.l.b16 %v2292
    %v3526 = vunpack.c.h.b16 %v2292
    %v3527 = vunpack.c.l.b16 %v2293
    %v3528 = vunpack.c.h.b16 %v2293
    %v3529 = vunpack.c.l.b16 %v2294
    %v3530 = vunpack.c.h.b16 %v2294
    %v3531 = vunpack.c.l.b16 %v2295
    %v3532 = vunpack.c.h.b16 %v2295
    %v3533 = vunpack.c.l.b16 %v2296
    %v3534 = vunpack.c.h.b16 %v2296
    %v3535 = vunpack.c.l.b16 %v2297
    %v3536 = vunpack.c.h.b16 %v2297
    %v3537 = vunpack.c.l.b16 %v2298
    %v3538 = vunpack.c.h.b16 %v2298
    %v3539 = vunpack.c.l.b16 %v2299
    %v3540 = vunpack.c.h.b16 %v2299
    %v3541 = vunpack.c.l.b16 %v2300
    %v3542 = vunpack.c.h.b16 %v2300
    %v3543 = vunpack.c.l.b16 %v2301
    %v3544 = vunpack.c.h.b16 %v2301
    %v3545 = vunpack.c.l.b16 %v2302
    %v3546 = vunpack.c.h.b16 %v2302
    %v3547 = vunpack.c.l.b16 %v2303
    %v3548 = vunpack.c.h.b16 %v2303
    %v3549 = vunpack.c.l.b16 %v2304
    %v3550 = vunpack.c.h.b16 %v2304
    %v3551 = vunpack.c.l.b16 %v2305
    %v3552 = vunpack.c.h.b16 %v2305
    %v3553 = vunpack.c.l.b16 %v2306
    %v3554 = vunpack.c.h.b16 %v2306
    %v3555 = vunpack.c.l.b16 %v2307
    %v3556 = vunpack.c.h.b16 %v2307
    %v3557 = vunpack.c.l.b16 %v2308
    %v3558 = vunpack.c.h.b16 %v2308
    %v3559 = vunpack.c.l.b16 %v2309
    %v3560 = vunpack.c.h.b16 %v2309
    %v3561 = vunpack.c.l.b16 %v2310
    %v3562 = vunpack.c.h.b16 %v2310
    %v3563 = vunpack.c.l.b16 %v2311
    %v3564 = vunpack.c.h.b16 %v2311
    %v3565 = vunpack.c.l.b16 %v2312
    %v3566 = vunpack.c.h.b16 %v2312
    %v3567 = vpack.c.b16 %v2777, %v2767
    %v3568 = vpack.c.b16 %v2778, %v2768
    %v3569 = vpack.c.b16 %v2779, %v2769
    %v3570 = vpack.c.b16 %v2780, %v2770
    %v3571 = vpack.c.b16 %v2781, %v2771
    %v3572 = vpack.c.b16 %v2782, %v2772
    %v3573 = vpack.c.b16 %v2783, %v2773
    %v3574 = vpack.c.b16 %v2784, %v2774
    %v3575 = vpack.c.b16 %v2785, %v2775
    %v3576 = vpack.c.b16 %v2786, %v2776
    %v3577 = vpack.c.b16 %v2797, %v2787
    %v3578 = vpack.c.b16 %v2798, %v2788
    %v3579 = vpack.c.b16 %v2799, %v2789
    %v3580 = vpack.c.b16 %v2800, %v2790
    %v3581 = vpack.c.b16 %v2801, %v2791
    %v3582 = vpack.c.b16 %v2802, %v2792
    %v3583 = vpack.c.b16 %v2803, %v2793
    %v3584 = vpack.c.b16 %v2804, %v2794
    %v3585 = vpack.c.b16 %v2805, %v2795
    %v3586 = vpack.c.b16 %v2806, %v2796
    %v3587 = vpack.c.b16 %v2817, %v2807
    %v3588 = vpack.c.b16 %v2818, %v2808
    %v3589 = vpack.c.b16 %v2819, %v2809
    %v3590 = vpack.c.b16 %v2820, %v2810
    %v3591 = vpack.c.b16 %v2821, %v2811
    %v3592 = vpack.c.b16 %v2822, %v2812
    %v3593 = vpack.c.b16 %v2823, %v2813
    %v3594 = vpack.c.b16 %v2824, %v2814
    %v3595 = vpack.c.b16 %v2825, %v2815
    %v3596 = vpack.c.b16 %v2826, %v2816
    %v3597 = vpack.c.b16 %v2837, %v2827
    %v3598 = vpack.c.b16 %v2838, %v2828
    %v3599 = vpack.c.b16 %v2839, %v2829
    %v3600 = vpack.c.b16 %v2840, %v2830
    %v3601 = vpack.c.b16 %v2841, %v2831
    %v3602 = vpack.c.b16 %v2842, %v2832
    %v3603 = vpack.c.b16 %v2843, %v2833
    %v3604 = vpack.c.b16 %v2844, %v2834
    %v3605 = vpack.c.b16 %v2845, %v2835
    %v3606 = vpack.c.b16 %v2846, %v2836
    %v3607 = vpack.c.b16 %v2857, %v2847
    %v3608 = vpack.c.b16 %v2858, %v2848
    %v3609 = vpack.c.b16 %v2859, %v2849
    %v3610 = vpack.c.b16 %v2860, %v2850
    %v3611 = vpack.c.b16 %v2861, %v2851
    %v3612 = vpack.c.b16 %v2862, %v2852
    %v3613 = vpack.c.b16 %v2863, %v2853
    %v3614 = vpack.c.b16 %v2864, %v2854
    %v3615 = vpack.c.b16 %v2865, %v2855
    %v3616 = vpack.c.b16 %v2866, %v2856
    %v3617 = vpack.c.b16 %v2877, %v2867
    %v3618 = vpack.c.b16 %v2878, %v2868
    %v3619 = vpack.c.b16 %v2879, %v2869
    %v3620 = vpack.c.b16 %v2880, %v2870
    %v3621 = vpack.c.b16 %v2881, %v2871
    %v3622 = vpack.c.b16 %v2882, %v2872
    %v3623 = vpack.c.b16 %v2883, %v2873
    %v3624 = vpack.c.b16 %v2884, %v2874
    %v3625 = vpack.c.b16 %v2885, %v2875
    %v3626 = vpack.c.b16 %v2886, %v2876
    %v3627 = vpack.c.b16 %v2897, %v2887
    %v3628 = vpack.c.b16 %v2898, %v2888
    %v3629 = vpack.c.b16 %v2899, %v2889
    %v3630 = vpack.c.b16 %v2900, %v2890
    %v3631 = vpack.c.b16 %v2901, %v2891
    %v3632 = vpack.c.b16 %v2902, %v2892
    %v3633 = vpack.c.b16 %v2903, %v2893
    %v3634 = vpack.c.b16 %v2904, %v2894
    %v3635 = vpack.c.b16 %v2905, %v2895
    %v3636 = vpack.c.b16 %v2906, %v2896
    %v3637 = vpack.c.b16 %v2917, %v2907
    %v3638 = vpack.c.b16 %v2918, %v2908
    %v3639 = vpack.c.b16 %v2919, %v2909
    %v3640 = vpack.c.b16 %v2920, %v2910
    %v3641 = vpack.c.b16 %v2921, %v2911
    %v3642 = vpack.c.b16 %v2922, %v2912
    %v3643 = vpack.c.b16 %v2923, %v2913
    %v3644 = vpack.c.b16 %v2924, %v2914
    %v3645 = vpack.c.b16 %v2925, %v2915
    %v3646 = vpack.c.b16 %v2926, %v2916
    %v3647 = vpack.c.b16 %v2937, %v2927
    %v3648 = vpack.c.b16 %v2938, %v2928
    %v3649 = vpack.c.b16 %v2939, %v2929
    %v3650 = vpack.c.b16 %v2940, %v2930
    %v3651 = vpack.c.b16 %v2941, %v2931
    %v3652 = vpack.c.b16 %v2942, %v2932
    %v3653 = vpack.c.b16 %v2943, %v2933
    %v3654 = vpack.c.b16 %v2944, %v2934
    %v3655 = vpack.c.b16 %v2945, %v2935
    %v3656 = vpack.c.b16 %v2946, %v2936
    %v3657 = vpack.c.b16 %v2957, %v2947
    %v3658 = vpack.c.b16 %v2958, %v2948
    %v3659 = vpack.c.b16 %v2959, %v2949
    %v3660 = vpack.c.b16 %v2960, %v2950
    %v3661 = vpack.c.b16 %v2961, %v2951
    %v3662 = vpack.c.b16 %v2962, %v2952
    %v3663 = vpack.c.b16 %v2963, %v2953
    %v3664 = vpack.c.b16 %v2964, %v2954
    %v3665 = vpack.c.b16 %v2965, %v2955
    %v3666 = vpack.c.b16 %v2966, %v2956
    %v3667 = vpack.c.b16 %v2977, %v2967
    %v3668 = vpack.c.b16 %v2978, %v2968
    %v3669 = vpack.c.b16 %v2979, %v2969
    %v3670 = vpack.c.b16 %v2980, %v2970
    %v3671 = vpack.c.b16 %v2981, %v2971
    %v3672 = vpack.c.b16 %v2982, %v2972
    %v3673 = vpack.c.b16 %v2983, %v2973
    %v3674 = vpack.c.b16 %v2984, %v2974
    %v3675 = vpack.c.b16 %v2985, %v2975
    %v3676 = vpack.c.b16 %v2986, %v2976
    %v3677 = vpack.c.b16 %v2997, %v2987
    %v3678 = vpack.c.b16 %v2998, %v2988
    %v3679 = vpack.c.b16 %v2999, %v2989
    %v3680 = vpack.c.b16 %v3000, %v2990
    %v3681 = vpack.c.b16 %v3001, %v2991
    %v3682 = vpack.c.b16 %v3002, %v2992
    %v3683 = vpack.c.b16 %v3003, %v2993
    %v3684 = vpack.c.b16 %v3004, %v2994
    %v3685 = vpack.c.b16 %v3005, %v2995
    %v3686 = vpack.c.b16 %v3006, %v2996
    %v3687 = vpack.c.b16 %v3017, %v3007
    %v3688 = vpack.c.b16 %v3018, %v3008
    %v3689 = vpack.c.b16 %v3019, %v3009
    %v3690 = vpack.c.b16 %v3020, %v3010
    %v3691 = vpack.c.b16 %v3021, %v3011
    %v3692 = vpack.c.b16 %v3022, %v3012
    %v3693 = vpack.c.b16 %v3023, %v3013
    %v3694 = vpack.c.b16 %v3024, %v3014
    %v3695 = vpack.c.b16 %v3025, %v3015
    %v3696 = vpack.c.b16 %v3026, %v3016
    %v3697 = vpack.c.b16 %v3037, %v3027
    %v3698 = vpack.c.b16 %v3038, %v3028
    %v3699 = vpack.c.b16 %v3039, %v3029
    %v3700 = vpack.c.b16 %v3040, %v3030
    %v3701 = vpack.c.b16 %v3041, %v3031
    %v3702 = vpack.c.b16 %v3042, %v3032
    %v3703 = vpack.c.b16 %v3043, %v3033
    %v3704 = vpack.c.b16 %v3044, %v3034
    %v3705 = vpack.c.b16 %v3045, %v3035
    %v3706 = vpack.c.b16 %v3046, %v3036
    %v3707 = vpack.c.b16 %v3057, %v3047
    %v3708 = vpack.c.b16 %v3058, %v3048
    %v3709 = vpack.c.b16 %v3059, %v3049
    %v3710 = vpack.c.b16 %v3060, %v3050
    %v3711 = vpack.c.b16 %v3061, %v3051
    %v3712 = vpack.c.b16 %v3062, %v3052
    %v3713 = vpack.c.b16 %v3063, %v3053
    %v3714 = vpack.c.b16 %v3064, %v3054
    %v3715 = vpack.c.b16 %v3065, %v3055
    %v3716 = vpack.c.b16 %v3066, %v3056
    %v3717 = vpack.c.b16 %v3077, %v3067
    %v3718 = vpack.c.b16 %v3078, %v3068
    %v3719 = vpack.c.b16 %v3079, %v3069
    %v3720 = vpack.c.b16 %v3080, %v3070
    %v3721 = vpack.c.b16 %v3081, %v3071
    %v3722 = vpack.c.b16 %v3082, %v3072
    %v3723 = vpack.c.b16 %v3083, %v3073
    %v3724 = vpack.c.b16 %v3084, %v3074
    %v3725 = vpack.c.b16 %v3085, %v3075
    %v3726 = vpack.c.b16 %v3086, %v3076
    %v3727 = vpack.c.b16 %v3097, %v3087
    %v3728 = vpack.c.b16 %v3098, %v3088
    %v3729 = vpack.c.b16 %v3099, %v3089
    %v3730 = vpack.c.b16 %v3100, %v3090
    %v3731 = vpack.c.b16 %v3101, %v3091
    %v3732 = vpack.c.b16 %v3102, %v3092
    %v3733 = vpack.c.b16 %v3103, %v3093
    %v3734 = vpack.c.b16 %v3104, %v3094
    %v3735 = vpack.c.b16 %v3105, %v3095
    %v3736 = vpack.c.b16 %v3106, %v3096
    %v3737 = vpack.c.b16 %v3117, %v3107
    %v3738 = vpack.c.b16 %v3118, %v3108
    %v3739 = vpack.c.b16 %v3119, %v3109
    %v3740 = vpack.c.b16 %v3120, %v3110
    %v3741 = vpack.c.b16 %v3121, %v3111
    %v3742 = vpack.c.b16 %v3122, %v3112
    %v3743 = vpack.c.b16 %v3123, %v3113
    %v3744 = vpack.c.b16 %v3124, %v3114
    %v3745 = vpack.c.b16 %v3125, %v3115
    %v3746 = vpack.c.b16 %v3126, %v3116
    %v3747 = vpack.c.b16 %v3137, %v3127
    %v3748 = vpack.c.b16 %v3138, %v3128
    %v3749 = vpack.c.b16 %v3139, %v3129
    %v3750 = vpack.c.b16 %v3140, %v3130
    %v3751 = vpack.c.b16 %v3141, %v3131
    %v3752 = vpack.c.b16 %v3142, %v3132
    %v3753 = vpack.c.b16 %v3143, %v3133
    %v3754 = vpack.c.b16 %v3144, %v3134
    %v3755 = vpack.c.b16 %v3145, %v3135
    %v3756 = vpack.c.b16 %v3146, %v3136
    %v3757 = vpack.c.b16 %v3157, %v3147
    %v3758 = vpack.c.b16 %v3158, %v3148
    %v3759 = vpack.c.b16 %v3159, %v3149
    %v3760 = vpack.c.b16 %v3160, %v3150
    %v3761 = vpack.c.b16 %v3161, %v3151
    %v3762 = vpack.c.b16 %v3162, %v3152
    %v3763 = vpack.c.b16 %v3163, %v3153
    %v3764 = vpack.c.b16 %v3164, %v3154
    %v3765 = vpack.c.b16 %v3165, %v3155
    %v3766 = vpack.c.b16 %v3166, %v3156
    %v3767 = vpack.c.b16 %v3177, %v3167
    %v3768 = vpack.c.b16 %v3178, %v3168
    %v3769 = vpack.c.b16 %v3179, %v3169
    %v3770 = vpack.c.b16 %v3180, %v3170
    %v3771 = vpack.c.b16 %v3181, %v3171
    %v3772 = vpack.c.b16 %v3182, %v3172
    %v3773 = vpack.c.b16 %v3183, %v3173
    %v3774 = vpack.c.b16 %v3184, %v3174
    %v3775 = vpack.c.b16 %v3185, %v3175
    %v3776 = vpack.c.b16 %v3186, %v3176
    %v3777 = vpack.c.b16 %v3197, %v3187
    %v3778 = vpack.c.b16 %v3198, %v3188
    %v3779 = vpack.c.b16 %v3199, %v3189
    %v3780 = vpack.c.b16 %v3200, %v3190
    %v3781 = vpack.c.b16 %v3201, %v3191
    %v3782 = vpack.c.b16 %v3202, %v3192
    %v3783 = vpack.c.b16 %v3203, %v3193
    %v3784 = vpack.c.b16 %v3204, %v3194
    %v3785 = vpack.c.b16 %v3205, %v3195
    %v3786 = vpack.c.b16 %v3206, %v3196
    %v3787 = vpack.c.b16 %v3217, %v3207
    %v3788 = vpack.c.b16 %v3218, %v3208
    %v3789 = vpack.c.b16 %v3219, %v3209
    %v3790 = vpack.c.b16 %v3220, %v3210
    %v3791 = vpack.c.b16 %v3221, %v3211
    %v3792 = vpack.c.b16 %v3222, %v3212
    %v3793 = vpack.c.b16 %v3223, %v3213
    %v3794 = vpack.c.b16 %v3224, %v3214
    %v3795 = vpack.c.b16 %v3225, %v3215
    %v3796 = vpack.c.b16 %v3226, %v3216
    %v3797 = vpack.c.b16 %v3237, %v3227
    %v3798 = vpack.c.b16 %v3238, %v3228
    %v3799 = vpack.c.b16 %v3239, %v3229
    %v3800 = vpack.c.b16 %v3240, %v3230
    %v3801 = vpack.c.b16 %v3241, %v3231
    %v3802 = vpack.c.b16 %v3242, %v3232
    %v3803 = vpack.c.b16 %v3243, %v3233
    %v3804 = vpack.c.b16 %v3244, %v3234
    %v3805 = vpack.c.b16 %v3245, %v3235
    %v3806 = vpack.c.b16 %v3246, %v3236
    %v3807 = vpack.c.b16 %v3257, %v3247
    %v3808 = vpack.c.b16 %v3258, %v3248
    %v3809 = vpack.c.b16 %v3259, %v3249
    %v3810 = vpack.c.b16 %v3260, %v3250
    %v3811 = vpack.c.b16 %v3261, %v3251
    %v3812 = vpack.c.b16 %v3262, %v3252
    %v3813 = vpack.c.b16 %v3263, %v3253
    %v3814 = vpack.c.b16 %v3264, %v3254
    %v3815 = vpack.c.b16 %v3265, %v3255
    %v3816 = vpack.c.b16 %v3266, %v3256
    %v3817 = vpack.c.b16 %v3277, %v3267
    %v3818 = vpack.c.b16 %v3278, %v3268
    %v3819 = vpack.c.b16 %v3279, %v3269
    %v3820 = vpack.c.b16 %v3280, %v3270
    %v3821 = vpack.c.b16 %v3281, %v3271
    %v3822 = vpack.c.b16 %v3282, %v3272
    %v3823 = vpack.c.b16 %v3283, %v3273
    %v3824 = vpack.c.b16 %v3284, %v3274
    %v3825 = vpack.c.b16 %v3285, %v3275
    %v3826 = vpack.c.b16 %v3286, %v3276
    %v3827 = vpack.c.b16 %v3297, %v3287
    %v3828 = vpack.c.b16 %v3298, %v3288
    %v3829 = vpack.c.b16 %v3299, %v3289
    %v3830 = vpack.c.b16 %v3300, %v3290
    %v3831 = vpack.c.b16 %v3301, %v3291
    %v3832 = vpack.c.b16 %v3302, %v3292
    %v3833 = vpack.c.b16 %v3303, %v3293
    %v3834 = vpack.c.b16 %v3304, %v3294
    %v3835 = vpack.c.b16 %v3305, %v3295
    %v3836 = vpack.c.b16 %v3306, %v3296
    %v3837 = vpack.c.b16 %v3317, %v3307
    %v3838 = vpack.c.b16 %v3318, %v3308
    %v3839 = vpack.c.b16 %v3319, %v3309
    %v3840 = vpack.c.b16 %v3320, %v3310
    %v3841 = vpack.c.b16 %v3321, %v3311
    %v3842 = vpack.c.b16 %v3322, %v3312
    %v3843 = vpack.c.b16 %v3323, %v3313
    %v3844 = vpack.c.b16 %v3324, %v3314
    %v3845 = vpack.c.b16 %v3325, %v3315
    %v3846 = vpack.c.b16 %v3326, %v3316
    %v3847 = vpack.c.b16 %v3337, %v3327
    %v3848 = vpack.c.b16 %v3338, %v3328
    %v3849 = vpack.c.b16 %v3339, %v3329
    %v3850 = vpack.c.b16 %v3340, %v3330
    %v3851 = vpack.c.b16 %v3341, %v3331
    %v3852 = vpack.c.b16 %v3342, %v3332
    %v3853 = vpack.c.b16 %v3343, %v3333
    %v3854 = vpack.c.b16 %v3344, %v3334
    %v3855 = vpack.c.b16 %v3345, %v3335
    %v3856 = vpack.c.b16 %v3346, %v3336
    %v3857 = vpack.c.b16 %v3357, %v3347
    %v3858 = vpack.c.b16 %v3358, %v3348
    %v3859 = vpack.c.b16 %v3359, %v3349
    %v3860 = vpack.c.b16 %v3360, %v3350
    %v3861 = vpack.c.b16 %v3361, %v3351
    %v3862 = vpack.c.b16 %v3362, %v3352
    %v3863 = vpack.c.b16 %v3363, %v3353
    %v3864 = vpack.c.b16 %v3364, %v3354
    %v3865 = vpack.c.b16 %v3365, %v3355
    %v3866 = vpack.c.b16 %v3366, %v3356
    %v3867 = vpack.c.b16 %v3377, %v3367
    %v3868 = vpack.c.b16 %v3378, %v3368
    %v3869 = vpack.c.b16 %v3379, %v3369
    %v3870 = vpack.c.b16 %v3380, %v3370
    %v3871 = vpack.c.b16 %v3381, %v3371
    %v3872 = vpack.c.b16 %v3382, %v3372
    %v3873 = vpack.c.b16 %v3383, %v3373
    %v3874 = vpack.c.b16 %v3384, %v3374
    %v3875 = vpack.c.b16 %v3385, %v3375
    %v3876 = vpack.c.b16 %v3386, %v3376
    %v3877 = vpack.c.b16 %v3397, %v3387
    %v3878 = vpack.c.b16 %v3398, %v3388
    %v3879 = vpack.c.b16 %v3399, %v3389
    %v3880 = vpack.c.b16 %v3400, %v3390
    %v3881 = vpack.c.b16 %v3401, %v3391
    %v3882 = vpack.c.b16 %v3402, %v3392
    %v3883 = vpack.c.b16 %v3403, %v3393
    %v3884 = vpack.c.b16 %v3404, %v3394
    %v3885 = vpack.c.b16 %v3405, %v3395
    %v3886 = vpack.c.b16 %v3406, %v3396
    %v3887 = vpack.c.b16 %v3417, %v3407
    %v3888 = vpack.c.b16 %v3418, %v3408
    %v3889 = vpack.c.b16 %v3419, %v3409
    %v3890 = vpack.c.b16 %v3420, %v3410
    %v3891 = vpack.c.b16 %v3421, %v3411
    %v3892 = vpack.c.b16 %v3422, %v3412
    %v3893 = vpack.c.b16 %v3423, %v3413
    %v3894 = vpack.c.b16 %v3424, %v3414
    %v3895 = vpack.c.b16 %v3425, %v3415
    %v3896 = vpack.c.b16 %v3426, %v3416
    %v3897 = vpack.c.b16 %v3437, %v3427
    %v3898 = vpack.c.b16 %v3438, %v3428
    %v3899 = vpack.c.b16 %v3439, %v3429
    %v3900 = vpack.c.b16 %v3440, %v3430
    %v3901 = vpack.c.b16 %v3441, %v3431
    %v3902 = vpack.c.b16 %v3442, %v3432
    %v3903 = vpack.c.b16 %v3443, %v3433
    %v3904 = vpack.c.b16 %v3444, %v3434
    %v3905 = vpack.c.b16 %v3445, %v3435
    %v3906 = vpack.c.b16 %v3446, %v3436
    %v3907 = vpack.c.b16 %v3457, %v3447
    %v3908 = vpack.c.b16 %v3458, %v3448
    %v3909 = vpack.c.b16 %v3459, %v3449
    %v3910 = vpack.c.b16 %v3460, %v3450
    %v3911 = vpack.c.b16 %v3461, %v3451
    %v3912 = vpack.c.b16 %v3462, %v3452
    %v3913 = vpack.c.b16 %v3463, %v3453
    %v3914 = vpack.c.b16 %v3464, %v3454
    %v3915 = vpack.c.b16 %v3465, %v3455
    %v3916 = vpack.c.b16 %v3466, %v3456
    %v3917 = vpack.c.b16 %v3477, %v3467
    %v3918 = vpack.c.b16 %v3478, %v3468
    %v3919 = vpack.c.b16 %v3479, %v3469
    %v3920 = vpack.c.b16 %v3480, %v3470
    %v3921 = vpack.c.b16 %v3481, %v3471
    %v3922 = vpack.c.b16 %v3482, %v3472
    %v3923 = vpack.c.b16 %v3483, %v3473
    %v3924 = vpack.c.b16 %v3484, %v3474
    %v3925 = vpack.c.b16 %v3485, %v3475
    %v3926 = vpack.c.b16 %v3486, %v3476
    %v3927 = vpack.c.b16 %v3497, %v3487
    %v3928 = vpack.c.b16 %v3498, %v3488
    %v3929 = vpack.c.b16 %v3499, %v3489
    %v3930 = vpack.c.b16 %v3500, %v3490
    %v3931 = vpack.c.b16 %v3501, %v3491
    %v3932 = vpack.c.b16 %v3502, %v3492
    %v3933 = vpack.c.b16 %v3503, %v3493
    %v3934 = vpack.c.b16 %v3504, %v3494
    %v3935 = vpack.c.b16 %v3505, %v3495
    %v3936 = vpack.c.b16 %v3506, %v3496
    %v3937 = vpack.c.b16 %v3517, %v3507
    %v3938 = vpack.c.b16 %v3518, %v3508
    %v3939 = vpack.c.b16 %v3519, %v3509
    %v3940 = vpack.c.b16 %v3520, %v3510
    %v3941 = vpack.c.b16 %v3521, %v3511
    %v3942 = vpack.c.b16 %v3522, %v3512
    %v3943 = vpack.c.b16 %v3523, %v3513
    %v3944 = vpack.c.b16 %v3524, %v3514
    %v3945 = vpack.c.b16 %v3525, %v3515
    %v3946 = vpack.c.b16 %v3526, %v3516
    %v3947 = vpack.c.b16 %v3537, %v3527
    %v3948 = vpack.c.b16 %v3538, %v3528
    %v3949 = vpack.c.b16 %v3539, %v3529
    %v3950 = vpack.c.b16 %v3540, %v3530
    %v3951 = vpack.c.b16 %v3541, %v3531
    %v3952 = vpack.c.b16 %v3542, %v3532
    %v3953 = vpack.c.b16 %v3543, %v3533
    %v3954 = vpack.c.b16 %v3544, %v3534
    %v3955 = vpack.c.b16 %v3545, %v3535
    %v3956 = vpack.c.b16 %v3546, %v3536
    %v3957 = vpack.c.b16 %v3557, %v3547
    %v3958 = vpack.c.b16 %v3558, %v3548
    %v3959 = vpack.c.b16 %v3559, %v3549
    %v3960 = vpack.c.b16 %v3560, %v3550
    %v3961 = vpack.c.b16 %v3561, %v3551
    %v3962 = vpack.c.b16 %v3562, %v3552
    %v3963 = vpack.c.b16 %v3563, %v3553
    %v3964 = vpack.c.b16 %v3564, %v3554
    %v3965 = vpack.c.b16 %v3565, %v3555
    %v3966 = vpack.c.b16 %v3566, %v3556
    %4367 = vmatprep.subr.bf16.mxu0 %v3568
    %4368 = vmatpush1.bf16.msra.mxu0 %v3567
    %4369 = vmatprep.subr.bf16.mxu0 %v3578
    %4370 = vmatpush1.bf16.msra.mxu0 %v3577
    %4371 = vmatprep.subr.bf16.mxu0 %v3588
    %4372 = vmatpush1.bf16.msra.mxu0 %v3587
    %4373 = vmatprep.subr.bf16.mxu0 %v3598
    %4374 = vmatpush1.bf16.msra.mxu0 %v3597
    %4375 = vmatprep.subr.bf16.mxu0 %v3608
    %4376 = vmatpush1.bf16.msra.mxu0 %v3607
    %4377 = vmatprep.subr.bf16.mxu0 %v3618
    %4378 = vmatpush1.bf16.msra.mxu0 %v3617
    %4379 = vmatprep.subr.bf16.mxu0 %v3628
    %4380 = vmatpush1.bf16.msra.mxu0 %v3627
    %4381 = vmatprep.subr.bf16.mxu0 %v3638
    %4382 = vmatpush1.bf16.msra.mxu0 %v3637
    %4383 = vmatprep.subr.bf16.mxu0 %v3648
    %4384 = vmatpush1.bf16.msra.mxu0 %v3647
    %4385 = vmatprep.subr.bf16.mxu0 %v3658
    %4386 = vmatpush1.bf16.msra.mxu0 %v3657
    %4387 = vmatprep.subr.bf16.mxu0 %v3668
    %4388 = vmatpush1.bf16.msra.mxu0 %v3667
    %4389 = vmatprep.subr.bf16.mxu0 %v3678
    %4390 = vmatpush1.bf16.msra.mxu0 %v3677
    %4391 = vmatprep.subr.bf16.mxu0 %v3688
    %4392 = vmatpush1.bf16.msra.mxu0 %v3687
    %4393 = vmatprep.subr.bf16.mxu0 %v3698
    %4394 = vmatpush1.bf16.msra.mxu0 %v3697
    %4395 = vmatprep.subr.bf16.mxu0 %v3708
    %4396 = vmatpush1.bf16.msra.mxu0 %v3707
    %4397 = vmatprep.subr.bf16.mxu0 %v3718
    %4398 = vmatpush1.bf16.msra.mxu0 %v3717
    %4399 = vmatprep.mubr.bf16.mxu0 %v1909
    %4400 = vmatmul.mubr.bf16.gmra.mrb[0].mxu0 %v1908
    %v4401 = vpop.f32.mrb[0].mxu0
    %v4402 = vadd.f32 %v2320, %v4401
    %v4403 = vpop.f32.mrb[0].mxu0
    %v4404 = vadd.f32 %v2324, %v4403
    %v4405 = vpop.f32.mrb[0].mxu0
    %v4406 = vadd.f32 %v2320, %v4405
    %v4407 = vpop.f32.mrb[0].mxu0
    %v4408 = vadd.f32 %v2324, %v4407
    %4409 = vdwg.mxu0
    %4410 = vmatprep.subr.bf16.mxu0 %v3728
    %4411 = vmatpush1.bf16.msra.mxu0 %v3727
    %4412 = vmatprep.subr.bf16.mxu0 %v3738
    %4413 = vmatpush1.bf16.msra.mxu0 %v3737
    %4414 = vmatprep.subr.bf16.mxu0 %v3748
    %4415 = vmatpush1.bf16.msra.mxu0 %v3747
    %4416 = vmatprep.subr.bf16.mxu0 %v3758
    %4417 = vmatpush1.bf16.msra.mxu0 %v3757
    %4418 = vmatprep.subr.bf16.mxu0 %v3768
    %4419 = vmatpush1.bf16.msra.mxu0 %v3767
    %4420 = vmatprep.subr.bf16.mxu0 %v3778
    %4421 = vmatpush1.bf16.msra.mxu0 %v3777
    %4422 = vmatprep.subr.bf16.mxu0 %v3788
    %4423 = vmatpush1.bf16.msra.mxu0 %v3787
    %4424 = vmatprep.subr.bf16.mxu0 %v3798
    %4425 = vmatpush1.bf16.msra.mxu0 %v3797
    %4426 = vmatprep.subr.bf16.mxu0 %v3808
    %4427 = vmatpush1.bf16.msra.mxu0 %v3807
    %4428 = vmatprep.subr.bf16.mxu0 %v3818
    %4429 = vmatpush1.bf16.msra.mxu0 %v3817
    %4430 = vmatprep.subr.bf16.mxu0 %v3828
    %4431 = vmatpush1.bf16.msra.mxu0 %v3827
    %4432 = vmatprep.subr.bf16.mxu0 %v3838
    %4433 = vmatpush1.bf16.msra.mxu0 %v3837
    %4434 = vmatprep.subr.bf16.mxu0 %v3848
    %4435 = vmatpush1.bf16.msra.mxu0 %v3847
    %4436 = vmatprep.subr.bf16.mxu0 %v3858
    %4437 = vmatpush1.bf16.msra.mxu0 %v3857
    %4438 = vmatprep.subr.bf16.mxu0 %v3868
    %4439 = vmatpush1.bf16.msra.mxu0 %v3867
    %4440 = vmatprep.subr.bf16.mxu0 %v3878
    %4441 = vmatpush1.bf16.msra.mxu0 %v3877
    %4442 = vmatprep.mubr.bf16.mxu0 %v1911
    %4443 = vmatmul.mubr.bf16.gmra.mrb[0].mxu0 %v1910
    %v4444 = vpop.f32.mrb[0].mxu0
    %v4445 = vadd.f32 %v4402, %v4444
    %v4446 = vpop.f32.mrb[0].mxu0
    %v4447 = vadd.f32 %v4404, %v4446
    %v4448 = vpop.f32.mrb[0].mxu0
    %v4449 = vadd.f32 %v4406, %v4448
    %v4450 = vpop.f32.mrb[0].mxu0
    %v4451 = vadd.f32 %v4408, %v4450
    %4452 = vdwg.mxu0
    %4453 = vmatprep.subr.bf16.mxu0 %v3888
    %4454 = vmatpush1.bf16.msra.mxu0 %v3887
    %4455 = vmatprep.subr.bf16.mxu0 %v3898
    %4456 = vmatpush1.bf16.msra.mxu0 %v3897
    %4457 = vmatprep.subr.bf16.mxu0 %v3908
    %4458 = vmatpush1.bf16.msra.mxu0 %v3907
    %4459 = vmatprep.subr.bf16.mxu0 %v3918
    %4460 = vmatpush1.bf16.msra.mxu0 %v3917
    %4461 = vmatprep.subr.bf16.mxu0 %v3928
    %4462 = vmatpush1.bf16.msra.mxu0 %v3927
    %4463 = vmatprep.subr.bf16.mxu0 %v3938
    %4464 = vmatpush1.bf16.msra.mxu0 %v3937
    %4465 = vmatprep.subr.bf16.mxu0 %v3948
    %4466 = vmatpush1.bf16.msra.mxu0 %v3947
    %4467 = vmatprep.subr.bf16.mxu0 %v3958
    %4468 = vmatpush1.bf16.msra.mxu0 %v3957
    %4469 = vmatprep.subr.bf16.mxu0 0
    %4470 = vmatpush1.bf16.msra.mxu0 0
    %4471 = vmatprep.subr.bf16.mxu0 0
    %4472 = vmatpush1.bf16.msra.mxu0 0
    %4473 = vmatprep.subr.bf16.mxu0 0
    %4474 = vmatpush1.bf16.msra.mxu0 0
    %4475 = vmatprep.subr.bf16.mxu0 0
    %4476 = vmatpush1.bf16.msra.mxu0 0
    %4477 = vmatprep.subr.bf16.mxu0 0
    %4478 = vmatpush1.bf16.msra.mxu0 0
    %4479 = vmatprep.subr.bf16.mxu0 0
    %4480 = vmatpush1.bf16.msra.mxu0 0
    %4481 = vmatprep.subr.bf16.mxu0 0
    %4482 = vmatpush1.bf16.msra.mxu0 0
    %4483 = vmatprep.subr.bf16.mxu0 0
    %4484 = vmatpush1.bf16.msra.mxu0 0
    %4485 = vmatprep.mubr.bf16.mxu0 0
    %4486 = vmatmul.mubr.bf16.gmra.mrb[0].mxu0 %v1912
    %v4487 = vpop.f32.mrb[0].mxu0
    %v4488 = vadd.f32 %v4445, %v4487
    %v4489 = vpop.f32.mrb[0].mxu0
    %v4490 = vadd.f32 %v4447, %v4489
    %v4491 = vpop.f32.mrb[0].mxu0
    %v4492 = vadd.f32 %v4449, %v4491
    %v4493 = vpop.f32.mrb[0].mxu0
    %v4494 = vadd.f32 %v4451, %v4493
    %4495 = vdwg.mxu0
    %4496 = vmatprep.subr.bf16.mxu0 %v3570
    %4497 = vmatpush1.bf16.msra.mxu0 %v3569
    %4498 = vmatprep.subr.bf16.mxu0 %v3580
    %4499 = vmatpush1.bf16.msra.mxu0 %v3579
    %4500 = vmatprep.subr.bf16.mxu0 %v3590
    %4501 = vmatpush1.bf16.msra.mxu0 %v3589
    %4502 = vmatprep.subr.bf16.mxu0 %v3600
    %4503 = vmatpush1.bf16.msra.mxu0 %v3599
    %4504 = vmatprep.subr.bf16.mxu0 %v3610
    %4505 = vmatpush1.bf16.msra.mxu0 %v3609
    %4506 = vmatprep.subr.bf16.mxu0 %v3620
    %4507 = vmatpush1.bf16.msra.mxu0 %v3619
    %4508 = vmatprep.subr.bf16.mxu0 %v3630
    %4509 = vmatpush1.bf16.msra.mxu0 %v3629
    %4510 = vmatprep.subr.bf16.mxu0 %v3640
    %4511 = vmatpush1.bf16.msra.mxu0 %v3639
    %4512 = vmatprep.subr.bf16.mxu0 %v3650
    %4513 = vmatpush1.bf16.msra.mxu0 %v3649
    %4514 = vmatprep.subr.bf16.mxu0 %v3660
    %4515 = vmatpush1.bf16.msra.mxu0 %v3659
    %4516 = vmatprep.subr.bf16.mxu0 %v3670
    %4517 = vmatpush1.bf16.msra.mxu0 %v3669
    %4518 = vmatprep.subr.bf16.mxu0 %v3680
    %4519 = vmatpush1.bf16.msra.mxu0 %v3679
    %4520 = vmatprep.subr.bf16.mxu0 %v3690
    %4521 = vmatpush1.bf16.msra.mxu0 %v3689
    %4522 = vmatprep.subr.bf16.mxu0 %v3700
    %4523 = vmatpush1.bf16.msra.mxu0 %v3699
    %4524 = vmatprep.subr.bf16.mxu0 %v3710
    %4525 = vmatpush1.bf16.msra.mxu0 %v3709
    %4526 = vmatprep.subr.bf16.mxu0 %v3720
    %4527 = vmatpush1.bf16.msra.mxu0 %v3719
    %4528 = vmatprep.mubr.bf16.mxu0 %v1909
    %4529 = vmatmul.mubr.bf16.gmra.mrb[0].mxu0 %v1908
    %v4530 = vpop.f32.mrb[0].mxu0
    %v4531 = vadd.f32 %v2328, %v4530
    %v4532 = vpop.f32.mrb[0].mxu0
    %v4533 = vadd.f32 %v2332, %v4532
    %v4534 = vpop.f32.mrb[0].mxu0
    %v4535 = vadd.f32 %v2328, %v4534
    %v4536 = vpop.f32.mrb[0].mxu0
    %v4537 = vadd.f32 %v2332, %v4536
    %4538 = vdwg.mxu0
    %4539 = vmatprep.subr.bf16.mxu0 %v3730
    %4540 = vmatpush1.bf16.msra.mxu0 %v3729
    %4541 = vmatprep.subr.bf16.mxu0 %v3740
    %4542 = vmatpush1.bf16.msra.mxu0 %v3739
    %4543 = vmatprep.subr.bf16.mxu0 %v3750
    %4544 = vmatpush1.bf16.msra.mxu0 %v3749
    %4545 = vmatprep.subr.bf16.mxu0 %v3760
    %4546 = vmatpush1.bf16.msra.mxu0 %v3759
    %4547 = vmatprep.subr.bf16.mxu0 %v3770
    %4548 = vmatpush1.bf16.msra.mxu0 %v3769
    %4549 = vmatprep.subr.bf16.mxu0 %v3780
    %4550 = vmatpush1.bf16.msra.mxu0 %v3779
    %4551 = vmatprep.subr.bf16.mxu0 %v3790
    %4552 = vmatpush1.bf16.msra.mxu0 %v3789
    %4553 = vmatprep.subr.bf16.mxu0 %v3800
    %4554 = vmatpush1.bf16.msra.mxu0 %v3799
    %4555 = vmatprep.subr.bf16.mxu0 %v3810
    %4556 = vmatpush1.bf16.msra.mxu0 %v3809
    %4557 = vmatprep.subr.bf16.mxu0 %v3820
    %4558 = vmatpush1.bf16.msra.mxu0 %v3819
    %4559 = vmatprep.subr.bf16.mxu0 %v3830
    %4560 = vmatpush1.bf16.msra.mxu0 %v3829
    %4561 = vmatprep.subr.bf16.mxu0 %v3840
    %4562 = vmatpush1.bf16.msra.mxu0 %v3839
    %4563 = vmatprep.subr.bf16.mxu0 %v3850
    %4564 = vmatpush1.bf16.msra.mxu0 %v3849
    %4565 = vmatprep.subr.bf16.mxu0 %v3860
    %4566 = vmatpush1.bf16.msra.mxu0 %v3859
    %4567 = vmatprep.subr.bf16.mxu0 %v3870
    %4568 = vmatpush1.bf16.msra.mxu0 %v3869
    %4569 = vmatprep.subr.bf16.mxu0 %v3880
    %4570 = vmatpush1.bf16.msra.mxu0 %v3879
    %4571 = vmatprep.mubr.bf16.mxu0 %v1911
    %4572 = vmatmul.mubr.bf16.gmra.mrb[0].mxu0 %v1910
    %v4573 = vpop.f32.mrb[0].mxu0
    %v4574 = vadd.f32 %v4531, %v4573
    %v4575 = vpop.f32.mrb[0].mxu0
    %v4576 = vadd.f32 %v4533, %v4575
    %v4577 = vpop.f32.mrb[0].mxu0
    %v4578 = vadd.f32 %v4535, %v4577
    %v4579 = vpop.f32.mrb[0].mxu0
    %v4580 = vadd.f32 %v4537, %v4579
    %4581 = vdwg.mxu0
    %4582 = vmatprep.subr.bf16.mxu0 %v3890
    %4583 = vmatpush1.bf16.msra.mxu0 %v3889
    %4584 = vmatprep.subr.bf16.mxu0 %v3900
    %4585 = vmatpush1.bf16.msra.mxu0 %v3899
    %4586 = vmatprep.subr.bf16.mxu0 %v3910
    %4587 = vmatpush1.bf16.msra.mxu0 %v3909
    %4588 = vmatprep.subr.bf16.mxu0 %v3920
    %4589 = vmatpush1.bf16.msra.mxu0 %v3919
    %4590 = vmatprep.subr.bf16.mxu0 %v3930
    %4591 = vmatpush1.bf16.msra.mxu0 %v3929
    %4592 = vmatprep.subr.bf16.mxu0 %v3940
    %4593 = vmatpush1.bf16.msra.mxu0 %v3939
    %4594 = vmatprep.subr.bf16.mxu0 %v3950
    %4595 = vmatpush1.bf16.msra.mxu0 %v3949
    %4596 = vmatprep.subr.bf16.mxu0 %v3960
    %4597 = vmatpush1.bf16.msra.mxu0 %v3959
    %4598 = vmatprep.subr.bf16.mxu0 0
    %4599 = vmatpush1.bf16.msra.mxu0 0
    %4600 = vmatprep.subr.bf16.mxu0 0
    %4601 = vmatpush1.bf16.msra.mxu0 0
    %4602 = vmatprep.subr.bf16.mxu0 0
    %4603 = vmatpush1.bf16.msra.mxu0 0
    %4604 = vmatprep.subr.bf16.mxu0 0
    %4605 = vmatpush1.bf16.msra.mxu0 0
    %4606 = vmatprep.subr.bf16.mxu0 0
    %4607 = vmatpush1.bf16.msra.mxu0 0
    %4608 = vmatprep.subr.bf16.mxu0 0
    %4609 = vmatpush1.bf16.msra.mxu0 0
    %4610 = vmatprep.subr.bf16.mxu0 0
    %4611 = vmatpush1.bf16.msra.mxu0 0
    %4612 = vmatprep.subr.bf16.mxu0 0
    %4613 = vmatpush1.bf16.msra.mxu0 0
    %4614 = vmatprep.mubr.bf16.mxu0 0
    %4615 = vmatmul.mubr.bf16.gmra.mrb[0].mxu0 %v1912
    %v4616 = vpop.f32.mrb[0].mxu0
    %v4617 = vadd.f32 %v4574, %v4616
    %v4618 = vpop.f32.mrb[0].mxu0
    %v4619 = vadd.f32 %v4576, %v4618
    %v4620 = vpop.f32.mrb[0].mxu0
    %v4621 = vadd.f32 %v4578, %v4620
    %v4622 = vpop.f32.mrb[0].mxu0
    %v4623 = vadd.f32 %v4580, %v4622
    %4624 = vdwg.mxu0
    %4625 = vmatprep.subr.bf16.mxu0 %v3572
    %4626 = vmatpush1.bf16.msra.mxu0 %v3571
    %4627 = vmatprep.subr.bf16.mxu0 %v3582
    %4628 = vmatpush1.bf16.msra.mxu0 %v3581
    %4629 = vmatprep.subr.bf16.mxu0 %v3592
    %4630 = vmatpush1.bf16.msra.mxu0 %v3591
    %4631 = vmatprep.subr.bf16.mxu0 %v3602
    %4632 = vmatpush1.bf16.msra.mxu0 %v3601
    %4633 = vmatprep.subr.bf16.mxu0 %v3612
    %4634 = vmatpush1.bf16.msra.mxu0 %v3611
    %4635 = vmatprep.subr.bf16.mxu0 %v3622
    %4636 = vmatpush1.bf16.msra.mxu0 %v3621
    %4637 = vmatprep.subr.bf16.mxu0 %v3632
    %4638 = vmatpush1.bf16.msra.mxu0 %v3631
    %4639 = vmatprep.subr.bf16.mxu0 %v3642
    %4640 = vmatpush1.bf16.msra.mxu0 %v3641
    %4641 = vmatprep.subr.bf16.mxu0 %v3652
    %4642 = vmatpush1.bf16.msra.mxu0 %v3651
    %4643 = vmatprep.subr.bf16.mxu0 %v3662
    %4644 = vmatpush1.bf16.msra.mxu0 %v3661
    %4645 = vmatprep.subr.bf16.mxu0 %v3672
    %4646 = vmatpush1.bf16.msra.mxu0 %v3671
    %4647 = vmatprep.subr.bf16.mxu0 %v3682
    %4648 = vmatpush1.bf16.msra.mxu0 %v3681
    %4649 = vmatprep.subr.bf16.mxu0 %v3692
    %4650 = vmatpush1.bf16.msra.mxu0 %v3691
    %4651 = vmatprep.subr.bf16.mxu0 %v3702
    %4652 = vmatpush1.bf16.msra.mxu0 %v3701
    %4653 = vmatprep.subr.bf16.mxu0 %v3712
    %4654 = vmatpush1.bf16.msra.mxu0 %v3711
    %4655 = vmatprep.subr.bf16.mxu0 %v3722
    %4656 = vmatpush1.bf16.msra.mxu0 %v3721
    %4657 = vmatprep.mubr.bf16.mxu0 %v1909
    %4658 = vmatmul.mubr.bf16.gmra.mrb[0].mxu0 %v1908
    %v4659 = vpop.f32.mrb[0].mxu0
    %v4660 = vadd.f32 %v2336, %v4659
    %v4661 = vpop.f32.mrb[0].mxu0
    %v4662 = vadd.f32 %v2340, %v4661
    %v4663 = vpop.f32.mrb[0].mxu0
    %v4664 = vadd.f32 %v2336, %v4663
    %v4665 = vpop.f32.mrb[0].mxu0
    %v4666 = vadd.f32 %v2340, %v4665
    %4667 = vdwg.mxu0
    %4668 = vmatprep.subr.bf16.mxu0 %v3732
    %4669 = vmatpush1.bf16.msra.mxu0 %v3731
    %4670 = vmatprep.subr.bf16.mxu0 %v3742
    %4671 = vmatpush1.bf16.msra.mxu0 %v3741
    %4672 = vmatprep.subr.bf16.mxu0 %v3752
    %4673 = vmatpush1.bf16.msra.mxu0 %v3751
    %4674 = vmatprep.subr.bf16.mxu0 %v3762
    %4675 = vmatpush1.bf16.msra.mxu0 %v3761
    %4676 = vmatprep.subr.bf16.mxu0 %v3772
    %4677 = vmatpush1.bf16.msra.mxu0 %v3771
    %4678 = vmatprep.subr.bf16.mxu0 %v3782
    %4679 = vmatpush1.bf16.msra.mxu0 %v3781
    %4680 = vmatprep.subr.bf16.mxu0 %v3792
    %4681 = vmatpush1.bf16.msra.mxu0 %v3791
    %4682 = vmatprep.subr.bf16.mxu0 %v3802
    %4683 = vmatpush1.bf16.msra.mxu0 %v3801
    %4684 = vmatprep.subr.bf16.mxu0 %v3812
    %4685 = vmatpush1.bf16.msra.mxu0 %v3811
    %4686 = vmatprep.subr.bf16.mxu0 %v3822
    %4687 = vmatpush1.bf16.msra.mxu0 %v3821
    %4688 = vmatprep.subr.bf16.mxu0 %v3832
    %4689 = vmatpush1.bf16.msra.mxu0 %v3831
    %4690 = vmatprep.subr.bf16.mxu0 %v3842
    %4691 = vmatpush1.bf16.msra.mxu0 %v3841
    %4692 = vmatprep.subr.bf16.mxu0 %v3852
    %4693 = vmatpush1.bf16.msra.mxu0 %v3851
    %4694 = vmatprep.subr.bf16.mxu0 %v3862
    %4695 = vmatpush1.bf16.msra.mxu0 %v3861
    %4696 = vmatprep.subr.bf16.mxu0 %v3872
    %4697 = vmatpush1.bf16.msra.mxu0 %v3871
    %4698 = vmatprep.subr.bf16.mxu0 %v3882
    %4699 = vmatpush1.bf16.msra.mxu0 %v3881
    %4700 = vmatprep.mubr.bf16.mxu0 %v1911
    %4701 = vmatmul.mubr.bf16.gmra.mrb[0].mxu0 %v1910
    %v4702 = vpop.f32.mrb[0].mxu0
    %v4703 = vadd.f32 %v4660, %v4702
    %v4704 = vpop.f32.mrb[0].mxu0
    %v4705 = vadd.f32 %v4662, %v4704
    %v4706 = vpop.f32.mrb[0].mxu0
    %v4707 = vadd.f32 %v4664, %v4706
    %v4708 = vpop.f32.mrb[0].mxu0
    %v4709 = vadd.f32 %v4666, %v4708
    %4710 = vdwg.mxu0
    %4711 = vmatprep.subr.bf16.mxu0 %v3892
    %4712 = vmatpush1.bf16.msra.mxu0 %v3891
    %4713 = vmatprep.subr.bf16.mxu0 %v3902
    %4714 = vmatpush1.bf16.msra.mxu0 %v3901
    %4715 = vmatprep.subr.bf16.mxu0 %v3912
    %4716 = vmatpush1.bf16.msra.mxu0 %v3911
    %4717 = vmatprep.subr.bf16.mxu0 %v3922
    %4718 = vmatpush1.bf16.msra.mxu0 %v3921
    %4719 = vmatprep.subr.bf16.mxu0 %v3932
    %4720 = vmatpush1.bf16.msra.mxu0 %v3931
    %4721 = vmatprep.subr.bf16.mxu0 %v3942
    %4722 = vmatpush1.bf16.msra.mxu0 %v3941
    %4723 = vmatprep.subr.bf16.mxu0 %v3952
    %4724 = vmatpush1.bf16.msra.mxu0 %v3951
    %4725 = vmatprep.subr.bf16.mxu0 %v3962
    %4726 = vmatpush1.bf16.msra.mxu0 %v3961
    %4727 = vmatprep.subr.bf16.mxu0 0
    %4728 = vmatpush1.bf16.msra.mxu0 0
    %4729 = vmatprep.subr.bf16.mxu0 0
    %4730 = vmatpush1.bf16.msra.mxu0 0
    %4731 = vmatprep.subr.bf16.mxu0 0
    %4732 = vmatpush1.bf16.msra.mxu0 0
    %4733 = vmatprep.subr.bf16.mxu0 0
    %4734 = vmatpush1.bf16.msra.mxu0 0
    %4735 = vmatprep.subr.bf16.mxu0 0
    %4736 = vmatpush1.bf16.msra.mxu0 0
    %4737 = vmatprep.subr.bf16.mxu0 0
    %4738 = vmatpush1.bf16.msra.mxu0 0
    %4739 = vmatprep.subr.bf16.mxu0 0
    %4740 = vmatpush1.bf16.msra.mxu0 0
    %4741 = vmatprep.subr.bf16.mxu0 0
    %4742 = vmatpush1.bf16.msra.mxu0 0
    %4743 = vmatprep.mubr.bf16.mxu0 0
    %4744 = vmatmul.mubr.bf16.gmra.mrb[0].mxu0 %v1912
    %v4745 = vpop.f32.mrb[0].mxu0
    %v4746 = vadd.f32 %v4703, %v4745
    %v4747 = vpop.f32.mrb[0].mxu0
    %v4748 = vadd.f32 %v4705, %v4747
    %v4749 = vpop.f32.mrb[0].mxu0
    %v4750 = vadd.f32 %v4707, %v4749
    %v4751 = vpop.f32.mrb[0].mxu0
    %v4752 = vadd.f32 %v4709, %v4751
    %4753 = vdwg.mxu0
    %4754 = vmatprep.subr.bf16.mxu0 %v3574
    %4755 = vmatpush1.bf16.msra.mxu0 %v3573
    %4756 = vmatprep.subr.bf16.mxu0 %v3584
    %4757 = vmatpush1.bf16.msra.mxu0 %v3583
    %4758 = vmatprep.subr.bf16.mxu0 %v3594
    %4759 = vmatpush1.bf16.msra.mxu0 %v3593
    %4760 = vmatprep.subr.bf16.mxu0 %v3604
    %4761 = vmatpush1.bf16.msra.mxu0 %v3603
    %4762 = vmatprep.subr.bf16.mxu0 %v3614
    %4763 = vmatpush1.bf16.msra.mxu0 %v3613
    %4764 = vmatprep.subr.bf16.mxu0 %v3624
    %4765 = vmatpush1.bf16.msra.mxu0 %v3623
    %4766 = vmatprep.subr.bf16.mxu0 %v3634
    %4767 = vmatpush1.bf16.msra.mxu0 %v3633
    %4768 = vmatprep.subr.bf16.mxu0 %v3644
    %4769 = vmatpush1.bf16.msra.mxu0 %v3643
    %4770 = vmatprep.subr.bf16.mxu0 %v3654
    %4771 = vmatpush1.bf16.msra.mxu0 %v3653
    %4772 = vmatprep.subr.bf16.mxu0 %v3664
    %4773 = vmatpush1.bf16.msra.mxu0 %v3663
    %4774 = vmatprep.subr.bf16.mxu0 %v3674
    %4775 = vmatpush1.bf16.msra.mxu0 %v3673
    %4776 = vmatprep.subr.bf16.mxu0 %v3684
    %4777 = vmatpush1.bf16.msra.mxu0 %v3683
    %4778 = vmatprep.subr.bf16.mxu0 %v3694
    %4779 = vmatpush1.bf16.msra.mxu0 %v3693
    %4780 = vmatprep.subr.bf16.mxu0 %v3704
    %4781 = vmatpush1.bf16.msra.mxu0 %v3703
    %4782 = vmatprep.subr.bf16.mxu0 %v3714
    %4783 = vmatpush1.bf16.msra.mxu0 %v3713
    %4784 = vmatprep.subr.bf16.mxu0 %v3724
    %4785 = vmatpush1.bf16.msra.mxu0 %v3723
    %4786 = vmatprep.mubr.bf16.mxu0 %v1909
    %4787 = vmatmul.mubr.bf16.gmra.mrb[0].mxu0 %v1908
    %v4788 = vpop.f32.mrb[0].mxu0
    %v4789 = vadd.f32 %v2344, %v4788
    %v4790 = vpop.f32.mrb[0].mxu0
    %v4791 = vadd.f32 %v2348, %v4790
    %v4792 = vpop.f32.mrb[0].mxu0
    %v4793 = vadd.f32 %v2344, %v4792
    %v4794 = vpop.f32.mrb[0].mxu0
    %v4795 = vadd.f32 %v2348, %v4794
    %4796 = vdwg.mxu0
    %4797 = vmatprep.subr.bf16.mxu0 %v3734
    %4798 = vmatpush1.bf16.msra.mxu0 %v3733
    %4799 = vmatprep.subr.bf16.mxu0 %v3744
    %4800 = vmatpush1.bf16.msra.mxu0 %v3743
    %4801 = vmatprep.subr.bf16.mxu0 %v3754
    %4802 = vmatpush1.bf16.msra.mxu0 %v3753
    %4803 = vmatprep.subr.bf16.mxu0 %v3764
    %4804 = vmatpush1.bf16.msra.mxu0 %v3763
    %4805 = vmatprep.subr.bf16.mxu0 %v3774
    %4806 = vmatpush1.bf16.msra.mxu0 %v3773
    %4807 = vmatprep.subr.bf16.mxu0 %v3784
    %4808 = vmatpush1.bf16.msra.mxu0 %v3783
    %4809 = vmatprep.subr.bf16.mxu0 %v3794
    %4810 = vmatpush1.bf16.msra.mxu0 %v3793
    %4811 = vmatprep.subr.bf16.mxu0 %v3804
    %4812 = vmatpush1.bf16.msra.mxu0 %v3803
    %4813 = vmatprep.subr.bf16.mxu0 %v3814
    %4814 = vmatpush1.bf16.msra.mxu0 %v3813
    %4815 = vmatprep.subr.bf16.mxu0 %v3824
    %4816 = vmatpush1.bf16.msra.mxu0 %v3823
    %4817 = vmatprep.subr.bf16.mxu0 %v3834
    %4818 = vmatpush1.bf16.msra.mxu0 %v3833
    %4819 = vmatprep.subr.bf16.mxu0 %v3844
    %4820 = vmatpush1.bf16.msra.mxu0 %v3843
    %4821 = vmatprep.subr.bf16.mxu0 %v3854
    %4822 = vmatpush1.bf16.msra.mxu0 %v3853
    %4823 = vmatprep.subr.bf16.mxu0 %v3864
    %4824 = vmatpush1.bf16.msra.mxu0 %v3863
    %4825 = vmatprep.subr.bf16.mxu0 %v3874
    %4826 = vmatpush1.bf16.msra.mxu0 %v3873
    %4827 = vmatprep.subr.bf16.mxu0 %v3884
    %4828 = vmatpush1.bf16.msra.mxu0 %v3883
    %4829 = vmatprep.mubr.bf16.mxu0 %v1911
    %4830 = vmatmul.mubr.bf16.gmra.mrb[0].mxu0 %v1910
    %v4831 = vpop.f32.mrb[0].mxu0
    %v4832 = vadd.f32 %v4789, %v4831
    %v4833 = vpop.f32.mrb[0].mxu0
    %v4834 = vadd.f32 %v4791, %v4833
    %v4835 = vpop.f32.mrb[0].mxu0
    %v4836 = vadd.f32 %v4793, %v4835
    %v4837 = vpop.f32.mrb[0].mxu0
    %v4838 = vadd.f32 %v4795, %v4837
    %4839 = vdwg.mxu0
    %4840 = vmatprep.subr.bf16.mxu0 %v3894
    %4841 = vmatpush1.bf16.msra.mxu0 %v3893
    %4842 = vmatprep.subr.bf16.mxu0 %v3904
    %4843 = vmatpush1.bf16.msra.mxu0 %v3903
    %4844 = vmatprep.subr.bf16.mxu0 %v3914
    %4845 = vmatpush1.bf16.msra.mxu0 %v3913
    %4846 = vmatprep.subr.bf16.mxu0 %v3924
    %4847 = vmatpush1.bf16.msra.mxu0 %v3923
    %4848 = vmatprep.subr.bf16.mxu0 %v3934
    %4849 = vmatpush1.bf16.msra.mxu0 %v3933
    %4850 = vmatprep.subr.bf16.mxu0 %v3944
    %4851 = vmatpush1.bf16.msra.mxu0 %v3943
    %4852 = vmatprep.subr.bf16.mxu0 %v3954
    %4853 = vmatpush1.bf16.msra.mxu0 %v3953
    %4854 = vmatprep.subr.bf16.mxu0 %v3964
    %4855 = vmatpush1.bf16.msra.mxu0 %v3963
    %4856 = vmatprep.subr.bf16.mxu0 0
    %4857 = vmatpush1.bf16.msra.mxu0 0
    %4858 = vmatprep.subr.bf16.mxu0 0
    %4859 = vmatpush1.bf16.msra.mxu0 0
    %4860 = vmatprep.subr.bf16.mxu0 0
    %4861 = vmatpush1.bf16.msra.mxu0 0
    %4862 = vmatprep.subr.bf16.mxu0 0
    %4863 = vmatpush1.bf16.msra.mxu0 0
    %4864 = vmatprep.subr.bf16.mxu0 0
    %4865 = vmatpush1.bf16.msra.mxu0 0
    %4866 = vmatprep.subr.bf16.mxu0 0
    %4867 = vmatpush1.bf16.msra.mxu0 0
    %4868 = vmatprep.subr.bf16.mxu0 0
    %4869 = vmatpush1.bf16.msra.mxu0 0
    %4870 = vmatprep.subr.bf16.mxu0 0
    %4871 = vmatpush1.bf16.msra.mxu0 0
    %4872 = vmatprep.mubr.bf16.mxu0 0
    %4873 = vmatmul.mubr.bf16.gmra.mrb[0].mxu0 %v1912
    %v4874 = vpop.f32.mrb[0].mxu0
    %v4875 = vadd.f32 %v4832, %v4874
    %v4876 = vpop.f32.mrb[0].mxu0
    %v4877 = vadd.f32 %v4834, %v4876
    %v4878 = vpop.f32.mrb[0].mxu0
    %v4879 = vadd.f32 %v4836, %v4878
    %v4880 = vpop.f32.mrb[0].mxu0
    %v4881 = vadd.f32 %v4838, %v4880
    %4882 = vdwg.mxu0
    %4883 = vmatprep.subr.bf16.mxu0 %v3576
    %4884 = vmatpush1.bf16.msra.mxu0 %v3575
    %4885 = vmatprep.subr.bf16.mxu0 %v3586
    %4886 = vmatpush1.bf16.msra.mxu0 %v3585
    %4887 = vmatprep.subr.bf16.mxu0 %v3596
    %4888 = vmatpush1.bf16.msra.mxu0 %v3595
    %4889 = vmatprep.subr.bf16.mxu0 %v3606
    %4890 = vmatpush1.bf16.msra.mxu0 %v3605
    %4891 = vmatprep.subr.bf16.mxu0 %v3616
    %4892 = vmatpush1.bf16.msra.mxu0 %v3615
    %4893 = vmatprep.subr.bf16.mxu0 %v3626
    %4894 = vmatpush1.bf16.msra.mxu0 %v3625
    %4895 = vmatprep.subr.bf16.mxu0 %v3636
    %4896 = vmatpush1.bf16.msra.mxu0 %v3635
    %4897 = vmatprep.subr.bf16.mxu0 %v3646
    %4898 = vmatpush1.bf16.msra.mxu0 %v3645
    %4899 = vmatprep.subr.bf16.mxu0 %v3656
    %4900 = vmatpush1.bf16.msra.mxu0 %v3655
    %4901 = vmatprep.subr.bf16.mxu0 %v3666
    %4902 = vmatpush1.bf16.msra.mxu0 %v3665
    %4903 = vmatprep.subr.bf16.mxu0 %v3676
    %4904 = vmatpush1.bf16.msra.mxu0 %v3675
    %4905 = vmatprep.subr.bf16.mxu0 %v3686
    %4906 = vmatpush1.bf16.msra.mxu0 %v3685
    %4907 = vmatprep.subr.bf16.mxu0 %v3696
    %4908 = vmatpush1.bf16.msra.mxu0 %v3695
    %4909 = vmatprep.subr.bf16.mxu0 %v3706
    %4910 = vmatpush1.bf16.msra.mxu0 %v3705
    %4911 = vmatprep.subr.bf16.mxu0 %v3716
    %4912 = vmatpush1.bf16.msra.mxu0 %v3715
    %4913 = vmatprep.subr.bf16.mxu0 %v3726
    %4914 = vmatpush1.bf16.msra.mxu0 %v3725
    %4915 = vmatprep.mubr.bf16.mxu0 %v1909
    %4916 = vmatmul.mubr.bf16.gmra.mrb[0].mxu0 %v1908
    %v4917 = vpop.f32.mrb[0].mxu0
    %v4918 = vadd.f32 %v2352, %v4917
    %v4919 = vpop.f32.mrb[0].mxu0
    %v4920 = vadd.f32 %v2356, %v4919
    %v4921 = vpop.f32.mrb[0].mxu0
    %v4922 = vadd.f32 %v2352, %v4921
    %v4923 = vpop.f32.mrb[0].mxu0
    %v4924 = vadd.f32 %v2356, %v4923
    %4925 = vdwg.mxu0
    %4926 = vmatprep.subr.bf16.mxu0 %v3736
    %4927 = vmatpush1.bf16.msra.mxu0 %v3735
    %4928 = vmatprep.subr.bf16.mxu0 %v3746
    %4929 = vmatpush1.bf16.msra.mxu0 %v3745
    %4930 = vmatprep.subr.bf16.mxu0 %v3756
    %4931 = vmatpush1.bf16.msra.mxu0 %v3755
    %4932 = vmatprep.subr.bf16.mxu0 %v3766
    %4933 = vmatpush1.bf16.msra.mxu0 %v3765
    %4934 = vmatprep.subr.bf16.mxu0 %v3776
    %4935 = vmatpush1.bf16.msra.mxu0 %v3775
    %4936 = vmatprep.subr.bf16.mxu0 %v3786
    %4937 = vmatpush1.bf16.msra.mxu0 %v3785
    %4938 = vmatprep.subr.bf16.mxu0 %v3796
    %4939 = vmatpush1.bf16.msra.mxu0 %v3795
    %4940 = vmatprep.subr.bf16.mxu0 %v3806
    %4941 = vmatpush1.bf16.msra.mxu0 %v3805
    %4942 = vmatprep.subr.bf16.mxu0 %v3816
    %4943 = vmatpush1.bf16.msra.mxu0 %v3815
    %4944 = vmatprep.subr.bf16.mxu0 %v3826
    %4945 = vmatpush1.bf16.msra.mxu0 %v3825
    %4946 = vmatprep.subr.bf16.mxu0 %v3836
    %4947 = vmatpush1.bf16.msra.mxu0 %v3835
    %4948 = vmatprep.subr.bf16.mxu0 %v3846
    %4949 = vmatpush1.bf16.msra.mxu0 %v3845
    %4950 = vmatprep.subr.bf16.mxu0 %v3856
    %4951 = vmatpush1.bf16.msra.mxu0 %v3855
    %4952 = vmatprep.subr.bf16.mxu0 %v3866
    %4953 = vmatpush1.bf16.msra.mxu0 %v3865
    %4954 = vmatprep.subr.bf16.mxu0 %v3876
    %4955 = vmatpush1.bf16.msra.mxu0 %v3875
    %4956 = vmatprep.subr.bf16.mxu0 %v3886
    %4957 = vmatpush1.bf16.msra.mxu0 %v3885
    %4958 = vmatprep.mubr.bf16.mxu0 %v1911
    %4959 = vmatmul.mubr.bf16.gmra.mrb[0].mxu0 %v1910
    %v4960 = vpop.f32.mrb[0].mxu0
    %v4961 = vadd.f32 %v4918, %v4960
    %v4962 = vpop.f32.mrb[0].mxu0
    %v4963 = vadd.f32 %v4920, %v4962
    %v4964 = vpop.f32.mrb[0].mxu0
    %v4965 = vadd.f32 %v4922, %v4964
    %v4966 = vpop.f32.mrb[0].mxu0
    %v4967 = vadd.f32 %v4924, %v4966
    %4968 = vdwg.mxu0
    %4969 = vmatprep.subr.bf16.mxu0 %v3896
    %4970 = vmatpush1.bf16.msra.mxu0 %v3895
    %4971 = vmatprep.subr.bf16.mxu0 %v3906
    %4972 = vmatpush1.bf16.msra.mxu0 %v3905
    %4973 = vmatprep.subr.bf16.mxu0 %v3916
    %4974 = vmatpush1.bf16.msra.mxu0 %v3915
    %4975 = vmatprep.subr.bf16.mxu0 %v3926
    %4976 = vmatpush1.bf16.msra.mxu0 %v3925
    %4977 = vmatprep.subr.bf16.mxu0 %v3936
    %4978 = vmatpush1.bf16.msra.mxu0 %v3935
    %4979 = vmatprep.subr.bf16.mxu0 %v3946
    %4980 = vmatpush1.bf16.msra.mxu0 %v3945
    %4981 = vmatprep.subr.bf16.mxu0 %v3956
    %4982 = vmatpush1.bf16.msra.mxu0 %v3955
    %4983 = vmatprep.subr.bf16.mxu0 %v3966
    %4984 = vmatpush1.bf16.msra.mxu0 %v3965
    %4985 = vmatprep.subr.bf16.mxu0 0
    %4986 = vmatpush1.bf16.msra.mxu0 0
    %4987 = vmatprep.subr.bf16.mxu0 0
    %4988 = vmatpush1.bf16.msra.mxu0 0
    %4989 = vmatprep.subr.bf16.mxu0 0
    %4990 = vmatpush1.bf16.msra.mxu0 0
    %4991 = vmatprep.subr.bf16.mxu0 0
    %4992 = vmatpush1.bf16.msra.mxu0 0
    %4993 = vmatprep.subr.bf16.mxu0 0
    %4994 = vmatpush1.bf16.msra.mxu0 0
    %4995 = vmatprep.subr.bf16.mxu0 0
    %4996 = vmatpush1.bf16.msra.mxu0 0
    %4997 = vmatprep.subr.bf16.mxu0 0
    %4998 = vmatpush1.bf16.msra.mxu0 0
    %4999 = vmatprep.subr.bf16.mxu0 0
    %5000 = vmatpush1.bf16.msra.mxu0 0
    %5001 = vmatprep.mubr.bf16.mxu0 0
    %5002 = vmatmul.mubr.bf16.gmra.mrb[0].mxu0 %v1912
    %v5003 = vpop.f32.mrb[0].mxu0
    %v5004 = vadd.f32 %v4961, %v5003
    %v5005 = vpop.f32.mrb[0].mxu0
    %v5006 = vadd.f32 %v4963, %v5005
    %v5007 = vpop.f32.mrb[0].mxu0
    %v5008 = vadd.f32 %v4965, %v5007
    %v5009 = vpop.f32.mrb[0].mxu0
    %v5010 = vadd.f32 %v4967, %v5009
    %5011 = vdwg.mxu0
    %v5012 = vmax.f32 %v4488, 0.0
    %v5013 = vmax.f32 %v4490, 0.0
    %v5014 = vmax.f32 %v4617, 0.0
    %v5015 = vmax.f32 %v4619, 0.0
    %v5016 = vmax.f32 %v4746, 0.0
    %v5017 = vmax.f32 %v4748, 0.0
    %v5018 = vmax.f32 %v4875, 0.0
    %v5019 = vmax.f32 %v4877, 0.0
    %v5020 = vmax.f32 %v5004, 0.0
    %v5021 = vmax.f32 %v5006, 0.0
    %v5022 = vmax.f32 %v4492, 0.0
    %v5023 = vmax.f32 %v4494, 0.0
    %v5024 = vmax.f32 %v4621, 0.0
    %v5025 = vmax.f32 %v4623, 0.0
    %v5026 = vmax.f32 %v4750, 0.0
    %v5027 = vmax.f32 %v4752, 0.0
    %v5028 = vmax.f32 %v4879, 0.0
    %v5029 = vmax.f32 %v4881, 0.0
    %v5030 = vmax.f32 %v5008, 0.0
    %v5031 = vmax.f32 %v5010, 0.0
    %v5032 = vpack.c.bf16 %v5022, %v5012
    %v5033 = vpack.c.bf16 %v5023, %v5013
    %v5034 = vpack.c.bf16 %v5024, %v5014
    %v5035 = vpack.c.bf16 %v5025, %v5015
    %v5036 = vpack.c.bf16 %v5026, %v5016
    %v5037 = vpack.c.bf16 %v5027, %v5017
    %v5038 = vpack.c.bf16 %v5028, %v5018
    %v5039 = vpack.c.bf16 %v5029, %v5019
    %v5040 = vpack.c.bf16 %v5030, %v5020
    %v5041 = vpack.c.bf16 %v5031, %v5021
    %v5042 = vld [vmem:[#allocation19] sm:$0xf]
    %v5043 = vld [vmem:[#allocation19 + $0x4] sm:$0xf]
    %v5044 = vld [vmem:[#allocation19 + $0x8] sm:$0xf]
    %v5045 = vld [vmem:[#allocation19 + $0xc] sm:$0xf]
    %v5046 = vld [vmem:[#allocation19 + $0x10] sm:$0xf]
    %v5047 = vld [vmem:[#allocation19 + $0x14] sm:$0xf]
    %v5048 = vld [vmem:[#allocation19 + $0x18] sm:$0xf]
    %v5049 = vld [vmem:[#allocation19 + $0x1c] sm:$0xf]
    %v5050 = vld [vmem:[#allocation19 + $0x20] sm:$0xf]
    %v5051 = vld [vmem:[#allocation19 + $0x24] sm:$0xf]
    %v5052 = vld [vmem:[#allocation19 + $0x28] sm:$0xf]
    %v5053 = vld [vmem:[#allocation19 + $0x2c] sm:$0xf]
    %v5054 = vld [vmem:[#allocation19 + $0x30] sm:$0xf]
    %v5055 = vld [vmem:[#allocation19 + $0x34] sm:$0xf]
    %v5056 = vld [vmem:[#allocation19 + $0x38] sm:$0xf]
    %v5057 = vld [vmem:[#allocation19 + $0x3c] sm:$0xf]
    %v5058 = vld [vmem:[#allocation19 + $0x40] sm:$0xf]
    %v5059 = vld [vmem:[#allocation19 + $0x44] sm:$0xf]
    %v5060 = vld [vmem:[#allocation19 + $0x48] sm:$0xf]
    %v5061 = vld [vmem:[#allocation19 + $0x4c] sm:$0xf]
    %v5062 = vld [vmem:[#allocation19 + $0x50] sm:$0xf]
    %v5063 = vld [vmem:[#allocation19 + $0x54] sm:$0xf]
    %v5064 = vld [vmem:[#allocation19 + $0x58] sm:$0xf]
    %v5065 = vld [vmem:[#allocation19 + $0x5c] sm:$0xf]
    %v5066 = vld [vmem:[#allocation19 + $0x60] sm:$0xf]
    %v5067 = vld [vmem:[#allocation19 + $0x64] sm:$0xf]
    %v5068 = vld [vmem:[#allocation19 + $0x68] sm:$0xf]
    %v5069 = vld [vmem:[#allocation19 + $0x6c] sm:$0xf]
    %v5070 = vld [vmem:[#allocation19 + $0x70] sm:$0xf]
    %v5071 = vld [vmem:[#allocation19 + $0x74] sm:$0xf]
    %v5072 = vld [vmem:[#allocation19 + $0x78] sm:$0xf]
    %v5073 = vld [vmem:[#allocation19 + $0x7c] sm:$0xf]
    %v5074 = vld [vmem:[#allocation19 + $0x80] sm:$0xf]
    %v5075 = vld [vmem:[#allocation19 + $0x84] sm:$0xf]
    %v5076 = vld [vmem:[#allocation19 + $0x88] sm:$0xf]
    %v5077 = vld [vmem:[#allocation19 + $0x8c] sm:$0xf]
    %v5078 = vld [vmem:[#allocation19 + $0x90] sm:$0xf]
    %v5079 = vld [vmem:[#allocation19 + $0x94] sm:$0xf]
    %v5080 = vld [vmem:[#allocation19 + $0x98] sm:$0xf]
    %v5081 = vld [vmem:[#allocation19 + $0x9c] sm:$0xf]
    %v5082 = vld [vmem:[#allocation19 + $0xa0] sm:$0xf]
    %v5083 = vld [vmem:[#allocation19 + $0xa4] sm:$0xf]
    %v5084 = vld [vmem:[#allocation19 + $0xa8] sm:$0xf]
    %v5085 = vld [vmem:[#allocation19 + $0xac] sm:$0xf]
    %v5086 = vld [vmem:[#allocation19 + $0xb0] sm:$0xf]
    %v5087 = vld [vmem:[#allocation19 + $0xb4] sm:$0xf]
    %v5088 = vld [vmem:[#allocation19 + $0xb8] sm:$0xf]
    %v5089 = vld [vmem:[#allocation19 + $0xbc] sm:$0xf]
    %v5090 = vld [vmem:[#allocation19 + $0xc0] sm:$0xf]
    %v5091 = vld [vmem:[#allocation19 + $0xc4] sm:$0xf]
    %v5092 = vld [vmem:[#allocation19 + $0xc8] sm:$0xf]
    %v5093 = vld [vmem:[#allocation19 + $0xcc] sm:$0xf]
    %v5094 = vld [vmem:[#allocation19 + $0xd0] sm:$0xf]
    %v5095 = vld [vmem:[#allocation19 + $0xd4] sm:$0xf]
    %v5096 = vld [vmem:[#allocation19 + $0xd8] sm:$0xf]
    %v5097 = vld [vmem:[#allocation19 + $0xdc] sm:$0xf]
    %v5098 = vld [vmem:[#allocation19 + $0xe0] sm:$0xf]
    %v5099 = vld [vmem:[#allocation19 + $0xe4] sm:$0xf]
    %v5100 = vld [vmem:[#allocation19 + $0xe8] sm:$0xf]
    %v5101 = vld [vmem:[#allocation19 + $0xec] sm:$0xf]
    %v5102 = vld [vmem:[#allocation19 + $0xf0] sm:$0xf]
    %v5103 = vld [vmem:[#allocation19 + $0xf4] sm:$0xf]
    %v5104 = vld [vmem:[#allocation19 + $0xf8] sm:$0xf]
    %v5105 = vld [vmem:[#allocation19 + $0xfc] sm:$0xf]
    %v5106 = vld [vmem:[#allocation19 + $0x100] sm:$0xf]
    %v5107 = vld [vmem:[#allocation19 + $0x104] sm:$0xf]
    %v5108 = vld [vmem:[#allocation19 + $0x108] sm:$0xf]
    %v5109 = vld [vmem:[#allocation19 + $0x10c] sm:$0xf]
    %v5110 = vld [vmem:[#allocation19 + $0x110] sm:$0xf]
    %v5111 = vld [vmem:[#allocation19 + $0x114] sm:$0xf]
    %v5112 = vld [vmem:[#allocation19 + $0x118] sm:$0xf]
    %v5113 = vld [vmem:[#allocation19 + $0x11c] sm:$0xf]
    %v5114 = vld [vmem:[#allocation19 + $0x120] sm:$0xf]
    %v5115 = vld [vmem:[#allocation19 + $0x124] sm:$0xf]
    %v5116 = vld [vmem:[#allocation19 + $0x128] sm:$0xf]
    %v5117 = vld [vmem:[#allocation19 + $0x12c] sm:$0xf]
    %v5118 = vld [vmem:[#allocation19 + $0x130] sm:$0xf]
    %v5119 = vld [vmem:[#allocation19 + $0x134] sm:$0xf]
    %v5120 = vld [vmem:[#allocation19 + $0x138] sm:$0xf]
    %v5121 = vld [vmem:[#allocation19 + $0x13c] sm:$0xf]
    %v5122 = vld [vmem:[#allocation19 + $0x140] sm:$0xf]
    %v5123 = vld [vmem:[#allocation19 + $0x144] sm:$0xf]
    %v5124 = vld [vmem:[#allocation19 + $0x148] sm:$0xf]
    %v5125 = vld [vmem:[#allocation19 + $0x14c] sm:$0xf]
    %v5126 = vld [vmem:[#allocation19 + $0x150] sm:$0xf]
    %v5127 = vld [vmem:[#allocation19 + $0x154] sm:$0xf]
    %v5128 = vld [vmem:[#allocation19 + $0x158] sm:$0xf]
    %v5129 = vld [vmem:[#allocation19 + $0x15c] sm:$0xf]
    %v5130 = vld [vmem:[#allocation19 + $0x160] sm:$0xf]
    %v5131 = vld [vmem:[#allocation19 + $0x164] sm:$0xf]
    %v5132 = vld [vmem:[#allocation19 + $0x168] sm:$0xf]
    %v5133 = vld [vmem:[#allocation19 + $0x16c] sm:$0xf]
    %v5134 = vld [vmem:[#allocation19 + $0x170] sm:$0xf]
    %v5135 = vld [vmem:[#allocation19 + $0x174] sm:$0xf]
    %v5136 = vld [vmem:[#allocation19 + $0x178] sm:$0xf]
    %v5137 = vld [vmem:[#allocation19 + $0x17c] sm:$0xf]
    %v5138 = vld [vmem:[#allocation19 + $0x180] sm:$0xf]
    %v5139 = vld [vmem:[#allocation19 + $0x184] sm:$0xf]
    %v5140 = vld [vmem:[#allocation19 + $0x188] sm:$0xf]
    %v5141 = vld [vmem:[#allocation19 + $0x18c] sm:$0xf]
    %v5142 = vld [vmem:[#allocation19 + $0x190] sm:$0xf]
    %v5143 = vld [vmem:[#allocation19 + $0x194] sm:$0xf]
    %v5144 = vld [vmem:[#allocation19 + $0x198] sm:$0xf]
    %v5145 = vld [vmem:[#allocation19 + $0x19c] sm:$0xf]
    %v5146 = vld [vmem:[#allocation19 + $0x1a0] sm:$0xf]
    %v5147 = vld [vmem:[#allocation19 + $0x1a4] sm:$0xf]
    %v5148 = vld [vmem:[#allocation19 + $0x1a8] sm:$0xf]
    %v5149 = vld [vmem:[#allocation19 + $0x1ac] sm:$0xf]
    %v5150 = vld [vmem:[#allocation19 + $0x1b0] sm:$0xf]
    %v5151 = vld [vmem:[#allocation19 + $0x1b4] sm:$0xf]
    %v5152 = vld [vmem:[#allocation19 + $0x1b8] sm:$0xf]
    %v5153 = vld [vmem:[#allocation19 + $0x1bc] sm:$0xf]
    %v5154 = vld [vmem:[#allocation19 + $0x1c0] sm:$0xf]
    %v5155 = vld [vmem:[#allocation19 + $0x1c4] sm:$0xf]
    %v5156 = vld [vmem:[#allocation19 + $0x1c8] sm:$0xf]
    %v5157 = vld [vmem:[#allocation19 + $0x1cc] sm:$0xf]
    %v5158 = vld [vmem:[#allocation19 + $0x1d0] sm:$0xf]
    %v5159 = vld [vmem:[#allocation19 + $0x1d4] sm:$0xf]
    %v5160 = vld [vmem:[#allocation19 + $0x1d8] sm:$0xf]
    %v5161 = vld [vmem:[#allocation19 + $0x1dc] sm:$0xf]
    %v5162 = vld [vmem:[#allocation19 + $0x1e0] sm:$0xf]
    %v5163 = vld [vmem:[#allocation19 + $0x1e4] sm:$0xf]
    %v5164 = vld [vmem:[#allocation19 + $0x1e8] sm:$0xf]
    %v5165 = vld [vmem:[#allocation19 + $0x1ec] sm:$0xf]
    %v5166 = vld [vmem:[#allocation19 + $0x1f0] sm:$0xf]
    %v5167 = vld [vmem:[#allocation19 + $0x1f4] sm:$0xf]
    %v5168 = vld [vmem:[#allocation19 + $0x1f8] sm:$0xf]
    %v5169 = vld [vmem:[#allocation19 + $0x1fc] sm:$0xf]
    %v5170 = vld [vmem:[#allocation19 + $0x200] sm:$0xf]
    %v5171 = vld [vmem:[#allocation19 + $0x204] sm:$0xf]
    %v5172 = vld [vmem:[#allocation19 + $0x208] sm:$0xf]
    %v5173 = vld [vmem:[#allocation19 + $0x20c] sm:$0xf]
    %v5174 = vld [vmem:[#allocation19 + $0x210] sm:$0xf]
    %v5175 = vld [vmem:[#allocation19 + $0x214] sm:$0xf]
    %v5176 = vld [vmem:[#allocation19 + $0x218] sm:$0xf]
    %v5177 = vld [vmem:[#allocation19 + $0x21c] sm:$0xf]
    %v5178 = vld [vmem:[#allocation19 + $0x220] sm:$0xf]
    %v5179 = vld [vmem:[#allocation19 + $0x224] sm:$0xf]
    %v5180 = vld [vmem:[#allocation19 + $0x228] sm:$0xf]
    %v5181 = vld [vmem:[#allocation19 + $0x22c] sm:$0xf]
    %v5182 = vld [vmem:[#allocation19 + $0x230] sm:$0xf]
    %v5183 = vld [vmem:[#allocation19 + $0x234] sm:$0xf]
    %v5184 = vld [vmem:[#allocation19 + $0x238] sm:$0xf]
    %v5185 = vld [vmem:[#allocation19 + $0x23c] sm:$0xf]
    %v5186 = vld [vmem:[#allocation19 + $0x240] sm:$0xf]
    %v5187 = vld [vmem:[#allocation19 + $0x244] sm:$0xf]
    %v5188 = vld [vmem:[#allocation19 + $0x248] sm:$0xf]
    %v5189 = vld [vmem:[#allocation19 + $0x24c] sm:$0xf]
    %v5190 = vld [vmem:[#allocation19 + $0x250] sm:$0xf]
    %v5191 = vld [vmem:[#allocation19 + $0x254] sm:$0xf]
    %v5192 = vld [vmem:[#allocation19 + $0x258] sm:$0xf]
    %v5193 = vld [vmem:[#allocation19 + $0x25c] sm:$0xf]
    %v5194 = vld [vmem:[#allocation19 + $0x260] sm:$0xf]
    %v5195 = vld [vmem:[#allocation19 + $0x264] sm:$0xf]
    %v5196 = vld [vmem:[#allocation19 + $0x268] sm:$0xf]
    %v5197 = vld [vmem:[#allocation19 + $0x26c] sm:$0xf]
    %v5198 = vld [vmem:[#allocation19 + $0x270] sm:$0xf]
    %v5199 = vld [vmem:[#allocation19 + $0x274] sm:$0xf]
    %v5200 = vld [vmem:[#allocation19 + $0x278] sm:$0xf]
    %v5201 = vld [vmem:[#allocation19 + $0x27c] sm:$0xf]
    %v5202 = vld [vmem:[#allocation20] sm:$0x1]
    %v5204 = vlaneseq
    %v5205 = vshrl.u32 %v5204, 7
    %v5206 = vsub.s32 0, %v5205
    %v5207 = vrot.slane %v5202, %v5206
    %v5369 = vunpack.c.l.b16 %v5042
    %v5370 = vunpack.c.l.b16 %v5043
    %v5371 = vunpack.c.l.b16 %v5044
    %v5372 = vunpack.c.l.b16 %v5045
    %v5373 = vunpack.c.l.b16 %v5046
    %v5374 = vunpack.c.l.b16 %v5047
    %v5375 = vunpack.c.l.b16 %v5048
    %v5376 = vunpack.c.l.b16 %v5049
    %v5377 = vunpack.c.l.b16 %v5050
    %v5378 = vunpack.c.l.b16 %v5051
    %v5379 = vunpack.c.l.b16 %v5052
    %v5380 = vunpack.c.l.b16 %v5053
    %v5381 = vunpack.c.l.b16 %v5054
    %v5382 = vunpack.c.l.b16 %v5055
    %v5383 = vunpack.c.l.b16 %v5056
    %v5384 = vunpack.c.l.b16 %v5057
    %v5385 = vunpack.c.l.b16 %v5058
    %v5386 = vunpack.c.l.b16 %v5059
    %v5387 = vunpack.c.l.b16 %v5060
    %v5388 = vunpack.c.l.b16 %v5061
    %v5389 = vunpack.c.l.b16 %v5062
    %v5390 = vunpack.c.l.b16 %v5063
    %v5391 = vunpack.c.l.b16 %v5064
    %v5392 = vunpack.c.l.b16 %v5065
    %v5393 = vunpack.c.l.b16 %v5066
    %v5394 = vunpack.c.l.b16 %v5067
    %v5395 = vunpack.c.l.b16 %v5068
    %v5396 = vunpack.c.l.b16 %v5069
    %v5397 = vunpack.c.l.b16 %v5070
    %v5398 = vunpack.c.l.b16 %v5071
    %v5399 = vunpack.c.l.b16 %v5072
    %v5400 = vunpack.c.l.b16 %v5073
    %v5401 = vunpack.c.l.b16 %v5074
    %v5402 = vunpack.c.l.b16 %v5075
    %v5403 = vunpack.c.l.b16 %v5076
    %v5404 = vunpack.c.l.b16 %v5077
    %v5405 = vunpack.c.l.b16 %v5078
    %v5406 = vunpack.c.l.b16 %v5079
    %v5407 = vunpack.c.l.b16 %v5080
    %v5408 = vunpack.c.l.b16 %v5081
    %v5409 = vunpack.c.l.b16 %v5082
    %v5410 = vunpack.c.l.b16 %v5083
    %v5411 = vunpack.c.l.b16 %v5084
    %v5412 = vunpack.c.l.b16 %v5085
    %v5413 = vunpack.c.l.b16 %v5086
    %v5414 = vunpack.c.l.b16 %v5087
    %v5415 = vunpack.c.l.b16 %v5088
    %v5416 = vunpack.c.l.b16 %v5089
    %v5417 = vunpack.c.l.b16 %v5090
    %v5418 = vunpack.c.l.b16 %v5091
    %v5419 = vunpack.c.l.b16 %v5092
    %v5420 = vunpack.c.l.b16 %v5093
    %v5421 = vunpack.c.l.b16 %v5094
    %v5422 = vunpack.c.l.b16 %v5095
    %v5423 = vunpack.c.l.b16 %v5096
    %v5424 = vunpack.c.l.b16 %v5097
    %v5425 = vunpack.c.l.b16 %v5098
    %v5426 = vunpack.c.l.b16 %v5099
    %v5427 = vunpack.c.l.b16 %v5100
    %v5428 = vunpack.c.l.b16 %v5101
    %v5429 = vunpack.c.l.b16 %v5102
    %v5430 = vunpack.c.l.b16 %v5103
    %v5431 = vunpack.c.l.b16 %v5104
    %v5432 = vunpack.c.l.b16 %v5105
    %v5433 = vunpack.c.l.b16 %v5106
    %v5434 = vunpack.c.l.b16 %v5107
    %v5435 = vunpack.c.l.b16 %v5108
    %v5436 = vunpack.c.l.b16 %v5109
    %v5437 = vunpack.c.l.b16 %v5110
    %v5438 = vunpack.c.l.b16 %v5111
    %v5439 = vunpack.c.l.b16 %v5112
    %v5440 = vunpack.c.l.b16 %v5113
    %v5441 = vunpack.c.l.b16 %v5114
    %v5442 = vunpack.c.l.b16 %v5115
    %v5443 = vunpack.c.l.b16 %v5116
    %v5444 = vunpack.c.l.b16 %v5117
    %v5445 = vunpack.c.l.b16 %v5118
    %v5446 = vunpack.c.l.b16 %v5119
    %v5447 = vunpack.c.l.b16 %v5120
    %v5448 = vunpack.c.l.b16 %v5121
    %v5449 = vunpack.c.l.b16 %v5122
    %v5450 = vunpack.c.l.b16 %v5123
    %v5451 = vunpack.c.l.b16 %v5124
    %v5452 = vunpack.c.l.b16 %v5125
    %v5453 = vunpack.c.l.b16 %v5126
    %v5454 = vunpack.c.l.b16 %v5127
    %v5455 = vunpack.c.l.b16 %v5128
    %v5456 = vunpack.c.l.b16 %v5129
    %v5457 = vunpack.c.l.b16 %v5130
    %v5458 = vunpack.c.l.b16 %v5131
    %v5459 = vunpack.c.l.b16 %v5132
    %v5460 = vunpack.c.l.b16 %v5133
    %v5461 = vunpack.c.l.b16 %v5134
    %v5462 = vunpack.c.l.b16 %v5135
    %v5463 = vunpack.c.l.b16 %v5136
    %v5464 = vunpack.c.l.b16 %v5137
    %v5465 = vunpack.c.l.b16 %v5138
    %v5466 = vunpack.c.l.b16 %v5139
    %v5467 = vunpack.c.l.b16 %v5140
    %v5468 = vunpack.c.l.b16 %v5141
    %v5469 = vunpack.c.l.b16 %v5142
    %v5470 = vunpack.c.l.b16 %v5143
    %v5471 = vunpack.c.l.b16 %v5144
    %v5472 = vunpack.c.l.b16 %v5145
    %v5473 = vunpack.c.l.b16 %v5146
    %v5474 = vunpack.c.l.b16 %v5147
    %v5475 = vunpack.c.l.b16 %v5148
    %v5476 = vunpack.c.l.b16 %v5149
    %v5477 = vunpack.c.l.b16 %v5150
    %v5478 = vunpack.c.l.b16 %v5151
    %v5479 = vunpack.c.l.b16 %v5152
    %v5480 = vunpack.c.l.b16 %v5153
    %v5481 = vunpack.c.l.b16 %v5154
    %v5482 = vunpack.c.l.b16 %v5155
    %v5483 = vunpack.c.l.b16 %v5156
    %v5484 = vunpack.c.l.b16 %v5157
    %v5485 = vunpack.c.l.b16 %v5158
    %v5486 = vunpack.c.l.b16 %v5159
    %v5487 = vunpack.c.l.b16 %v5160
    %v5488 = vunpack.c.l.b16 %v5161
    %v5489 = vunpack.c.l.b16 %v5162
    %v5490 = vunpack.c.l.b16 %v5163
    %v5491 = vunpack.c.l.b16 %v5164
    %v5492 = vunpack.c.l.b16 %v5165
    %v5493 = vunpack.c.l.b16 %v5166
    %v5494 = vunpack.c.l.b16 %v5167
    %v5495 = vunpack.c.l.b16 %v5168
    %v5496 = vunpack.c.l.b16 %v5169
    %v5497 = vunpack.c.l.b16 %v5170
    %v5498 = vunpack.c.l.b16 %v5171
    %v5499 = vunpack.c.l.b16 %v5172
    %v5500 = vunpack.c.l.b16 %v5173
    %v5501 = vunpack.c.l.b16 %v5174
    %v5502 = vunpack.c.l.b16 %v5175
    %v5503 = vunpack.c.l.b16 %v5176
    %v5504 = vunpack.c.l.b16 %v5177
    %v5505 = vunpack.c.l.b16 %v5178
    %v5506 = vunpack.c.l.b16 %v5179
    %v5507 = vunpack.c.l.b16 %v5180
    %v5508 = vunpack.c.l.b16 %v5181
    %v5509 = vunpack.c.l.b16 %v5182
    %v5510 = vunpack.c.l.b16 %v5183
    %v5511 = vunpack.c.l.b16 %v5184
    %v5512 = vunpack.c.l.b16 %v5185
    %v5513 = vunpack.c.l.b16 %v5186
    %v5514 = vunpack.c.l.b16 %v5187
    %v5515 = vunpack.c.l.b16 %v5188
    %v5516 = vunpack.c.l.b16 %v5189
    %v5517 = vunpack.c.l.b16 %v5190
    %v5518 = vunpack.c.l.b16 %v5191
    %v5519 = vunpack.c.l.b16 %v5192
    %v5520 = vunpack.c.l.b16 %v5193
    %v5521 = vunpack.c.l.b16 %v5194
    %v5522 = vunpack.c.l.b16 %v5195
    %v5523 = vunpack.c.l.b16 %v5196
    %v5524 = vunpack.c.l.b16 %v5197
    %v5525 = vunpack.c.l.b16 %v5198
    %v5526 = vunpack.c.l.b16 %v5199
    %v5527 = vunpack.c.l.b16 %v5200
    %v5528 = vunpack.c.l.b16 %v5201
    %v5529 = vpack.c.b16 %v5370, %v5369
    %v5530 = vpack.c.b16 %v5372, %v5371
    %v5531 = vpack.c.b16 %v5374, %v5373
    %v5532 = vpack.c.b16 %v5376, %v5375
    %v5533 = vpack.c.b16 %v5378, %v5377
    %v5534 = vpack.c.b16 %v5380, %v5379
    %v5535 = vpack.c.b16 %v5382, %v5381
    %v5536 = vpack.c.b16 %v5384, %v5383
    %v5537 = vpack.c.b16 %v5386, %v5385
    %v5538 = vpack.c.b16 %v5388, %v5387
    %v5539 = vpack.c.b16 %v5390, %v5389
    %v5540 = vpack.c.b16 %v5392, %v5391
    %v5541 = vpack.c.b16 %v5394, %v5393
    %v5542 = vpack.c.b16 %v5396, %v5395
    %v5543 = vpack.c.b16 %v5398, %v5397
    %v5544 = vpack.c.b16 %v5400, %v5399
    %v5545 = vpack.c.b16 %v5402, %v5401
    %v5546 = vpack.c.b16 %v5404, %v5403
    %v5547 = vpack.c.b16 %v5406, %v5405
    %v5548 = vpack.c.b16 %v5408, %v5407
    %v5549 = vpack.c.b16 %v5410, %v5409
    %v5550 = vpack.c.b16 %v5412, %v5411
    %v5551 = vpack.c.b16 %v5414, %v5413
    %v5552 = vpack.c.b16 %v5416, %v5415
    %v5553 = vpack.c.b16 %v5418, %v5417
    %v5554 = vpack.c.b16 %v5420, %v5419
    %v5555 = vpack.c.b16 %v5422, %v5421
    %v5556 = vpack.c.b16 %v5424, %v5423
    %v5557 = vpack.c.b16 %v5426, %v5425
    %v5558 = vpack.c.b16 %v5428, %v5427
    %v5559 = vpack.c.b16 %v5430, %v5429
    %v5560 = vpack.c.b16 %v5432, %v5431
    %v5561 = vpack.c.b16 %v5434, %v5433
    %v5562 = vpack.c.b16 %v5436, %v5435
    %v5563 = vpack.c.b16 %v5438, %v5437
    %v5564 = vpack.c.b16 %v5440, %v5439
    %v5565 = vpack.c.b16 %v5442, %v5441
    %v5566 = vpack.c.b16 %v5444, %v5443
    %v5567 = vpack.c.b16 %v5446, %v5445
    %v5568 = vpack.c.b16 %v5448, %v5447
    %v5569 = vpack.c.b16 %v5450, %v5449
    %v5570 = vpack.c.b16 %v5452, %v5451
    %v5571 = vpack.c.b16 %v5454, %v5453
    %v5572 = vpack.c.b16 %v5456, %v5455
    %v5573 = vpack.c.b16 %v5458, %v5457
    %v5574 = vpack.c.b16 %v5460, %v5459
    %v5575 = vpack.c.b16 %v5462, %v5461
    %v5576 = vpack.c.b16 %v5464, %v5463
    %v5577 = vpack.c.b16 %v5466, %v5465
    %v5578 = vpack.c.b16 %v5468, %v5467
    %v5579 = vpack.c.b16 %v5470, %v5469
    %v5580 = vpack.c.b16 %v5472, %v5471
    %v5581 = vpack.c.b16 %v5474, %v5473
    %v5582 = vpack.c.b16 %v5476, %v5475
    %v5583 = vpack.c.b16 %v5478, %v5477
    %v5584 = vpack.c.b16 %v5480, %v5479
    %v5585 = vpack.c.b16 %v5482, %v5481
    %v5586 = vpack.c.b16 %v5484, %v5483
    %v5587 = vpack.c.b16 %v5486, %v5485
    %v5588 = vpack.c.b16 %v5488, %v5487
    %v5589 = vpack.c.b16 %v5490, %v5489
    %v5590 = vpack.c.b16 %v5492, %v5491
    %v5591 = vpack.c.b16 %v5494, %v5493
    %v5592 = vpack.c.b16 %v5496, %v5495
    %v5593 = vpack.c.b16 %v5498, %v5497
    %v5594 = vpack.c.b16 %v5500, %v5499
    %v5595 = vpack.c.b16 %v5502, %v5501
    %v5596 = vpack.c.b16 %v5504, %v5503
    %v5597 = vpack.c.b16 %v5506, %v5505
    %v5598 = vpack.c.b16 %v5508, %v5507
    %v5599 = vpack.c.b16 %v5510, %v5509
    %v5600 = vpack.c.b16 %v5512, %v5511
    %v5601 = vpack.c.b16 %v5514, %v5513
    %v5602 = vpack.c.b16 %v5516, %v5515
    %v5603 = vpack.c.b16 %v5518, %v5517
    %v5604 = vpack.c.b16 %v5520, %v5519
    %v5605 = vpack.c.b16 %v5522, %v5521
    %v5606 = vpack.c.b16 %v5524, %v5523
    %v5607 = vpack.c.b16 %v5526, %v5525
    %v5608 = vpack.c.b16 %v5528, %v5527
    %5689 = vmatprep.subr.bf16.mxu0 0
    %5690 = vmatpush1.bf16.msra.mxu0 %v5529
    %5691 = vmatprep.subr.bf16.mxu0 0
    %5692 = vmatpush1.bf16.msra.mxu0 %v5530
    %5693 = vmatprep.subr.bf16.mxu0 0
    %5694 = vmatpush1.bf16.msra.mxu0 %v5531
    %5695 = vmatprep.subr.bf16.mxu0 0
    %5696 = vmatpush1.bf16.msra.mxu0 %v5532
    %5697 = vmatprep.subr.bf16.mxu0 0
    %5698 = vmatpush1.bf16.msra.mxu0 %v5533
    %5699 = vmatprep.subr.bf16.mxu0 0
    %5700 = vmatpush1.bf16.msra.mxu0 %v5534
    %5701 = vmatprep.subr.bf16.mxu0 0
    %5702 = vmatpush1.bf16.msra.mxu0 %v5535
    %5703 = vmatprep.subr.bf16.mxu0 0
    %5704 = vmatpush1.bf16.msra.mxu0 %v5536
    %5705 = vmatprep.subr.bf16.mxu0 0
    %5706 = vmatpush1.bf16.msra.mxu0 %v5537
    %5707 = vmatprep.subr.bf16.mxu0 0
    %5708 = vmatpush1.bf16.msra.mxu0 %v5538
    %5709 = vmatprep.subr.bf16.mxu0 0
    %5710 = vmatpush1.bf16.msra.mxu0 %v5539
    %5711 = vmatprep.subr.bf16.mxu0 0
    %5712 = vmatpush1.bf16.msra.mxu0 %v5540
    %5713 = vmatprep.subr.bf16.mxu0 0
    %5714 = vmatpush1.bf16.msra.mxu0 %v5541
    %5715 = vmatprep.subr.bf16.mxu0 0
    %5716 = vmatpush1.bf16.msra.mxu0 %v5542
    %5717 = vmatprep.subr.bf16.mxu0 0
    %5718 = vmatpush1.bf16.msra.mxu0 %v5543
    %5719 = vmatprep.subr.bf16.mxu0 0
    %5720 = vmatpush1.bf16.msra.mxu0 %v5544
    %5721 = vmatprep.mubr.bf16.mxu0 %v5033
    %5722 = vmatmul.mubr.bf16.gmra.mrb[0].mxu0 %v5032
    %v5723 = vpop.f32.mrb[0].mxu0
    %v5724 = vadd.f32 %v5207, %v5723
    %v5725 = vpop.f32.mrb[0].mxu0
    %v5726 = vpop.f32.mrb[0].mxu0
    %v5727 = vadd.f32 %v5207, %v5726
    %v5728 = vpop.f32.mrb[0].mxu0
    %5729 = vdwg.mxu0
    %5730 = vmatprep.subr.bf16.mxu0 0
    %5731 = vmatpush1.bf16.msra.mxu0 %v5545
    %5732 = vmatprep.subr.bf16.mxu0 0
    %5733 = vmatpush1.bf16.msra.mxu0 %v5546
    %5734 = vmatprep.subr.bf16.mxu0 0
    %5735 = vmatpush1.bf16.msra.mxu0 %v5547
    %5736 = vmatprep.subr.bf16.mxu0 0
    %5737 = vmatpush1.bf16.msra.mxu0 %v5548
    %5738 = vmatprep.subr.bf16.mxu0 0
    %5739 = vmatpush1.bf16.msra.mxu0 %v5549
    %5740 = vmatprep.subr.bf16.mxu0 0
    %5741 = vmatpush1.bf16.msra.mxu0 %v5550
    %5742 = vmatprep.subr.bf16.mxu0 0
    %5743 = vmatpush1.bf16.msra.mxu0 %v5551
    %5744 = vmatprep.subr.bf16.mxu0 0
    %5745 = vmatpush1.bf16.msra.mxu0 %v5552
    %5746 = vmatprep.subr.bf16.mxu0 0
    %5747 = vmatpush1.bf16.msra.mxu0 %v5553
    %5748 = vmatprep.subr.bf16.mxu0 0
    %5749 = vmatpush1.bf16.msra.mxu0 %v5554
    %5750 = vmatprep.subr.bf16.mxu0 0
    %5751 = vmatpush1.bf16.msra.mxu0 %v5555
    %5752 = vmatprep.subr.bf16.mxu0 0
    %5753 = vmatpush1.bf16.msra.mxu0 %v5556
    %5754 = vmatprep.subr.bf16.mxu0 0
    %5755 = vmatpush1.bf16.msra.mxu0 %v5557
    %5756 = vmatprep.subr.bf16.mxu0 0
    %5757 = vmatpush1.bf16.msra.mxu0 %v5558
    %5758 = vmatprep.subr.bf16.mxu0 0
    %5759 = vmatpush1.bf16.msra.mxu0 %v5559
    %5760 = vmatprep.subr.bf16.mxu0 0
    %5761 = vmatpush1.bf16.msra.mxu0 %v5560
    %5762 = vmatprep.mubr.bf16.mxu0 %v5035
    %5763 = vmatmul.mubr.bf16.gmra.mrb[0].mxu0 %v5034
    %v5764 = vpop.f32.mrb[0].mxu0
    %v5765 = vadd.f32 %v5724, %v5764
    %v5766 = vpop.f32.mrb[0].mxu0
    %v5767 = vpop.f32.mrb[0].mxu0
    %v5768 = vadd.f32 %v5727, %v5767
    %v5769 = vpop.f32.mrb[0].mxu0
    %5770 = vdwg.mxu0
    %5771 = vmatprep.subr.bf16.mxu0 0
    %5772 = vmatpush1.bf16.msra.mxu0 %v5561
    %5773 = vmatprep.subr.bf16.mxu0 0
    %5774 = vmatpush1.bf16.msra.mxu0 %v5562
    %5775 = vmatprep.subr.bf16.mxu0 0
    %5776 = vmatpush1.bf16.msra.mxu0 %v5563
    %5777 = vmatprep.subr.bf16.mxu0 0
    %5778 = vmatpush1.bf16.msra.mxu0 %v5564
    %5779 = vmatprep.subr.bf16.mxu0 0
    %5780 = vmatpush1.bf16.msra.mxu0 %v5565
    %5781 = vmatprep.subr.bf16.mxu0 0
    %5782 = vmatpush1.bf16.msra.mxu0 %v5566
    %5783 = vmatprep.subr.bf16.mxu0 0
    %5784 = vmatpush1.bf16.msra.mxu0 %v5567
    %5785 = vmatprep.subr.bf16.mxu0 0
    %5786 = vmatpush1.bf16.msra.mxu0 %v5568
    %5787 = vmatprep.subr.bf16.mxu0 0
    %5788 = vmatpush1.bf16.msra.mxu0 %v5569
    %5789 = vmatprep.subr.bf16.mxu0 0
    %5790 = vmatpush1.bf16.msra.mxu0 %v5570
    %5791 = vmatprep.subr.bf16.mxu0 0
    %5792 = vmatpush1.bf16.msra.mxu0 %v5571
    %5793 = vmatprep.subr.bf16.mxu0 0
    %5794 = vmatpush1.bf16.msra.mxu0 %v5572
    %5795 = vmatprep.subr.bf16.mxu0 0
    %5796 = vmatpush1.bf16.msra.mxu0 %v5573
    %5797 = vmatprep.subr.bf16.mxu0 0
    %5798 = vmatpush1.bf16.msra.mxu0 %v5574
    %5799 = vmatprep.subr.bf16.mxu0 0
    %5800 = vmatpush1.bf16.msra.mxu0 %v5575
    %5801 = vmatprep.subr.bf16.mxu0 0
    %5802 = vmatpush1.bf16.msra.mxu0 %v5576
    %5803 = vmatprep.mubr.bf16.mxu0 %v5037
    %5804 = vmatmul.mubr.bf16.gmra.mrb[0].mxu0 %v5036
    %v5805 = vpop.f32.mrb[0].mxu0
    %v5806 = vadd.f32 %v5765, %v5805
    %v5807 = vpop.f32.mrb[0].mxu0
    %v5808 = vpop.f32.mrb[0].mxu0
    %v5809 = vadd.f32 %v5768, %v5808
    %v5810 = vpop.f32.mrb[0].mxu0
    %5811 = vdwg.mxu0
    %5812 = vmatprep.subr.bf16.mxu0 0
    %5813 = vmatpush1.bf16.msra.mxu0 %v5577
    %5814 = vmatprep.subr.bf16.mxu0 0
    %5815 = vmatpush1.bf16.msra.mxu0 %v5578
    %5816 = vmatprep.subr.bf16.mxu0 0
    %5817 = vmatpush1.bf16.msra.mxu0 %v5579
    %5818 = vmatprep.subr.bf16.mxu0 0
    %5819 = vmatpush1.bf16.msra.mxu0 %v5580
    %5820 = vmatprep.subr.bf16.mxu0 0
    %5821 = vmatpush1.bf16.msra.mxu0 %v5581
    %5822 = vmatprep.subr.bf16.mxu0 0
    %5823 = vmatpush1.bf16.msra.mxu0 %v5582
    %5824 = vmatprep.subr.bf16.mxu0 0
    %5825 = vmatpush1.bf16.msra.mxu0 %v5583
    %5826 = vmatprep.subr.bf16.mxu0 0
    %5827 = vmatpush1.bf16.msra.mxu0 %v5584
    %5828 = vmatprep.subr.bf16.mxu0 0
    %5829 = vmatpush1.bf16.msra.mxu0 %v5585
    %5830 = vmatprep.subr.bf16.mxu0 0
    %5831 = vmatpush1.bf16.msra.mxu0 %v5586
    %5832 = vmatprep.subr.bf16.mxu0 0
    %5833 = vmatpush1.bf16.msra.mxu0 %v5587
    %5834 = vmatprep.subr.bf16.mxu0 0
    %5835 = vmatpush1.bf16.msra.mxu0 %v5588
    %5836 = vmatprep.subr.bf16.mxu0 0
    %5837 = vmatpush1.bf16.msra.mxu0 %v5589
    %5838 = vmatprep.subr.bf16.mxu0 0
    %5839 = vmatpush1.bf16.msra.mxu0 %v5590
    %5840 = vmatprep.subr.bf16.mxu0 0
    %5841 = vmatpush1.bf16.msra.mxu0 %v5591
    %5842 = vmatprep.subr.bf16.mxu0 0
    %5843 = vmatpush1.bf16.msra.mxu0 %v5592
    %5844 = vmatprep.mubr.bf16.mxu0 %v5039
    %5845 = vmatmul.mubr.bf16.gmra.mrb[0].mxu0 %v5038
    %v5846 = vpop.f32.mrb[0].mxu0
    %v5847 = vadd.f32 %v5806, %v5846
    %v5848 = vpop.f32.mrb[0].mxu0
    %v5849 = vpop.f32.mrb[0].mxu0
    %v5850 = vadd.f32 %v5809, %v5849
    %v5851 = vpop.f32.mrb[0].mxu0
    %5852 = vdwg.mxu0
    %5853 = vmatprep.subr.bf16.mxu0 0
    %5854 = vmatpush1.bf16.msra.mxu0 %v5593
    %5855 = vmatprep.subr.bf16.mxu0 0
    %5856 = vmatpush1.bf16.msra.mxu0 %v5594
    %5857 = vmatprep.subr.bf16.mxu0 0
    %5858 = vmatpush1.bf16.msra.mxu0 %v5595
    %5859 = vmatprep.subr.bf16.mxu0 0
    %5860 = vmatpush1.bf16.msra.mxu0 %v5596
    %5861 = vmatprep.subr.bf16.mxu0 0
    %5862 = vmatpush1.bf16.msra.mxu0 %v5597
    %5863 = vmatprep.subr.bf16.mxu0 0
    %5864 = vmatpush1.bf16.msra.mxu0 %v5598
    %5865 = vmatprep.subr.bf16.mxu0 0
    %5866 = vmatpush1.bf16.msra.mxu0 %v5599
    %5867 = vmatprep.subr.bf16.mxu0 0
    %5868 = vmatpush1.bf16.msra.mxu0 %v5600
    %5869 = vmatprep.subr.bf16.mxu0 0
    %5870 = vmatpush1.bf16.msra.mxu0 %v5601
    %5871 = vmatprep.subr.bf16.mxu0 0
    %5872 = vmatpush1.bf16.msra.mxu0 %v5602
    %5873 = vmatprep.subr.bf16.mxu0 0
    %5874 = vmatpush1.bf16.msra.mxu0 %v5603
    %5875 = vmatprep.subr.bf16.mxu0 0
    %5876 = vmatpush1.bf16.msra.mxu0 %v5604
    %5877 = vmatprep.subr.bf16.mxu0 0
    %5878 = vmatpush1.bf16.msra.mxu0 %v5605
    %5879 = vmatprep.subr.bf16.mxu0 0
    %5880 = vmatpush1.bf16.msra.mxu0 %v5606
    %5881 = vmatprep.subr.bf16.mxu0 0
    %5882 = vmatpush1.bf16.msra.mxu0 %v5607
    %5883 = vmatprep.subr.bf16.mxu0 0
    %5884 = vmatpush1.bf16.msra.mxu0 %v5608
    %5885 = vmatprep.mubr.bf16.mxu0 %v5041
    %5886 = vmatmul.mubr.bf16.gmra.mrb[0].mxu0 %v5040
    %v5887 = vpop.f32.mrb[0].mxu0
    %v5888 = vadd.f32 %v5847, %v5887
    %v5889 = vpop.f32.mrb[0].mxu0
    %v5890 = vpop.f32.mrb[0].mxu0
    %v5891 = vadd.f32 %v5850, %v5890
    %v5892 = vpop.f32.mrb[0].mxu0
    %5893 = vdwg.mxu0
    %v5894 = vmax.f32 %v5888, 0.0
    %v5895 = vmax.f32 %v5891, 0.0
    %5896 = vst [vmem:[#allocation22] sm:$0xff] %v5894
    %5897 = vst [vmem:[#allocation22 + $0x8] sm:$0xff] %v5895
    // Predicated region
    $region102: #{tpu_custom_call.1} parent=1 // pred_check
      _
    $region103: #{tpu_custom_call.1} parent=1 // pred_check_branch
      %5899 = sbr.rel (0) target = $region105
    $region104: #{tpu_custom_call.1} parent=1 // pred_region
      %s5901 = ssub.s32 256, 256
      %5902 = vsyncadd [#allocation4], %s5901
      %s5903 = sshll.u32 [#allocation22], 4
      %s5904 = int_to_ptr.vmem [resolvable:$true] %s5903
      %5909 = dma.vmem_to_hbm [thread:$0]  %s5904, 256, %s13, [#allocation4], 128, 128, 8
    $region105: #{tpu_custom_call.1} parent=1 // pred_fallthru
      _
    // Predicated region
    $region106: #{tpu_custom_call.1} parent=1 // pred_check
      _
    $region107: #{tpu_custom_call.1} parent=1 // pred_check_branch
      %5911 = sbr.rel (0) target = $region109
    $region108: #{tpu_custom_call.1} parent=1 // pred_region
      %5912 = dma.done [#allocation4], 256
    $region109: #{tpu_custom_call.1} parent=1 // pred_fallthru
      _
    %5913 = vsyncpa [#allocation3], 1
    %5914 = vsyncpa [#allocation6], 1
    %5915 = vsyncpa [#allocation9], 1
    %5916 = vsyncpa [#allocation12], 1
    %5917 = vsyncpa [#allocation15], 1
    %5918 = vsyncpa [#allocation18], 1
    %5919 = vsyncpa [#allocation21], 1
    %5920 = vsyncpa [#allocation4], 1

// kernel: tpu_custom_call.1
$region0: #{tpu_custom_call.1}
  #allocation0 [shape = 'u32[]', space=smem, size = 0x4, offset = 0x4, fixed_abs, tag = 'smem constant byte address 0x4 - core index']
  #allocation1 [shape = 'u32[144,128]{1,0:T(1,128)}', space=vmem, size = 0x12000, scoped, tag = 'internal scratch']
  %s0 = inlined_call_operand.vmem [shape: bf16[16,8], index: 0, kind: input, shape index: {}]
  %s1 = inlined_call_operand.hbm [shape: bf16[8,128], index: 1, kind: input, shape index: {}]
  %s2 = inlined_call_operand.hbm [shape: f32[1,128], index: 2, kind: input, shape index: {}]
  %s3 = inlined_call_operand.hbm [shape: bf16[128,256], index: 3, kind: input, shape index: {}]
  %s4 = inlined_call_operand.hbm [shape: f32[1,256], index: 4, kind: input, shape index: {}]
  %s5 = inlined_call_operand.hbm [shape: bf16[256,384], index: 5, kind: input, shape index: {}]
  %s6 = inlined_call_operand.hbm [shape: f32[1,384], index: 6, kind: input, shape index: {}]
  %s7 = inlined_call_operand.hbm [shape: bf16[384,640], index: 7, kind: input, shape index: {}]
  %s8 = inlined_call_operand.hbm [shape: f32[1,640], index: 8, kind: input, shape index: {}]
  %s9 = inlined_call_operand.hbm [shape: bf16[640,1280], index: 9, kind: input, shape index: {}]
  %s10 = inlined_call_operand.hbm [shape: f32[1,1280], index: 10, kind: input, shape index: {}]
  %s11 = inlined_call_operand.hbm [shape: bf16[1280,128], index: 11, kind: input, shape index: {}]
  %s12 = inlined_call_operand.hbm [shape: f32[1,128], index: 12, kind: input, shape index: {}]
  %s13 = inlined_call_operand.hbm [shape: f32[16,128], index: 13, kind: output, shape index: {}]
  %s14 = sld [smem:[#allocation0]]
  $region110: #{tpu_custom_call.1} parent=0
    _
  %s16 = ssub.s32 1, %s14
  %s17 = scalar_select 0, %s16, %s14
  $region1: #{tpu_custom_call.1} parent=0
    #allocation2 [shape = 'u8[2048]{0}', space=vmem, size = 0x800, scoped, tag = 'input window, operand 1, single buffered']
    #allocation3 [shape = 's32[1]{0}', space=sflag, size = 0x4, scoped, tag = 'scoped memory for tpu_custom_call.1']
    #allocation4 [shape = 's32[1]{0}', space=sflag, size = 0x4, scoped, tag = 'scoped memory for tpu_custom_call.1']
    #allocation5 [shape = 'u8[512]{0}', space=vmem, size = 0x400, scoped, tag = 'input window, operand 2, single buffered']
    #allocation6 [shape = 's32[1]{0}', space=sflag, size = 0x4, scoped, tag = 'scoped memory for tpu_custom_call.1']
    #allocation7 [shape = 'u8[65536]{0}', space=vmem, size = 0x10000, scoped, tag = 'input window, operand 3, single buffered']
    #allocation8 [shape = 'u8[1024]{0}', space=vmem, size = 0x400, scoped, tag = 'input window, operand 4, single buffered']
    #allocation9 [shape = 's32[1]{0}', space=sflag, size = 0x4, scoped, tag = 'scoped memory for tpu_custom_call.1']
    #allocation10 [shape = 'u8[196608]{0}', space=vmem, size = 0x30000, scoped, tag = 'input window, operand 5, single buffered']
    #allocation11 [shape = 'u8[1536]{0}', space=vmem, size = 0x800, scoped, tag = 'input window, operand 6, single buffered']
    #allocation12 [shape = 's32[1]{0}', space=sflag, size = 0x4, scoped, tag = 'scoped memory for tpu_custom_call.1']
    #allocation13 [shape = 'u8[491520]{0}', space=vmem, size = 0x78000, scoped, tag = 'input window, operand 7, single buffered']
    #allocation14 [shape = 'u8[2560]{0}', space=vmem, size = 0xc00, scoped, tag = 'input window, operand 8, single buffered']
    #allocation15 [shape = 's32[1]{0}', space=sflag, size = 0x4, scoped, tag = 'scoped memory for tpu_custom_call.1']
    #allocation16 [shape = 'u8[1638400]{0}', space=vmem, size = 0x190000, scoped, tag = 'input window, operand 9, single buffered']
    #allocation17 [shape = 'u8[5120]{0}', space=vmem, size = 0x1400, scoped, tag = 'input window, operand 10, single buffered']
    #allocation18 [shape = 's32[1]{0}', space=sflag, size = 0x4, scoped, tag = 'scoped memory for tpu_custom_call.1']
    #allocation19 [shape = 'u8[327680]{0}', space=vmem, size = 0x50000, scoped, tag = 'input window, operand 11, single buffered']
    #allocation20 [shape = 'u8[512]{0}', space=vmem, size = 0x400, scoped, tag = 'input window, operand 12, single buffered']
    #allocation21 [shape = 's32[1]{0}', space=sflag, size = 0x4, scoped, tag = 'scoped memory for tpu_custom_call.1']
    #allocation22 [shape = 'u8[8192]{0}', space=vmem, size = 0x2000, scoped, tag = 'output window, operand 0, single buffered']
    %18 = vsyncpa [#allocation3], 0
    %19 = vsyncpa [#allocation6], 0
    %20 = vsyncpa [#allocation9], 0
    %21 = vsyncpa [#allocation12], 0
    %22 = vsyncpa [#allocation15], 0
    %23 = vsyncpa [#allocation18], 0
    %24 = vsyncpa [#allocation21], 0
    %25 = vsyncpa [#allocation4], 0
    // Predicated region
    $region2: #{tpu_custom_call.1} parent=1 // pred_check
      _
    $region3: #{tpu_custom_call.1} parent=1 // pred_check_branch
      %27 = sbr.rel (0) target = $region5
    $region4: #{tpu_custom_call.1} parent=1 // pred_region
      _
    $region5: #{tpu_custom_call.1} parent=1 // pred_fallthru
      _
    // Predicated region
    $region6: #{tpu_custom_call.1} parent=1 // pred_check
      _
    $region7: #{tpu_custom_call.1} parent=1 // pred_check_branch
      %29 = sbr.rel (0) target = $region9
    $region8: #{tpu_custom_call.1} parent=1 // pred_region
      %s31 = ssub.s32 64, 64
      %32 = vsyncadd [#allocation3], %s31
      %s34 = sshll.u32 [#allocation2], 4
      %s35 = int_to_ptr.vmem [resolvable:$true] %s34
      %37 = dma.hbm_to_vmem [thread:$0]  %s1, 64, %s35, [#allocation3]
    $region9: #{tpu_custom_call.1} parent=1 // pred_fallthru
      _
    // Predicated region
    $region10: #{tpu_custom_call.1} parent=1 // pred_check
      _
    $region11: #{tpu_custom_call.1} parent=1 // pred_check_branch
      %39 = sbr.rel (0) target = $region13
    $region12: #{tpu_custom_call.1} parent=1 // pred_region
      %s41 = ssub.s32 16, 16
      %42 = vsyncadd [#allocation6], %s41
      %s44 = sshll.u32 [#allocation5], 4
      %s45 = int_to_ptr.vmem [resolvable:$true] %s44
      %47 = dma.hbm_to_vmem [thread:$0]  %s2, 16, %s45, [#allocation6]
    $region13: #{tpu_custom_call.1} parent=1 // pred_fallthru
      _
    // Predicated region
    $region14: #{tpu_custom_call.1} parent=1 // pred_check
      _
    $region15: #{tpu_custom_call.1} parent=1 // pred_check_branch
      %49 = sbr.rel (0) target = $region17
    $region16: #{tpu_custom_call.1} parent=1 // pred_region
      %s51 = ssub.s32 2048, 2048
      %52 = vsyncadd [#allocation6], %s51
      %s53 = sshll.u32 [#allocation7], 4
      %s54 = int_to_ptr.vmem [resolvable:$true] %s53
      %59 = dma.hbm_to_vmem [thread:$0]  %s3, 2048, %s54, [#allocation6], 128, 128, 8
    $region17: #{tpu_custom_call.1} parent=1 // pred_fallthru
      _
    // Predicated region
    $region18: #{tpu_custom_call.1} parent=1 // pred_check
      _
    $region19: #{tpu_custom_call.1} parent=1 // pred_check_branch
      %61 = sbr.rel (0) target = $region21
    $region20: #{tpu_custom_call.1} parent=1 // pred_region
      %s63 = ssub.s32 32, 32
      %64 = vsyncadd [#allocation9], %s63
      %s66 = sshll.u32 [#allocation8], 4
      %s67 = int_to_ptr.vmem [resolvable:$true] %s66
      %69 = dma.hbm_to_vmem [thread:$0]  %s4, 32, %s67, [#allocation9]
    $region21: #{tpu_custom_call.1} parent=1 // pred_fallthru
      _
    // Predicated region
    $region22: #{tpu_custom_call.1} parent=1 // pred_check
      _
    $region23: #{tpu_custom_call.1} parent=1 // pred_check_branch
      %71 = sbr.rel (0) target = $region25
    $region24: #{tpu_custom_call.1} parent=1 // pred_region
      %s73 = ssub.s32 6144, 6144
      %74 = vsyncadd [#allocation9], %s73
      %s75 = sshll.u32 [#allocation10], 4
      %s76 = int_to_ptr.vmem [resolvable:$true] %s75
      %81 = dma.hbm_to_vmem [thread:$0]  %s5, 6144, %s76, [#allocation9], 192, 192, 12
    $region25: #{tpu_custom_call.1} parent=1 // pred_fallthru
      _
    // Predicated region
    $region26: #{tpu_custom_call.1} parent=1 // pred_check
      _
    $region27: #{tpu_custom_call.1} parent=1 // pred_check_branch
      %83 = sbr.rel (0) target = $region29
    $region28: #{tpu_custom_call.1} parent=1 // pred_region
      %s85 = ssub.s32 48, 48
      %86 = vsyncadd [#allocation12], %s85
      %s88 = sshll.u32 [#allocation11], 4
      %s89 = int_to_ptr.vmem [resolvable:$true] %s88
      %91 = dma.hbm_to_vmem [thread:$0]  %s6, 48, %s89, [#allocation12]
    $region29: #{tpu_custom_call.1} parent=1 // pred_fallthru
      _
    // Predicated region
    $region30: #{tpu_custom_call.1} parent=1 // pred_check
      _
    $region31: #{tpu_custom_call.1} parent=1 // pred_check_branch
      %93 = sbr.rel (0) target = $region33
    $region32: #{tpu_custom_call.1} parent=1 // pred_region
      %s95 = ssub.s32 15360, 15360
      %96 = vsyncadd [#allocation12], %s95
      %s97 = sshll.u32 [#allocation13], 4
      %s98 = int_to_ptr.vmem [resolvable:$true] %s97
      %103 = dma.hbm_to_vmem [thread:$0]  %s7, 15360, %s98, [#allocation12], 320, 320, 20
    $region33: #{tpu_custom_call.1} parent=1 // pred_fallthru
      _
    // Predicated region
    $region34: #{tpu_custom_call.1} parent=1 // pred_check
      _
    $region35: #{tpu_custom_call.1} parent=1 // pred_check_branch
      %105 = sbr.rel (0) target = $region37
    $region36: #{tpu_custom_call.1} parent=1 // pred_region
      %s107 = ssub.s32 80, 80
      %108 = vsyncadd [#allocation15], %s107
      %s110 = sshll.u32 [#allocation14], 4
      %s111 = int_to_ptr.vmem [resolvable:$true] %s110
      %113 = dma.hbm_to_vmem [thread:$0]  %s8, 80, %s111, [#allocation15]
    $region37: #{tpu_custom_call.1} parent=1 // pred_fallthru
      _
    // Predicated region
    $region38: #{tpu_custom_call.1} parent=1 // pred_check
      _
    $region39: #{tpu_custom_call.1} parent=1 // pred_check_branch
      %115 = sbr.rel (0) target = $region41
    $region40: #{tpu_custom_call.1} parent=1 // pred_region
      %s117 = ssub.s32 51200, 51200
      %118 = vsyncadd [#allocation15], %s117
      %s119 = sshll.u32 [#allocation16], 4
      %s120 = int_to_ptr.vmem [resolvable:$true] %s119
      %125 = dma.hbm_to_vmem [thread:$0]  %s9, 51200, %s120, [#allocation15], 640, 640, 40
    $region41: #{tpu_custom_call.1} parent=1 // pred_fallthru
      _
    // Predicated region
    $region42: #{tpu_custom_call.1} parent=1 // pred_check
      _
    $region43: #{tpu_custom_call.1} parent=1 // pred_check_branch
      %127 = sbr.rel (0) target = $region45
    $region44: #{tpu_custom_call.1} parent=1 // pred_region
      %s129 = ssub.s32 160, 160
      %130 = vsyncadd [#allocation18], %s129
      %s132 = sshll.u32 [#allocation17], 4
      %s133 = int_to_ptr.vmem [resolvable:$true] %s132
      %135 = dma.hbm_to_vmem [thread:$0]  %s10, 160, %s133, [#allocation18]
    $region45: #{tpu_custom_call.1} parent=1 // pred_fallthru
      _
    // Predicated region
    $region46: #{tpu_custom_call.1} parent=1 // pred_check
      _
    $region47: #{tpu_custom_call.1} parent=1 // pred_check_branch
      %137 = sbr.rel (0) target = $region49
    $region48: #{tpu_custom_call.1} parent=1 // pred_region
      %s139 = ssub.s32 10240, 10240
      %140 = vsyncadd [#allocation18], %s139
      %s141 = sshll.u32 [#allocation19], 4
      %s142 = int_to_ptr.vmem [resolvable:$true] %s141
      %147 = dma.hbm_to_vmem [thread:$0]  %s11, 10240, %s142, [#allocation18], 64, 64, 4
    $region49: #{tpu_custom_call.1} parent=1 // pred_fallthru
      _
    // Predicated region
    $region50: #{tpu_custom_call.1} parent=1 // pred_check
      _
    $region51: #{tpu_custom_call.1} parent=1 // pred_check_branch
      %149 = sbr.rel (0) target = $region53
    $region52: #{tpu_custom_call.1} parent=1 // pred_region
      %s151 = ssub.s32 16, 16
      %152 = vsyncadd [#allocation21], %s151
      %s154 = sshll.u32 [#allocation20], 4
      %s155 = int_to_ptr.vmem [resolvable:$true] %s154
      %157 = dma.hbm_to_vmem [thread:$0]  %s12, 16, %s155, [#allocation21]
    $region53: #{tpu_custom_call.1} parent=1 // pred_fallthru
      _
    // Predicated region
    $region54: #{tpu_custom_call.1} parent=1 // pred_check
      _
    $region55: #{tpu_custom_call.1} parent=1 // pred_check_branch
      %159 = sbr.rel (0) target = $region57
    $region56: #{tpu_custom_call.1} parent=1 // pred_region
      %160 = dma.done [#allocation3], 64
    $region57: #{tpu_custom_call.1} parent=1 // pred_fallthru
      _
    // Predicated region
    $region58: #{tpu_custom_call.1} parent=1 // pred_check
      _
    $region59: #{tpu_custom_call.1} parent=1 // pred_check_branch
      %162 = sbr.rel (0) target = $region61
    $region60: #{tpu_custom_call.1} parent=1 // pred_region
      %163 = dma.done [#allocation6], 16
    $region61: #{tpu_custom_call.1} parent=1 // pred_fallthru
      _
    // Predicated region
    $region62: #{tpu_custom_call.1} parent=1 // pred_check
      _
    $region63: #{tpu_custom_call.1} parent=1 // pred_check_branch
      %165 = sbr.rel (0) target = $region65
    $region64: #{tpu_custom_call.1} parent=1 // pred_region
      %166 = dma.done [#allocation6], 2048
    $region65: #{tpu_custom_call.1} parent=1 // pred_fallthru
      _
    // Predicated region
    $region66: #{tpu_custom_call.1} parent=1 // pred_check
      _
    $region67: #{tpu_custom_call.1} parent=1 // pred_check_branch
      %168 = sbr.rel (0) target = $region69
    $region68: #{tpu_custom_call.1} parent=1 // pred_region
      %169 = dma.done [#allocation9], 32
    $region69: #{tpu_custom_call.1} parent=1 // pred_fallthru
      _
    // Predicated region
    $region70: #{tpu_custom_call.1} parent=1 // pred_check
      _
    $region71: #{tpu_custom_call.1} parent=1 // pred_check_branch
      %171 = sbr.rel (0) target = $region73
    $region72: #{tpu_custom_call.1} parent=1 // pred_region
      %172 = dma.done [#allocation9], 6144
    $region73: #{tpu_custom_call.1} parent=1 // pred_fallthru
      _
    // Predicated region
    $region74: #{tpu_custom_call.1} parent=1 // pred_check
      _
    $region75: #{tpu_custom_call.1} parent=1 // pred_check_branch
      %174 = sbr.rel (0) target = $region77
    $region76: #{tpu_custom_call.1} parent=1 // pred_region
      %175 = dma.done [#allocation12], 48
    $region77: #{tpu_custom_call.1} parent=1 // pred_fallthru
      _
    // Predicated region
    $region78: #{tpu_custom_call.1} parent=1 // pred_check
      _
    $region79: #{tpu_custom_call.1} parent=1 // pred_check_branch
      %177 = sbr.rel (0) target = $region81
    $region80: #{tpu_custom_call.1} parent=1 // pred_region
      %178 = dma.done [#allocation12], 15360
    $region81: #{tpu_custom_call.1} parent=1 // pred_fallthru
      _
    // Predicated region
    $region82: #{tpu_custom_call.1} parent=1 // pred_check
      _
    $region83: #{tpu_custom_call.1} parent=1 // pred_check_branch
      %180 = sbr.rel (0) target = $region85
    $region84: #{tpu_custom_call.1} parent=1 // pred_region
      %181 = dma.done [#allocation15], 80
    $region85: #{tpu_custom_call.1} parent=1 // pred_fallthru
      _
    // Predicated region
    $region86: #{tpu_custom_call.1} parent=1 // pred_check
      _
    $region87: #{tpu_custom_call.1} parent=1 // pred_check_branch
      %183 = sbr.rel (0) target = $region89
    $region88: #{tpu_custom_call.1} parent=1 // pred_region
      %184 = dma.done [#allocation15], 51200
    $region89: #{tpu_custom_call.1} parent=1 // pred_fallthru
      _
    // Predicated region
    $region90: #{tpu_custom_call.1} parent=1 // pred_check
      _
    $region91: #{tpu_custom_call.1} parent=1 // pred_check_branch
      %186 = sbr.rel (0) target = $region93
    $region92: #{tpu_custom_call.1} parent=1 // pred_region
      %187 = dma.done [#allocation18], 160
    $region93: #{tpu_custom_call.1} parent=1 // pred_fallthru
      _
    // Predicated region
    $region94: #{tpu_custom_call.1} parent=1 // pred_check
      _
    $region95: #{tpu_custom_call.1} parent=1 // pred_check_branch
      %189 = sbr.rel (0) target = $region97
    $region96: #{tpu_custom_call.1} parent=1 // pred_region
      %190 = dma.done [#allocation18], 10240
    $region97: #{tpu_custom_call.1} parent=1 // pred_fallthru
      _
    // Predicated region
    $region98: #{tpu_custom_call.1} parent=1 // pred_check
      _
    $region99: #{tpu_custom_call.1} parent=1 // pred_check_branch
      %192 = sbr.rel (0) target = $region101
    $region100: #{tpu_custom_call.1} parent=1 // pred_region
      %193 = dma.done [#allocation21], 16
    $region101: #{tpu_custom_call.1} parent=1 // pred_fallthru
      _
    %v195 = vld [vmem:[%s0] sm:$0xf]
    %v196 = vld [vmem:[%s0 + $0x4] sm:$0xf]
    %v197 = vld [vmem:[#allocation2] sm:$0xf]
    %v198 = vld [vmem:[#allocation5] sm:$0x1]
    %v200 = vlaneseq
    %v201 = vshrl.u32 %v200, 7
    %v202 = vsub.s32 0, %v201
    %v203 = vrot.slane %v198, %v202
    %v207 = vunpack.c.l.b16 %v195
    %v208 = vunpack.c.l.b16 %v196
    %v209 = vpack.c.b16 %v208, %v207
    %vm210 = vcmask 64512
    %v212 = vsel %vm210, %v209, 0
    %vm214 = vcmask 1043456
    %v216 = vsel %vm214, %v197, 0
    %218 = vmatprep.subr.bf16.mxu0 0
    %219 = vmatpush1.bf16.msra.mxu0 %v216
    %220 = vmatprep.subr.bf16.mxu0 0
    %221 = vmatpush1.bf16.msra.mxu0 0
    %222 = vmatprep.subr.bf16.mxu0 0
    %223 = vmatpush1.bf16.msra.mxu0 0
    %224 = vmatprep.subr.bf16.mxu0 0
    %225 = vmatpush1.bf16.msra.mxu0 0
    %226 = vmatprep.subr.bf16.mxu0 0
    %227 = vmatpush1.bf16.msra.mxu0 0
    %228 = vmatprep.subr.bf16.mxu0 0
    %229 = vmatpush1.bf16.msra.mxu0 0
    %230 = vmatprep.subr.bf16.mxu0 0
    %231 = vmatpush1.bf16.msra.mxu0 0
    %232 = vmatprep.subr.bf16.mxu0 0
    %233 = vmatpush1.bf16.msra.mxu0 0
    %234 = vmatprep.subr.bf16.mxu0 0
    %235 = vmatpush1.bf16.msra.mxu0 0
    %236 = vmatprep.subr.bf16.mxu0 0
    %237 = vmatpush1.bf16.msra.mxu0 0
    %238 = vmatprep.subr.bf16.mxu0 0
    %239 = vmatpush1.bf16.msra.mxu0 0
    %240 = vmatprep.subr.bf16.mxu0 0
    %241 = vmatpush1.bf16.msra.mxu0 0
    %242 = vmatprep.subr.bf16.mxu0 0
    %243 = vmatpush1.bf16.msra.mxu0 0
    %244 = vmatprep.subr.bf16.mxu0 0
    %245 = vmatpush1.bf16.msra.mxu0 0
    %246 = vmatprep.subr.bf16.mxu0 0
    %247 = vmatpush1.bf16.msra.mxu0 0
    %248 = vmatprep.subr.bf16.mxu0 0
    %249 = vmatpush1.bf16.msra.mxu0 0
    %250 = vmatprep.mubr.bf16.mxu0 0
    %251 = vmatmul.mubr.bf16.gmra.mrb[0].mxu0 %v212
    %v252 = vpop.f32.mrb[0].mxu0
    %v253 = vadd.f32 %v203, %v252
    %v254 = vpop.f32.mrb[0].mxu0
    %v255 = vpop.f32.mrb[0].mxu0
    %v256 = vadd.f32 %v203, %v255
    %v257 = vpop.f32.mrb[0].mxu0
    %258 = vdwg.mxu0
    %v259 = vmax.f32 %v253, 0.0
    %v260 = vmax.f32 %v256, 0.0
    %v261 = vpack.c.bf16 %v260, %v259
    %v262 = vld [vmem:[#allocation7] sm:$0xff]
    %v263 = vld [vmem:[#allocation7 + $0x8] sm:$0xff]
    %v264 = vld [vmem:[#allocation7 + $0x10] sm:$0xff]
    %v265 = vld [vmem:[#allocation7 + $0x18] sm:$0xff]
    %v266 = vld [vmem:[#allocation7 + $0x20] sm:$0xff]
    %v267 = vld [vmem:[#allocation7 + $0x28] sm:$0xff]
    %v268 = vld [vmem:[#allocation7 + $0x30] sm:$0xff]
    %v269 = vld [vmem:[#allocation7 + $0x38] sm:$0xff]
    %v270 = vld [vmem:[#allocation7 + $0x40] sm:$0xff]
    %v271 = vld [vmem:[#allocation7 + $0x48] sm:$0xff]
    %v272 = vld [vmem:[#allocation7 + $0x50] sm:$0xff]
    %v273 = vld [vmem:[#allocation7 + $0x58] sm:$0xff]
    %v274 = vld [vmem:[#allocation7 + $0x60] sm:$0xff]
    %v275 = vld [vmem:[#allocation7 + $0x68] sm:$0xff]
    %v276 = vld [vmem:[#allocation7 + $0x70] sm:$0xff]
    %v277 = vld [vmem:[#allocation7 + $0x78] sm:$0xff]
    %v278 = vld [vmem:[#allocation8] sm:$0x3]
    %v280 = vlaneseq
    %v281 = vshrl.u32 %v280, 7
    %v282 = vsub.s32 0, %v281
    %v283 = vrot.slane %v278, %v282
    %v284 = vlaneseq
    %v285 = vshrl.u32 %v284, 7
    %v286 = vsub.s32 1, %v285
    %v287 = vrot.slane %v278, %v286
    %v306 = vunpack.c.l.b16 %v262
    %v307 = vunpack.c.h.b16 %v262
    %v308 = vunpack.c.l.b16 %v263
    %v309 = vunpack.c.h.b16 %v263
    %v310 = vunpack.c.l.b16 %v264
    %v311 = vunpack.c.h.b16 %v264
    %v312 = vunpack.c.l.b16 %v265
    %v313 = vunpack.c.h.b16 %v265
    %v314 = vunpack.c.l.b16 %v266
    %v315 = vunpack.c.h.b16 %v266
    %v316 = vunpack.c.l.b16 %v267
    %v317 = vunpack.c.h.b16 %v267
    %v318 = vunpack.c.l.b16 %v268
    %v319 = vunpack.c.h.b16 %v268
    %v320 = vunpack.c.l.b16 %v269
    %v321 = vunpack.c.h.b16 %v269
    %v322 = vunpack.c.l.b16 %v270
    %v323 = vunpack.c.h.b16 %v270
    %v324 = vunpack.c.l.b16 %v271
    %v325 = vunpack.c.h.b16 %v271
    %v326 = vunpack.c.l.b16 %v272
    %v327 = vunpack.c.h.b16 %v272
    %v328 = vunpack.c.l.b16 %v273
    %v329 = vunpack.c.h.b16 %v273
    %v330 = vunpack.c.l.b16 %v274
    %v331 = vunpack.c.h.b16 %v274
    %v332 = vunpack.c.l.b16 %v275
    %v333 = vunpack.c.h.b16 %v275
    %v334 = vunpack.c.l.b16 %v276
    %v335 = vunpack.c.h.b16 %v276
    %v336 = vunpack.c.l.b16 %v277
    %v337 = vunpack.c.h.b16 %v277
    %v338 = vpack.c.b16 %v308, %v306
    %v339 = vpack.c.b16 %v309, %v307
    %v340 = vpack.c.b16 %v312, %v310
    %v341 = vpack.c.b16 %v313, %v311
    %v342 = vpack.c.b16 %v316, %v314
    %v343 = vpack.c.b16 %v317, %v315
    %v344 = vpack.c.b16 %v320, %v318
    %v345 = vpack.c.b16 %v321, %v319
    %v346 = vpack.c.b16 %v324, %v322
    %v347 = vpack.c.b16 %v325, %v323
    %v348 = vpack.c.b16 %v328, %v326
    %v349 = vpack.c.b16 %v329, %v327
    %v350 = vpack.c.b16 %v332, %v330
    %v351 = vpack.c.b16 %v333, %v331
    %v352 = vpack.c.b16 %v336, %v334
    %v353 = vpack.c.b16 %v337, %v335
    %370 = vmatprep.subr.bf16.mxu0 %v339
    %371 = vmatpush1.bf16.msra.mxu0 %v338
    %372 = vmatprep.subr.bf16.mxu0 %v341
    %373 = vmatpush1.bf16.msra.mxu0 %v340
    %374 = vmatprep.subr.bf16.mxu0 %v343
    %375 = vmatpush1.bf16.msra.mxu0 %v342
    %376 = vmatprep.subr.bf16.mxu0 %v345
    %377 = vmatpush1.bf16.msra.mxu0 %v344
    %378 = vmatprep.subr.bf16.mxu0 %v347
    %379 = vmatpush1.bf16.msra.mxu0 %v346
    %380 = vmatprep.subr.bf16.mxu0 %v349
    %381 = vmatpush1.bf16.msra.mxu0 %v348
    %382 = vmatprep.subr.bf16.mxu0 %v351
    %383 = vmatpush1.bf16.msra.mxu0 %v350
    %384 = vmatprep.subr.bf16.mxu0 %v353
    %385 = vmatpush1.bf16.msra.mxu0 %v352
    %386 = vmatprep.subr.bf16.mxu0 0
    %387 = vmatpush1.bf16.msra.mxu0 0
    %388 = vmatprep.subr.bf16.mxu0 0
    %389 = vmatpush1.bf16.msra.mxu0 0
    %390 = vmatprep.subr.bf16.mxu0 0
    %391 = vmatpush1.bf16.msra.mxu0 0
    %392 = vmatprep.subr.bf16.mxu0 0
    %393 = vmatpush1.bf16.msra.mxu0 0
    %394 = vmatprep.subr.bf16.mxu0 0
    %395 = vmatpush1.bf16.msra.mxu0 0
    %396 = vmatprep.subr.bf16.mxu0 0
    %397 = vmatpush1.bf16.msra.mxu0 0
    %398 = vmatprep.subr.bf16.mxu0 0
    %399 = vmatpush1.bf16.msra.mxu0 0
    %400 = vmatprep.subr.bf16.mxu0 0
    %401 = vmatpush1.bf16.msra.mxu0 0
    %402 = vmatprep.mubr.bf16.mxu0 0
    %403 = vmatmul.mubr.bf16.gmra.mrb[0].mxu0 %v261
    %v404 = vpop.f32.mrb[0].mxu0
    %v405 = vadd.f32 %v283, %v404
    %v406 = vpop.f32.mrb[0].mxu0
    %v407 = vadd.f32 %v287, %v406
    %v408 = vpop.f32.mrb[0].mxu0
    %v409 = vadd.f32 %v283, %v408
    %v410 = vpop.f32.mrb[0].mxu0
    %v411 = vadd.f32 %v287, %v410
    %412 = vdwg.mxu0
    %v413 = vmax.f32 %v405, 0.0
    %v414 = vmax.f32 %v407, 0.0
    %v415 = vmax.f32 %v409, 0.0
    %v416 = vmax.f32 %v411, 0.0
    %v417 = vpack.c.bf16 %v415, %v413
    %v418 = vpack.c.bf16 %v416, %v414
    %v419 = vld [vmem:[#allocation10] sm:$0xff]
    %v420 = vld [vmem:[#allocation10 + $0x8] sm:$0xf]
    %v421 = vld [vmem:[#allocation10 + $0xc] sm:$0xff]
    %v422 = vld [vmem:[#allocation10 + $0x14] sm:$0xf]
    %v423 = vld [vmem:[#allocation10 + $0x18] sm:$0xff]
    %v424 = vld [vmem:[#allocation10 + $0x20] sm:$0xf]
    %v425 = vld [vmem:[#allocation10 + $0x24] sm:$0xff]
    %v426 = vld [vmem:[#allocation10 + $0x2c] sm:$0xf]
    %v427 = vld [vmem:[#allocation10 + $0x30] sm:$0xff]
    %v428 = vld [vmem:[#allocation10 + $0x38] sm:$0xf]
    %v429 = vld [vmem:[#allocation10 + $0x3c] sm:$0xff]
    %v430 = vld [vmem:[#allocation10 + $0x44] sm:$0xf]
    %v431 = vld [vmem:[#allocation10 + $0x48] sm:$0xff]
    %v432 = vld [vmem:[#allocation10 + $0x50] sm:$0xf]
    %v433 = vld [vmem:[#allocation10 + $0x54] sm:$0xff]
    %v434 = vld [vmem:[#allocation10 + $0x5c] sm:$0xf]
    %v435 = vld [vmem:[#allocation10 + $0x60] sm:$0xff]
    %v436 = vld [vmem:[#allocation10 + $0x68] sm:$0xf]
    %v437 = vld [vmem:[#allocation10 + $0x6c] sm:$0xff]
    %v438 = vld [vmem:[#allocation10 + $0x74] sm:$0xf]
    %v439 = vld [vmem:[#allocation10 + $0x78] sm:$0xff]
    %v440 = vld [vmem:[#allocation10 + $0x80] sm:$0xf]
    %v441 = vld [vmem:[#allocation10 + $0x84] sm:$0xff]
    %v442 = vld [vmem:[#allocation10 + $0x8c] sm:$0xf]
    %v443 = vld [vmem:[#allocation10 + $0x90] sm:$0xff]
    %v444 = vld [vmem:[#allocation10 + $0x98] sm:$0xf]
    %v445 = vld [vmem:[#allocation10 + $0x9c] sm:$0xff]
    %v446 = vld [vmem:[#allocation10 + $0xa4] sm:$0xf]
    %v447 = vld [vmem:[#allocation10 + $0xa8] sm:$0xff]
    %v448 = vld [vmem:[#allocation10 + $0xb0] sm:$0xf]
    %v449 = vld [vmem:[#allocation10 + $0xb4] sm:$0xff]
    %v450 = vld [vmem:[#allocation10 + $0xbc] sm:$0xf]
    %v451 = vld [vmem:[#allocation10 + $0xc0] sm:$0xff]
    %v452 = vld [vmem:[#allocation10 + $0xc8] sm:$0xf]
    %v453 = vld [vmem:[#allocation10 + $0xcc] sm:$0xff]
    %v454 = vld [vmem:[#allocation10 + $0xd4] sm:$0xf]
    %v455 = vld [vmem:[#allocation10 + $0xd8] sm:$0xff]
    %v456 = vld [vmem:[#allocation10 + $0xe0] sm:$0xf]
    %v457 = vld [vmem:[#allocation10 + $0xe4] sm:$0xff]
    %v458 = vld [vmem:[#allocation10 + $0xec] sm:$0xf]
    %v459 = vld [vmem:[#allocation10 + $0xf0] sm:$0xff]
    %v460 = vld [vmem:[#allocation10 + $0xf8] sm:$0xf]
    %v461 = vld [vmem:[#allocation10 + $0xfc] sm:$0xff]
    %v462 = vld [vmem:[#allocation10 + $0x104] sm:$0xf]
    %v463 = vld [vmem:[#allocation10 + $0x108] sm:$0xff]
    %v464 = vld [vmem:[#allocation10 + $0x110] sm:$0xf]
    %v465 = vld [vmem:[#allocation10 + $0x114] sm:$0xff]
    %v466 = vld [vmem:[#allocation10 + $0x11c] sm:$0xf]
    %v467 = vld [vmem:[#allocation10 + $0x120] sm:$0xff]
    %v468 = vld [vmem:[#allocation10 + $0x128] sm:$0xf]
    %v469 = vld [vmem:[#allocation10 + $0x12c] sm:$0xff]
    %v470 = vld [vmem:[#allocation10 + $0x134] sm:$0xf]
    %v471 = vld [vmem:[#allocation10 + $0x138] sm:$0xff]
    %v472 = vld [vmem:[#allocation10 + $0x140] sm:$0xf]
    %v473 = vld [vmem:[#allocation10 + $0x144] sm:$0xff]
    %v474 = vld [vmem:[#allocation10 + $0x14c] sm:$0xf]
    %v475 = vld [vmem:[#allocation10 + $0x150] sm:$0xff]
    %v476 = vld [vmem:[#allocation10 + $0x158] sm:$0xf]
    %v477 = vld [vmem:[#allocation10 + $0x15c] sm:$0xff]
    %v478 = vld [vmem:[#allocation10 + $0x164] sm:$0xf]
    %v479 = vld [vmem:[#allocation10 + $0x168] sm:$0xff]
    %v480 = vld [vmem:[#allocation10 + $0x170] sm:$0xf]
    %v481 = vld [vmem:[#allocation10 + $0x174] sm:$0xff]
    %v482 = vld [vmem:[#allocation10 + $0x17c] sm:$0xf]
    %v483 = vld [vmem:[#allocation11] sm:$0x7]
    %v485 = vlaneseq
    %v486 = vshrl.u32 %v485, 7
    %v487 = vsub.s32 0, %v486
    %v488 = vrot.slane %v483, %v487
    %v489 = vlaneseq
    %v490 = vshrl.u32 %v489, 7
    %v491 = vsub.s32 1, %v490
    %v492 = vrot.slane %v483, %v491
    %v493 = vlaneseq
    %v494 = vshrl.u32 %v493, 7
    %v495 = vsub.s32 2, %v494
    %v496 = vrot.slane %v483, %v495
    %v564 = vunpack.c.l.b16 %v419
    %v565 = vunpack.c.h.b16 %v419
    %v566 = vunpack.c.l.b16 %v420
    %v567 = vunpack.c.l.b16 %v421
    %v568 = vunpack.c.h.b16 %v421
    %v569 = vunpack.c.l.b16 %v422
    %v570 = vunpack.c.l.b16 %v423
    %v571 = vunpack.c.h.b16 %v423
    %v572 = vunpack.c.l.b16 %v424
    %v573 = vunpack.c.l.b16 %v425
    %v574 = vunpack.c.h.b16 %v425
    %v575 = vunpack.c.l.b16 %v426
    %v576 = vunpack.c.l.b16 %v427
    %v577 = vunpack.c.h.b16 %v427
    %v578 = vunpack.c.l.b16 %v428
    %v579 = vunpack.c.l.b16 %v429
    %v580 = vunpack.c.h.b16 %v429
    %v581 = vunpack.c.l.b16 %v430
    %v582 = vunpack.c.l.b16 %v431
    %v583 = vunpack.c.h.b16 %v431
    %v584 = vunpack.c.l.b16 %v432
    %v585 = vunpack.c.l.b16 %v433
    %v586 = vunpack.c.h.b16 %v433
    %v587 = vunpack.c.l.b16 %v434
    %v588 = vunpack.c.l.b16 %v435
    %v589 = vunpack.c.h.b16 %v435
    %v590 = vunpack.c.l.b16 %v436
    %v591 = vunpack.c.l.b16 %v437
    %v592 = vunpack.c.h.b16 %v437
    %v593 = vunpack.c.l.b16 %v438
    %v594 = vunpack.c.l.b16 %v439
    %v595 = vunpack.c.h.b16 %v439
    %v596 = vunpack.c.l.b16 %v440
    %v597 = vunpack.c.l.b16 %v441
    %v598 = vunpack.c.h.b16 %v441
    %v599 = vunpack.c.l.b16 %v442
    %v600 = vunpack.c.l.b16 %v443
    %v601 = vunpack.c.h.b16 %v443
    %v602 = vunpack.c.l.b16 %v444
    %v603 = vunpack.c.l.b16 %v445
    %v604 = vunpack.c.h.b16 %v445
    %v605 = vunpack.c.l.b16 %v446
    %v606 = vunpack.c.l.b16 %v447
    %v607 = vunpack.c.h.b16 %v447
    %v608 = vunpack.c.l.b16 %v448
    %v609 = vunpack.c.l.b16 %v449
    %v610 = vunpack.c.h.b16 %v449
    %v611 = vunpack.c.l.b16 %v450
    %v612 = vunpack.c.l.b16 %v451
    %v613 = vunpack.c.h.b16 %v451
    %v614 = vunpack.c.l.b16 %v452
    %v615 = vunpack.c.l.b16 %v453
    %v616 = vunpack.c.h.b16 %v453
    %v617 = vunpack.c.l.b16 %v454
    %v618 = vunpack.c.l.b16 %v455
    %v619 = vunpack.c.h.b16 %v455
    %v620 = vunpack.c.l.b16 %v456
    %v621 = vunpack.c.l.b16 %v457
    %v622 = vunpack.c.h.b16 %v457
    %v623 = vunpack.c.l.b16 %v458
    %v624 = vunpack.c.l.b16 %v459
    %v625 = vunpack.c.h.b16 %v459
    %v626 = vunpack.c.l.b16 %v460
    %v627 = vunpack.c.l.b16 %v461
    %v628 = vunpack.c.h.b16 %v461
    %v629 = vunpack.c.l.b16 %v462
    %v630 = vunpack.c.l.b16 %v463
    %v631 = vunpack.c.h.b16 %v463
    %v632 = vunpack.c.l.b16 %v464
    %v633 = vunpack.c.l.b16 %v465
    %v634 = vunpack.c.h.b16 %v465
    %v635 = vunpack.c.l.b16 %v466
    %v636 = vunpack.c.l.b16 %v467
    %v637 = vunpack.c.h.b16 %v467
    %v638 = vunpack.c.l.b16 %v468
    %v639 = vunpack.c.l.b16 %v469
    %v640 = vunpack.c.h.b16 %v469
    %v641 = vunpack.c.l.b16 %v470
    %v642 = vunpack.c.l.b16 %v471
    %v643 = vunpack.c.h.b16 %v471
    %v644 = vunpack.c.l.b16 %v472
    %v645 = vunpack.c.l.b16 %v473
    %v646 = vunpack.c.h.b16 %v473
    %v647 = vunpack.c.l.b16 %v474
    %v648 = vunpack.c.l.b16 %v475
    %v649 = vunpack.c.h.b16 %v475
    %v650 = vunpack.c.l.b16 %v476
    %v651 = vunpack.c.l.b16 %v477
    %v652 = vunpack.c.h.b16 %v477
    %v653 = vunpack.c.l.b16 %v478
    %v654 = vunpack.c.l.b16 %v479
    %v655 = vunpack.c.h.b16 %v479
    %v656 = vunpack.c.l.b16 %v480
    %v657 = vunpack.c.l.b16 %v481
    %v658 = vunpack.c.h.b16 %v481
    %v659 = vunpack.c.l.b16 %v482
    %v660 = vpack.c.b16 %v567, %v564
    %v661 = vpack.c.b16 %v568, %v565
    %v662 = vpack.c.b16 %v569, %v566
    %v663 = vpack.c.b16 %v573, %v570
    %v664 = vpack.c.b16 %v574, %v571
    %v665 = vpack.c.b16 %v575, %v572
    %v666 = vpack.c.b16 %v579, %v576
    %v667 = vpack.c.b16 %v580, %v577
    %v668 = vpack.c.b16 %v581, %v578
    %v669 = vpack.c.b16 %v585, %v582
    %v670 = vpack.c.b16 %v586, %v583
    %v671 = vpack.c.b16 %v587, %v584
    %v672 = vpack.c.b16 %v591, %v588
    %v673 = vpack.c.b16 %v592, %v589
    %v674 = vpack.c.b16 %v593, %v590
    %v675 = vpack.c.b16 %v597, %v594
    %v676 = vpack.c.b16 %v598, %v595
    %v677 = vpack.c.b16 %v599, %v596
    %v678 = vpack.c.b16 %v603, %v600
    %v679 = vpack.c.b16 %v604, %v601
    %v680 = vpack.c.b16 %v605, %v602
    %v681 = vpack.c.b16 %v609, %v606
    %v682 = vpack.c.b16 %v610, %v607
    %v683 = vpack.c.b16 %v611, %v608
    %v684 = vpack.c.b16 %v615, %v612
    %v685 = vpack.c.b16 %v616, %v613
    %v686 = vpack.c.b16 %v617, %v614
    %v687 = vpack.c.b16 %v621, %v618
    %v688 = vpack.c.b16 %v622, %v619
    %v689 = vpack.c.b16 %v623, %v620
    %v690 = vpack.c.b16 %v627, %v624
    %v691 = vpack.c.b16 %v628, %v625
    %v692 = vpack.c.b16 %v629, %v626
    %v693 = vpack.c.b16 %v633, %v630
    %v694 = vpack.c.b16 %v634, %v631
    %v695 = vpack.c.b16 %v635, %v632
    %v696 = vpack.c.b16 %v639, %v636
    %v697 = vpack.c.b16 %v640, %v637
    %v698 = vpack.c.b16 %v641, %v638
    %v699 = vpack.c.b16 %v645, %v642
    %v700 = vpack.c.b16 %v646, %v643
    %v701 = vpack.c.b16 %v647, %v644
    %v702 = vpack.c.b16 %v651, %v648
    %v703 = vpack.c.b16 %v652, %v649
    %v704 = vpack.c.b16 %v653, %v650
    %v705 = vpack.c.b16 %v657, %v654
    %v706 = vpack.c.b16 %v658, %v655
    %v707 = vpack.c.b16 %v659, %v656
    %756 = vmatprep.subr.bf16.mxu0 %v661
    %757 = vmatpush1.bf16.msra.mxu0 %v660
    %758 = vmatprep.subr.bf16.mxu0 %v664
    %759 = vmatpush1.bf16.msra.mxu0 %v663
    %760 = vmatprep.subr.bf16.mxu0 %v667
    %761 = vmatpush1.bf16.msra.mxu0 %v666
    %762 = vmatprep.subr.bf16.mxu0 %v670
    %763 = vmatpush1.bf16.msra.mxu0 %v669
    %764 = vmatprep.subr.bf16.mxu0 %v673
    %765 = vmatpush1.bf16.msra.mxu0 %v672
    %766 = vmatprep.subr.bf16.mxu0 %v676
    %767 = vmatpush1.bf16.msra.mxu0 %v675
    %768 = vmatprep.subr.bf16.mxu0 %v679
    %769 = vmatpush1.bf16.msra.mxu0 %v678
    %770 = vmatprep.subr.bf16.mxu0 %v682
    %771 = vmatpush1.bf16.msra.mxu0 %v681
    %772 = vmatprep.subr.bf16.mxu0 %v685
    %773 = vmatpush1.bf16.msra.mxu0 %v684
    %774 = vmatprep.subr.bf16.mxu0 %v688
    %775 = vmatpush1.bf16.msra.mxu0 %v687
    %776 = vmatprep.subr.bf16.mxu0 %v691
    %777 = vmatpush1.bf16.msra.mxu0 %v690
    %778 = vmatprep.subr.bf16.mxu0 %v694
    %779 = vmatpush1.bf16.msra.mxu0 %v693
    %780 = vmatprep.subr.bf16.mxu0 %v697
    %781 = vmatpush1.bf16.msra.mxu0 %v696
    %782 = vmatprep.subr.bf16.mxu0 %v700
    %783 = vmatpush1.bf16.msra.mxu0 %v699
    %784 = vmatprep.subr.bf16.mxu0 %v703
    %785 = vmatpush1.bf16.msra.mxu0 %v702
    %786 = vmatprep.subr.bf16.mxu0 %v706
    %787 = vmatpush1.bf16.msra.mxu0 %v705
    %788 = vmatprep.mubr.bf16.mxu0 %v418
    %789 = vmatmul.mubr.bf16.gmra.mrb[0].mxu0 %v417
    %v790 = vpop.f32.mrb[0].mxu0
    %v791 = vadd.f32 %v488, %v790
    %v792 = vpop.f32.mrb[0].mxu0
    %v793 = vadd.f32 %v492, %v792
    %v794 = vpop.f32.mrb[0].mxu0
    %v795 = vadd.f32 %v488, %v794
    %v796 = vpop.f32.mrb[0].mxu0
    %v797 = vadd.f32 %v492, %v796
    %798 = vdwg.mxu0
    %799 = vmatprep.subr.bf16.mxu0 0
    %800 = vmatpush1.bf16.msra.mxu0 %v662
    %801 = vmatprep.subr.bf16.mxu0 0
    %802 = vmatpush1.bf16.msra.mxu0 %v665
    %803 = vmatprep.subr.bf16.mxu0 0
    %804 = vmatpush1.bf16.msra.mxu0 %v668
    %805 = vmatprep.subr.bf16.mxu0 0
    %806 = vmatpush1.bf16.msra.mxu0 %v671
    %807 = vmatprep.subr.bf16.mxu0 0
    %808 = vmatpush1.bf16.msra.mxu0 %v674
    %809 = vmatprep.subr.bf16.mxu0 0
    %810 = vmatpush1.bf16.msra.mxu0 %v677
    %811 = vmatprep.subr.bf16.mxu0 0
    %812 = vmatpush1.bf16.msra.mxu0 %v680
    %813 = vmatprep.subr.bf16.mxu0 0
    %814 = vmatpush1.bf16.msra.mxu0 %v683
    %815 = vmatprep.subr.bf16.mxu0 0
    %816 = vmatpush1.bf16.msra.mxu0 %v686
    %817 = vmatprep.subr.bf16.mxu0 0
    %818 = vmatpush1.bf16.msra.mxu0 %v689
    %819 = vmatprep.subr.bf16.mxu0 0
    %820 = vmatpush1.bf16.msra.mxu0 %v692
    %821 = vmatprep.subr.bf16.mxu0 0
    %822 = vmatpush1.bf16.msra.mxu0 %v695
    %823 = vmatprep.subr.bf16.mxu0 0
    %824 = vmatpush1.bf16.msra.mxu0 %v698
    %825 = vmatprep.subr.bf16.mxu0 0
    %826 = vmatpush1.bf16.msra.mxu0 %v701
    %827 = vmatprep.subr.bf16.mxu0 0
    %828 = vmatpush1.bf16.msra.mxu0 %v704
    %829 = vmatprep.subr.bf16.mxu0 0
    %830 = vmatpush1.bf16.msra.mxu0 %v707
    %831 = vmatprep.mubr.bf16.mxu0 %v418
    %832 = vmatmul.mubr.bf16.gmra.mrb[0].mxu0 %v417
    %v833 = vpop.f32.mrb[0].mxu0
    %v834 = vadd.f32 %v496, %v833
    %v835 = vpop.f32.mrb[0].mxu0
    %v836 = vpop.f32.mrb[0].mxu0
    %v837 = vadd.f32 %v496, %v836
    %v838 = vpop.f32.mrb[0].mxu0
    %839 = vdwg.mxu0
    %v840 = vmax.f32 %v791, 0.0
    %v841 = vmax.f32 %v793, 0.0
    %v842 = vmax.f32 %v834, 0.0
    %v843 = vmax.f32 %v795, 0.0
    %v844 = vmax.f32 %v797, 0.0
    %v845 = vmax.f32 %v837, 0.0
    %v846 = vpack.c.bf16 %v843, %v840
    %v847 = vpack.c.bf16 %v844, %v841
    %v848 = vpack.c.bf16 %v845, %v842
    %v849 = vld [vmem:[#allocation13] sm:$0xff]
    %v850 = vld [vmem:[#allocation13 + $0x8] sm:$0xff]
    %v851 = vld [vmem:[#allocation13 + $0x10] sm:$0xf]
    %v852 = vld [vmem:[#allocation13 + $0x14] sm:$0xff]
    %v853 = vld [vmem:[#allocation13 + $0x1c] sm:$0xff]
    %v854 = vld [vmem:[#allocation13 + $0x24] sm:$0xf]
    %v855 = vld [vmem:[#allocation13 + $0x28] sm:$0xff]
    %v856 = vld [vmem:[#allocation13 + $0x30] sm:$0xff]
    %v857 = vld [vmem:[#allocation13 + $0x38] sm:$0xf]
    %v858 = vld [vmem:[#allocation13 + $0x3c] sm:$0xff]
    %v859 = vld [vmem:[#allocation13 + $0x44] sm:$0xff]
    %v860 = vld [vmem:[#allocation13 + $0x4c] sm:$0xf]
    %v861 = vld [vmem:[#allocation13 + $0x50] sm:$0xff]
    %v862 = vld [vmem:[#allocation13 + $0x58] sm:$0xff]
    %v863 = vld [vmem:[#allocation13 + $0x60] sm:$0xf]
    %v864 = vld [vmem:[#allocation13 + $0x64] sm:$0xff]
    %v865 = vld [vmem:[#allocation13 + $0x6c] sm:$0xff]
    %v866 = vld [vmem:[#allocation13 + $0x74] sm:$0xf]
    %v867 = vld [vmem:[#allocation13 + $0x78] sm:$0xff]
    %v868 = vld [vmem:[#allocation13 + $0x80] sm:$0xff]
    %v869 = vld [vmem:[#allocation13 + $0x88] sm:$0xf]
    %v870 = vld [vmem:[#allocation13 + $0x8c] sm:$0xff]
    %v871 = vld [vmem:[#allocation13 + $0x94] sm:$0xff]
    %v872 = vld [vmem:[#allocation13 + $0x9c] sm:$0xf]
    %v873 = vld [vmem:[#allocation13 + $0xa0] sm:$0xff]
    %v874 = vld [vmem:[#allocation13 + $0xa8] sm:$0xff]
    %v875 = vld [vmem:[#allocation13 + $0xb0] sm:$0xf]
    %v876 = vld [vmem:[#allocation13 + $0xb4] sm:$0xff]
    %v877 = vld [vmem:[#allocation13 + $0xbc] sm:$0xff]
    %v878 = vld [vmem:[#allocation13 + $0xc4] sm:$0xf]
    %v879 = vld [vmem:[#allocation13 + $0xc8] sm:$0xff]
    %v880 = vld [vmem:[#allocation13 + $0xd0] sm:$0xff]
    %v881 = vld [vmem:[#allocation13 + $0xd8] sm:$0xf]
    %v882 = vld [vmem:[#allocation13 + $0xdc] sm:$0xff]
    %v883 = vld [vmem:[#allocation13 + $0xe4] sm:$0xff]
    %v884 = vld [vmem:[#allocation13 + $0xec] sm:$0xf]
    %v885 = vld [vmem:[#allocation13 + $0xf0] sm:$0xff]
    %v886 = vld [vmem:[#allocation13 + $0xf8] sm:$0xff]
    %v887 = vld [vmem:[#allocation13 + $0x100] sm:$0xf]
    %v888 = vld [vmem:[#allocation13 + $0x104] sm:$0xff]
    %v889 = vld [vmem:[#allocation13 + $0x10c] sm:$0xff]
    %v890 = vld [vmem:[#allocation13 + $0x114] sm:$0xf]
    %v891 = vld [vmem:[#allocation13 + $0x118] sm:$0xff]
    %v892 = vld [vmem:[#allocation13 + $0x120] sm:$0xff]
    %v893 = vld [vmem:[#allocation13 + $0x128] sm:$0xf]
    %v894 = vld [vmem:[#allocation13 + $0x12c] sm:$0xff]
    %v895 = vld [vmem:[#allocation13 + $0x134] sm:$0xff]
    %v896 = vld [vmem:[#allocation13 + $0x13c] sm:$0xf]
    %v897 = vld [vmem:[#allocation13 + $0x140] sm:$0xff]
    %v898 = vld [vmem:[#allocation13 + $0x148] sm:$0xff]
    %v899 = vld [vmem:[#allocation13 + $0x150] sm:$0xf]
    %v900 = vld [vmem:[#allocation13 + $0x154] sm:$0xff]
    %v901 = vld [vmem:[#allocation13 + $0x15c] sm:$0xff]
    %v902 = vld [vmem:[#allocation13 + $0x164] sm:$0xf]
    %v903 = vld [vmem:[#allocation13 + $0x168] sm:$0xff]
    %v904 = vld [vmem:[#allocation13 + $0x170] sm:$0xff]
    %v905 = vld [vmem:[#allocation13 + $0x178] sm:$0xf]
    %v906 = vld [vmem:[#allocation13 + $0x17c] sm:$0xff]
    %v907 = vld [vmem:[#allocation13 + $0x184] sm:$0xff]
    %v908 = vld [vmem:[#allocation13 + $0x18c] sm:$0xf]
    %v909 = vld [vmem:[#allocation13 + $0x190] sm:$0xff]
    %v910 = vld [vmem:[#allocation13 + $0x198] sm:$0xff]
    %v911 = vld [vmem:[#allocation13 + $0x1a0] sm:$0xf]
    %v912 = vld [vmem:[#allocation13 + $0x1a4] sm:$0xff]
    %v913 = vld [vmem:[#allocation13 + $0x1ac] sm:$0xff]
    %v914 = vld [vmem:[#allocation13 + $0x1b4] sm:$0xf]
    %v915 = vld [vmem:[#allocation13 + $0x1b8] sm:$0xff]
    %v916 = vld [vmem:[#allocation13 + $0x1c0] sm:$0xff]
    %v917 = vld [vmem:[#allocation13 + $0x1c8] sm:$0xf]
    %v918 = vld [vmem:[#allocation13 + $0x1cc] sm:$0xff]
    %v919 = vld [vmem:[#allocation13 + $0x1d4] sm:$0xff]
    %v920 = vld [vmem:[#allocation13 + $0x1dc] sm:$0xf]
    %v921 = vld [vmem:[#allocation13 + $0x1e0] sm:$0xff]
    %v922 = vld [vmem:[#allocation13 + $0x1e8] sm:$0xff]
    %v923 = vld [vmem:[#allocation13 + $0x1f0] sm:$0xf]
    %v924 = vld [vmem:[#allocation13 + $0x1f4] sm:$0xff]
    %v925 = vld [vmem:[#allocation13 + $0x1fc] sm:$0xff]
    %v926 = vld [vmem:[#allocation13 + $0x204] sm:$0xf]
    %v927 = vld [vmem:[#allocation13 + $0x208] sm:$0xff]
    %v928 = vld [vmem:[#allocation13 + $0x210] sm:$0xff]
    %v929 = vld [vmem:[#allocation13 + $0x218] sm:$0xf]
    %v930 = vld [vmem:[#allocation13 + $0x21c] sm:$0xff]
    %v931 = vld [vmem:[#allocation13 + $0x224] sm:$0xff]
    %v932 = vld [vmem:[#allocation13 + $0x22c] sm:$0xf]
    %v933 = vld [vmem:[#allocation13 + $0x230] sm:$0xff]
    %v934 = vld [vmem:[#allocation13 + $0x238] sm:$0xff]
    %v935 = vld [vmem:[#allocation13 + $0x240] sm:$0xf]
    %v936 = vld [vmem:[#allocation13 + $0x244] sm:$0xff]
    %v937 = vld [vmem:[#allocation13 + $0x24c] sm:$0xff]
    %v938 = vld [vmem:[#allocation13 + $0x254] sm:$0xf]
    %v939 = vld [vmem:[#allocation13 + $0x258] sm:$0xff]
    %v940 = vld [vmem:[#allocation13 + $0x260] sm:$0xff]
    %v941 = vld [vmem:[#allocation13 + $0x268] sm:$0xf]
    %v942 = vld [vmem:[#allocation13 + $0x26c] sm:$0xff]
    %v943 = vld [vmem:[#allocation13 + $0x274] sm:$0xff]
    %v944 = vld [vmem:[#allocation13 + $0x27c] sm:$0xf]
    %v945 = vld [vmem:[#allocation13 + $0x280] sm:$0xff]
    %v946 = vld [vmem:[#allocation13 + $0x288] sm:$0xff]
    %v947 = vld [vmem:[#allocation13 + $0x290] sm:$0xf]
    %v948 = vld [vmem:[#allocation13 + $0x294] sm:$0xff]
    %v949 = vld [vmem:[#allocation13 + $0x29c] sm:$0xff]
    %v950 = vld [vmem:[#allocation13 + $0x2a4] sm:$0xf]
    %v951 = vld [vmem:[#allocation13 + $0x2a8] sm:$0xff]
    %v952 = vld [vmem:[#allocation13 + $0x2b0] sm:$0xff]
    %v953 = vld [vmem:[#allocation13 + $0x2b8] sm:$0xf]
    %v954 = vld [vmem:[#allocation13 + $0x2bc] sm:$0xff]
    %v955 = vld [vmem:[#allocation13 + $0x2c4] sm:$0xff]
    %v956 = vld [vmem:[#allocation13 + $0x2cc] sm:$0xf]
    %v957 = vld [vmem:[#allocation13 + $0x2d0] sm:$0xff]
    %v958 = vld [vmem:[#allocation13 + $0x2d8] sm:$0xff]
    %v959 = vld [vmem:[#allocation13 + $0x2e0] sm:$0xf]
    %v960 = vld [vmem:[#allocation13 + $0x2e4] sm:$0xff]
    %v961 = vld [vmem:[#allocation13 + $0x2ec] sm:$0xff]
    %v962 = vld [vmem:[#allocation13 + $0x2f4] sm:$0xf]
    %v963 = vld [vmem:[#allocation13 + $0x2f8] sm:$0xff]
    %v964 = vld [vmem:[#allocation13 + $0x300] sm:$0xff]
    %v965 = vld [vmem:[#allocation13 + $0x308] sm:$0xf]
    %v966 = vld [vmem:[#allocation13 + $0x30c] sm:$0xff]
    %v967 = vld [vmem:[#allocation13 + $0x314] sm:$0xff]
    %v968 = vld [vmem:[#allocation13 + $0x31c] sm:$0xf]
    %v969 = vld [vmem:[#allocation13 + $0x320] sm:$0xff]
    %v970 = vld [vmem:[#allocation13 + $0x328] sm:$0xff]
    %v971 = vld [vmem:[#allocation13 + $0x330] sm:$0xf]
    %v972 = vld [vmem:[#allocation13 + $0x334] sm:$0xff]
    %v973 = vld [vmem:[#allocation13 + $0x33c] sm:$0xff]
    %v974 = vld [vmem:[#allocation13 + $0x344] sm:$0xf]
    %v975 = vld [vmem:[#allocation13 + $0x348] sm:$0xff]
    %v976 = vld [vmem:[#allocation13 + $0x350] sm:$0xff]
    %v977 = vld [vmem:[#allocation13 + $0x358] sm:$0xf]
    %v978 = vld [vmem:[#allocation13 + $0x35c] sm:$0xff]
    %v979 = vld [vmem:[#allocation13 + $0x364] sm:$0xff]
    %v980 = vld [vmem:[#allocation13 + $0x36c] sm:$0xf]
    %v981 = vld [vmem:[#allocation13 + $0x370] sm:$0xff]
    %v982 = vld [vmem:[#allocation13 + $0x378] sm:$0xff]
    %v983 = vld [vmem:[#allocation13 + $0x380] sm:$0xf]
    %v984 = vld [vmem:[#allocation13 + $0x384] sm:$0xff]
    %v985 = vld [vmem:[#allocation13 + $0x38c] sm:$0xff]
    %v986 = vld [vmem:[#allocation13 + $0x394] sm:$0xf]
    %v987 = vld [vmem:[#allocation13 + $0x398] sm:$0xff]
    %v988 = vld [vmem:[#allocation13 + $0x3a0] sm:$0xff]
    %v989 = vld [vmem:[#allocation13 + $0x3a8] sm:$0xf]
    %v990 = vld [vmem:[#allocation13 + $0x3ac] sm:$0xff]
    %v991 = vld [vmem:[#allocation13 + $0x3b4] sm:$0xff]
    %v992 = vld [vmem:[#allocation13 + $0x3bc] sm:$0xf]
    %v993 = vld [vmem:[#allocation14] sm:$0x1f]
    %v995 = vlaneseq
    %v996 = vshrl.u32 %v995, 7
    %v997 = vsub.s32 0, %v996
    %v998 = vrot.slane %v993, %v997
    %v999 = vlaneseq
    %v1000 = vshrl.u32 %v999, 7
    %v1001 = vsub.s32 1, %v1000
    %v1002 = vrot.slane %v993, %v1001
    %v1003 = vlaneseq
    %v1004 = vshrl.u32 %v1003, 7
    %v1005 = vsub.s32 2, %v1004
    %v1006 = vrot.slane %v993, %v1005
    %v1007 = vlaneseq
    %v1008 = vshrl.u32 %v1007, 7
    %v1009 = vsub.s32 3, %v1008
    %v1010 = vrot.slane %v993, %v1009
    %v1011 = vlaneseq
    %v1012 = vshrl.u32 %v1011, 7
    %v1013 = vsub.s32 4, %v1012
    %v1014 = vrot.slane %v993, %v1013
    %v1164 = vunpack.c.l.b16 %v849
    %v1165 = vunpack.c.h.b16 %v849
    %v1166 = vunpack.c.l.b16 %v850
    %v1167 = vunpack.c.h.b16 %v850
    %v1168 = vunpack.c.l.b16 %v851
    %v1169 = vunpack.c.l.b16 %v852
    %v1170 = vunpack.c.h.b16 %v852
    %v1171 = vunpack.c.l.b16 %v853
    %v1172 = vunpack.c.h.b16 %v853
    %v1173 = vunpack.c.l.b16 %v854
    %v1174 = vunpack.c.l.b16 %v855
    %v1175 = vunpack.c.h.b16 %v855
    %v1176 = vunpack.c.l.b16 %v856
    %v1177 = vunpack.c.h.b16 %v856
    %v1178 = vunpack.c.l.b16 %v857
    %v1179 = vunpack.c.l.b16 %v858
    %v1180 = vunpack.c.h.b16 %v858
    %v1181 = vunpack.c.l.b16 %v859
    %v1182 = vunpack.c.h.b16 %v859
    %v1183 = vunpack.c.l.b16 %v860
    %v1184 = vunpack.c.l.b16 %v861
    %v1185 = vunpack.c.h.b16 %v861
    %v1186 = vunpack.c.l.b16 %v862
    %v1187 = vunpack.c.h.b16 %v862
    %v1188 = vunpack.c.l.b16 %v863
    %v1189 = vunpack.c.l.b16 %v864
    %v1190 = vunpack.c.h.b16 %v864
    %v1191 = vunpack.c.l.b16 %v865
    %v1192 = vunpack.c.h.b16 %v865
    %v1193 = vunpack.c.l.b16 %v866
    %v1194 = vunpack.c.l.b16 %v867
    %v1195 = vunpack.c.h.b16 %v867
    %v1196 = vunpack.c.l.b16 %v868
    %v1197 = vunpack.c.h.b16 %v868
    %v1198 = vunpack.c.l.b16 %v869
    %v1199 = vunpack.c.l.b16 %v870
    %v1200 = vunpack.c.h.b16 %v870
    %v1201 = vunpack.c.l.b16 %v871
    %v1202 = vunpack.c.h.b16 %v871
    %v1203 = vunpack.c.l.b16 %v872
    %v1204 = vunpack.c.l.b16 %v873
    %v1205 = vunpack.c.h.b16 %v873
    %v1206 = vunpack.c.l.b16 %v874
    %v1207 = vunpack.c.h.b16 %v874
    %v1208 = vunpack.c.l.b16 %v875
    %v1209 = vunpack.c.l.b16 %v876
    %v1210 = vunpack.c.h.b16 %v876
    %v1211 = vunpack.c.l.b16 %v877
    %v1212 = vunpack.c.h.b16 %v877
    %v1213 = vunpack.c.l.b16 %v878
    %v1214 = vunpack.c.l.b16 %v879
    %v1215 = vunpack.c.h.b16 %v879
    %v1216 = vunpack.c.l.b16 %v880
    %v1217 = vunpack.c.h.b16 %v880
    %v1218 = vunpack.c.l.b16 %v881
    %v1219 = vunpack.c.l.b16 %v882
    %v1220 = vunpack.c.h.b16 %v882
    %v1221 = vunpack.c.l.b16 %v883
    %v1222 = vunpack.c.h.b16 %v883
    %v1223 = vunpack.c.l.b16 %v884
    %v1224 = vunpack.c.l.b16 %v885
    %v1225 = vunpack.c.h.b16 %v885
    %v1226 = vunpack.c.l.b16 %v886
    %v1227 = vunpack.c.h.b16 %v886
    %v1228 = vunpack.c.l.b16 %v887
    %v1229 = vunpack.c.l.b16 %v888
    %v1230 = vunpack.c.h.b16 %v888
    %v1231 = vunpack.c.l.b16 %v889
    %v1232 = vunpack.c.h.b16 %v889
    %v1233 = vunpack.c.l.b16 %v890
    %v1234 = vunpack.c.l.b16 %v891
    %v1235 = vunpack.c.h.b16 %v891
    %v1236 = vunpack.c.l.b16 %v892
    %v1237 = vunpack.c.h.b16 %v892
    %v1238 = vunpack.c.l.b16 %v893
    %v1239 = vunpack.c.l.b16 %v894
    %v1240 = vunpack.c.h.b16 %v894
    %v1241 = vunpack.c.l.b16 %v895
    %v1242 = vunpack.c.h.b16 %v895
    %v1243 = vunpack.c.l.b16 %v896
    %v1244 = vunpack.c.l.b16 %v897
    %v1245 = vunpack.c.h.b16 %v897
    %v1246 = vunpack.c.l.b16 %v898
    %v1247 = vunpack.c.h.b16 %v898
    %v1248 = vunpack.c.l.b16 %v899
    %v1249 = vunpack.c.l.b16 %v900
    %v1250 = vunpack.c.h.b16 %v900
    %v1251 = vunpack.c.l.b16 %v901
    %v1252 = vunpack.c.h.b16 %v901
    %v1253 = vunpack.c.l.b16 %v902
    %v1254 = vunpack.c.l.b16 %v903
    %v1255 = vunpack.c.h.b16 %v903
    %v1256 = vunpack.c.l.b16 %v904
    %v1257 = vunpack.c.h.b16 %v904
    %v1258 = vunpack.c.l.b16 %v905
    %v1259 = vunpack.c.l.b16 %v906
    %v1260 = vunpack.c.h.b16 %v906
    %v1261 = vunpack.c.l.b16 %v907
    %v1262 = vunpack.c.h.b16 %v907
    %v1263 = vunpack.c.l.b16 %v908
    %v1264 = vunpack.c.l.b16 %v909
    %v1265 = vunpack.c.h.b16 %v909
    %v1266 = vunpack.c.l.b16 %v910
    %v1267 = vunpack.c.h.b16 %v910
    %v1268 = vunpack.c.l.b16 %v911
    %v1269 = vunpack.c.l.b16 %v912
    %v1270 = vunpack.c.h.b16 %v912
    %v1271 = vunpack.c.l.b16 %v913
    %v1272 = vunpack.c.h.b16 %v913
    %v1273 = vunpack.c.l.b16 %v914
    %v1274 = vunpack.c.l.b16 %v915
    %v1275 = vunpack.c.h.b16 %v915
    %v1276 = vunpack.c.l.b16 %v916
    %v1277 = vunpack.c.h.b16 %v916
    %v1278 = vunpack.c.l.b16 %v917
    %v1279 = vunpack.c.l.b16 %v918
    %v1280 = vunpack.c.h.b16 %v918
    %v1281 = vunpack.c.l.b16 %v919
    %v1282 = vunpack.c.h.b16 %v919
    %v1283 = vunpack.c.l.b16 %v920
    %v1284 = vunpack.c.l.b16 %v921
    %v1285 = vunpack.c.h.b16 %v921
    %v1286 = vunpack.c.l.b16 %v922
    %v1287 = vunpack.c.h.b16 %v922
    %v1288 = vunpack.c.l.b16 %v923
    %v1289 = vunpack.c.l.b16 %v924
    %v1290 = vunpack.c.h.b16 %v924
    %v1291 = vunpack.c.l.b16 %v925
    %v1292 = vunpack.c.h.b16 %v925
    %v1293 = vunpack.c.l.b16 %v926
    %v1294 = vunpack.c.l.b16 %v927
    %v1295 = vunpack.c.h.b16 %v927
    %v1296 = vunpack.c.l.b16 %v928
    %v1297 = vunpack.c.h.b16 %v928
    %v1298 = vunpack.c.l.b16 %v929
    %v1299 = vunpack.c.l.b16 %v930
    %v1300 = vunpack.c.h.b16 %v930
    %v1301 = vunpack.c.l.b16 %v931
    %v1302 = vunpack.c.h.b16 %v931
    %v1303 = vunpack.c.l.b16 %v932
    %v1304 = vunpack.c.l.b16 %v933
    %v1305 = vunpack.c.h.b16 %v933
    %v1306 = vunpack.c.l.b16 %v934
    %v1307 = vunpack.c.h.b16 %v934
    %v1308 = vunpack.c.l.b16 %v935
    %v1309 = vunpack.c.l.b16 %v936
    %v1310 = vunpack.c.h.b16 %v936
    %v1311 = vunpack.c.l.b16 %v937
    %v1312 = vunpack.c.h.b16 %v937
    %v1313 = vunpack.c.l.b16 %v938
    %v1314 = vunpack.c.l.b16 %v939
    %v1315 = vunpack.c.h.b16 %v939
    %v1316 = vunpack.c.l.b16 %v940
    %v1317 = vunpack.c.h.b16 %v940
    %v1318 = vunpack.c.l.b16 %v941
    %v1319 = vunpack.c.l.b16 %v942
    %v1320 = vunpack.c.h.b16 %v942
    %v1321 = vunpack.c.l.b16 %v943
    %v1322 = vunpack.c.h.b16 %v943
    %v1323 = vunpack.c.l.b16 %v944
    %v1324 = vunpack.c.l.b16 %v945
    %v1325 = vunpack.c.h.b16 %v945
    %v1326 = vunpack.c.l.b16 %v946
    %v1327 = vunpack.c.h.b16 %v946
    %v1328 = vunpack.c.l.b16 %v947
    %v1329 = vunpack.c.l.b16 %v948
    %v1330 = vunpack.c.h.b16 %v948
    %v1331 = vunpack.c.l.b16 %v949
    %v1332 = vunpack.c.h.b16 %v949
    %v1333 = vunpack.c.l.b16 %v950
    %v1334 = vunpack.c.l.b16 %v951
    %v1335 = vunpack.c.h.b16 %v951
    %v1336 = vunpack.c.l.b16 %v952
    %v1337 = vunpack.c.h.b16 %v952
    %v1338 = vunpack.c.l.b16 %v953
    %v1339 = vunpack.c.l.b16 %v954
    %v1340 = vunpack.c.h.b16 %v954
    %v1341 = vunpack.c.l.b16 %v955
    %v1342 = vunpack.c.h.b16 %v955
    %v1343 = vunpack.c.l.b16 %v956
    %v1344 = vunpack.c.l.b16 %v957
    %v1345 = vunpack.c.h.b16 %v957
    %v1346 = vunpack.c.l.b16 %v958
    %v1347 = vunpack.c.h.b16 %v958
    %v1348 = vunpack.c.l.b16 %v959
    %v1349 = vunpack.c.l.b16 %v960
    %v1350 = vunpack.c.h.b16 %v960
    %v1351 = vunpack.c.l.b16 %v961
    %v1352 = vunpack.c.h.b16 %v961
    %v1353 = vunpack.c.l.b16 %v962
    %v1354 = vunpack.c.l.b16 %v963
    %v1355 = vunpack.c.h.b16 %v963
    %v1356 = vunpack.c.l.b16 %v964
    %v1357 = vunpack.c.h.b16 %v964
    %v1358 = vunpack.c.l.b16 %v965
    %v1359 = vunpack.c.l.b16 %v966
    %v1360 = vunpack.c.h.b16 %v966
    %v1361 = vunpack.c.l.b16 %v967
    %v1362 = vunpack.c.h.b16 %v967
    %v1363 = vunpack.c.l.b16 %v968
    %v1364 = vunpack.c.l.b16 %v969
    %v1365 = vunpack.c.h.b16 %v969
    %v1366 = vunpack.c.l.b16 %v970
    %v1367 = vunpack.c.h.b16 %v970
    %v1368 = vunpack.c.l.b16 %v971
    %v1369 = vunpack.c.l.b16 %v972
    %v1370 = vunpack.c.h.b16 %v972
    %v1371 = vunpack.c.l.b16 %v973
    %v1372 = vunpack.c.h.b16 %v973
    %v1373 = vunpack.c.l.b16 %v974
    %v1374 = vunpack.c.l.b16 %v975
    %v1375 = vunpack.c.h.b16 %v975
    %v1376 = vunpack.c.l.b16 %v976
    %v1377 = vunpack.c.h.b16 %v976
    %v1378 = vunpack.c.l.b16 %v977
    %v1379 = vunpack.c.l.b16 %v978
    %v1380 = vunpack.c.h.b16 %v978
    %v1381 = vunpack.c.l.b16 %v979
    %v1382 = vunpack.c.h.b16 %v979
    %v1383 = vunpack.c.l.b16 %v980
    %v1384 = vunpack.c.l.b16 %v981
    %v1385 = vunpack.c.h.b16 %v981
    %v1386 = vunpack.c.l.b16 %v982
    %v1387 = vunpack.c.h.b16 %v982
    %v1388 = vunpack.c.l.b16 %v983
    %v1389 = vunpack.c.l.b16 %v984
    %v1390 = vunpack.c.h.b16 %v984
    %v1391 = vunpack.c.l.b16 %v985
    %v1392 = vunpack.c.h.b16 %v985
    %v1393 = vunpack.c.l.b16 %v986
    %v1394 = vunpack.c.l.b16 %v987
    %v1395 = vunpack.c.h.b16 %v987
    %v1396 = vunpack.c.l.b16 %v988
    %v1397 = vunpack.c.h.b16 %v988
    %v1398 = vunpack.c.l.b16 %v989
    %v1399 = vunpack.c.l.b16 %v990
    %v1400 = vunpack.c.h.b16 %v990
    %v1401 = vunpack.c.l.b16 %v991
    %v1402 = vunpack.c.h.b16 %v991
    %v1403 = vunpack.c.l.b16 %v992
    %v1404 = vpack.c.b16 %v1169, %v1164
    %v1405 = vpack.c.b16 %v1170, %v1165
    %v1406 = vpack.c.b16 %v1171, %v1166
    %v1407 = vpack.c.b16 %v1172, %v1167
    %v1408 = vpack.c.b16 %v1173, %v1168
    %v1409 = vpack.c.b16 %v1179, %v1174
    %v1410 = vpack.c.b16 %v1180, %v1175
    %v1411 = vpack.c.b16 %v1181, %v1176
    %v1412 = vpack.c.b16 %v1182, %v1177
    %v1413 = vpack.c.b16 %v1183, %v1178
    %v1414 = vpack.c.b16 %v1189, %v1184
    %v1415 = vpack.c.b16 %v1190, %v1185
    %v1416 = vpack.c.b16 %v1191, %v1186
    %v1417 = vpack.c.b16 %v1192, %v1187
    %v1418 = vpack.c.b16 %v1193, %v1188
    %v1419 = vpack.c.b16 %v1199, %v1194
    %v1420 = vpack.c.b16 %v1200, %v1195
    %v1421 = vpack.c.b16 %v1201, %v1196
    %v1422 = vpack.c.b16 %v1202, %v1197
    %v1423 = vpack.c.b16 %v1203, %v1198
    %v1424 = vpack.c.b16 %v1209, %v1204
    %v1425 = vpack.c.b16 %v1210, %v1205
    %v1426 = vpack.c.b16 %v1211, %v1206
    %v1427 = vpack.c.b16 %v1212, %v1207
    %v1428 = vpack.c.b16 %v1213, %v1208
    %v1429 = vpack.c.b16 %v1219, %v1214
    %v1430 = vpack.c.b16 %v1220, %v1215
    %v1431 = vpack.c.b16 %v1221, %v1216
    %v1432 = vpack.c.b16 %v1222, %v1217
    %v1433 = vpack.c.b16 %v1223, %v1218
    %v1434 = vpack.c.b16 %v1229, %v1224
    %v1435 = vpack.c.b16 %v1230, %v1225
    %v1436 = vpack.c.b16 %v1231, %v1226
    %v1437 = vpack.c.b16 %v1232, %v1227
    %v1438 = vpack.c.b16 %v1233, %v1228
    %v1439 = vpack.c.b16 %v1239, %v1234
    %v1440 = vpack.c.b16 %v1240, %v1235
    %v1441 = vpack.c.b16 %v1241, %v1236
    %v1442 = vpack.c.b16 %v1242, %v1237
    %v1443 = vpack.c.b16 %v1243, %v1238
    %v1444 = vpack.c.b16 %v1249, %v1244
    %v1445 = vpack.c.b16 %v1250, %v1245
    %v1446 = vpack.c.b16 %v1251, %v1246
    %v1447 = vpack.c.b16 %v1252, %v1247
    %v1448 = vpack.c.b16 %v1253, %v1248
    %v1449 = vpack.c.b16 %v1259, %v1254
    %v1450 = vpack.c.b16 %v1260, %v1255
    %v1451 = vpack.c.b16 %v1261, %v1256
    %v1452 = vpack.c.b16 %v1262, %v1257
    %v1453 = vpack.c.b16 %v1263, %v1258
    %v1454 = vpack.c.b16 %v1269, %v1264
    %v1455 = vpack.c.b16 %v1270, %v1265
    %v1456 = vpack.c.b16 %v1271, %v1266
    %v1457 = vpack.c.b16 %v1272, %v1267
    %v1458 = vpack.c.b16 %v1273, %v1268
    %v1459 = vpack.c.b16 %v1279, %v1274
    %v1460 = vpack.c.b16 %v1280, %v1275
    %v1461 = vpack.c.b16 %v1281, %v1276
    %v1462 = vpack.c.b16 %v1282, %v1277
    %v1463 = vpack.c.b16 %v1283, %v1278
    %v1464 = vpack.c.b16 %v1289, %v1284
    %v1465 = vpack.c.b16 %v1290, %v1285
    %v1466 = vpack.c.b16 %v1291, %v1286
    %v1467 = vpack.c.b16 %v1292, %v1287
    %v1468 = vpack.c.b16 %v1293, %v1288
    %v1469 = vpack.c.b16 %v1299, %v1294
    %v1470 = vpack.c.b16 %v1300, %v1295
    %v1471 = vpack.c.b16 %v1301, %v1296
    %v1472 = vpack.c.b16 %v1302, %v1297
    %v1473 = vpack.c.b16 %v1303, %v1298
    %v1474 = vpack.c.b16 %v1309, %v1304
    %v1475 = vpack.c.b16 %v1310, %v1305
    %v1476 = vpack.c.b16 %v1311, %v1306
    %v1477 = vpack.c.b16 %v1312, %v1307
    %v1478 = vpack.c.b16 %v1313, %v1308
    %v1479 = vpack.c.b16 %v1319, %v1314
    %v1480 = vpack.c.b16 %v1320, %v1315
    %v1481 = vpack.c.b16 %v1321, %v1316
    %v1482 = vpack.c.b16 %v1322, %v1317
    %v1483 = vpack.c.b16 %v1323, %v1318
    %v1484 = vpack.c.b16 %v1329, %v1324
    %v1485 = vpack.c.b16 %v1330, %v1325
    %v1486 = vpack.c.b16 %v1331, %v1326
    %v1487 = vpack.c.b16 %v1332, %v1327
    %v1488 = vpack.c.b16 %v1333, %v1328
    %v1489 = vpack.c.b16 %v1339, %v1334
    %v1490 = vpack.c.b16 %v1340, %v1335
    %v1491 = vpack.c.b16 %v1341, %v1336
    %v1492 = vpack.c.b16 %v1342, %v1337
    %v1493 = vpack.c.b16 %v1343, %v1338
    %v1494 = vpack.c.b16 %v1349, %v1344
    %v1495 = vpack.c.b16 %v1350, %v1345
    %v1496 = vpack.c.b16 %v1351, %v1346
    %v1497 = vpack.c.b16 %v1352, %v1347
    %v1498 = vpack.c.b16 %v1353, %v1348
    %v1499 = vpack.c.b16 %v1359, %v1354
    %v1500 = vpack.c.b16 %v1360, %v1355
    %v1501 = vpack.c.b16 %v1361, %v1356
    %v1502 = vpack.c.b16 %v1362, %v1357
    %v1503 = vpack.c.b16 %v1363, %v1358
    %v1504 = vpack.c.b16 %v1369, %v1364
    %v1505 = vpack.c.b16 %v1370, %v1365
    %v1506 = vpack.c.b16 %v1371, %v1366
    %v1507 = vpack.c.b16 %v1372, %v1367
    %v1508 = vpack.c.b16 %v1373, %v1368
    %v1509 = vpack.c.b16 %v1379, %v1374
    %v1510 = vpack.c.b16 %v1380, %v1375
    %v1511 = vpack.c.b16 %v1381, %v1376
    %v1512 = vpack.c.b16 %v1382, %v1377
    %v1513 = vpack.c.b16 %v1383, %v1378
    %v1514 = vpack.c.b16 %v1389, %v1384
    %v1515 = vpack.c.b16 %v1390, %v1385
    %v1516 = vpack.c.b16 %v1391, %v1386
    %v1517 = vpack.c.b16 %v1392, %v1387
    %v1518 = vpack.c.b16 %v1393, %v1388
    %v1519 = vpack.c.b16 %v1399, %v1394
    %v1520 = vpack.c.b16 %v1400, %v1395
    %v1521 = vpack.c.b16 %v1401, %v1396
    %v1522 = vpack.c.b16 %v1402, %v1397
    %v1523 = vpack.c.b16 %v1403, %v1398
    %1644 = vmatprep.subr.bf16.mxu0 %v1405
    %1645 = vmatpush1.bf16.msra.mxu0 %v1404
    %1646 = vmatprep.subr.bf16.mxu0 %v1410
    %1647 = vmatpush1.bf16.msra.mxu0 %v1409
    %1648 = vmatprep.subr.bf16.mxu0 %v1415
    %1649 = vmatpush1.bf16.msra.mxu0 %v1414
    %1650 = vmatprep.subr.bf16.mxu0 %v1420
    %1651 = vmatpush1.bf16.msra.mxu0 %v1419
    %1652 = vmatprep.subr.bf16.mxu0 %v1425
    %1653 = vmatpush1.bf16.msra.mxu0 %v1424
    %1654 = vmatprep.subr.bf16.mxu0 %v1430
    %1655 = vmatpush1.bf16.msra.mxu0 %v1429
    %1656 = vmatprep.subr.bf16.mxu0 %v1435
    %1657 = vmatpush1.bf16.msra.mxu0 %v1434
    %1658 = vmatprep.subr.bf16.mxu0 %v1440
    %1659 = vmatpush1.bf16.msra.mxu0 %v1439
    %1660 = vmatprep.subr.bf16.mxu0 %v1445
    %1661 = vmatpush1.bf16.msra.mxu0 %v1444
    %1662 = vmatprep.subr.bf16.mxu0 %v1450
    %1663 = vmatpush1.bf16.msra.mxu0 %v1449
    %1664 = vmatprep.subr.bf16.mxu0 %v1455
    %1665 = vmatpush1.bf16.msra.mxu0 %v1454
    %1666 = vmatprep.subr.bf16.mxu0 %v1460
    %1667 = vmatpush1.bf16.msra.mxu0 %v1459
    %1668 = vmatprep.subr.bf16.mxu0 %v1465
    %1669 = vmatpush1.bf16.msra.mxu0 %v1464
    %1670 = vmatprep.subr.bf16.mxu0 %v1470
    %1671 = vmatpush1.bf16.msra.mxu0 %v1469
    %1672 = vmatprep.subr.bf16.mxu0 %v1475
    %1673 = vmatpush1.bf16.msra.mxu0 %v1474
    %1674 = vmatprep.subr.bf16.mxu0 %v1480
    %1675 = vmatpush1.bf16.msra.mxu0 %v1479
    %1676 = vmatprep.mubr.bf16.mxu0 %v847
    %1677 = vmatmul.mubr.bf16.gmra.mrb[0].mxu0 %v846
    %v1678 = vpop.f32.mrb[0].mxu0
    %v1679 = vadd.f32 %v998, %v1678
    %v1680 = vpop.f32.mrb[0].mxu0
    %v1681 = vadd.f32 %v1002, %v1680
    %v1682 = vpop.f32.mrb[0].mxu0
    %v1683 = vadd.f32 %v998, %v1682
    %v1684 = vpop.f32.mrb[0].mxu0
    %v1685 = vadd.f32 %v1002, %v1684
    %1686 = vdwg.mxu0
    %1687 = vmatprep.subr.bf16.mxu0 %v1485
    %1688 = vmatpush1.bf16.msra.mxu0 %v1484
    %1689 = vmatprep.subr.bf16.mxu0 %v1490
    %1690 = vmatpush1.bf16.msra.mxu0 %v1489
    %1691 = vmatprep.subr.bf16.mxu0 %v1495
    %1692 = vmatpush1.bf16.msra.mxu0 %v1494
    %1693 = vmatprep.subr.bf16.mxu0 %v1500
    %1694 = vmatpush1.bf16.msra.mxu0 %v1499
    %1695 = vmatprep.subr.bf16.mxu0 %v1505
    %1696 = vmatpush1.bf16.msra.mxu0 %v1504
    %1697 = vmatprep.subr.bf16.mxu0 %v1510
    %1698 = vmatpush1.bf16.msra.mxu0 %v1509
    %1699 = vmatprep.subr.bf16.mxu0 %v1515
    %1700 = vmatpush1.bf16.msra.mxu0 %v1514
    %1701 = vmatprep.subr.bf16.mxu0 %v1520
    %1702 = vmatpush1.bf16.msra.mxu0 %v1519
    %1703 = vmatprep.subr.bf16.mxu0 0
    %1704 = vmatpush1.bf16.msra.mxu0 0
    %1705 = vmatprep.subr.bf16.mxu0 0
    %1706 = vmatpush1.bf16.msra.mxu0 0
    %1707 = vmatprep.subr.bf16.mxu0 0
    %1708 = vmatpush1.bf16.msra.mxu0 0
    %1709 = vmatprep.subr.bf16.mxu0 0
    %1710 = vmatpush1.bf16.msra.mxu0 0
    %1711 = vmatprep.subr.bf16.mxu0 0
    %1712 = vmatpush1.bf16.msra.mxu0 0
    %1713 = vmatprep.subr.bf16.mxu0 0
    %1714 = vmatpush1.bf16.msra.mxu0 0
    %1715 = vmatprep.subr.bf16.mxu0 0
    %1716 = vmatpush1.bf16.msra.mxu0 0
    %1717 = vmatprep.subr.bf16.mxu0 0
    %1718 = vmatpush1.bf16.msra.mxu0 0
    %1719 = vmatprep.mubr.bf16.mxu0 0
    %1720 = vmatmul.mubr.bf16.gmra.mrb[0].mxu0 %v848
    %v1721 = vpop.f32.mrb[0].mxu0
    %v1722 = vadd.f32 %v1679, %v1721
    %v1723 = vpop.f32.mrb[0].mxu0
    %v1724 = vadd.f32 %v1681, %v1723
    %v1725 = vpop.f32.mrb[0].mxu0
    %v1726 = vadd.f32 %v1683, %v1725
    %v1727 = vpop.f32.mrb[0].mxu0
    %v1728 = vadd.f32 %v1685, %v1727
    %1729 = vdwg.mxu0
    %1730 = vmatprep.subr.bf16.mxu0 %v1407
    %1731 = vmatpush1.bf16.msra.mxu0 %v1406
    %1732 = vmatprep.subr.bf16.mxu0 %v1412
    %1733 = vmatpush1.bf16.msra.mxu0 %v1411
    %1734 = vmatprep.subr.bf16.mxu0 %v1417
    %1735 = vmatpush1.bf16.msra.mxu0 %v1416
    %1736 = vmatprep.subr.bf16.mxu0 %v1422
    %1737 = vmatpush1.bf16.msra.mxu0 %v1421
    %1738 = vmatprep.subr.bf16.mxu0 %v1427
    %1739 = vmatpush1.bf16.msra.mxu0 %v1426
    %1740 = vmatprep.subr.bf16.mxu0 %v1432
    %1741 = vmatpush1.bf16.msra.mxu0 %v1431
    %1742 = vmatprep.subr.bf16.mxu0 %v1437
    %1743 = vmatpush1.bf16.msra.mxu0 %v1436
    %1744 = vmatprep.subr.bf16.mxu0 %v1442
    %1745 = vmatpush1.bf16.msra.mxu0 %v1441
    %1746 = vmatprep.subr.bf16.mxu0 %v1447
    %1747 = vmatpush1.bf16.msra.mxu0 %v1446
    %1748 = vmatprep.subr.bf16.mxu0 %v1452
    %1749 = vmatpush1.bf16.msra.mxu0 %v1451
    %1750 = vmatprep.subr.bf16.mxu0 %v1457
    %1751 = vmatpush1.bf16.msra.mxu0 %v1456
    %1752 = vmatprep.subr.bf16.mxu0 %v1462
    %1753 = vmatpush1.bf16.msra.mxu0 %v1461
    %1754 = vmatprep.subr.bf16.mxu0 %v1467
    %1755 = vmatpush1.bf16.msra.mxu0 %v1466
    %1756 = vmatprep.subr.bf16.mxu0 %v1472
    %1757 = vmatpush1.bf16.msra.mxu0 %v1471
    %1758 = vmatprep.subr.bf16.mxu0 %v1477
    %1759 = vmatpush1.bf16.msra.mxu0 %v1476
    %1760 = vmatprep.subr.bf16.mxu0 %v1482
    %1761 = vmatpush1.bf16.msra.mxu0 %v1481
    %1762 = vmatprep.mubr.bf16.mxu0 %v847
    %1763 = vmatmul.mubr.bf16.gmra.mrb[0].mxu0 %v846
    %v1764 = vpop.f32.mrb[0].mxu0
    %v1765 = vadd.f32 %v1006, %v1764
    %v1766 = vpop.f32.mrb[0].mxu0
    %v1767 = vadd.f32 %v1010, %v1766
    %v1768 = vpop.f32.mrb[0].mxu0
    %v1769 = vadd.f32 %v1006, %v1768
    %v1770 = vpop.f32.mrb[0].mxu0
    %v1771 = vadd.f32 %v1010, %v1770
    %1772 = vdwg.mxu0
    %1773 = vmatprep.subr.bf16.mxu0 %v1487
    %1774 = vmatpush1.bf16.msra.mxu0 %v1486
    %1775 = vmatprep.subr.bf16.mxu0 %v1492
    %1776 = vmatpush1.bf16.msra.mxu0 %v1491
    %1777 = vmatprep.subr.bf16.mxu0 %v1497
    %1778 = vmatpush1.bf16.msra.mxu0 %v1496
    %1779 = vmatprep.subr.bf16.mxu0 %v1502
    %1780 = vmatpush1.bf16.msra.mxu0 %v1501
    %1781 = vmatprep.subr.bf16.mxu0 %v1507
    %1782 = vmatpush1.bf16.msra.mxu0 %v1506
    %1783 = vmatprep.subr.bf16.mxu0 %v1512
    %1784 = vmatpush1.bf16.msra.mxu0 %v1511
    %1785 = vmatprep.subr.bf16.mxu0 %v1517
    %1786 = vmatpush1.bf16.msra.mxu0 %v1516
    %1787 = vmatprep.subr.bf16.mxu0 %v1522
    %1788 = vmatpush1.bf16.msra.mxu0 %v1521
    %1789 = vmatprep.subr.bf16.mxu0 0
    %1790 = vmatpush1.bf16.msra.mxu0 0
    %1791 = vmatprep.subr.bf16.mxu0 0
    %1792 = vmatpush1.bf16.msra.mxu0 0
    %1793 = vmatprep.subr.bf16.mxu0 0
    %1794 = vmatpush1.bf16.msra.mxu0 0
    %1795 = vmatprep.subr.bf16.mxu0 0
    %1796 = vmatpush1.bf16.msra.mxu0 0
    %1797 = vmatprep.subr.bf16.mxu0 0
    %1798 = vmatpush1.bf16.msra.mxu0 0
    %1799 = vmatprep.subr.bf16.mxu0 0
    %1800 = vmatpush1.bf16.msra.mxu0 0
    %1801 = vmatprep.subr.bf16.mxu0 0
    %1802 = vmatpush1.bf16.msra.mxu0 0
    %1803 = vmatprep.subr.bf16.mxu0 0
    %1804 = vmatpush1.bf16.msra.mxu0 0
    %1805 = vmatprep.mubr.bf16.mxu0 0
    %1806 = vmatmul.mubr.bf16.gmra.mrb[0].mxu0 %v848
    %v1807 = vpop.f32.mrb[0].mxu0
    %v1808 = vadd.f32 %v1765, %v1807
    %v1809 = vpop.f32.mrb[0].mxu0
    %v1810 = vadd.f32 %v1767, %v1809
    %v1811 = vpop.f32.mrb[0].mxu0
    %v1812 = vadd.f32 %v1769, %v1811
    %v1813 = vpop.f32.mrb[0].mxu0
    %v1814 = vadd.f32 %v1771, %v1813
    %1815 = vdwg.mxu0
    %1816 = vmatprep.subr.bf16.mxu0 0
    %1817 = vmatpush1.bf16.msra.mxu0 %v1408
    %1818 = vmatprep.subr.bf16.mxu0 0
    %1819 = vmatpush1.bf16.msra.mxu0 %v1413
    %1820 = vmatprep.subr.bf16.mxu0 0
    %1821 = vmatpush1.bf16.msra.mxu0 %v1418
    %1822 = vmatprep.subr.bf16.mxu0 0
    %1823 = vmatpush1.bf16.msra.mxu0 %v1423
    %1824 = vmatprep.subr.bf16.mxu0 0
    %1825 = vmatpush1.bf16.msra.mxu0 %v1428
    %1826 = vmatprep.subr.bf16.mxu0 0
    %1827 = vmatpush1.bf16.msra.mxu0 %v1433
    %1828 = vmatprep.subr.bf16.mxu0 0
    %1829 = vmatpush1.bf16.msra.mxu0 %v1438
    %1830 = vmatprep.subr.bf16.mxu0 0
    %1831 = vmatpush1.bf16.msra.mxu0 %v1443
    %1832 = vmatprep.subr.bf16.mxu0 0
    %1833 = vmatpush1.bf16.msra.mxu0 %v1448
    %1834 = vmatprep.subr.bf16.mxu0 0
    %1835 = vmatpush1.bf16.msra.mxu0 %v1453
    %1836 = vmatprep.subr.bf16.mxu0 0
    %1837 = vmatpush1.bf16.msra.mxu0 %v1458
    %1838 = vmatprep.subr.bf16.mxu0 0
    %1839 = vmatpush1.bf16.msra.mxu0 %v1463
    %1840 = vmatprep.subr.bf16.mxu0 0
    %1841 = vmatpush1.bf16.msra.mxu0 %v1468
    %1842 = vmatprep.subr.bf16.mxu0 0
    %1843 = vmatpush1.bf16.msra.mxu0 %v1473
    %1844 = vmatprep.subr.bf16.mxu0 0
    %1845 = vmatpush1.bf16.msra.mxu0 %v1478
    %1846 = vmatprep.subr.bf16.mxu0 0
    %1847 = vmatpush1.bf16.msra.mxu0 %v1483
    %1848 = vmatprep.mubr.bf16.mxu0 %v847
    %1849 = vmatmul.mubr.bf16.gmra.mrb[0].mxu0 %v846
    %v1850 = vpop.f32.mrb[0].mxu0
    %v1851 = vadd.f32 %v1014, %v1850
    %v1852 = vpop.f32.mrb[0].mxu0
    %v1853 = vpop.f32.mrb[0].mxu0
    %v1854 = vadd.f32 %v1014, %v1853
    %v1855 = vpop.f32.mrb[0].mxu0
    %1856 = vdwg.mxu0
    %1857 = vmatprep.subr.bf16.mxu0 0
    %1858 = vmatpush1.bf16.msra.mxu0 %v1488
    %1859 = vmatprep.subr.bf16.mxu0 0
    %1860 = vmatpush1.bf16.msra.mxu0 %v1493
    %1861 = vmatprep.subr.bf16.mxu0 0
    %1862 = vmatpush1.bf16.msra.mxu0 %v1498
    %1863 = vmatprep.subr.bf16.mxu0 0
    %1864 = vmatpush1.bf16.msra.mxu0 %v1503
    %1865 = vmatprep.subr.bf16.mxu0 0
    %1866 = vmatpush1.bf16.msra.mxu0 %v1508
    %1867 = vmatprep.subr.bf16.mxu0 0
    %1868 = vmatpush1.bf16.msra.mxu0 %v1513
    %1869 = vmatprep.subr.bf16.mxu0 0
    %1870 = vmatpush1.bf16.msra.mxu0 %v1518
    %1871 = vmatprep.subr.bf16.mxu0 0
    %1872 = vmatpush1.bf16.msra.mxu0 %v1523
    %1873 = vmatprep.subr.bf16.mxu0 0
    %1874 = vmatpush1.bf16.msra.mxu0 0
    %1875 = vmatprep.subr.bf16.mxu0 0
    %1876 = vmatpush1.bf16.msra.mxu0 0
    %1877 = vmatprep.subr.bf16.mxu0 0
    %1878 = vmatpush1.bf16.msra.mxu0 0
    %1879 = vmatprep.subr.bf16.mxu0 0
    %1880 = vmatpush1.bf16.msra.mxu0 0
    %1881 = vmatprep.subr.bf16.mxu0 0
    %1882 = vmatpush1.bf16.msra.mxu0 0
    %1883 = vmatprep.subr.bf16.mxu0 0
    %1884 = vmatpush1.bf16.msra.mxu0 0
    %1885 = vmatprep.subr.bf16.mxu0 0
    %1886 = vmatpush1.bf16.msra.mxu0 0
    %1887 = vmatprep.subr.bf16.mxu0 0
    %1888 = vmatpush1.bf16.msra.mxu0 0
    %1889 = vmatprep.mubr.bf16.mxu0 0
    %1890 = vmatmul.mubr.bf16.gmra.mrb[0].mxu0 %v848
    %v1891 = vpop.f32.mrb[0].mxu0
    %v1892 = vadd.f32 %v1851, %v1891
    %v1893 = vpop.f32.mrb[0].mxu0
    %v1894 = vpop.f32.mrb[0].mxu0
    %v1895 = vadd.f32 %v1854, %v1894
    %v1896 = vpop.f32.mrb[0].mxu0
    %1897 = vdwg.mxu0
    %v1898 = vmax.f32 %v1722, 0.0
    %v1899 = vmax.f32 %v1724, 0.0
    %v1900 = vmax.f32 %v1808, 0.0
    %v1901 = vmax.f32 %v1810, 0.0
    %v1902 = vmax.f32 %v1892, 0.0
    %v1903 = vmax.f32 %v1726, 0.0
    %v1904 = vmax.f32 %v1728, 0.0
    %v1905 = vmax.f32 %v1812, 0.0
    %v1906 = vmax.f32 %v1814, 0.0
    %v1907 = vmax.f32 %v1895, 0.0
    %v1908 = vpack.c.bf16 %v1903, %v1898
    %v1909 = vpack.c.bf16 %v1904, %v1899
    %v1910 = vpack.c.bf16 %v1905, %v1900
    %v1911 = vpack.c.bf16 %v1906, %v1901
    %v1912 = vpack.c.bf16 %v1907, %v1902
    %v1913 = vld [vmem:[#allocation16] sm:$0xff]
    %v1914 = vld [vmem:[#allocation16 + $0x8] sm:$0xff]
    %v1915 = vld [vmem:[#allocation16 + $0x10] sm:$0xff]
    %v1916 = vld [vmem:[#allocation16 + $0x18] sm:$0xff]
    %v1917 = vld [vmem:[#allocation16 + $0x20] sm:$0xff]
    %v1918 = vld [vmem:[#allocation16 + $0x28] sm:$0xff]
    %v1919 = vld [vmem:[#allocation16 + $0x30] sm:$0xff]
    %v1920 = vld [vmem:[#allocation16 + $0x38] sm:$0xff]
    %v1921 = vld [vmem:[#allocation16 + $0x40] sm:$0xff]
    %v1922 = vld [vmem:[#allocation16 + $0x48] sm:$0xff]
    %v1923 = vld [vmem:[#allocation16 + $0x50] sm:$0xff]
    %v1924 = vld [vmem:[#allocation16 + $0x58] sm:$0xff]
    %v1925 = vld [vmem:[#allocation16 + $0x60] sm:$0xff]
    %v1926 = vld [vmem:[#allocation16 + $0x68] sm:$0xff]
    %v1927 = vld [vmem:[#allocation16 + $0x70] sm:$0xff]
    %v1928 = vld [vmem:[#allocation16 + $0x78] sm:$0xff]
    %v1929 = vld [vmem:[#allocation16 + $0x80] sm:$0xff]
    %v1930 = vld [vmem:[#allocation16 + $0x88] sm:$0xff]
    %v1931 = vld [vmem:[#allocation16 + $0x90] sm:$0xff]
    %v1932 = vld [vmem:[#allocation16 + $0x98] sm:$0xff]
    %v1933 = vld [vmem:[#allocation16 + $0xa0] sm:$0xff]
    %v1934 = vld [vmem:[#allocation16 + $0xa8] sm:$0xff]
    %v1935 = vld [vmem:[#allocation16 + $0xb0] sm:$0xff]
    %v1936 = vld [vmem:[#allocation16 + $0xb8] sm:$0xff]
    %v1937 = vld [vmem:[#allocation16 + $0xc0] sm:$0xff]
    %v1938 = vld [vmem:[#allocation16 + $0xc8] sm:$0xff]
    %v1939 = vld [vmem:[#allocation16 + $0xd0] sm:$0xff]
    %v1940 = vld [vmem:[#allocation16 + $0xd8] sm:$0xff]
    %v1941 = vld [vmem:[#allocation16 + $0xe0] sm:$0xff]
    %v1942 = vld [vmem:[#allocation16 + $0xe8] sm:$0xff]
    %v1943 = vld [vmem:[#allocation16 + $0xf0] sm:$0xff]
    %v1944 = vld [vmem:[#allocation16 + $0xf8] sm:$0xff]
    %v1945 = vld [vmem:[#allocation16 + $0x100] sm:$0xff]
    %v1946 = vld [vmem:[#allocation16 + $0x108] sm:$0xff]
    %v1947 = vld [vmem:[#allocation16 + $0x110] sm:$0xff]
    %v1948 = vld [vmem:[#allocation16 + $0x118] sm:$0xff]
    %v1949 = vld [vmem:[#allocation16 + $0x120] sm:$0xff]
    %v1950 = vld [vmem:[#allocation16 + $0x128] sm:$0xff]
    %v1951 = vld [vmem:[#allocation16 + $0x130] sm:$0xff]
    %v1952 = vld [vmem:[#allocation16 + $0x138] sm:$0xff]
    %v1953 = vld [vmem:[#allocation16 + $0x140] sm:$0xff]
    %v1954 = vld [vmem:[#allocation16 + $0x148] sm:$0xff]
    %v1955 = vld [vmem:[#allocation16 + $0x150] sm:$0xff]
    %v1956 = vld [vmem:[#allocation16 + $0x158] sm:$0xff]
    %v1957 = vld [vmem:[#allocation16 + $0x160] sm:$0xff]
    %v1958 = vld [vmem:[#allocation16 + $0x168] sm:$0xff]
    %v1959 = vld [vmem:[#allocation16 + $0x170] sm:$0xff]
    %v1960 = vld [vmem:[#allocation16 + $0x178] sm:$0xff]
    %v1961 = vld [vmem:[#allocation16 + $0x180] sm:$0xff]
    %v1962 = vld [vmem:[#allocation16 + $0x188] sm:$0xff]
    %v1963 = vld [vmem:[#allocation16 + $0x190] sm:$0xff]
    %v1964 = vld [vmem:[#allocation16 + $0x198] sm:$0xff]
    %v1965 = vld [vmem:[#allocation16 + $0x1a0] sm:$0xff]
    %v1966 = vld [vmem:[#allocation16 + $0x1a8] sm:$0xff]
    %v1967 = vld [vmem:[#allocation16 + $0x1b0] sm:$0xff]
    %v1968 = vld [vmem:[#allocation16 + $0x1b8] sm:$0xff]
    %v1969 = vld [vmem:[#allocation16 + $0x1c0] sm:$0xff]
    %v1970 = vld [vmem:[#allocation16 + $0x1c8] sm:$0xff]
    %v1971 = vld [vmem:[#allocation16 + $0x1d0] sm:$0xff]
    %v1972 = vld [vmem:[#allocation16 + $0x1d8] sm:$0xff]
    %v1973 = vld [vmem:[#allocation16 + $0x1e0] sm:$0xff]
    %v1974 = vld [vmem:[#allocation16 + $0x1e8] sm:$0xff]
    %v1975 = vld [vmem:[#allocation16 + $0x1f0] sm:$0xff]
    %v1976 = vld [vmem:[#allocation16 + $0x1f8] sm:$0xff]
    %v1977 = vld [vmem:[#allocation16 + $0x200] sm:$0xff]
    %v1978 = vld [vmem:[#allocation16 + $0x208] sm:$0xff]
    %v1979 = vld [vmem:[#allocation16 + $0x210] sm:$0xff]
    %v1980 = vld [vmem:[#allocation16 + $0x218] sm:$0xff]
    %v1981 = vld [vmem:[#allocation16 + $0x220] sm:$0xff]
    %v1982 = vld [vmem:[#allocation16 + $0x228] sm:$0xff]
    %v1983 = vld [vmem:[#allocation16 + $0x230] sm:$0xff]
    %v1984 = vld [vmem:[#allocation16 + $0x238] sm:$0xff]
    %v1985 = vld [vmem:[#allocation16 + $0x240] sm:$0xff]
    %v1986 = vld [vmem:[#allocation16 + $0x248] sm:$0xff]
    %v1987 = vld [vmem:[#allocation16 + $0x250] sm:$0xff]
    %v1988 = vld [vmem:[#allocation16 + $0x258] sm:$0xff]
    %v1989 = vld [vmem:[#allocation16 + $0x260] sm:$0xff]
    %v1990 = vld [vmem:[#allocation16 + $0x268] sm:$0xff]
    %v1991 = vld [vmem:[#allocation16 + $0x270] sm:$0xff]
    %v1992 = vld [vmem:[#allocation16 + $0x278] sm:$0xff]
    %v1993 = vld [vmem:[#allocation16 + $0x280] sm:$0xff]
    %v1994 = vld [vmem:[#allocation16 + $0x288] sm:$0xff]
    %v1995 = vld [vmem:[#allocation16 + $0x290] sm:$0xff]
    %v1996 = vld [vmem:[#allocation16 + $0x298] sm:$0xff]
    %v1997 = vld [vmem:[#allocation16 + $0x2a0] sm:$0xff]
    %v1998 = vld [vmem:[#allocation16 + $0x2a8] sm:$0xff]
    %v1999 = vld [vmem:[#allocation16 + $0x2b0] sm:$0xff]
    %v2000 = vld [vmem:[#allocation16 + $0x2b8] sm:$0xff]
    %v2001 = vld [vmem:[#allocation16 + $0x2c0] sm:$0xff]
    %v2002 = vld [vmem:[#allocation16 + $0x2c8] sm:$0xff]
    %v2003 = vld [vmem:[#allocation16 + $0x2d0] sm:$0xff]
    %v2004 = vld [vmem:[#allocation16 + $0x2d8] sm:$0xff]
    %v2005 = vld [vmem:[#allocation16 + $0x2e0] sm:$0xff]
    %v2006 = vld [vmem:[#allocation16 + $0x2e8] sm:$0xff]
    %v2007 = vld [vmem:[#allocation16 + $0x2f0] sm:$0xff]
    %v2008 = vld [vmem:[#allocation16 + $0x2f8] sm:$0xff]
    %v2009 = vld [vmem:[#allocation16 + $0x300] sm:$0xff]
    %v2010 = vld [vmem:[#allocation16 + $0x308] sm:$0xff]
    %v2011 = vld [vmem:[#allocation16 + $0x310] sm:$0xff]
    %v2012 = vld [vmem:[#allocation16 + $0x318] sm:$0xff]
    %v2013 = vld [vmem:[#allocation16 + $0x320] sm:$0xff]
    %v2014 = vld [vmem:[#allocation16 + $0x328] sm:$0xff]
    %v2015 = vld [vmem:[#allocation16 + $0x330] sm:$0xff]
    %v2016 = vld [vmem:[#allocation16 + $0x338] sm:$0xff]
    %v2017 = vld [vmem:[#allocation16 + $0x340] sm:$0xff]
    %v2018 = vld [vmem:[#allocation16 + $0x348] sm:$0xff]
    %v2019 = vld [vmem:[#allocation16 + $0x350] sm:$0xff]
    %v2020 = vld [vmem:[#allocation16 + $0x358] sm:$0xff]
    %v2021 = vld [vmem:[#allocation16 + $0x360] sm:$0xff]
    %v2022 = vld [vmem:[#allocation16 + $0x368] sm:$0xff]
    %v2023 = vld [vmem:[#allocation16 + $0x370] sm:$0xff]
    %v2024 = vld [vmem:[#allocation16 + $0x378] sm:$0xff]
    %v2025 = vld [vmem:[#allocation16 + $0x380] sm:$0xff]
    %v2026 = vld [vmem:[#allocation16 + $0x388] sm:$0xff]
    %v2027 = vld [vmem:[#allocation16 + $0x390] sm:$0xff]
    %v2028 = vld [vmem:[#allocation16 + $0x398] sm:$0xff]
    %v2029 = vld [vmem:[#allocation16 + $0x3a0] sm:$0xff]
    %v2030 = vld [vmem:[#allocation16 + $0x3a8] sm:$0xff]
    %v2031 = vld [vmem:[#allocation16 + $0x3b0] sm:$0xff]
    %v2032 = vld [vmem:[#allocation16 + $0x3b8] sm:$0xff]
    %v2033 = vld [vmem:[#allocation16 + $0x3c0] sm:$0xff]
    %v2034 = vld [vmem:[#allocation16 + $0x3c8] sm:$0xff]
    %v2035 = vld [vmem:[#allocation16 + $0x3d0] sm:$0xff]
    %v2036 = vld [vmem:[#allocation16 + $0x3d8] sm:$0xff]
    %v2037 = vld [vmem:[#allocation16 + $0x3e0] sm:$0xff]
    %v2038 = vld [vmem:[#allocation16 + $0x3e8] sm:$0xff]
    %v2039 = vld [vmem:[#allocation16 + $0x3f0] sm:$0xff]
    %v2040 = vld [vmem:[#allocation16 + $0x3f8] sm:$0xff]
    %v2041 = vld [vmem:[#allocation16 + $0x400] sm:$0xff]
    %v2042 = vld [vmem:[#allocation16 + $0x408] sm:$0xff]
    %v2043 = vld [vmem:[#allocation16 + $0x410] sm:$0xff]
    %v2044 = vld [vmem:[#allocation16 + $0x418] sm:$0xff]
    %v2045 = vld [vmem:[#allocation16 + $0x420] sm:$0xff]
    %v2046 = vld [vmem:[#allocation16 + $0x428] sm:$0xff]
    %v2047 = vld [vmem:[#allocation16 + $0x430] sm:$0xff]
    %v2048 = vld [vmem:[#allocation16 + $0x438] sm:$0xff]
    %v2049 = vld [vmem:[#allocation16 + $0x440] sm:$0xff]
    %v2050 = vld [vmem:[#allocation16 + $0x448] sm:$0xff]
    %v2051 = vld [vmem:[#allocation16 + $0x450] sm:$0xff]
    %v2052 = vld [vmem:[#allocation16 + $0x458] sm:$0xff]
    %v2053 = vld [vmem:[#allocation16 + $0x460] sm:$0xff]
    %v2054 = vld [vmem:[#allocation16 + $0x468] sm:$0xff]
    %v2055 = vld [vmem:[#allocation16 + $0x470] sm:$0xff]
    %v2056 = vld [vmem:[#allocation16 + $0x478] sm:$0xff]
    %v2057 = vld [vmem:[#allocation16 + $0x480] sm:$0xff]
    %v2058 = vld [vmem:[#allocation16 + $0x488] sm:$0xff]
    %v2059 = vld [vmem:[#allocation16 + $0x490] sm:$0xff]
    %v2060 = vld [vmem:[#allocation16 + $0x498] sm:$0xff]
    %v2061 = vld [vmem:[#allocation16 + $0x4a0] sm:$0xff]
    %v2062 = vld [vmem:[#allocation16 + $0x4a8] sm:$0xff]
    %v2063 = vld [vmem:[#allocation16 + $0x4b0] sm:$0xff]
    %v2064 = vld [vmem:[#allocation16 + $0x4b8] sm:$0xff]
    %v2065 = vld [vmem:[#allocation16 + $0x4c0] sm:$0xff]
    %v2066 = vld [vmem:[#allocation16 + $0x4c8] sm:$0xff]
    %v2067 = vld [vmem:[#allocation16 + $0x4d0] sm:$0xff]
    %v2068 = vld [vmem:[#allocation16 + $0x4d8] sm:$0xff]
    %v2069 = vld [vmem:[#allocation16 + $0x4e0] sm:$0xff]
    %v2070 = vld [vmem:[#allocation16 + $0x4e8] sm:$0xff]
    %v2071 = vld [vmem:[#allocation16 + $0x4f0] sm:$0xff]
    %v2072 = vld [vmem:[#allocation16 + $0x4f8] sm:$0xff]
    %v2073 = vld [vmem:[#allocation16 + $0x500] sm:$0xff]
    %v2074 = vld [vmem:[#allocation16 + $0x508] sm:$0xff]
    %v2075 = vld [vmem:[#allocation16 + $0x510] sm:$0xff]
    %v2076 = vld [vmem:[#allocation16 + $0x518] sm:$0xff]
    %v2077 = vld [vmem:[#allocation16 + $0x520] sm:$0xff]
    %v2078 = vld [vmem:[#allocation16 + $0x528] sm:$0xff]
    %v2079 = vld [vmem:[#allocation16 + $0x530] sm:$0xff]
    %v2080 = vld [vmem:[#allocation16 + $0x538] sm:$0xff]
    %v2081 = vld [vmem:[#allocation16 + $0x540] sm:$0xff]
    %v2082 = vld [vmem:[#allocation16 + $0x548] sm:$0xff]
    %v2083 = vld [vmem:[#allocation16 + $0x550] sm:$0xff]
    %v2084 = vld [vmem:[#allocation16 + $0x558] sm:$0xff]
    %v2085 = vld [vmem:[#allocation16 + $0x560] sm:$0xff]
    %v2086 = vld [vmem:[#allocation16 + $0x568] sm:$0xff]
    %v2087 = vld [vmem:[#allocation16 + $0x570] sm:$0xff]
    %v2088 = vld [vmem:[#allocation16 + $0x578] sm:$0xff]
    %v2089 = vld [vmem:[#allocation16 + $0x580] sm:$0xff]
    %v2090 = vld [vmem:[#allocation16 + $0x588] sm:$0xff]
    %v2091 = vld [vmem:[#allocation16 + $0x590] sm:$0xff]
    %v2092 = vld [vmem:[#allocation16 + $0x598] sm:$0xff]
    %v2093 = vld [vmem:[#allocation16 + $0x5a0] sm:$0xff]
    %v2094 = vld [vmem:[#allocation16 + $0x5a8] sm:$0xff]
    %v2095 = vld [vmem:[#allocation16 + $0x5b0] sm:$0xff]
    %v2096 = vld [vmem:[#allocation16 + $0x5b8] sm:$0xff]
    %v2097 = vld [vmem:[#allocation16 + $0x5c0] sm:$0xff]
    %v2098 = vld [vmem:[#allocation16 + $0x5c8] sm:$0xff]
    %v2099 = vld [vmem:[#allocation16 + $0x5d0] sm:$0xff]
    %v2100 = vld [vmem:[#allocation16 + $0x5d8] sm:$0xff]
    %v2101 = vld [vmem:[#allocation16 + $0x5e0] sm:$0xff]
    %v2102 = vld [vmem:[#allocation16 + $0x5e8] sm:$0xff]
    %v2103 = vld [vmem:[#allocation16 + $0x5f0] sm:$0xff]
    %v2104 = vld [vmem:[#allocation16 + $0x5f8] sm:$0xff]
    %v2105 = vld [vmem:[#allocation16 + $0x600] sm:$0xff]
    %v2106 = vld [vmem:[#allocation16 + $0x608] sm:$0xff]
    %v2107 = vld [vmem:[#allocation16 + $0x610] sm:$0xff]
    %v2108 = vld [vmem:[#allocation16 + $0x618] sm:$0xff]
    %v2109 = vld [vmem:[#allocation16 + $0x620] sm:$0xff]
    %v2110 = vld [vmem:[#allocation16 + $0x628] sm:$0xff]
    %v2111 = vld [vmem:[#allocation16 + $0x630] sm:$0xff]
    %v2112 = vld [vmem:[#allocation16 + $0x638] sm:$0xff]
    %v2113 = vld [vmem:[#allocation16 + $0x640] sm:$0xff]
    %v2114 = vld [vmem:[#allocation16 + $0x648] sm:$0xff]
    %v2115 = vld [vmem:[#allocation16 + $0x650] sm:$0xff]
    %v2116 = vld [vmem:[#allocation16 + $0x658] sm:$0xff]
    %v2117 = vld [vmem:[#allocation16 + $0x660] sm:$0xff]
    %v2118 = vld [vmem:[#allocation16 + $0x668] sm:$0xff]
    %v2119 = vld [vmem:[#allocation16 + $0x670] sm:$0xff]
    %v2120 = vld [vmem:[#allocation16 + $0x678] sm:$0xff]
    %v2121 = vld [vmem:[#allocation16 + $0x680] sm:$0xff]
    %v2122 = vld [vmem:[#allocation16 + $0x688] sm:$0xff]
    %v2123 = vld [vmem:[#allocation16 + $0x690] sm:$0xff]
    %v2124 = vld [vmem:[#allocation16 + $0x698] sm:$0xff]
    %v2125 = vld [vmem:[#allocation16 + $0x6a0] sm:$0xff]
    %v2126 = vld [vmem:[#allocation16 + $0x6a8] sm:$0xff]
    %v2127 = vld [vmem:[#allocation16 + $0x6b0] sm:$0xff]
    %v2128 = vld [vmem:[#allocation16 + $0x6b8] sm:$0xff]
    %v2129 = vld [vmem:[#allocation16 + $0x6c0] sm:$0xff]
    %v2130 = vld [vmem:[#allocation16 + $0x6c8] sm:$0xff]
    %v2131 = vld [vmem:[#allocation16 + $0x6d0] sm:$0xff]
    %v2132 = vld [vmem:[#allocation16 + $0x6d8] sm:$0xff]
    %v2133 = vld [vmem:[#allocation16 + $0x6e0] sm:$0xff]
    %v2134 = vld [vmem:[#allocation16 + $0x6e8] sm:$0xff]
    %v2135 = vld [vmem:[#allocation16 + $0x6f0] sm:$0xff]
    %v2136 = vld [vmem:[#allocation16 + $0x6f8] sm:$0xff]
    %v2137 = vld [vmem:[#allocation16 + $0x700] sm:$0xff]
    %v2138 = vld [vmem:[#allocation16 + $0x708] sm:$0xff]
    %v2139 = vld [vmem:[#allocation16 + $0x710] sm:$0xff]
    %v2140 = vld [vmem:[#allocation16 + $0x718] sm:$0xff]
    %v2141 = vld [vmem:[#allocation16 + $0x720] sm:$0xff]
    %v2142 = vld [vmem:[#allocation16 + $0x728] sm:$0xff]
    %v2143 = vld [vmem:[#allocation16 + $0x730] sm:$0xff]
    %v2144 = vld [vmem:[#allocation16 + $0x738] sm:$0xff]
    %v2145 = vld [vmem:[#allocation16 + $0x740] sm:$0xff]
    %v2146 = vld [vmem:[#allocation16 + $0x748] sm:$0xff]
    %v2147 = vld [vmem:[#allocation16 + $0x750] sm:$0xff]
    %v2148 = vld [vmem:[#allocation16 + $0x758] sm:$0xff]
    %v2149 = vld [vmem:[#allocation16 + $0x760] sm:$0xff]
    %v2150 = vld [vmem:[#allocation16 + $0x768] sm:$0xff]
    %v2151 = vld [vmem:[#allocation16 + $0x770] sm:$0xff]
    %v2152 = vld [vmem:[#allocation16 + $0x778] sm:$0xff]
    %v2153 = vld [vmem:[#allocation16 + $0x780] sm:$0xff]
    %v2154 = vld [vmem:[#allocation16 + $0x788] sm:$0xff]
    %v2155 = vld [vmem:[#allocation16 + $0x790] sm:$0xff]
    %v2156 = vld [vmem:[#allocation16 + $0x798] sm:$0xff]
    %v2157 = vld [vmem:[#allocation16 + $0x7a0] sm:$0xff]
    %v2158 = vld [vmem:[#allocation16 + $0x7a8] sm:$0xff]
    %v2159 = vld [vmem:[#allocation16 + $0x7b0] sm:$0xff]
    %v2160 = vld [vmem:[#allocation16 + $0x7b8] sm:$0xff]
    %v2161 = vld [vmem:[#allocation16 + $0x7c0] sm:$0xff]
    %v2162 = vld [vmem:[#allocation16 + $0x7c8] sm:$0xff]
    %v2163 = vld [vmem:[#allocation16 + $0x7d0] sm:$0xff]
    %v2164 = vld [vmem:[#allocation16 + $0x7d8] sm:$0xff]
    %v2165 = vld [vmem:[#allocation16 + $0x7e0] sm:$0xff]
    %v2166 = vld [vmem:[#allocation16 + $0x7e8] sm:$0xff]
    %v2167 = vld [vmem:[#allocation16 + $0x7f0] sm:$0xff]
    %v2168 = vld [vmem:[#allocation16 + $0x7f8] sm:$0xff]
    %v2169 = vld [vmem:[#allocation16 + $0x800] sm:$0xff]
    %v2170 = vld [vmem:[#allocation16 + $0x808] sm:$0xff]
    %v2171 = vld [vmem:[#allocation16 + $0x810] sm:$0xff]
    %v2172 = vld [vmem:[#allocation16 + $0x818] sm:$0xff]
    %v2173 = vld [vmem:[#allocation16 + $0x820] sm:$0xff]
    %v2174 = vld [vmem:[#allocation16 + $0x828] sm:$0xff]
    %v2175 = vld [vmem:[#allocation16 + $0x830] sm:$0xff]
    %v2176 = vld [vmem:[#allocation16 + $0x838] sm:$0xff]
    %v2177 = vld [vmem:[#allocation16 + $0x840] sm:$0xff]
    %v2178 = vld [vmem:[#allocation16 + $0x848] sm:$0xff]
    %v2179 = vld [vmem:[#allocation16 + $0x850] sm:$0xff]
    %v2180 = vld [vmem:[#allocation16 + $0x858] sm:$0xff]
    %v2181 = vld [vmem:[#allocation16 + $0x860] sm:$0xff]
    %v2182 = vld [vmem:[#allocation16 + $0x868] sm:$0xff]
    %v2183 = vld [vmem:[#allocation16 + $0x870] sm:$0xff]
    %v2184 = vld [vmem:[#allocation16 + $0x878] sm:$0xff]
    %v2185 = vld [vmem:[#allocation16 + $0x880] sm:$0xff]
    %v2186 = vld [vmem:[#allocation16 + $0x888] sm:$0xff]
    %v2187 = vld [vmem:[#allocation16 + $0x890] sm:$0xff]
    %v2188 = vld [vmem:[#allocation16 + $0x898] sm:$0xff]
    %v2189 = vld [vmem:[#allocation16 + $0x8a0] sm:$0xff]
    %v2190 = vld [vmem:[#allocation16 + $0x8a8] sm:$0xff]
    %v2191 = vld [vmem:[#allocation16 + $0x8b0] sm:$0xff]
    %v2192 = vld [vmem:[#allocation16 + $0x8b8] sm:$0xff]
    %v2193 = vld [vmem:[#allocation16 + $0x8c0] sm:$0xff]
    %v2194 = vld [vmem:[#allocation16 + $0x8c8] sm:$0xff]
    %v2195 = vld [vmem:[#allocation16 + $0x8d0] sm:$0xff]
    %v2196 = vld [vmem:[#allocation16 + $0x8d8] sm:$0xff]
    %v2197 = vld [vmem:[#allocation16 + $0x8e0] sm:$0xff]
    %v2198 = vld [vmem:[#allocation16 + $0x8e8] sm:$0xff]
    %v2199 = vld [vmem:[#allocation16 + $0x8f0] sm:$0xff]
    %v2200 = vld [vmem:[#allocation16 + $0x8f8] sm:$0xff]
    %v2201 = vld [vmem:[#allocation16 + $0x900] sm:$0xff]
    %v2202 = vld [vmem:[#allocation16 + $0x908] sm:$0xff]
    %v2203 = vld [vmem:[#allocation16 + $0x910] sm:$0xff]
    %v2204 = vld [vmem:[#allocation16 + $0x918] sm:$0xff]
    %v2205 = vld [vmem:[#allocation16 + $0x920] sm:$0xff]
    %v2206 = vld [vmem:[#allocation16 + $0x928] sm:$0xff]
    %v2207 = vld [vmem:[#allocation16 + $0x930] sm:$0xff]
    %v2208 = vld [vmem:[#allocation16 + $0x938] sm:$0xff]
    %v2209 = vld [vmem:[#allocation16 + $0x940] sm:$0xff]
    %v2210 = vld [vmem:[#allocation16 + $0x948] sm:$0xff]
    %v2211 = vld [vmem:[#allocation16 + $0x950] sm:$0xff]
    %v2212 = vld [vmem:[#allocation16 + $0x958] sm:$0xff]
    %v2213 = vld [vmem:[#allocation16 + $0x960] sm:$0xff]
    %v2214 = vld [vmem:[#allocation16 + $0x968] sm:$0xff]
    %v2215 = vld [vmem:[#allocation16 + $0x970] sm:$0xff]
    %v2216 = vld [vmem:[#allocation16 + $0x978] sm:$0xff]
    %v2217 = vld [vmem:[#allocation16 + $0x980] sm:$0xff]
    %v2218 = vld [vmem:[#allocation16 + $0x988] sm:$0xff]
    %v2219 = vld [vmem:[#allocation16 + $0x990] sm:$0xff]
    %v2220 = vld [vmem:[#allocation16 + $0x998] sm:$0xff]
    %v2221 = vld [vmem:[#allocation16 + $0x9a0] sm:$0xff]
    %v2222 = vld [vmem:[#allocation16 + $0x9a8] sm:$0xff]
    %v2223 = vld [vmem:[#allocation16 + $0x9b0] sm:$0xff]
    %v2224 = vld [vmem:[#allocation16 + $0x9b8] sm:$0xff]
    %v2225 = vld [vmem:[#allocation16 + $0x9c0] sm:$0xff]
    %v2226 = vld [vmem:[#allocation16 + $0x9c8] sm:$0xff]
    %v2227 = vld [vmem:[#allocation16 + $0x9d0] sm:$0xff]
    %v2228 = vld [vmem:[#allocation16 + $0x9d8] sm:$0xff]
    %v2229 = vld [vmem:[#allocation16 + $0x9e0] sm:$0xff]
    %v2230 = vld [vmem:[#allocation16 + $0x9e8] sm:$0xff]
    %v2231 = vld [vmem:[#allocation16 + $0x9f0] sm:$0xff]
    %v2232 = vld [vmem:[#allocation16 + $0x9f8] sm:$0xff]
    %v2233 = vld [vmem:[#allocation16 + $0xa00] sm:$0xff]
    %v2234 = vld [vmem:[#allocation16 + $0xa08] sm:$0xff]
    %v2235 = vld [vmem:[#allocation16 + $0xa10] sm:$0xff]
    %v2236 = vld [vmem:[#allocation16 + $0xa18] sm:$0xff]
    %v2237 = vld [vmem:[#allocation16 + $0xa20] sm:$0xff]
    %v2238 = vld [vmem:[#allocation16 + $0xa28] sm:$0xff]
    %v2239 = vld [vmem:[#allocation16 + $0xa30] sm:$0xff]
    %v2240 = vld [vmem:[#allocation16 + $0xa38] sm:$0xff]
    %v2241 = vld [vmem:[#allocation16 + $0xa40] sm:$0xff]
    %v2242 = vld [vmem:[#allocation16 + $0xa48] sm:$0xff]
    %v2243 = vld [vmem:[#allocation16 + $0xa50] sm:$0xff]
    %v2244 = vld [vmem:[#allocation16 + $0xa58] sm:$0xff]
    %v2245 = vld [vmem:[#allocation16 + $0xa60] sm:$0xff]
    %v2246 = vld [vmem:[#allocation16 + $0xa68] sm:$0xff]
    %v2247 = vld [vmem:[#allocation16 + $0xa70] sm:$0xff]
    %v2248 = vld [vmem:[#allocation16 + $0xa78] sm:$0xff]
    %v2249 = vld [vmem:[#allocation16 + $0xa80] sm:$0xff]
    %v2250 = vld [vmem:[#allocation16 + $0xa88] sm:$0xff]
    %v2251 = vld [vmem:[#allocation16 + $0xa90] sm:$0xff]
    %v2252 = vld [vmem:[#allocation16 + $0xa98] sm:$0xff]
    %v2253 = vld [vmem:[#allocation16 + $0xaa0] sm:$0xff]
    %v2254 = vld [vmem:[#allocation16 + $0xaa8] sm:$0xff]
    %v2255 = vld [vmem:[#allocation16 + $0xab0] sm:$0xff]
    %v2256 = vld [vmem:[#allocation16 + $0xab8] sm:$0xff]
    %v2257 = vld [vmem:[#allocation16 + $0xac0] sm:$0xff]
    %v2258 = vld [vmem:[#allocation16 + $0xac8] sm:$0xff]
    %v2259 = vld [vmem:[#allocation16 + $0xad0] sm:$0xff]
    %v2260 = vld [vmem:[#allocation16 + $0xad8] sm:$0xff]
    %v2261 = vld [vmem:[#allocation16 + $0xae0] sm:$0xff]
    %v2262 = vld [vmem:[#allocation16 + $0xae8] sm:$0xff]
    %v2263 = vld [vmem:[#allocation16 + $0xaf0] sm:$0xff]
    %v2264 = vld [vmem:[#allocation16 + $0xaf8] sm:$0xff]
    %v2265 = vld [vmem:[#allocation16 + $0xb00] sm:$0xff]
    %v2266 = vld [vmem:[#allocation16 + $0xb08] sm:$0xff]
    %v2267 = vld [vmem:[#allocation16 + $0xb10] sm:$0xff]
    %v2268 = vld [vmem:[#allocation16 + $0xb18] sm:$0xff]
    %v2269 = vld [vmem:[#allocation16 + $0xb20] sm:$0xff]
    %v2270 = vld [vmem:[#allocation16 + $0xb28] sm:$0xff]
    %v2271 = vld [vmem:[#allocation16 + $0xb30] sm:$0xff]
    %v2272 = vld [vmem:[#allocation16 + $0xb38] sm:$0xff]
    %v2273 = vld [vmem:[#allocation16 + $0xb40] sm:$0xff]
    %v2274 = vld [vmem:[#allocation16 + $0xb48] sm:$0xff]
    %v2275 = vld [vmem:[#allocation16 + $0xb50] sm:$0xff]
    %v2276 = vld [vmem:[#allocation16 + $0xb58] sm:$0xff]
    %v2277 = vld [vmem:[#allocation16 + $0xb60] sm:$0xff]
    %v2278 = vld [vmem:[#allocation16 + $0xb68] sm:$0xff]
    %v2279 = vld [vmem:[#allocation16 + $0xb70] sm:$0xff]
    %v2280 = vld [vmem:[#allocation16 + $0xb78] sm:$0xff]
    %v2281 = vld [vmem:[#allocation16 + $0xb80] sm:$0xff]
    %v2282 = vld [vmem:[#allocation16 + $0xb88] sm:$0xff]
    %v2283 = vld [vmem:[#allocation16 + $0xb90] sm:$0xff]
    %v2284 = vld [vmem:[#allocation16 + $0xb98] sm:$0xff]
    %v2285 = vld [vmem:[#allocation16 + $0xba0] sm:$0xff]
    %v2286 = vld [vmem:[#allocation16 + $0xba8] sm:$0xff]
    %v2287 = vld [vmem:[#allocation16 + $0xbb0] sm:$0xff]
    %v2288 = vld [vmem:[#allocation16 + $0xbb8] sm:$0xff]
    %v2289 = vld [vmem:[#allocation16 + $0xbc0] sm:$0xff]
    %v2290 = vld [vmem:[#allocation16 + $0xbc8] sm:$0xff]
    %v2291 = vld [vmem:[#allocation16 + $0xbd0] sm:$0xff]
    %v2292 = vld [vmem:[#allocation16 + $0xbd8] sm:$0xff]
    %v2293 = vld [vmem:[#allocation16 + $0xbe0] sm:$0xff]
    %v2294 = vld [vmem:[#allocation16 + $0xbe8] sm:$0xff]
    %v2295 = vld [vmem:[#allocation16 + $0xbf0] sm:$0xff]
    %v2296 = vld [vmem:[#allocation16 + $0xbf8] sm:$0xff]
    %v2297 = vld [vmem:[#allocation16 + $0xc00] sm:$0xff]
    %v2298 = vld [vmem:[#allocation16 + $0xc08] sm:$0xff]
    %v2299 = vld [vmem:[#allocation16 + $0xc10] sm:$0xff]
    %v2300 = vld [vmem:[#allocation16 + $0xc18] sm:$0xff]
    %v2301 = vld [vmem:[#allocation16 + $0xc20] sm:$0xff]
    %v2302 = vld [vmem:[#allocation16 + $0xc28] sm:$0xff]
    %v2303 = vld [vmem:[#allocation16 + $0xc30] sm:$0xff]
    %v2304 = vld [vmem:[#allocation16 + $0xc38] sm:$0xff]
    %v2305 = vld [vmem:[#allocation16 + $0xc40] sm:$0xff]
    %v2306 = vld [vmem:[#allocation16 + $0xc48] sm:$0xff]
    %v2307 = vld [vmem:[#allocation16 + $0xc50] sm:$0xff]
    %v2308 = vld [vmem:[#allocation16 + $0xc58] sm:$0xff]
    %v2309 = vld [vmem:[#allocation16 + $0xc60] sm:$0xff]
    %v2310 = vld [vmem:[#allocation16 + $0xc68] sm:$0xff]
    %v2311 = vld [vmem:[#allocation16 + $0xc70] sm:$0xff]
    %v2312 = vld [vmem:[#allocation16 + $0xc78] sm:$0xff]
    %v2313 = vld [vmem:[#allocation17] sm:$0xff]
    %v2314 = vld [vmem:[#allocation17 + $0x8] sm:$0x3]
    %v2317 = vlaneseq
    %v2318 = vshrl.u32 %v2317, 7
    %v2319 = vsub.s32 0, %v2318
    %v2320 = vrot.slane %v2313, %v2319
    %v2321 = vlaneseq
    %v2322 = vshrl.u32 %v2321, 7
    %v2323 = vsub.s32 1, %v2322
    %v2324 = vrot.slane %v2313, %v2323
    %v2325 = vlaneseq
    %v2326 = vshrl.u32 %v2325, 7
    %v2327 = vsub.s32 2, %v2326
    %v2328 = vrot.slane %v2313, %v2327
    %v2329 = vlaneseq
    %v2330 = vshrl.u32 %v2329, 7
    %v2331 = vsub.s32 3, %v2330
    %v2332 = vrot.slane %v2313, %v2331
    %v2333 = vlaneseq
    %v2334 = vshrl.u32 %v2333, 7
    %v2335 = vsub.s32 4, %v2334
    %v2336 = vrot.slane %v2313, %v2335
    %v2337 = vlaneseq
    %v2338 = vshrl.u32 %v2337, 7
    %v2339 = vsub.s32 5, %v2338
    %v2340 = vrot.slane %v2313, %v2339
    %v2341 = vlaneseq
    %v2342 = vshrl.u32 %v2341, 7
    %v2343 = vsub.s32 6, %v2342
    %v2344 = vrot.slane %v2313, %v2343
    %v2345 = vlaneseq
    %v2346 = vshrl.u32 %v2345, 7
    %v2347 = vsub.s32 7, %v2346
    %v2348 = vrot.slane %v2313, %v2347
    %v2349 = vlaneseq
    %v2350 = vshrl.u32 %v2349, 7
    %v2351 = vsub.s32 0, %v2350
    %v2352 = vrot.slane %v2314, %v2351
    %v2353 = vlaneseq
    %v2354 = vshrl.u32 %v2353, 7
    %v2355 = vsub.s32 1, %v2354
    %v2356 = vrot.slane %v2314, %v2355
    %v2767 = vunpack.c.l.b16 %v1913
    %v2768 = vunpack.c.h.b16 %v1913
    %v2769 = vunpack.c.l.b16 %v1914
    %v2770 = vunpack.c.h.b16 %v1914
    %v2771 = vunpack.c.l.b16 %v1915
    %v2772 = vunpack.c.h.b16 %v1915
    %v2773 = vunpack.c.l.b16 %v1916
    %v2774 = vunpack.c.h.b16 %v1916
    %v2775 = vunpack.c.l.b16 %v1917
    %v2776 = vunpack.c.h.b16 %v1917
    %v2777 = vunpack.c.l.b16 %v1918
    %v2778 = vunpack.c.h.b16 %v1918
    %v2779 = vunpack.c.l.b16 %v1919
    %v2780 = vunpack.c.h.b16 %v1919
    %v2781 = vunpack.c.l.b16 %v1920
    %v2782 = vunpack.c.h.b16 %v1920
    %v2783 = vunpack.c.l.b16 %v1921
    %v2784 = vunpack.c.h.b16 %v1921
    %v2785 = vunpack.c.l.b16 %v1922
    %v2786 = vunpack.c.h.b16 %v1922
    %v2787 = vunpack.c.l.b16 %v1923
    %v2788 = vunpack.c.h.b16 %v1923
    %v2789 = vunpack.c.l.b16 %v1924
    %v2790 = vunpack.c.h.b16 %v1924
    %v2791 = vunpack.c.l.b16 %v1925
    %v2792 = vunpack.c.h.b16 %v1925
    %v2793 = vunpack.c.l.b16 %v1926
    %v2794 = vunpack.c.h.b16 %v1926
    %v2795 = vunpack.c.l.b16 %v1927
    %v2796 = vunpack.c.h.b16 %v1927
    %v2797 = vunpack.c.l.b16 %v1928
    %v2798 = vunpack.c.h.b16 %v1928
    %v2799 = vunpack.c.l.b16 %v1929
    %v2800 = vunpack.c.h.b16 %v1929
    %v2801 = vunpack.c.l.b16 %v1930
    %v2802 = vunpack.c.h.b16 %v1930
    %v2803 = vunpack.c.l.b16 %v1931
    %v2804 = vunpack.c.h.b16 %v1931
    %v2805 = vunpack.c.l.b16 %v1932
    %v2806 = vunpack.c.h.b16 %v1932
    %v2807 = vunpack.c.l.b16 %v1933
    %v2808 = vunpack.c.h.b16 %v1933
    %v2809 = vunpack.c.l.b16 %v1934
    %v2810 = vunpack.c.h.b16 %v1934
    %v2811 = vunpack.c.l.b16 %v1935
    %v2812 = vunpack.c.h.b16 %v1935
    %v2813 = vunpack.c.l.b16 %v1936
    %v2814 = vunpack.c.h.b16 %v1936
    %v2815 = vunpack.c.l.b16 %v1937
    %v2816 = vunpack.c.h.b16 %v1937
    %v2817 = vunpack.c.l.b16 %v1938
    %v2818 = vunpack.c.h.b16 %v1938
    %v2819 = vunpack.c.l.b16 %v1939
    %v2820 = vunpack.c.h.b16 %v1939
    %v2821 = vunpack.c.l.b16 %v1940
    %v2822 = vunpack.c.h.b16 %v1940
    %v2823 = vunpack.c.l.b16 %v1941
    %v2824 = vunpack.c.h.b16 %v1941
    %v2825 = vunpack.c.l.b16 %v1942
    %v2826 = vunpack.c.h.b16 %v1942
    %v2827 = vunpack.c.l.b16 %v1943
    %v2828 = vunpack.c.h.b16 %v1943
    %v2829 = vunpack.c.l.b16 %v1944
    %v2830 = vunpack.c.h.b16 %v1944
    %v2831 = vunpack.c.l.b16 %v1945
    %v2832 = vunpack.c.h.b16 %v1945
    %v2833 = vunpack.c.l.b16 %v1946
    %v2834 = vunpack.c.h.b16 %v1946
    %v2835 = vunpack.c.l.b16 %v1947
    %v2836 = vunpack.c.h.b16 %v1947
    %v2837 = vunpack.c.l.b16 %v1948
    %v2838 = vunpack.c.h.b16 %v1948
    %v2839 = vunpack.c.l.b16 %v1949
    %v2840 = vunpack.c.h.b16 %v1949
    %v2841 = vunpack.c.l.b16 %v1950
    %v2842 = vunpack.c.h.b16 %v1950
    %v2843 = vunpack.c.l.b16 %v1951
    %v2844 = vunpack.c.h.b16 %v1951
    %v2845 = vunpack.c.l.b16 %v1952
    %v2846 = vunpack.c.h.b16 %v1952
    %v2847 = vunpack.c.l.b16 %v1953
    %v2848 = vunpack.c.h.b16 %v1953
    %v2849 = vunpack.c.l.b16 %v1954
    %v2850 = vunpack.c.h.b16 %v1954
    %v2851 = vunpack.c.l.b16 %v1955
    %v2852 = vunpack.c.h.b16 %v1955
    %v2853 = vunpack.c.l.b16 %v1956
    %v2854 = vunpack.c.h.b16 %v1956
    %v2855 = vunpack.c.l.b16 %v1957
    %v2856 = vunpack.c.h.b16 %v1957
    %v2857 = vunpack.c.l.b16 %v1958
    %v2858 = vunpack.c.h.b16 %v1958
    %v2859 = vunpack.c.l.b16 %v1959
    %v2860 = vunpack.c.h.b16 %v1959
    %v2861 = vunpack.c.l.b16 %v1960
    %v2862 = vunpack.c.h.b16 %v1960
    %v2863 = vunpack.c.l.b16 %v1961
    %v2864 = vunpack.c.h.b16 %v1961
    %v2865 = vunpack.c.l.b16 %v1962
    %v2866 = vunpack.c.h.b16 %v1962
    %v2867 = vunpack.c.l.b16 %v1963
    %v2868 = vunpack.c.h.b16 %v1963
    %v2869 = vunpack.c.l.b16 %v1964
    %v2870 = vunpack.c.h.b16 %v1964
    %v2871 = vunpack.c.l.b16 %v1965
    %v2872 = vunpack.c.h.b16 %v1965
    %v2873 = vunpack.c.l.b16 %v1966
    %v2874 = vunpack.c.h.b16 %v1966
    %v2875 = vunpack.c.l.b16 %v1967
    %v2876 = vunpack.c.h.b16 %v1967
    %v2877 = vunpack.c.l.b16 %v1968
    %v2878 = vunpack.c.h.b16 %v1968
    %v2879 = vunpack.c.l.b16 %v1969
    %v2880 = vunpack.c.h.b16 %v1969
    %v2881 = vunpack.c.l.b16 %v1970
    %v2882 = vunpack.c.h.b16 %v1970
    %v2883 = vunpack.c.l.b16 %v1971
    %v2884 = vunpack.c.h.b16 %v1971
    %v2885 = vunpack.c.l.b16 %v1972
    %v2886 = vunpack.c.h.b16 %v1972
    %v2887 = vunpack.c.l.b16 %v1973
    %v2888 = vunpack.c.h.b16 %v1973
    %v2889 = vunpack.c.l.b16 %v1974
    %v2890 = vunpack.c.h.b16 %v1974
    %v2891 = vunpack.c.l.b16 %v1975
    %v2892 = vunpack.c.h.b16 %v1975
    %v2893 = vunpack.c.l.b16 %v1976
    %v2894 = vunpack.c.h.b16 %v1976
    %v2895 = vunpack.c.l.b16 %v1977
    %v2896 = vunpack.c.h.b16 %v1977
    %v2897 = vunpack.c.l.b16 %v1978
    %v2898 = vunpack.c.h.b16 %v1978
    %v2899 = vunpack.c.l.b16 %v1979
    %v2900 = vunpack.c.h.b16 %v1979
    %v2901 = vunpack.c.l.b16 %v1980
    %v2902 = vunpack.c.h.b16 %v1980
    %v2903 = vunpack.c.l.b16 %v1981
    %v2904 = vunpack.c.h.b16 %v1981
    %v2905 = vunpack.c.l.b16 %v1982
    %v2906 = vunpack.c.h.b16 %v1982
    %v2907 = vunpack.c.l.b16 %v1983
    %v2908 = vunpack.c.h.b16 %v1983
    %v2909 = vunpack.c.l.b16 %v1984
    %v2910 = vunpack.c.h.b16 %v1984
    %v2911 = vunpack.c.l.b16 %v1985
    %v2912 = vunpack.c.h.b16 %v1985
    %v2913 = vunpack.c.l.b16 %v1986
    %v2914 = vunpack.c.h.b16 %v1986
    %v2915 = vunpack.c.l.b16 %v1987
    %v2916 = vunpack.c.h.b16 %v1987
    %v2917 = vunpack.c.l.b16 %v1988
    %v2918 = vunpack.c.h.b16 %v1988
    %v2919 = vunpack.c.l.b16 %v1989
    %v2920 = vunpack.c.h.b16 %v1989
    %v2921 = vunpack.c.l.b16 %v1990
    %v2922 = vunpack.c.h.b16 %v1990
    %v2923 = vunpack.c.l.b16 %v1991
    %v2924 = vunpack.c.h.b16 %v1991
    %v2925 = vunpack.c.l.b16 %v1992
    %v2926 = vunpack.c.h.b16 %v1992
    %v2927 = vunpack.c.l.b16 %v1993
    %v2928 = vunpack.c.h.b16 %v1993
    %v2929 = vunpack.c.l.b16 %v1994
    %v2930 = vunpack.c.h.b16 %v1994
    %v2931 = vunpack.c.l.b16 %v1995
    %v2932 = vunpack.c.h.b16 %v1995
    %v2933 = vunpack.c.l.b16 %v1996
    %v2934 = vunpack.c.h.b16 %v1996
    %v2935 = vunpack.c.l.b16 %v1997
    %v2936 = vunpack.c.h.b16 %v1997
    %v2937 = vunpack.c.l.b16 %v1998
    %v2938 = vunpack.c.h.b16 %v1998
    %v2939 = vunpack.c.l.b16 %v1999
    %v2940 = vunpack.c.h.b16 %v1999
    %v2941 = vunpack.c.l.b16 %v2000
    %v2942 = vunpack.c.h.b16 %v2000
    %v2943 = vunpack.c.l.b16 %v2001
    %v2944 = vunpack.c.h.b16 %v2001
    %v2945 = vunpack.c.l.b16 %v2002
    %v2946 = vunpack.c.h.b16 %v2002
    %v2947 = vunpack.c.l.b16 %v2003
    %v2948 = vunpack.c.h.b16 %v2003
    %v2949 = vunpack.c.l.b16 %v2004
    %v2950 = vunpack.c.h.b16 %v2004
    %v2951 = vunpack.c.l.b16 %v2005
    %v2952 = vunpack.c.h.b16 %v2005
    %v2953 = vunpack.c.l.b16 %v2006
    %v2954 = vunpack.c.h.b16 %v2006
    %v2955 = vunpack.c.l.b16 %v2007
    %v2956 = vunpack.c.h.b16 %v2007
    %v2957 = vunpack.c.l.b16 %v2008
    %v2958 = vunpack.c.h.b16 %v2008
    %v2959 = vunpack.c.l.b16 %v2009
    %v2960 = vunpack.c.h.b16 %v2009
    %v2961 = vunpack.c.l.b16 %v2010
    %v2962 = vunpack.c.h.b16 %v2010
    %v2963 = vunpack.c.l.b16 %v2011
    %v2964 = vunpack.c.h.b16 %v2011
    %v2965 = vunpack.c.l.b16 %v2012
    %v2966 = vunpack.c.h.b16 %v2012
    %v2967 = vunpack.c.l.b16 %v2013
    %v2968 = vunpack.c.h.b16 %v2013
    %v2969 = vunpack.c.l.b16 %v2014
    %v2970 = vunpack.c.h.b16 %v2014
    %v2971 = vunpack.c.l.b16 %v2015
    %v2972 = vunpack.c.h.b16 %v2015
    %v2973 = vunpack.c.l.b16 %v2016
    %v2974 = vunpack.c.h.b16 %v2016
    %v2975 = vunpack.c.l.b16 %v2017
    %v2976 = vunpack.c.h.b16 %v2017
    %v2977 = vunpack.c.l.b16 %v2018
    %v2978 = vunpack.c.h.b16 %v2018
    %v2979 = vunpack.c.l.b16 %v2019
    %v2980 = vunpack.c.h.b16 %v2019
    %v2981 = vunpack.c.l.b16 %v2020
    %v2982 = vunpack.c.h.b16 %v2020
    %v2983 = vunpack.c.l.b16 %v2021
    %v2984 = vunpack.c.h.b16 %v2021
    %v2985 = vunpack.c.l.b16 %v2022
    %v2986 = vunpack.c.h.b16 %v2022
    %v2987 = vunpack.c.l.b16 %v2023
    %v2988 = vunpack.c.h.b16 %v2023
    %v2989 = vunpack.c.l.b16 %v2024
    %v2990 = vunpack.c.h.b16 %v2024
    %v2991 = vunpack.c.l.b16 %v2025
    %v2992 = vunpack.c.h.b16 %v2025
    %v2993 = vunpack.c.l.b16 %v2026
    %v2994 = vunpack.c.h.b16 %v2026
    %v2995 = vunpack.c.l.b16 %v2027
    %v2996 = vunpack.c.h.b16 %v2027
    %v2997 = vunpack.c.l.b16 %v2028
    %v2998 = vunpack.c.h.b16 %v2028
    %v2999 = vunpack.c.l.b16 %v2029
    %v3000 = vunpack.c.h.b16 %v2029
    %v3001 = vunpack.c.l.b16 %v2030
    %v3002 = vunpack.c.h.b16 %v2030
    %v3003 = vunpack.c.l.b16 %v2031
    %v3004 = vunpack.c.h.b16 %v2031
    %v3005 = vunpack.c.l.b16 %v2032
    %v3006 = vunpack.c.h.b16 %v2032
    %v3007 = vunpack.c.l.b16 %v2033
    %v3008 = vunpack.c.h.b16 %v2033
    %v3009 = vunpack.c.l.b16 %v2034
    %v3010 = vunpack.c.h.b16 %v2034
    %v3011 = vunpack.c.l.b16 %v2035
    %v3012 = vunpack.c.h.b16 %v2035
    %v3013 = vunpack.c.l.b16 %v2036
    %v3014 = vunpack.c.h.b16 %v2036
    %v3015 = vunpack.c.l.b16 %v2037
    %v3016 = vunpack.c.h.b16 %v2037
    %v3017 = vunpack.c.l.b16 %v2038
    %v3018 = vunpack.c.h.b16 %v2038
    %v3019 = vunpack.c.l.b16 %v2039
    %v3020 = vunpack.c.h.b16 %v2039
    %v3021 = vunpack.c.l.b16 %v2040
    %v3022 = vunpack.c.h.b16 %v2040
    %v3023 = vunpack.c.l.b16 %v2041
    %v3024 = vunpack.c.h.b16 %v2041
    %v3025 = vunpack.c.l.b16 %v2042
    %v3026 = vunpack.c.h.b16 %v2042
    %v3027 = vunpack.c.l.b16 %v2043
    %v3028 = vunpack.c.h.b16 %v2043
    %v3029 = vunpack.c.l.b16 %v2044
    %v3030 = vunpack.c.h.b16 %v2044
    %v3031 = vunpack.c.l.b16 %v2045
    %v3032 = vunpack.c.h.b16 %v2045
    %v3033 = vunpack.c.l.b16 %v2046
    %v3034 = vunpack.c.h.b16 %v2046
    %v3035 = vunpack.c.l.b16 %v2047
    %v3036 = vunpack.c.h.b16 %v2047
    %v3037 = vunpack.c.l.b16 %v2048
    %v3038 = vunpack.c.h.b16 %v2048
    %v3039 = vunpack.c.l.b16 %v2049
    %v3040 = vunpack.c.h.b16 %v2049
    %v3041 = vunpack.c.l.b16 %v2050
    %v3042 = vunpack.c.h.b16 %v2050
    %v3043 = vunpack.c.l.b16 %v2051
    %v3044 = vunpack.c.h.b16 %v2051
    %v3045 = vunpack.c.l.b16 %v2052
    %v3046 = vunpack.c.h.b16 %v2052
    %v3047 = vunpack.c.l.b16 %v2053
    %v3048 = vunpack.c.h.b16 %v2053
    %v3049 = vunpack.c.l.b16 %v2054
    %v3050 = vunpack.c.h.b16 %v2054
    %v3051 = vunpack.c.l.b16 %v2055
    %v3052 = vunpack.c.h.b16 %v2055
    %v3053 = vunpack.c.l.b16 %v2056
    %v3054 = vunpack.c.h.b16 %v2056
    %v3055 = vunpack.c.l.b16 %v2057
    %v3056 = vunpack.c.h.b16 %v2057
    %v3057 = vunpack.c.l.b16 %v2058
    %v3058 = vunpack.c.h.b16 %v2058
    %v3059 = vunpack.c.l.b16 %v2059
    %v3060 = vunpack.c.h.b16 %v2059
    %v3061 = vunpack.c.l.b16 %v2060
    %v3062 = vunpack.c.h.b16 %v2060
    %v3063 = vunpack.c.l.b16 %v2061
    %v3064 = vunpack.c.h.b16 %v2061
    %v3065 = vunpack.c.l.b16 %v2062
    %v3066 = vunpack.c.h.b16 %v2062
    %v3067 = vunpack.c.l.b16 %v2063
    %v3068 = vunpack.c.h.b16 %v2063
    %v3069 = vunpack.c.l.b16 %v2064
    %v3070 = vunpack.c.h.b16 %v2064
    %v3071 = vunpack.c.l.b16 %v2065
    %v3072 = vunpack.c.h.b16 %v2065
    %v3073 = vunpack.c.l.b16 %v2066
    %v3074 = vunpack.c.h.b16 %v2066
    %v3075 = vunpack.c.l.b16 %v2067
    %v3076 = vunpack.c.h.b16 %v2067
    %v3077 = vunpack.c.l.b16 %v2068
    %v3078 = vunpack.c.h.b16 %v2068
    %v3079 = vunpack.c.l.b16 %v2069
    %v3080 = vunpack.c.h.b16 %v2069
    %v3081 = vunpack.c.l.b16 %v2070
    %v3082 = vunpack.c.h.b16 %v2070
    %v3083 = vunpack.c.l.b16 %v2071
    %v3084 = vunpack.c.h.b16 %v2071
    %v3085 = vunpack.c.l.b16 %v2072
    %v3086 = vunpack.c.h.b16 %v2072
    %v3087 = vunpack.c.l.b16 %v2073
    %v3088 = vunpack.c.h.b16 %v2073
    %v3089 = vunpack.c.l.b16 %v2074
    %v3090 = vunpack.c.h.b16 %v2074
    %v3091 = vunpack.c.l.b16 %v2075
    %v3092 = vunpack.c.h.b16 %v2075
    %v3093 = vunpack.c.l.b16 %v2076
    %v3094 = vunpack.c.h.b16 %v2076
    %v3095 = vunpack.c.l.b16 %v2077
    %v3096 = vunpack.c.h.b16 %v2077
    %v3097 = vunpack.c.l.b16 %v2078
    %v3098 = vunpack.c.h.b16 %v2078
    %v3099 = vunpack.c.l.b16 %v2079
    %v3100 = vunpack.c.h.b16 %v2079
    %v3101 = vunpack.c.l.b16 %v2080
    %v3102 = vunpack.c.h.b16 %v2080
    %v3103 = vunpack.c.l.b16 %v2081
    %v3104 = vunpack.c.h.b16 %v2081
    %v3105 = vunpack.c.l.b16 %v2082
    %v3106 = vunpack.c.h.b16 %v2082
    %v3107 = vunpack.c.l.b16 %v2083
    %v3108 = vunpack.c.h.b16 %v2083
    %v3109 = vunpack.c.l.b16 %v2084
    %v3110 = vunpack.c.h.b16 %v2084
    %v3111 = vunpack.c.l.b16 %v2085
    %v3112 = vunpack.c.h.b16 %v2085
    %v3113 = vunpack.c.l.b16 %v2086
    %v3114 = vunpack.c.h.b16 %v2086
    %v3115 = vunpack.c.l.b16 %v2087
    %v3116 = vunpack.c.h.b16 %v2087
    %v3117 = vunpack.c.l.b16 %v2088
    %v3118 = vunpack.c.h.b16 %v2088
    %v3119 = vunpack.c.l.b16 %v2089
    %v3120 = vunpack.c.h.b16 %v2089
    %v3121 = vunpack.c.l.b16 %v2090
    %v3122 = vunpack.c.h.b16 %v2090
    %v3123 = vunpack.c.l.b16 %v2091
    %v3124 = vunpack.c.h.b16 %v2091
    %v3125 = vunpack.c.l.b16 %v2092
    %v3126 = vunpack.c.h.b16 %v2092
    %v3127 = vunpack.c.l.b16 %v2093
    %v3128 = vunpack.c.h.b16 %v2093
    %v3129 = vunpack.c.l.b16 %v2094
    %v3130 = vunpack.c.h.b16 %v2094
    %v3131 = vunpack.c.l.b16 %v2095
    %v3132 = vunpack.c.h.b16 %v2095
    %v3133 = vunpack.c.l.b16 %v2096
    %v3134 = vunpack.c.h.b16 %v2096
    %v3135 = vunpack.c.l.b16 %v2097
    %v3136 = vunpack.c.h.b16 %v2097
    %v3137 = vunpack.c.l.b16 %v2098
    %v3138 = vunpack.c.h.b16 %v2098
    %v3139 = vunpack.c.l.b16 %v2099
    %v3140 = vunpack.c.h.b16 %v2099
    %v3141 = vunpack.c.l.b16 %v2100
    %v3142 = vunpack.c.h.b16 %v2100
    %v3143 = vunpack.c.l.b16 %v2101
    %v3144 = vunpack.c.h.b16 %v2101
    %v3145 = vunpack.c.l.b16 %v2102
    %v3146 = vunpack.c.h.b16 %v2102
    %v3147 = vunpack.c.l.b16 %v2103
    %v3148 = vunpack.c.h.b16 %v2103
    %v3149 = vunpack.c.l.b16 %v2104
    %v3150 = vunpack.c.h.b16 %v2104
    %v3151 = vunpack.c.l.b16 %v2105
    %v3152 = vunpack.c.h.b16 %v2105
    %v3153 = vunpack.c.l.b16 %v2106
    %v3154 = vunpack.c.h.b16 %v2106
    %v3155 = vunpack.c.l.b16 %v2107
    %v3156 = vunpack.c.h.b16 %v2107
    %v3157 = vunpack.c.l.b16 %v2108
    %v3158 = vunpack.c.h.b16 %v2108
    %v3159 = vunpack.c.l.b16 %v2109
    %v3160 = vunpack.c.h.b16 %v2109
    %v3161 = vunpack.c.l.b16 %v2110
    %v3162 = vunpack.c.h.b16 %v2110
    %v3163 = vunpack.c.l.b16 %v2111
    %v3164 = vunpack.c.h.b16 %v2111
    %v3165 = vunpack.c.l.b16 %v2112
    %v3166 = vunpack.c.h.b16 %v2112
    %v3167 = vunpack.c.l.b16 %v2113
    %v3168 = vunpack.c.h.b16 %v2113
    %v3169 = vunpack.c.l.b16 %v2114
    %v3170 = vunpack.c.h.b16 %v2114
    %v3171 = vunpack.c.l.b16 %v2115
    %v3172 = vunpack.c.h.b16 %v2115
    %v3173 = vunpack.c.l.b16 %v2116
    %v3174 = vunpack.c.h.b16 %v2116
    %v3175 = vunpack.c.l.b16 %v2117
    %v3176 = vunpack.c.h.b16 %v2117
    %v3177 = vunpack.c.l.b16 %v2118
    %v3178 = vunpack.c.h.b16 %v2118
    %v3179 = vunpack.c.l.b16 %v2119
    %v3180 = vunpack.c.h.b16 %v2119
    %v3181 = vunpack.c.l.b16 %v2120
    %v3182 = vunpack.c.h.b16 %v2120
    %v3183 = vunpack.c.l.b16 %v2121
    %v3184 = vunpack.c.h.b16 %v2121
    %v3185 = vunpack.c.l.b16 %v2122
    %v3186 = vunpack.c.h.b16 %v2122
    %v3187 = vunpack.c.l.b16 %v2123
    %v3188 = vunpack.c.h.b16 %v2123
    %v3189 = vunpack.c.l.b16 %v2124
    %v3190 = vunpack.c.h.b16 %v2124
    %v3191 = vunpack.c.l.b16 %v2125
    %v3192 = vunpack.c.h.b16 %v2125
    %v3193 = vunpack.c.l.b16 %v2126
    %v3194 = vunpack.c.h.b16 %v2126
    %v3195 = vunpack.c.l.b16 %v2127
    %v3196 = vunpack.c.h.b16 %v2127
    %v3197 = vunpack.c.l.b16 %v2128
    %v3198 = vunpack.c.h.b16 %v2128
    %v3199 = vunpack.c.l.b16 %v2129
    %v3200 = vunpack.c.h.b16 %v2129
    %v3201 = vunpack.c.l.b16 %v2130
    %v3202 = vunpack.c.h.b16 %v2130
    %v3203 = vunpack.c.l.b16 %v2131
    %v3204 = vunpack.c.h.b16 %v2131
    %v3205 = vunpack.c.l.b16 %v2132
    %v3206 = vunpack.c.h.b16 %v2132
    %v3207 = vunpack.c.l.b16 %v2133
    %v3208 = vunpack.c.h.b16 %v2133
    %v3209 = vunpack.c.l.b16 %v2134
    %v3210 = vunpack.c.h.b16 %v2134
    %v3211 = vunpack.c.l.b16 %v2135
    %v3212 = vunpack.c.h.b16 %v2135
    %v3213 = vunpack.c.l.b16 %v2136
    %v3214 = vunpack.c.h.b16 %v2136
    %v3215 = vunpack.c.l.b16 %v2137
    %v3216 = vunpack.c.h.b16 %v2137
    %v3217 = vunpack.c.l.b16 %v2138
    %v3218 = vunpack.c.h.b16 %v2138
    %v3219 = vunpack.c.l.b16 %v2139
    %v3220 = vunpack.c.h.b16 %v2139
    %v3221 = vunpack.c.l.b16 %v2140
    %v3222 = vunpack.c.h.b16 %v2140
    %v3223 = vunpack.c.l.b16 %v2141
    %v3224 = vunpack.c.h.b16 %v2141
    %v3225 = vunpack.c.l.b16 %v2142
    %v3226 = vunpack.c.h.b16 %v2142
    %v3227 = vunpack.c.l.b16 %v2143
    %v3228 = vunpack.c.h.b16 %v2143
    %v3229 = vunpack.c.l.b16 %v2144
    %v3230 = vunpack.c.h.b16 %v2144
    %v3231 = vunpack.c.l.b16 %v2145
    %v3232 = vunpack.c.h.b16 %v2145
    %v3233 = vunpack.c.l.b16 %v2146
    %v3234 = vunpack.c.h.b16 %v2146
    %v3235 = vunpack.c.l.b16 %v2147
    %v3236 = vunpack.c.h.b16 %v2147
    %v3237 = vunpack.c.l.b16 %v2148
    %v3238 = vunpack.c.h.b16 %v2148
    %v3239 = vunpack.c.l.b16 %v2149
    %v3240 = vunpack.c.h.b16 %v2149
    %v3241 = vunpack.c.l.b16 %v2150
    %v3242 = vunpack.c.h.b16 %v2150
    %v3243 = vunpack.c.l.b16 %v2151
    %v3244 = vunpack.c.h.b16 %v2151
    %v3245 = vunpack.c.l.b16 %v2152
    %v3246 = vunpack.c.h.b16 %v2152
    %v3247 = vunpack.c.l.b16 %v2153
    %v3248 = vunpack.c.h.b16 %v2153
    %v3249 = vunpack.c.l.b16 %v2154
    %v3250 = vunpack.c.h.b16 %v2154
    %v3251 = vunpack.c.l.b16 %v2155
    %v3252 = vunpack.c.h.b16 %v2155
    %v3253 = vunpack.c.l.b16 %v2156
    %v3254 = vunpack.c.h.b16 %v2156
    %v3255 = vunpack.c.l.b16 %v2157
    %v3256 = vunpack.c.h.b16 %v2157
    %v3257 = vunpack.c.l.b16 %v2158
    %v3258 = vunpack.c.h.b16 %v2158
    %v3259 = vunpack.c.l.b16 %v2159
    %v3260 = vunpack.c.h.b16 %v2159
    %v3261 = vunpack.c.l.b16 %v2160
    %v3262 = vunpack.c.h.b16 %v2160
    %v3263 = vunpack.c.l.b16 %v2161
    %v3264 = vunpack.c.h.b16 %v2161
    %v3265 = vunpack.c.l.b16 %v2162
    %v3266 = vunpack.c.h.b16 %v2162
    %v3267 = vunpack.c.l.b16 %v2163
    %v3268 = vunpack.c.h.b16 %v2163
    %v3269 = vunpack.c.l.b16 %v2164
    %v3270 = vunpack.c.h.b16 %v2164
    %v3271 = vunpack.c.l.b16 %v2165
    %v3272 = vunpack.c.h.b16 %v2165
    %v3273 = vunpack.c.l.b16 %v2166
    %v3274 = vunpack.c.h.b16 %v2166
    %v3275 = vunpack.c.l.b16 %v2167
    %v3276 = vunpack.c.h.b16 %v2167
    %v3277 = vunpack.c.l.b16 %v2168
    %v3278 = vunpack.c.h.b16 %v2168
    %v3279 = vunpack.c.l.b16 %v2169
    %v3280 = vunpack.c.h.b16 %v2169
    %v3281 = vunpack.c.l.b16 %v2170
    %v3282 = vunpack.c.h.b16 %v2170
    %v3283 = vunpack.c.l.b16 %v2171
    %v3284 = vunpack.c.h.b16 %v2171
    %v3285 = vunpack.c.l.b16 %v2172
    %v3286 = vunpack.c.h.b16 %v2172
    %v3287 = vunpack.c.l.b16 %v2173
    %v3288 = vunpack.c.h.b16 %v2173
    %v3289 = vunpack.c.l.b16 %v2174
    %v3290 = vunpack.c.h.b16 %v2174
    %v3291 = vunpack.c.l.b16 %v2175
    %v3292 = vunpack.c.h.b16 %v2175
    %v3293 = vunpack.c.l.b16 %v2176
    %v3294 = vunpack.c.h.b16 %v2176
    %v3295 = vunpack.c.l.b16 %v2177
    %v3296 = vunpack.c.h.b16 %v2177
    %v3297 = vunpack.c.l.b16 %v2178
    %v3298 = vunpack.c.h.b16 %v2178
    %v3299 = vunpack.c.l.b16 %v2179
    %v3300 = vunpack.c.h.b16 %v2179
    %v3301 = vunpack.c.l.b16 %v2180
    %v3302 = vunpack.c.h.b16 %v2180
    %v3303 = vunpack.c.l.b16 %v2181
    %v3304 = vunpack.c.h.b16 %v2181
    %v3305 = vunpack.c.l.b16 %v2182
    %v3306 = vunpack.c.h.b16 %v2182
    %v3307 = vunpack.c.l.b16 %v2183
    %v3308 = vunpack.c.h.b16 %v2183
    %v3309 = vunpack.c.l.b16 %v2184
    %v3310 = vunpack.c.h.b16 %v2184
    %v3311 = vunpack.c.l.b16 %v2185
    %v3312 = vunpack.c.h.b16 %v2185
    %v3313 = vunpack.c.l.b16 %v2186
    %v3314 = vunpack.c.h.b16 %v2186
    %v3315 = vunpack.c.l.b16 %v2187
    %v3316 = vunpack.c.h.b16 %v2187
    %v3317 = vunpack.c.l.b16 %v2188
    %v3318 = vunpack.c.h.b16 %v2188
    %v3319 = vunpack.c.l.b16 %v2189
    %v3320 = vunpack.c.h.b16 %v2189
    %v3321 = vunpack.c.l.b16 %v2190
    %v3322 = vunpack.c.h.b16 %v2190
    %v3323 = vunpack.c.l.b16 %v2191
    %v3324 = vunpack.c.h.b16 %v2191
    %v3325 = vunpack.c.l.b16 %v2192
    %v3326 = vunpack.c.h.b16 %v2192
    %v3327 = vunpack.c.l.b16 %v2193
    %v3328 = vunpack.c.h.b16 %v2193
    %v3329 = vunpack.c.l.b16 %v2194
    %v3330 = vunpack.c.h.b16 %v2194
    %v3331 = vunpack.c.l.b16 %v2195
    %v3332 = vunpack.c.h.b16 %v2195
    %v3333 = vunpack.c.l.b16 %v2196
    %v3334 = vunpack.c.h.b16 %v2196
    %v3335 = vunpack.c.l.b16 %v2197
    %v3336 = vunpack.c.h.b16 %v2197
    %v3337 = vunpack.c.l.b16 %v2198
    %v3338 = vunpack.c.h.b16 %v2198
    %v3339 = vunpack.c.l.b16 %v2199
    %v3340 = vunpack.c.h.b16 %v2199
    %v3341 = vunpack.c.l.b16 %v2200
    %v3342 = vunpack.c.h.b16 %v2200
    %v3343 = vunpack.c.l.b16 %v2201
    %v3344 = vunpack.c.h.b16 %v2201
    %v3345 = vunpack.c.l.b16 %v2202
    %v3346 = vunpack.c.h.b16 %v2202
    %v3347 = vunpack.c.l.b16 %v2203
    %v3348 = vunpack.c.h.b16 %v2203
    %v3349 = vunpack.c.l.b16 %v2204
    %v3350 = vunpack.c.h.b16 %v2204
    %v3351 = vunpack.c.l.b16 %v2205
    %v3352 = vunpack.c.h.b16 %v2205
    %v3353 = vunpack.c.l.b16 %v2206
    %v3354 = vunpack.c.h.b16 %v2206
    %v3355 = vunpack.c.l.b16 %v2207
    %v3356 = vunpack.c.h.b16 %v2207
    %v3357 = vunpack.c.l.b16 %v2208
    %v3358 = vunpack.c.h.b16 %v2208
    %v3359 = vunpack.c.l.b16 %v2209
    %v3360 = vunpack.c.h.b16 %v2209
    %v3361 = vunpack.c.l.b16 %v2210
    %v3362 = vunpack.c.h.b16 %v2210
    %v3363 = vunpack.c.l.b16 %v2211
    %v3364 = vunpack.c.h.b16 %v2211
    %v3365 = vunpack.c.l.b16 %v2212
    %v3366 = vunpack.c.h.b16 %v2212
    %v3367 = vunpack.c.l.b16 %v2213
    %v3368 = vunpack.c.h.b16 %v2213
    %v3369 = vunpack.c.l.b16 %v2214
    %v3370 = vunpack.c.h.b16 %v2214
    %v3371 = vunpack.c.l.b16 %v2215
    %v3372 = vunpack.c.h.b16 %v2215
    %v3373 = vunpack.c.l.b16 %v2216
    %v3374 = vunpack.c.h.b16 %v2216
    %v3375 = vunpack.c.l.b16 %v2217
    %v3376 = vunpack.c.h.b16 %v2217
    %v3377 = vunpack.c.l.b16 %v2218
    %v3378 = vunpack.c.h.b16 %v2218
    %v3379 = vunpack.c.l.b16 %v2219
    %v3380 = vunpack.c.h.b16 %v2219
    %v3381 = vunpack.c.l.b16 %v2220
    %v3382 = vunpack.c.h.b16 %v2220
    %v3383 = vunpack.c.l.b16 %v2221
    %v3384 = vunpack.c.h.b16 %v2221
    %v3385 = vunpack.c.l.b16 %v2222
    %v3386 = vunpack.c.h.b16 %v2222
    %v3387 = vunpack.c.l.b16 %v2223
    %v3388 = vunpack.c.h.b16 %v2223
    %v3389 = vunpack.c.l.b16 %v2224
    %v3390 = vunpack.c.h.b16 %v2224
    %v3391 = vunpack.c.l.b16 %v2225
    %v3392 = vunpack.c.h.b16 %v2225
    %v3393 = vunpack.c.l.b16 %v2226
    %v3394 = vunpack.c.h.b16 %v2226
    %v3395 = vunpack.c.l.b16 %v2227
    %v3396 = vunpack.c.h.b16 %v2227
    %v3397 = vunpack.c.l.b16 %v2228
    %v3398 = vunpack.c.h.b16 %v2228
    %v3399 = vunpack.c.l.b16 %v2229
    %v3400 = vunpack.c.h.b16 %v2229
    %v3401 = vunpack.c.l.b16 %v2230
    %v3402 = vunpack.c.h.b16 %v2230
    %v3403 = vunpack.c.l.b16 %v2231
    %v3404 = vunpack.c.h.b16 %v2231
    %v3405 = vunpack.c.l.b16 %v2232
    %v3406 = vunpack.c.h.b16 %v2232
    %v3407 = vunpack.c.l.b16 %v2233
    %v3408 = vunpack.c.h.b16 %v2233
    %v3409 = vunpack.c.l.b16 %v2234
    %v3410 = vunpack.c.h.b16 %v2234
    %v3411 = vunpack.c.l.b16 %v2235
    %v3412 = vunpack.c.h.b16 %v2235
    %v3413 = vunpack.c.l.b16 %v2236
    %v3414 = vunpack.c.h.b16 %v2236
    %v3415 = vunpack.c.l.b16 %v2237
    %v3416 = vunpack.c.h.b16 %v2237
    %v3417 = vunpack.c.l.b16 %v2238
    %v3418 = vunpack.c.h.b16 %v2238
    %v3419 = vunpack.c.l.b16 %v2239
    %v3420 = vunpack.c.h.b16 %v2239
    %v3421 = vunpack.c.l.b16 %v2240
    %v3422 = vunpack.c.h.b16 %v2240
    %v3423 = vunpack.c.l.b16 %v2241
    %v3424 = vunpack.c.h.b16 %v2241
    %v3425 = vunpack.c.l.b16 %v2242
    %v3426 = vunpack.c.h.b16 %v2242
    %v3427 = vunpack.c.l.b16 %v2243
    %v3428 = vunpack.c.h.b16 %v2243
    %v3429 = vunpack.c.l.b16 %v2244
    %v3430 = vunpack.c.h.b16 %v2244
    %v3431 = vunpack.c.l.b16 %v2245
    %v3432 = vunpack.c.h.b16 %v2245
    %v3433 = vunpack.c.l.b16 %v2246
    %v3434 = vunpack.c.h.b16 %v2246
    %v3435 = vunpack.c.l.b16 %v2247
    %v3436 = vunpack.c.h.b16 %v2247
    %v3437 = vunpack.c.l.b16 %v2248
    %v3438 = vunpack.c.h.b16 %v2248
    %v3439 = vunpack.c.l.b16 %v2249
    %v3440 = vunpack.c.h.b16 %v2249
    %v3441 = vunpack.c.l.b16 %v2250
    %v3442 = vunpack.c.h.b16 %v2250
    %v3443 = vunpack.c.l.b16 %v2251
    %v3444 = vunpack.c.h.b16 %v2251
    %v3445 = vunpack.c.l.b16 %v2252
    %v3446 = vunpack.c.h.b16 %v2252
    %v3447 = vunpack.c.l.b16 %v2253
    %v3448 = vunpack.c.h.b16 %v2253
    %v3449 = vunpack.c.l.b16 %v2254
    %v3450 = vunpack.c.h.b16 %v2254
    %v3451 = vunpack.c.l.b16 %v2255
    %v3452 = vunpack.c.h.b16 %v2255
    %v3453 = vunpack.c.l.b16 %v2256
    %v3454 = vunpack.c.h.b16 %v2256
    %v3455 = vunpack.c.l.b16 %v2257
    %v3456 = vunpack.c.h.b16 %v2257
    %v3457 = vunpack.c.l.b16 %v2258
    %v3458 = vunpack.c.h.b16 %v2258
    %v3459 = vunpack.c.l.b16 %v2259
    %v3460 = vunpack.c.h.b16 %v2259
    %v3461 = vunpack.c.l.b16 %v2260
    %v3462 = vunpack.c.h.b16 %v2260
    %v3463 = vunpack.c.l.b16 %v2261
    %v3464 = vunpack.c.h.b16 %v2261
    %v3465 = vunpack.c.l.b16 %v2262
    %v3466 = vunpack.c.h.b16 %v2262
    %v3467 = vunpack.c.l.b16 %v2263
    %v3468 = vunpack.c.h.b16 %v2263
    %v3469 = vunpack.c.l.b16 %v2264
    %v3470 = vunpack.c.h.b16 %v2264
    %v3471 = vunpack.c.l.b16 %v2265
    %v3472 = vunpack.c.h.b16 %v2265
    %v3473 = vunpack.c.l.b16 %v2266
    %v3474 = vunpack.c.h.b16 %v2266
    %v3475 = vunpack.c.l.b16 %v2267
    %v3476 = vunpack.c.h.b16 %v2267
    %v3477 = vunpack.c.l.b16 %v2268
    %v3478 = vunpack.c.h.b16 %v2268
    %v3479 = vunpack.c.l.b16 %v2269
    %v3480 = vunpack.c.h.b16 %v2269
    %v3481 = vunpack.c.l.b16 %v2270
    %v3482 = vunpack.c.h.b16 %v2270
    %v3483 = vunpack.c.l.b16 %v2271
    %v3484 = vunpack.c.h.b16 %v2271
    %v3485 = vunpack.c.l.b16 %v2272
    %v3486 = vunpack.c.h.b16 %v2272
    %v3487 = vunpack.c.l.b16 %v2273
    %v3488 = vunpack.c.h.b16 %v2273
    %v3489 = vunpack.c.l.b16 %v2274
    %v3490 = vunpack.c.h.b16 %v2274
    %v3491 = vunpack.c.l.b16 %v2275
    %v3492 = vunpack.c.h.b16 %v2275
    %v3493 = vunpack.c.l.b16 %v2276
    %v3494 = vunpack.c.h.b16 %v2276
    %v3495 = vunpack.c.l.b16 %v2277
    %v3496 = vunpack.c.h.b16 %v2277
    %v3497 = vunpack.c.l.b16 %v2278
    %v3498 = vunpack.c.h.b16 %v2278
    %v3499 = vunpack.c.l.b16 %v2279
    %v3500 = vunpack.c.h.b16 %v2279
    %v3501 = vunpack.c.l.b16 %v2280
    %v3502 = vunpack.c.h.b16 %v2280
    %v3503 = vunpack.c.l.b16 %v2281
    %v3504 = vunpack.c.h.b16 %v2281
    %v3505 = vunpack.c.l.b16 %v2282
    %v3506 = vunpack.c.h.b16 %v2282
    %v3507 = vunpack.c.l.b16 %v2283
    %v3508 = vunpack.c.h.b16 %v2283
    %v3509 = vunpack.c.l.b16 %v2284
    %v3510 = vunpack.c.h.b16 %v2284
    %v3511 = vunpack.c.l.b16 %v2285
    %v3512 = vunpack.c.h.b16 %v2285
    %v3513 = vunpack.c.l.b16 %v2286
    %v3514 = vunpack.c.h.b16 %v2286
    %v3515 = vunpack.c.l.b16 %v2287
    %v3516 = vunpack.c.h.b16 %v2287
    %v3517 = vunpack.c.l.b16 %v2288
    %v3518 = vunpack.c.h.b16 %v2288
    %v3519 = vunpack.c.l.b16 %v2289
    %v3520 = vunpack.c.h.b16 %v2289
    %v3521 = vunpack.c.l.b16 %v2290
    %v3522 = vunpack.c.h.b16 %v2290
    %v3523 = vunpack.c.l.b16 %v2291
    %v3524 = vunpack.c.h.b16 %v2291
    %v3525 = vunpack.c.l.b16 %v2292
    %v3526 = vunpack.c.h.b16 %v2292
    %v3527 = vunpack.c.l.b16 %v2293
    %v3528 = vunpack.c.h.b16 %v2293
    %v3529 = vunpack.c.l.b16 %v2294
    %v3530 = vunpack.c.h.b16 %v2294
    %v3531 = vunpack.c.l.b16 %v2295
    %v3532 = vunpack.c.h.b16 %v2295
    %v3533 = vunpack.c.l.b16 %v2296
    %v3534 = vunpack.c.h.b16 %v2296
    %v3535 = vunpack.c.l.b16 %v2297
    %v3536 = vunpack.c.h.b16 %v2297
    %v3537 = vunpack.c.l.b16 %v2298
    %v3538 = vunpack.c.h.b16 %v2298
    %v3539 = vunpack.c.l.b16 %v2299
    %v3540 = vunpack.c.h.b16 %v2299
    %v3541 = vunpack.c.l.b16 %v2300
    %v3542 = vunpack.c.h.b16 %v2300
    %v3543 = vunpack.c.l.b16 %v2301
    %v3544 = vunpack.c.h.b16 %v2301
    %v3545 = vunpack.c.l.b16 %v2302
    %v3546 = vunpack.c.h.b16 %v2302
    %v3547 = vunpack.c.l.b16 %v2303
    %v3548 = vunpack.c.h.b16 %v2303
    %v3549 = vunpack.c.l.b16 %v2304
    %v3550 = vunpack.c.h.b16 %v2304
    %v3551 = vunpack.c.l.b16 %v2305
    %v3552 = vunpack.c.h.b16 %v2305
    %v3553 = vunpack.c.l.b16 %v2306
    %v3554 = vunpack.c.h.b16 %v2306
    %v3555 = vunpack.c.l.b16 %v2307
    %v3556 = vunpack.c.h.b16 %v2307
    %v3557 = vunpack.c.l.b16 %v2308
    %v3558 = vunpack.c.h.b16 %v2308
    %v3559 = vunpack.c.l.b16 %v2309
    %v3560 = vunpack.c.h.b16 %v2309
    %v3561 = vunpack.c.l.b16 %v2310
    %v3562 = vunpack.c.h.b16 %v2310
    %v3563 = vunpack.c.l.b16 %v2311
    %v3564 = vunpack.c.h.b16 %v2311
    %v3565 = vunpack.c.l.b16 %v2312
    %v3566 = vunpack.c.h.b16 %v2312
    %v3567 = vpack.c.b16 %v2777, %v2767
    %v3568 = vpack.c.b16 %v2778, %v2768
    %v3569 = vpack.c.b16 %v2779, %v2769
    %v3570 = vpack.c.b16 %v2780, %v2770
    %v3571 = vpack.c.b16 %v2781, %v2771
    %v3572 = vpack.c.b16 %v2782, %v2772
    %v3573 = vpack.c.b16 %v2783, %v2773
    %v3574 = vpack.c.b16 %v2784, %v2774
    %v3575 = vpack.c.b16 %v2785, %v2775
    %v3576 = vpack.c.b16 %v2786, %v2776
    %v3577 = vpack.c.b16 %v2797, %v2787
    %v3578 = vpack.c.b16 %v2798, %v2788
    %v3579 = vpack.c.b16 %v2799, %v2789
    %v3580 = vpack.c.b16 %v2800, %v2790
    %v3581 = vpack.c.b16 %v2801, %v2791
    %v3582 = vpack.c.b16 %v2802, %v2792
    %v3583 = vpack.c.b16 %v2803, %v2793
    %v3584 = vpack.c.b16 %v2804, %v2794
    %v3585 = vpack.c.b16 %v2805, %v2795
    %v3586 = vpack.c.b16 %v2806, %v2796
    %v3587 = vpack.c.b16 %v2817, %v2807
    %v3588 = vpack.c.b16 %v2818, %v2808
    %v3589 = vpack.c.b16 %v2819, %v2809
    %v3590 = vpack.c.b16 %v2820, %v2810
    %v3591 = vpack.c.b16 %v2821, %v2811
    %v3592 = vpack.c.b16 %v2822, %v2812
    %v3593 = vpack.c.b16 %v2823, %v2813
    %v3594 = vpack.c.b16 %v2824, %v2814
    %v3595 = vpack.c.b16 %v2825, %v2815
    %v3596 = vpack.c.b16 %v2826, %v2816
    %v3597 = vpack.c.b16 %v2837, %v2827
    %v3598 = vpack.c.b16 %v2838, %v2828
    %v3599 = vpack.c.b16 %v2839, %v2829
    %v3600 = vpack.c.b16 %v2840, %v2830
    %v3601 = vpack.c.b16 %v2841, %v2831
    %v3602 = vpack.c.b16 %v2842, %v2832
    %v3603 = vpack.c.b16 %v2843, %v2833
    %v3604 = vpack.c.b16 %v2844, %v2834
    %v3605 = vpack.c.b16 %v2845, %v2835
    %v3606 = vpack.c.b16 %v2846, %v2836
    %v3607 = vpack.c.b16 %v2857, %v2847
    %v3608 = vpack.c.b16 %v2858, %v2848
    %v3609 = vpack.c.b16 %v2859, %v2849
    %v3610 = vpack.c.b16 %v2860, %v2850
    %v3611 = vpack.c.b16 %v2861, %v2851
    %v3612 = vpack.c.b16 %v2862, %v2852
    %v3613 = vpack.c.b16 %v2863, %v2853
    %v3614 = vpack.c.b16 %v2864, %v2854
    %v3615 = vpack.c.b16 %v2865, %v2855
    %v3616 = vpack.c.b16 %v2866, %v2856
    %v3617 = vpack.c.b16 %v2877, %v2867
    %v3618 = vpack.c.b16 %v2878, %v2868
    %v3619 = vpack.c.b16 %v2879, %v2869
    %v3620 = vpack.c.b16 %v2880, %v2870
    %v3621 = vpack.c.b16 %v2881, %v2871
    %v3622 = vpack.c.b16 %v2882, %v2872
    %v3623 = vpack.c.b16 %v2883, %v2873
    %v3624 = vpack.c.b16 %v2884, %v2874
    %v3625 = vpack.c.b16 %v2885, %v2875
    %v3626 = vpack.c.b16 %v2886, %v2876
    %v3627 = vpack.c.b16 %v2897, %v2887
    %v3628 = vpack.c.b16 %v2898, %v2888
    %v3629 = vpack.c.b16 %v2899, %v2889
    %v3630 = vpack.c.b16 %v2900, %v2890
    %v3631 = vpack.c.b16 %v2901, %v2891
    %v3632 = vpack.c.b16 %v2902, %v2892
    %v3633 = vpack.c.b16 %v2903, %v2893
    %v3634 = vpack.c.b16 %v2904, %v2894
    %v3635 = vpack.c.b16 %v2905, %v2895
    %v3636 = vpack.c.b16 %v2906, %v2896
    %v3637 = vpack.c.b16 %v2917, %v2907
    %v3638 = vpack.c.b16 %v2918, %v2908
    %v3639 = vpack.c.b16 %v2919, %v2909
    %v3640 = vpack.c.b16 %v2920, %v2910
    %v3641 = vpack.c.b16 %v2921, %v2911
    %v3642 = vpack.c.b16 %v2922, %v2912
    %v3643 = vpack.c.b16 %v2923, %v2913
    %v3644 = vpack.c.b16 %v2924, %v2914
    %v3645 = vpack.c.b16 %v2925, %v2915
    %v3646 = vpack.c.b16 %v2926, %v2916
    %v3647 = vpack.c.b16 %v2937, %v2927
    %v3648 = vpack.c.b16 %v2938, %v2928
    %v3649 = vpack.c.b16 %v2939, %v2929
    %v3650 = vpack.c.b16 %v2940, %v2930
    %v3651 = vpack.c.b16 %v2941, %v2931
    %v3652 = vpack.c.b16 %v2942, %v2932
    %v3653 = vpack.c.b16 %v2943, %v2933
    %v3654 = vpack.c.b16 %v2944, %v2934
    %v3655 = vpack.c.b16 %v2945, %v2935
    %v3656 = vpack.c.b16 %v2946, %v2936
    %v3657 = vpack.c.b16 %v2957, %v2947
    %v3658 = vpack.c.b16 %v2958, %v2948
    %v3659 = vpack.c.b16 %v2959, %v2949
    %v3660 = vpack.c.b16 %v2960, %v2950
    %v3661 = vpack.c.b16 %v2961, %v2951
    %v3662 = vpack.c.b16 %v2962, %v2952
    %v3663 = vpack.c.b16 %v2963, %v2953
    %v3664 = vpack.c.b16 %v2964, %v2954
    %v3665 = vpack.c.b16 %v2965, %v2955
    %v3666 = vpack.c.b16 %v2966, %v2956
    %v3667 = vpack.c.b16 %v2977, %v2967
    %v3668 = vpack.c.b16 %v2978, %v2968
    %v3669 = vpack.c.b16 %v2979, %v2969
    %v3670 = vpack.c.b16 %v2980, %v2970
    %v3671 = vpack.c.b16 %v2981, %v2971
    %v3672 = vpack.c.b16 %v2982, %v2972
    %v3673 = vpack.c.b16 %v2983, %v2973
    %v3674 = vpack.c.b16 %v2984, %v2974
    %v3675 = vpack.c.b16 %v2985, %v2975
    %v3676 = vpack.c.b16 %v2986, %v2976
    %v3677 = vpack.c.b16 %v2997, %v2987
    %v3678 = vpack.c.b16 %v2998, %v2988
    %v3679 = vpack.c.b16 %v2999, %v2989
    %v3680 = vpack.c.b16 %v3000, %v2990
    %v3681 = vpack.c.b16 %v3001, %v2991
    %v3682 = vpack.c.b16 %v3002, %v2992
    %v3683 = vpack.c.b16 %v3003, %v2993
    %v3684 = vpack.c.b16 %v3004, %v2994
    %v3685 = vpack.c.b16 %v3005, %v2995
    %v3686 = vpack.c.b16 %v3006, %v2996
    %v3687 = vpack.c.b16 %v3017, %v3007
    %v3688 = vpack.c.b16 %v3018, %v3008
    %v3689 = vpack.c.b16 %v3019, %v3009
    %v3690 = vpack.c.b16 %v3020, %v3010
    %v3691 = vpack.c.b16 %v3021, %v3011
    %v3692 = vpack.c.b16 %v3022, %v3012
    %v3693 = vpack.c.b16 %v3023, %v3013
    %v3694 = vpack.c.b16 %v3024, %v3014
    %v3695 = vpack.c.b16 %v3025, %v3015
    %v3696 = vpack.c.b16 %v3026, %v3016
    %v3697 = vpack.c.b16 %v3037, %v3027
    %v3698 = vpack.c.b16 %v3038, %v3028
    %v3699 = vpack.c.b16 %v3039, %v3029
    %v3700 = vpack.c.b16 %v3040, %v3030
    %v3701 = vpack.c.b16 %v3041, %v3031
    %v3702 = vpack.c.b16 %v3042, %v3032
    %v3703 = vpack.c.b16 %v3043, %v3033
    %v3704 = vpack.c.b16 %v3044, %v3034
    %v3705 = vpack.c.b16 %v3045, %v3035
    %v3706 = vpack.c.b16 %v3046, %v3036
    %v3707 = vpack.c.b16 %v3057, %v3047
    %v3708 = vpack.c.b16 %v3058, %v3048
    %v3709 = vpack.c.b16 %v3059, %v3049
    %v3710 = vpack.c.b16 %v3060, %v3050
    %v3711 = vpack.c.b16 %v3061, %v3051
    %v3712 = vpack.c.b16 %v3062, %v3052
    %v3713 = vpack.c.b16 %v3063, %v3053
    %v3714 = vpack.c.b16 %v3064, %v3054
    %v3715 = vpack.c.b16 %v3065, %v3055
    %v3716 = vpack.c.b16 %v3066, %v3056
    %v3717 = vpack.c.b16 %v3077, %v3067
    %v3718 = vpack.c.b16 %v3078, %v3068
    %v3719 = vpack.c.b16 %v3079, %v3069
    %v3720 = vpack.c.b16 %v3080, %v3070
    %v3721 = vpack.c.b16 %v3081, %v3071
    %v3722 = vpack.c.b16 %v3082, %v3072
    %v3723 = vpack.c.b16 %v3083, %v3073
    %v3724 = vpack.c.b16 %v3084, %v3074
    %v3725 = vpack.c.b16 %v3085, %v3075
    %v3726 = vpack.c.b16 %v3086, %v3076
    %v3727 = vpack.c.b16 %v3097, %v3087
    %v3728 = vpack.c.b16 %v3098, %v3088
    %v3729 = vpack.c.b16 %v3099, %v3089
    %v3730 = vpack.c.b16 %v3100, %v3090
    %v3731 = vpack.c.b16 %v3101, %v3091
    %v3732 = vpack.c.b16 %v3102, %v3092
    %v3733 = vpack.c.b16 %v3103, %v3093
    %v3734 = vpack.c.b16 %v3104, %v3094
    %v3735 = vpack.c.b16 %v3105, %v3095
    %v3736 = vpack.c.b16 %v3106, %v3096
    %v3737 = vpack.c.b16 %v3117, %v3107
    %v3738 = vpack.c.b16 %v3118, %v3108
    %v3739 = vpack.c.b16 %v3119, %v3109
    %v3740 = vpack.c.b16 %v3120, %v3110
    %v3741 = vpack.c.b16 %v3121, %v3111
    %v3742 = vpack.c.b16 %v3122, %v3112
    %v3743 = vpack.c.b16 %v3123, %v3113
    %v3744 = vpack.c.b16 %v3124, %v3114
    %v3745 = vpack.c.b16 %v3125, %v3115
    %v3746 = vpack.c.b16 %v3126, %v3116
    %v3747 = vpack.c.b16 %v3137, %v3127
    %v3748 = vpack.c.b16 %v3138, %v3128
    %v3749 = vpack.c.b16 %v3139, %v3129
    %v3750 = vpack.c.b16 %v3140, %v3130
    %v3751 = vpack.c.b16 %v3141, %v3131
    %v3752 = vpack.c.b16 %v3142, %v3132
    %v3753 = vpack.c.b16 %v3143, %v3133
    %v3754 = vpack.c.b16 %v3144, %v3134
    %v3755 = vpack.c.b16 %v3145, %v3135
    %v3756 = vpack.c.b16 %v3146, %v3136
    %v3757 = vpack.c.b16 %v3157, %v3147
    %v3758 = vpack.c.b16 %v3158, %v3148
    %v3759 = vpack.c.b16 %v3159, %v3149
    %v3760 = vpack.c.b16 %v3160, %v3150
    %v3761 = vpack.c.b16 %v3161, %v3151
    %v3762 = vpack.c.b16 %v3162, %v3152
    %v3763 = vpack.c.b16 %v3163, %v3153
    %v3764 = vpack.c.b16 %v3164, %v3154
    %v3765 = vpack.c.b16 %v3165, %v3155
    %v3766 = vpack.c.b16 %v3166, %v3156
    %v3767 = vpack.c.b16 %v3177, %v3167
    %v3768 = vpack.c.b16 %v3178, %v3168
    %v3769 = vpack.c.b16 %v3179, %v3169
    %v3770 = vpack.c.b16 %v3180, %v3170
    %v3771 = vpack.c.b16 %v3181, %v3171
    %v3772 = vpack.c.b16 %v3182, %v3172
    %v3773 = vpack.c.b16 %v3183, %v3173
    %v3774 = vpack.c.b16 %v3184, %v3174
    %v3775 = vpack.c.b16 %v3185, %v3175
    %v3776 = vpack.c.b16 %v3186, %v3176
    %v3777 = vpack.c.b16 %v3197, %v3187
    %v3778 = vpack.c.b16 %v3198, %v3188
    %v3779 = vpack.c.b16 %v3199, %v3189
    %v3780 = vpack.c.b16 %v3200, %v3190
    %v3781 = vpack.c.b16 %v3201, %v3191
    %v3782 = vpack.c.b16 %v3202, %v3192
    %v3783 = vpack.c.b16 %v3203, %v3193
    %v3784 = vpack.c.b16 %v3204, %v3194
    %v3785 = vpack.c.b16 %v3205, %v3195
    %v3786 = vpack.c.b16 %v3206, %v3196
    %v3787 = vpack.c.b16 %v3217, %v3207
    %v3788 = vpack.c.b16 %v3218, %v3208
    %v3789 = vpack.c.b16 %v3219, %v3209
    %v3790 = vpack.c.b16 %v3220, %v3210
    %v3791 = vpack.c.b16 %v3221, %v3211
    %v3792 = vpack.c.b16 %v3222, %v3212
    %v3793 = vpack.c.b16 %v3223, %v3213
    %v3794 = vpack.c.b16 %v3224, %v3214
    %v3795 = vpack.c.b16 %v3225, %v3215
    %v3796 = vpack.c.b16 %v3226, %v3216
    %v3797 = vpack.c.b16 %v3237, %v3227
    %v3798 = vpack.c.b16 %v3238, %v3228
    %v3799 = vpack.c.b16 %v3239, %v3229
    %v3800 = vpack.c.b16 %v3240, %v3230
    %v3801 = vpack.c.b16 %v3241, %v3231
    %v3802 = vpack.c.b16 %v3242, %v3232
    %v3803 = vpack.c.b16 %v3243, %v3233
    %v3804 = vpack.c.b16 %v3244, %v3234
    %v3805 = vpack.c.b16 %v3245, %v3235
    %v3806 = vpack.c.b16 %v3246, %v3236
    %v3807 = vpack.c.b16 %v3257, %v3247
    %v3808 = vpack.c.b16 %v3258, %v3248
    %v3809 = vpack.c.b16 %v3259, %v3249
    %v3810 = vpack.c.b16 %v3260, %v3250
    %v3811 = vpack.c.b16 %v3261, %v3251
    %v3812 = vpack.c.b16 %v3262, %v3252
    %v3813 = vpack.c.b16 %v3263, %v3253
    %v3814 = vpack.c.b16 %v3264, %v3254
    %v3815 = vpack.c.b16 %v3265, %v3255
    %v3816 = vpack.c.b16 %v3266, %v3256
    %v3817 = vpack.c.b16 %v3277, %v3267
    %v3818 = vpack.c.b16 %v3278, %v3268
    %v3819 = vpack.c.b16 %v3279, %v3269
    %v3820 = vpack.c.b16 %v3280, %v3270
    %v3821 = vpack.c.b16 %v3281, %v3271
    %v3822 = vpack.c.b16 %v3282, %v3272
    %v3823 = vpack.c.b16 %v3283, %v3273
    %v3824 = vpack.c.b16 %v3284, %v3274
    %v3825 = vpack.c.b16 %v3285, %v3275
    %v3826 = vpack.c.b16 %v3286, %v3276
    %v3827 = vpack.c.b16 %v3297, %v3287
    %v3828 = vpack.c.b16 %v3298, %v3288
    %v3829 = vpack.c.b16 %v3299, %v3289
    %v3830 = vpack.c.b16 %v3300, %v3290
    %v3831 = vpack.c.b16 %v3301, %v3291
    %v3832 = vpack.c.b16 %v3302, %v3292
    %v3833 = vpack.c.b16 %v3303, %v3293
    %v3834 = vpack.c.b16 %v3304, %v3294
    %v3835 = vpack.c.b16 %v3305, %v3295
    %v3836 = vpack.c.b16 %v3306, %v3296
    %v3837 = vpack.c.b16 %v3317, %v3307
    %v3838 = vpack.c.b16 %v3318, %v3308
    %v3839 = vpack.c.b16 %v3319, %v3309
    %v3840 = vpack.c.b16 %v3320, %v3310
    %v3841 = vpack.c.b16 %v3321, %v3311
    %v3842 = vpack.c.b16 %v3322, %v3312
    %v3843 = vpack.c.b16 %v3323, %v3313
    %v3844 = vpack.c.b16 %v3324, %v3314
    %v3845 = vpack.c.b16 %v3325, %v3315
    %v3846 = vpack.c.b16 %v3326, %v3316
    %v3847 = vpack.c.b16 %v3337, %v3327
    %v3848 = vpack.c.b16 %v3338, %v3328
    %v3849 = vpack.c.b16 %v3339, %v3329
    %v3850 = vpack.c.b16 %v3340, %v3330
    %v3851 = vpack.c.b16 %v3341, %v3331
    %v3852 = vpack.c.b16 %v3342, %v3332
    %v3853 = vpack.c.b16 %v3343, %v3333
    %v3854 = vpack.c.b16 %v3344, %v3334
    %v3855 = vpack.c.b16 %v3345, %v3335
    %v3856 = vpack.c.b16 %v3346, %v3336
    %v3857 = vpack.c.b16 %v3357, %v3347
    %v3858 = vpack.c.b16 %v3358, %v3348
    %v3859 = vpack.c.b16 %v3359, %v3349
    %v3860 = vpack.c.b16 %v3360, %v3350
    %v3861 = vpack.c.b16 %v3361, %v3351
    %v3862 = vpack.c.b16 %v3362, %v3352
    %v3863 = vpack.c.b16 %v3363, %v3353
    %v3864 = vpack.c.b16 %v3364, %v3354
    %v3865 = vpack.c.b16 %v3365, %v3355
    %v3866 = vpack.c.b16 %v3366, %v3356
    %v3867 = vpack.c.b16 %v3377, %v3367
    %v3868 = vpack.c.b16 %v3378, %v3368
    %v3869 = vpack.c.b16 %v3379, %v3369
    %v3870 = vpack.c.b16 %v3380, %v3370
    %v3871 = vpack.c.b16 %v3381, %v3371
    %v3872 = vpack.c.b16 %v3382, %v3372
    %v3873 = vpack.c.b16 %v3383, %v3373
    %v3874 = vpack.c.b16 %v3384, %v3374
    %v3875 = vpack.c.b16 %v3385, %v3375
    %v3876 = vpack.c.b16 %v3386, %v3376
    %v3877 = vpack.c.b16 %v3397, %v3387
    %v3878 = vpack.c.b16 %v3398, %v3388
    %v3879 = vpack.c.b16 %v3399, %v3389
    %v3880 = vpack.c.b16 %v3400, %v3390
    %v3881 = vpack.c.b16 %v3401, %v3391
    %v3882 = vpack.c.b16 %v3402, %v3392
    %v3883 = vpack.c.b16 %v3403, %v3393
    %v3884 = vpack.c.b16 %v3404, %v3394
    %v3885 = vpack.c.b16 %v3405, %v3395
    %v3886 = vpack.c.b16 %v3406, %v3396
    %v3887 = vpack.c.b16 %v3417, %v3407
    %v3888 = vpack.c.b16 %v3418, %v3408
    %v3889 = vpack.c.b16 %v3419, %v3409
    %v3890 = vpack.c.b16 %v3420, %v3410
    %v3891 = vpack.c.b16 %v3421, %v3411
    %v3892 = vpack.c.b16 %v3422, %v3412
    %v3893 = vpack.c.b16 %v3423, %v3413
    %v3894 = vpack.c.b16 %v3424, %v3414
    %v3895 = vpack.c.b16 %v3425, %v3415
    %v3896 = vpack.c.b16 %v3426, %v3416
    %v3897 = vpack.c.b16 %v3437, %v3427
    %v3898 = vpack.c.b16 %v3438, %v3428
    %v3899 = vpack.c.b16 %v3439, %v3429
    %v3900 = vpack.c.b16 %v3440, %v3430
    %v3901 = vpack.c.b16 %v3441, %v3431
    %v3902 = vpack.c.b16 %v3442, %v3432
    %v3903 = vpack.c.b16 %v3443, %v3433
    %v3904 = vpack.c.b16 %v3444, %v3434
    %v3905 = vpack.c.b16 %v3445, %v3435
    %v3906 = vpack.c.b16 %v3446, %v3436
    %v3907 = vpack.c.b16 %v3457, %v3447
    %v3908 = vpack.c.b16 %v3458, %v3448
    %v3909 = vpack.c.b16 %v3459, %v3449
    %v3910 = vpack.c.b16 %v3460, %v3450
    %v3911 = vpack.c.b16 %v3461, %v3451
    %v3912 = vpack.c.b16 %v3462, %v3452
    %v3913 = vpack.c.b16 %v3463, %v3453
    %v3914 = vpack.c.b16 %v3464, %v3454
    %v3915 = vpack.c.b16 %v3465, %v3455
    %v3916 = vpack.c.b16 %v3466, %v3456
    %v3917 = vpack.c.b16 %v3477, %v3467
    %v3918 = vpack.c.b16 %v3478, %v3468
    %v3919 = vpack.c.b16 %v3479, %v3469
    %v3920 = vpack.c.b16 %v3480, %v3470
    %v3921 = vpack.c.b16 %v3481, %v3471
    %v3922 = vpack.c.b16 %v3482, %v3472
    %v3923 = vpack.c.b16 %v3483, %v3473
    %v3924 = vpack.c.b16 %v3484, %v3474
    %v3925 = vpack.c.b16 %v3485, %v3475
    %v3926 = vpack.c.b16 %v3486, %v3476
    %v3927 = vpack.c.b16 %v3497, %v3487
    %v3928 = vpack.c.b16 %v3498, %v3488
    %v3929 = vpack.c.b16 %v3499, %v3489
    %v3930 = vpack.c.b16 %v3500, %v3490
    %v3931 = vpack.c.b16 %v3501, %v3491
    %v3932 = vpack.c.b16 %v3502, %v3492
    %v3933 = vpack.c.b16 %v3503, %v3493
    %v3934 = vpack.c.b16 %v3504, %v3494
    %v3935 = vpack.c.b16 %v3505, %v3495
    %v3936 = vpack.c.b16 %v3506, %v3496
    %v3937 = vpack.c.b16 %v3517, %v3507
    %v3938 = vpack.c.b16 %v3518, %v3508
    %v3939 = vpack.c.b16 %v3519, %v3509
    %v3940 = vpack.c.b16 %v3520, %v3510
    %v3941 = vpack.c.b16 %v3521, %v3511
    %v3942 = vpack.c.b16 %v3522, %v3512
    %v3943 = vpack.c.b16 %v3523, %v3513
    %v3944 = vpack.c.b16 %v3524, %v3514
    %v3945 = vpack.c.b16 %v3525, %v3515
    %v3946 = vpack.c.b16 %v3526, %v3516
    %v3947 = vpack.c.b16 %v3537, %v3527
    %v3948 = vpack.c.b16 %v3538, %v3528
    %v3949 = vpack.c.b16 %v3539, %v3529
    %v3950 = vpack.c.b16 %v3540, %v3530
    %v3951 = vpack.c.b16 %v3541, %v3531
    %v3952 = vpack.c.b16 %v3542, %v3532
    %v3953 = vpack.c.b16 %v3543, %v3533
    %v3954 = vpack.c.b16 %v3544, %v3534
    %v3955 = vpack.c.b16 %v3545, %v3535
    %v3956 = vpack.c.b16 %v3546, %v3536
    %v3957 = vpack.c.b16 %v3557, %v3547
    %v3958 = vpack.c.b16 %v3558, %v3548
    %v3959 = vpack.c.b16 %v3559, %v3549
    %v3960 = vpack.c.b16 %v3560, %v3550
    %v3961 = vpack.c.b16 %v3561, %v3551
    %v3962 = vpack.c.b16 %v3562, %v3552
    %v3963 = vpack.c.b16 %v3563, %v3553
    %v3964 = vpack.c.b16 %v3564, %v3554
    %v3965 = vpack.c.b16 %v3565, %v3555
    %v3966 = vpack.c.b16 %v3566, %v3556
    %4367 = vmatprep.subr.bf16.mxu0 %v3568
    %4368 = vmatpush1.bf16.msra.mxu0 %v3567
    %4369 = vmatprep.subr.bf16.mxu0 %v3578
    %4370 = vmatpush1.bf16.msra.mxu0 %v3577
    %4371 = vmatprep.subr.bf16.mxu0 %v3588
    %4372 = vmatpush1.bf16.msra.mxu0 %v3587
    %4373 = vmatprep.subr.bf16.mxu0 %v3598
    %4374 = vmatpush1.bf16.msra.mxu0 %v3597
    %4375 = vmatprep.subr.bf16.mxu0 %v3608
    %4376 = vmatpush1.bf16.msra.mxu0 %v3607
    %4377 = vmatprep.subr.bf16.mxu0 %v3618
    %4378 = vmatpush1.bf16.msra.mxu0 %v3617
    %4379 = vmatprep.subr.bf16.mxu0 %v3628
    %4380 = vmatpush1.bf16.msra.mxu0 %v3627
    %4381 = vmatprep.subr.bf16.mxu0 %v3638
    %4382 = vmatpush1.bf16.msra.mxu0 %v3637
    %4383 = vmatprep.subr.bf16.mxu0 %v3648
    %4384 = vmatpush1.bf16.msra.mxu0 %v3647
    %4385 = vmatprep.subr.bf16.mxu0 %v3658
    %4386 = vmatpush1.bf16.msra.mxu0 %v3657
    %4387 = vmatprep.subr.bf16.mxu0 %v3668
    %4388 = vmatpush1.bf16.msra.mxu0 %v3667
    %4389 = vmatprep.subr.bf16.mxu0 %v3678
    %4390 = vmatpush1.bf16.msra.mxu0 %v3677
    %4391 = vmatprep.subr.bf16.mxu0 %v3688
    %4392 = vmatpush1.bf16.msra.mxu0 %v3687
    %4393 = vmatprep.subr.bf16.mxu0 %v3698
    %4394 = vmatpush1.bf16.msra.mxu0 %v3697
    %4395 = vmatprep.subr.bf16.mxu0 %v3708
    %4396 = vmatpush1.bf16.msra.mxu0 %v3707
    %4397 = vmatprep.subr.bf16.mxu0 %v3718
    %4398 = vmatpush1.bf16.msra.mxu0 %v3717
    %4399 = vmatprep.mubr.bf16.mxu0 %v1909
    %4400 = vmatmul.mubr.bf16.gmra.mrb[0].mxu0 %v1908
    %v4401 = vpop.f32.mrb[0].mxu0
    %v4402 = vadd.f32 %v2320, %v4401
    %v4403 = vpop.f32.mrb[0].mxu0
    %v4404 = vadd.f32 %v2324, %v4403
    %v4405 = vpop.f32.mrb[0].mxu0
    %v4406 = vadd.f32 %v2320, %v4405
    %v4407 = vpop.f32.mrb[0].mxu0
    %v4408 = vadd.f32 %v2324, %v4407
    %4409 = vdwg.mxu0
    %4410 = vmatprep.subr.bf16.mxu0 %v3728
    %4411 = vmatpush1.bf16.msra.mxu0 %v3727
    %4412 = vmatprep.subr.bf16.mxu0 %v3738
    %4413 = vmatpush1.bf16.msra.mxu0 %v3737
    %4414 = vmatprep.subr.bf16.mxu0 %v3748
    %4415 = vmatpush1.bf16.msra.mxu0 %v3747
    %4416 = vmatprep.subr.bf16.mxu0 %v3758
    %4417 = vmatpush1.bf16.msra.mxu0 %v3757
    %4418 = vmatprep.subr.bf16.mxu0 %v3768
    %4419 = vmatpush1.bf16.msra.mxu0 %v3767
    %4420 = vmatprep.subr.bf16.mxu0 %v3778
    %4421 = vmatpush1.bf16.msra.mxu0 %v3777
    %4422 = vmatprep.subr.bf16.mxu0 %v3788
    %4423 = vmatpush1.bf16.msra.mxu0 %v3787
    %4424 = vmatprep.subr.bf16.mxu0 %v3798
    %4425 = vmatpush1.bf16.msra.mxu0 %v3797
    %4426 = vmatprep.subr.bf16.mxu0 %v3808
    %4427 = vmatpush1.bf16.msra.mxu0 %v3807
    %4428 = vmatprep.subr.bf16.mxu0 %v3818
    %4429 = vmatpush1.bf16.msra.mxu0 %v3817
    %4430 = vmatprep.subr.bf16.mxu0 %v3828
    %4431 = vmatpush1.bf16.msra.mxu0 %v3827
    %4432 = vmatprep.subr.bf16.mxu0 %v3838
    %4433 = vmatpush1.bf16.msra.mxu0 %v3837
    %4434 = vmatprep.subr.bf16.mxu0 %v3848
    %4435 = vmatpush1.bf16.msra.mxu0 %v3847
    %4436 = vmatprep.subr.bf16.mxu0 %v3858
    %4437 = vmatpush1.bf16.msra.mxu0 %v3857
    %4438 = vmatprep.subr.bf16.mxu0 %v3868
    %4439 = vmatpush1.bf16.msra.mxu0 %v3867
    %4440 = vmatprep.subr.bf16.mxu0 %v3878
    %4441 = vmatpush1.bf16.msra.mxu0 %v3877
    %4442 = vmatprep.mubr.bf16.mxu0 %v1911
    %4443 = vmatmul.mubr.bf16.gmra.mrb[0].mxu0 %v1910
    %v4444 = vpop.f32.mrb[0].mxu0
    %v4445 = vadd.f32 %v4402, %v4444
    %v4446 = vpop.f32.mrb[0].mxu0
    %v4447 = vadd.f32 %v4404, %v4446
    %v4448 = vpop.f32.mrb[0].mxu0
    %v4449 = vadd.f32 %v4406, %v4448
    %v4450 = vpop.f32.mrb[0].mxu0
    %v4451 = vadd.f32 %v4408, %v4450
    %4452 = vdwg.mxu0
    %4453 = vmatprep.subr.bf16.mxu0 %v3888
    %4454 = vmatpush1.bf16.msra.mxu0 %v3887
    %4455 = vmatprep.subr.bf16.mxu0 %v3898
    %4456 = vmatpush1.bf16.msra.mxu0 %v3897
    %4457 = vmatprep.subr.bf16.mxu0 %v3908
    %4458 = vmatpush1.bf16.msra.mxu0 %v3907
    %4459 = vmatprep.subr.bf16.mxu0 %v3918
    %4460 = vmatpush1.bf16.msra.mxu0 %v3917
    %4461 = vmatprep.subr.bf16.mxu0 %v3928
    %4462 = vmatpush1.bf16.msra.mxu0 %v3927
    %4463 = vmatprep.subr.bf16.mxu0 %v3938
    %4464 = vmatpush1.bf16.msra.mxu0 %v3937
    %4465 = vmatprep.subr.bf16.mxu0 %v3948
    %4466 = vmatpush1.bf16.msra.mxu0 %v3947
    %4467 = vmatprep.subr.bf16.mxu0 %v3958
    %4468 = vmatpush1.bf16.msra.mxu0 %v3957
    %4469 = vmatprep.subr.bf16.mxu0 0
    %4470 = vmatpush1.bf16.msra.mxu0 0
    %4471 = vmatprep.subr.bf16.mxu0 0
    %4472 = vmatpush1.bf16.msra.mxu0 0
    %4473 = vmatprep.subr.bf16.mxu0 0
    %4474 = vmatpush1.bf16.msra.mxu0 0
    %4475 = vmatprep.subr.bf16.mxu0 0
    %4476 = vmatpush1.bf16.msra.mxu0 0
    %4477 = vmatprep.subr.bf16.mxu0 0
    %4478 = vmatpush1.bf16.msra.mxu0 0
    %4479 = vmatprep.subr.bf16.mxu0 0
    %4480 = vmatpush1.bf16.msra.mxu0 0
    %4481 = vmatprep.subr.bf16.mxu0 0
    %4482 = vmatpush1.bf16.msra.mxu0 0
    %4483 = vmatprep.subr.bf16.mxu0 0
    %4484 = vmatpush1.bf16.msra.mxu0 0
    %4485 = vmatprep.mubr.bf16.mxu0 0
    %4486 = vmatmul.mubr.bf16.gmra.mrb[0].mxu0 %v1912
    %v4487 = vpop.f32.mrb[0].mxu0
    %v4488 = vadd.f32 %v4445, %v4487
    %v4489 = vpop.f32.mrb[0].mxu0
    %v4490 = vadd.f32 %v4447, %v4489
    %v4491 = vpop.f32.mrb[0].mxu0
    %v4492 = vadd.f32 %v4449, %v4491
    %v4493 = vpop.f32.mrb[0].mxu0
    %v4494 = vadd.f32 %v4451, %v4493
    %4495 = vdwg.mxu0
    %4496 = vmatprep.subr.bf16.mxu0 %v3570
    %4497 = vmatpush1.bf16.msra.mxu0 %v3569
    %4498 = vmatprep.subr.bf16.mxu0 %v3580
    %4499 = vmatpush1.bf16.msra.mxu0 %v3579
    %4500 = vmatprep.subr.bf16.mxu0 %v3590
    %4501 = vmatpush1.bf16.msra.mxu0 %v3589
    %4502 = vmatprep.subr.bf16.mxu0 %v3600
    %4503 = vmatpush1.bf16.msra.mxu0 %v3599
    %4504 = vmatprep.subr.bf16.mxu0 %v3610
    %4505 = vmatpush1.bf16.msra.mxu0 %v3609
    %4506 = vmatprep.subr.bf16.mxu0 %v3620
    %4507 = vmatpush1.bf16.msra.mxu0 %v3619
    %4508 = vmatprep.subr.bf16.mxu0 %v3630
    %4509 = vmatpush1.bf16.msra.mxu0 %v3629
    %4510 = vmatprep.subr.bf16.mxu0 %v3640
    %4511 = vmatpush1.bf16.msra.mxu0 %v3639
    %4512 = vmatprep.subr.bf16.mxu0 %v3650
    %4513 = vmatpush1.bf16.msra.mxu0 %v3649
    %4514 = vmatprep.subr.bf16.mxu0 %v3660
    %4515 = vmatpush1.bf16.msra.mxu0 %v3659
    %4516 = vmatprep.subr.bf16.mxu0 %v3670
    %4517 = vmatpush1.bf16.msra.mxu0 %v3669
    %4518 = vmatprep.subr.bf16.mxu0 %v3680
    %4519 = vmatpush1.bf16.msra.mxu0 %v3679
    %4520 = vmatprep.subr.bf16.mxu0 %v3690
    %4521 = vmatpush1.bf16.msra.mxu0 %v3689
    %4522 = vmatprep.subr.bf16.mxu0 %v3700
    %4523 = vmatpush1.bf16.msra.mxu0 %v3699
    %4524 = vmatprep.subr.bf16.mxu0 %v3710
    %4525 = vmatpush1.bf16.msra.mxu0 %v3709
    %4526 = vmatprep.subr.bf16.mxu0 %v3720
    %4527 = vmatpush1.bf16.msra.mxu0 %v3719
    %4528 = vmatprep.mubr.bf16.mxu0 %v1909
    %4529 = vmatmul.mubr.bf16.gmra.mrb[0].mxu0 %v1908
    %v4530 = vpop.f32.mrb[0].mxu0
    %v4531 = vadd.f32 %v2328, %v4530
    %v4532 = vpop.f32.mrb[0].mxu0
    %v4533 = vadd.f32 %v2332, %v4532
    %v4534 = vpop.f32.mrb[0].mxu0
    %v4535 = vadd.f32 %v2328, %v4534
    %v4536 = vpop.f32.mrb[0].mxu0
    %v4537 = vadd.f32 %v2332, %v4536
    %4538 = vdwg.mxu0
    %4539 = vmatprep.subr.bf16.mxu0 %v3730
    %4540 = vmatpush1.bf16.msra.mxu0 %v3729
    %4541 = vmatprep.subr.bf16.mxu0 %v3740
    %4542 = vmatpush1.bf16.msra.mxu0 %v3739
    %4543 = vmatprep.subr.bf16.mxu0 %v3750
    %4544 = vmatpush1.bf16.msra.mxu0 %v3749
    %4545 = vmatprep.subr.bf16.mxu0 %v3760
    %4546 = vmatpush1.bf16.msra.mxu0 %v3759
    %4547 = vmatprep.subr.bf16.mxu0 %v3770
    %4548 = vmatpush1.bf16.msra.mxu0 %v3769
    %4549 = vmatprep.subr.bf16.mxu0 %v3780
    %4550 = vmatpush1.bf16.msra.mxu0 %v3779
    %4551 = vmatprep.subr.bf16.mxu0 %v3790
    %4552 = vmatpush1.bf16.msra.mxu0 %v3789
    %4553 = vmatprep.subr.bf16.mxu0 %v3800
    %4554 = vmatpush1.bf16.msra.mxu0 %v3799
    %4555 = vmatprep.subr.bf16.mxu0 %v3810
    %4556 = vmatpush1.bf16.msra.mxu0 %v3809
    %4557 = vmatprep.subr.bf16.mxu0 %v3820
    %4558 = vmatpush1.bf16.msra.mxu0 %v3819
    %4559 = vmatprep.subr.bf16.mxu0 %v3830
    %4560 = vmatpush1.bf16.msra.mxu0 %v3829
    %4561 = vmatprep.subr.bf16.mxu0 %v3840
    %4562 = vmatpush1.bf16.msra.mxu0 %v3839
    %4563 = vmatprep.subr.bf16.mxu0 %v3850
    %4564 = vmatpush1.bf16.msra.mxu0 %v3849
    %4565 = vmatprep.subr.bf16.mxu0 %v3860
    %4566 = vmatpush1.bf16.msra.mxu0 %v3859
    %4567 = vmatprep.subr.bf16.mxu0 %v3870
    %4568 = vmatpush1.bf16.msra.mxu0 %v3869
    %4569 = vmatprep.subr.bf16.mxu0 %v3880
    %4570 = vmatpush1.bf16.msra.mxu0 %v3879
    %4571 = vmatprep.mubr.bf16.mxu0 %v1911
    %4572 = vmatmul.mubr.bf16.gmra.mrb[0].mxu0 %v1910
    %v4573 = vpop.f32.mrb[0].mxu0
    %v4574 = vadd.f32 %v4531, %v4573
    %v4575 = vpop.f32.mrb[0].mxu0
    %v4576 = vadd.f32 %v4533, %v4575
    %v4577 = vpop.f32.mrb[0].mxu0
    %v4578 = vadd.f32 %v4535, %v4577
    %v4579 = vpop.f32.mrb[0].mxu0
    %v4580 = vadd.f32 %v4537, %v4579
    %4581 = vdwg.mxu0
    %4582 = vmatprep.subr.bf16.mxu0 %v3890
    %4583 = vmatpush1.bf16.msra.mxu0 %v3889
    %4584 = vmatprep.subr.bf16.mxu0 %v3900
    %4585 = vmatpush1.bf16.msra.mxu0 %v3899
    %4586 = vmatprep.subr.bf16.mxu0 %v3910
    %4587 = vmatpush1.bf16.msra.mxu0 %v3909
    %4588 = vmatprep.subr.bf16.mxu0 %v3920
    %4589 = vmatpush1.bf16.msra.mxu0 %v3919
    %4590 = vmatprep.subr.bf16.mxu0 %v3930
    %4591 = vmatpush1.bf16.msra.mxu0 %v3929
    %4592 = vmatprep.subr.bf16.mxu0 %v3940
    %4593 = vmatpush1.bf16.msra.mxu0 %v3939
    %4594 = vmatprep.subr.bf16.mxu0 %v3950
    %4595 = vmatpush1.bf16.msra.mxu0 %v3949
    %4596 = vmatprep.subr.bf16.mxu0 %v3960
    %4597 = vmatpush1.bf16.msra.mxu0 %v3959
    %4598 = vmatprep.subr.bf16.mxu0 0
    %4599 = vmatpush1.bf16.msra.mxu0 0
    %4600 = vmatprep.subr.bf16.mxu0 0
    %4601 = vmatpush1.bf16.msra.mxu0 0
    %4602 = vmatprep.subr.bf16.mxu0 0
    %4603 = vmatpush1.bf16.msra.mxu0 0
    %4604 = vmatprep.subr.bf16.mxu0 0
    %4605 = vmatpush1.bf16.msra.mxu0 0
    %4606 = vmatprep.subr.bf16.mxu0 0
    %4607 = vmatpush1.bf16.msra.mxu0 0
    %4608 = vmatprep.subr.bf16.mxu0 0
    %4609 = vmatpush1.bf16.msra.mxu0 0
    %4610 = vmatprep.subr.bf16.mxu0 0
    %4611 = vmatpush1.bf16.msra.mxu0 0
    %4612 = vmatprep.subr.bf16.mxu0 0
    %4613 = vmatpush1.bf16.msra.mxu0 0
    %4614 = vmatprep.mubr.bf16.mxu0 0
    %4615 = vmatmul.mubr.bf16.gmra.mrb[0].mxu0 %v1912
    %v4616 = vpop.f32.mrb[0].mxu0
    %v4617 = vadd.f32 %v4574, %v4616
    %v4618 = vpop.f32.mrb[0].mxu0
    %v4619 = vadd.f32 %v4576, %v4618
    %v4620 = vpop.f32.mrb[0].mxu0
    %v4621 = vadd.f32 %v4578, %v4620
    %v4622 = vpop.f32.mrb[0].mxu0
    %v4623 = vadd.f32 %v4580, %v4622
    %4624 = vdwg.mxu0
    %4625 = vmatprep.subr.bf16.mxu0 %v3572
    %4626 = vmatpush1.bf16.msra.mxu0 %v3571
    %4627 = vmatprep.subr.bf16.mxu0 %v3582
    %4628 = vmatpush1.bf16.msra.mxu0 %v3581
    %4629 = vmatprep.subr.bf16.mxu0 %v3592
    %4630 = vmatpush1.bf16.msra.mxu0 %v3591
    %4631 = vmatprep.subr.bf16.mxu0 %v3602
    %4632 = vmatpush1.bf16.msra.mxu0 %v3601
    %4633 = vmatprep.subr.bf16.mxu0 %v3612
    %4634 = vmatpush1.bf16.msra.mxu0 %v3611
    %4635 = vmatprep.subr.bf16.mxu0 %v3622
    %4636 = vmatpush1.bf16.msra.mxu0 %v3621
    %4637 = vmatprep.subr.bf16.mxu0 %v3632
    %4638 = vmatpush1.bf16.msra.mxu0 %v3631
    %4639 = vmatprep.subr.bf16.mxu0 %v3642
    %4640 = vmatpush1.bf16.msra.mxu0 %v3641
    %4641 = vmatprep.subr.bf16.mxu0 %v3652
    %4642 = vmatpush1.bf16.msra.mxu0 %v3651
    %4643 = vmatprep.subr.bf16.mxu0 %v3662
    %4644 = vmatpush1.bf16.msra.mxu0 %v3661
    %4645 = vmatprep.subr.bf16.mxu0 %v3672
    %4646 = vmatpush1.bf16.msra.mxu0 %v3671
    %4647 = vmatprep.subr.bf16.mxu0 %v3682
    %4648 = vmatpush1.bf16.msra.mxu0 %v3681
    %4649 = vmatprep.subr.bf16.mxu0 %v3692
    %4650 = vmatpush1.bf16.msra.mxu0 %v3691
    %4651 = vmatprep.subr.bf16.mxu0 %v3702
    %4652 = vmatpush1.bf16.msra.mxu0 %v3701
    %4653 = vmatprep.subr.bf16.mxu0 %v3712
    %4654 = vmatpush1.bf16.msra.mxu0 %v3711
    %4655 = vmatprep.subr.bf16.mxu0 %v3722
    %4656 = vmatpush1.bf16.msra.mxu0 %v3721
    %4657 = vmatprep.mubr.bf16.mxu0 %v1909
    %4658 = vmatmul.mubr.bf16.gmra.mrb[0].mxu0 %v1908
    %v4659 = vpop.f32.mrb[0].mxu0
    %v4660 = vadd.f32 %v2336, %v4659
    %v4661 = vpop.f32.mrb[0].mxu0
    %v4662 = vadd.f32 %v2340, %v4661
    %v4663 = vpop.f32.mrb[0].mxu0
    %v4664 = vadd.f32 %v2336, %v4663
    %v4665 = vpop.f32.mrb[0].mxu0
    %v4666 = vadd.f32 %v2340, %v4665
    %4667 = vdwg.mxu0
    %4668 = vmatprep.subr.bf16.mxu0 %v3732
    %4669 = vmatpush1.bf16.msra.mxu0 %v3731
    %4670 = vmatprep.subr.bf16.mxu0 %v3742
    %4671 = vmatpush1.bf16.msra.mxu0 %v3741
    %4672 = vmatprep.subr.bf16.mxu0 %v3752
    %4673 = vmatpush1.bf16.msra.mxu0 %v3751
    %4674 = vmatprep.subr.bf16.mxu0 %v3762
    %4675 = vmatpush1.bf16.msra.mxu0 %v3761
    %4676 = vmatprep.subr.bf16.mxu0 %v3772
    %4677 = vmatpush1.bf16.msra.mxu0 %v3771
    %4678 = vmatprep.subr.bf16.mxu0 %v3782
    %4679 = vmatpush1.bf16.msra.mxu0 %v3781
    %4680 = vmatprep.subr.bf16.mxu0 %v3792
    %4681 = vmatpush1.bf16.msra.mxu0 %v3791
    %4682 = vmatprep.subr.bf16.mxu0 %v3802
    %4683 = vmatpush1.bf16.msra.mxu0 %v3801
    %4684 = vmatprep.subr.bf16.mxu0 %v3812
    %4685 = vmatpush1.bf16.msra.mxu0 %v3811
    %4686 = vmatprep.subr.bf16.mxu0 %v3822
    %4687 = vmatpush1.bf16.msra.mxu0 %v3821
    %4688 = vmatprep.subr.bf16.mxu0 %v3832
    %4689 = vmatpush1.bf16.msra.mxu0 %v3831
    %4690 = vmatprep.subr.bf16.mxu0 %v3842
    %4691 = vmatpush1.bf16.msra.mxu0 %v3841
    %4692 = vmatprep.subr.bf16.mxu0 %v3852
    %4693 = vmatpush1.bf16.msra.mxu0 %v3851
    %4694 = vmatprep.subr.bf16.mxu0 %v3862
    %4695 = vmatpush1.bf16.msra.mxu0 %v3861
    %4696 = vmatprep.subr.bf16.mxu0 %v3872
    %4697 = vmatpush1.bf16.msra.mxu0 %v3871
    %4698 = vmatprep.subr.bf16.mxu0 %v3882
    %4699 = vmatpush1.bf16.msra.mxu0 %v3881
    %4700 = vmatprep.mubr.bf16.mxu0 %v1911
    %4701 = vmatmul.mubr.bf16.gmra.mrb[0].mxu0 %v1910
    %v4702 = vpop.f32.mrb[0].mxu0
    %v4703 = vadd.f32 %v4660, %v4702
    %v4704 = vpop.f32.mrb[0].mxu0
    %v4705 = vadd.f32 %v4662, %v4704
    %v4706 = vpop.f32.mrb[0].mxu0
    %v4707 = vadd.f32 %v4664, %v4706
    %v4708 = vpop.f32.mrb[0].mxu0
    %v4709 = vadd.f32 %v4666, %v4708
    %4710 = vdwg.mxu0
    %4711 = vmatprep.subr.bf16.mxu0 %v3892
    %4712 = vmatpush1.bf16.msra.mxu0 %v3891
    %4713 = vmatprep.subr.bf16.mxu0 %v3902
    %4714 = vmatpush1.bf16.msra.mxu0 %v3901
    %4715 = vmatprep.subr.bf16.mxu0 %v3912
    %4716 = vmatpush1.bf16.msra.mxu0 %v3911
    %4717 = vmatprep.subr.bf16.mxu0 %v3922
    %4718 = vmatpush1.bf16.msra.mxu0 %v3921
    %4719 = vmatprep.subr.bf16.mxu0 %v3932
    %4720 = vmatpush1.bf16.msra.mxu0 %v3931
    %4721 = vmatprep.subr.bf16.mxu0 %v3942
    %4722 = vmatpush1.bf16.msra.mxu0 %v3941
    %4723 = vmatprep.subr.bf16.mxu0 %v3952
    %4724 = vmatpush1.bf16.msra.mxu0 %v3951
    %4725 = vmatprep.subr.bf16.mxu0 %v3962
    %4726 = vmatpush1.bf16.msra.mxu0 %v3961
    %4727 = vmatprep.subr.bf16.mxu0 0
    %4728 = vmatpush1.bf16.msra.mxu0 0
    %4729 = vmatprep.subr.bf16.mxu0 0
    %4730 = vmatpush1.bf16.msra.mxu0 0
    %4731 = vmatprep.subr.bf16.mxu0 0
    %4732 = vmatpush1.bf16.msra.mxu0 0
    %4733 = vmatprep.subr.bf16.mxu0 0
    %4734 = vmatpush1.bf16.msra.mxu0 0
    %4735 = vmatprep.subr.bf16.mxu0 0
    %4736 = vmatpush1.bf16.msra.mxu0 0
    %4737 = vmatprep.subr.bf16.mxu0 0
    %4738 = vmatpush1.bf16.msra.mxu0 0
    %4739 = vmatprep.subr.bf16.mxu0 0
    %4740 = vmatpush1.bf16.msra.mxu0 0
    %4741 = vmatprep.subr.bf16.mxu0 0
    %4742 = vmatpush1.bf16.msra.mxu0 0
    %4743 = vmatprep.mubr.bf16.mxu0 0
    %4744 = vmatmul.mubr.bf16.gmra.mrb[0].mxu0 %v1912
    %v4745 = vpop.f32.mrb[0].mxu0
    %v4746 = vadd.f32 %v4703, %v4745
    %v4747 = vpop.f32.mrb[0].mxu0
    %v4748 = vadd.f32 %v4705, %v4747
    %v4749 = vpop.f32.mrb[0].mxu0
    %v4750 = vadd.f32 %v4707, %v4749
    %v4751 = vpop.f32.mrb[0].mxu0
    %v4752 = vadd.f32 %v4709, %v4751
    %4753 = vdwg.mxu0
    %4754 = vmatprep.subr.bf16.mxu0 %v3574
    %4755 = vmatpush1.bf16.msra.mxu0 %v3573
    %4756 = vmatprep.subr.bf16.mxu0 %v3584
    %4757 = vmatpush1.bf16.msra.mxu0 %v3583
    %4758 = vmatprep.subr.bf16.mxu0 %v3594
    %4759 = vmatpush1.bf16.msra.mxu0 %v3593
    %4760 = vmatprep.subr.bf16.mxu0 %v3604
    %4761 = vmatpush1.bf16.msra.mxu0 %v3603
    %4762 = vmatprep.subr.bf16.mxu0 %v3614
    %4763 = vmatpush1.bf16.msra.mxu0 %v3613
    %4764 = vmatprep.subr.bf16.mxu0 %v3624
    %4765 = vmatpush1.bf16.msra.mxu0 %v3623
    %4766 = vmatprep.subr.bf16.mxu0 %v3634
    %4767 = vmatpush1.bf16.msra.mxu0 %v3633
    %4768 = vmatprep.subr.bf16.mxu0 %v3644
    %4769 = vmatpush1.bf16.msra.mxu0 %v3643
    %4770 = vmatprep.subr.bf16.mxu0 %v3654
    %4771 = vmatpush1.bf16.msra.mxu0 %v3653
    %4772 = vmatprep.subr.bf16.mxu0 %v3664
    %4773 = vmatpush1.bf16.msra.mxu0 %v3663
    %4774 = vmatprep.subr.bf16.mxu0 %v3674
    %4775 = vmatpush1.bf16.msra.mxu0 %v3673
    %4776 = vmatprep.subr.bf16.mxu0 %v3684
    %4777 = vmatpush1.bf16.msra.mxu0 %v3683
    %4778 = vmatprep.subr.bf16.mxu0 %v3694
    %4779 = vmatpush1.bf16.msra.mxu0 %v3693
    %4780 = vmatprep.subr.bf16.mxu0 %v3704
    %4781 = vmatpush1.bf16.msra.mxu0 %v3703
    %4782 = vmatprep.subr.bf16.mxu0 %v3714
    %4783 = vmatpush1.bf16.msra.mxu0 %v3713
    %4784 = vmatprep.subr.bf16.mxu0 %v3724
    %4785 = vmatpush1.bf16.msra.mxu0 %v3723
    %4786 = vmatprep.mubr.bf16.mxu0 %v1909
    %4787 = vmatmul.mubr.bf16.gmra.mrb[0].mxu0 %v1908
    %v4788 = vpop.f32.mrb[0].mxu0
    %v4789 = vadd.f32 %v2344, %v4788
    %v4790 = vpop.f32.mrb[0].mxu0
    %v4791 = vadd.f32 %v2348, %v4790
    %v4792 = vpop.f32.mrb[0].mxu0
    %v4793 = vadd.f32 %v2344, %v4792
    %v4794 = vpop.f32.mrb[0].mxu0
    %v4795 = vadd.f32 %v2348, %v4794
    %4796 = vdwg.mxu0
    %4797 = vmatprep.subr.bf16.mxu0 %v3734
    %4798 = vmatpush1.bf16.msra.mxu0 %v3733
    %4799 = vmatprep.subr.bf16.mxu0 %v3744
    %4800 = vmatpush1.bf16.msra.mxu0 %v3743
    %4801 = vmatprep.subr.bf16.mxu0 %v3754
    %4802 = vmatpush1.bf16.msra.mxu0 %v3753
    %4803 = vmatprep.subr.bf16.mxu0 %v3764
    %4804 = vmatpush1.bf16.msra.mxu0 %v3763
    %4805 = vmatprep.subr.bf16.mxu0 %v3774
    %4806 = vmatpush1.bf16.msra.mxu0 %v3773
    %4807 = vmatprep.subr.bf16.mxu0 %v3784
    %4808 = vmatpush1.bf16.msra.mxu0 %v3783
    %4809 = vmatprep.subr.bf16.mxu0 %v3794
    %4810 = vmatpush1.bf16.msra.mxu0 %v3793
    %4811 = vmatprep.subr.bf16.mxu0 %v3804
    %4812 = vmatpush1.bf16.msra.mxu0 %v3803
    %4813 = vmatprep.subr.bf16.mxu0 %v3814
    %4814 = vmatpush1.bf16.msra.mxu0 %v3813
    %4815 = vmatprep.subr.bf16.mxu0 %v3824
    %4816 = vmatpush1.bf16.msra.mxu0 %v3823
    %4817 = vmatprep.subr.bf16.mxu0 %v3834
    %4818 = vmatpush1.bf16.msra.mxu0 %v3833
    %4819 = vmatprep.subr.bf16.mxu0 %v3844
    %4820 = vmatpush1.bf16.msra.mxu0 %v3843
    %4821 = vmatprep.subr.bf16.mxu0 %v3854
    %4822 = vmatpush1.bf16.msra.mxu0 %v3853
    %4823 = vmatprep.subr.bf16.mxu0 %v3864
    %4824 = vmatpush1.bf16.msra.mxu0 %v3863
    %4825 = vmatprep.subr.bf16.mxu0 %v3874
    %4826 = vmatpush1.bf16.msra.mxu0 %v3873
    %4827 = vmatprep.subr.bf16.mxu0 %v3884
    %4828 = vmatpush1.bf16.msra.mxu0 %v3883
    %4829 = vmatprep.mubr.bf16.mxu0 %v1911
    %4830 = vmatmul.mubr.bf16.gmra.mrb[0].mxu0 %v1910
    %v4831 = vpop.f32.mrb[0].mxu0
    %v4832 = vadd.f32 %v4789, %v4831
    %v4833 = vpop.f32.mrb[0].mxu0
    %v4834 = vadd.f32 %v4791, %v4833
    %v4835 = vpop.f32.mrb[0].mxu0
    %v4836 = vadd.f32 %v4793, %v4835
    %v4837 = vpop.f32.mrb[0].mxu0
    %v4838 = vadd.f32 %v4795, %v4837
    %4839 = vdwg.mxu0
    %4840 = vmatprep.subr.bf16.mxu0 %v3894
    %4841 = vmatpush1.bf16.msra.mxu0 %v3893
    %4842 = vmatprep.subr.bf16.mxu0 %v3904
    %4843 = vmatpush1.bf16.msra.mxu0 %v3903
    %4844 = vmatprep.subr.bf16.mxu0 %v3914
    %4845 = vmatpush1.bf16.msra.mxu0 %v3913
    %4846 = vmatprep.subr.bf16.mxu0 %v3924
    %4847 = vmatpush1.bf16.msra.mxu0 %v3923
    %4848 = vmatprep.subr.bf16.mxu0 %v3934
    %4849 = vmatpush1.bf16.msra.mxu0 %v3933
    %4850 = vmatprep.subr.bf16.mxu0 %v3944
    %4851 = vmatpush1.bf16.msra.mxu0 %v3943
    %4852 = vmatprep.subr.bf16.mxu0 %v3954
    %4853 = vmatpush1.bf16.msra.mxu0 %v3953
    %4854 = vmatprep.subr.bf16.mxu0 %v3964
    %4855 = vmatpush1.bf16.msra.mxu0 %v3963
    %4856 = vmatprep.subr.bf16.mxu0 0
    %4857 = vmatpush1.bf16.msra.mxu0 0
    %4858 = vmatprep.subr.bf16.mxu0 0
    %4859 = vmatpush1.bf16.msra.mxu0 0
    %4860 = vmatprep.subr.bf16.mxu0 0
    %4861 = vmatpush1.bf16.msra.mxu0 0
    %4862 = vmatprep.subr.bf16.mxu0 0
    %4863 = vmatpush1.bf16.msra.mxu0 0
    %4864 = vmatprep.subr.bf16.mxu0 0
    %4865 = vmatpush1.bf16.msra.mxu0 0
    %4866 = vmatprep.subr.bf16.mxu0 0
    %4867 = vmatpush1.bf16.msra.mxu0 0
    %4868 = vmatprep.subr.bf16.mxu0 0
    %4869 = vmatpush1.bf16.msra.mxu0 0
    %4870 = vmatprep.subr.bf16.mxu0 0
    %4871 = vmatpush1.bf16.msra.mxu0 0
    %4872 = vmatprep.mubr.bf16.mxu0 0
    %4873 = vmatmul.mubr.bf16.gmra.mrb[0].mxu0 %v1912
    %v4874 = vpop.f32.mrb[0].mxu0
    %v4875 = vadd.f32 %v4832, %v4874
    %v4876 = vpop.f32.mrb[0].mxu0
    %v4877 = vadd.f32 %v4834, %v4876
    %v4878 = vpop.f32.mrb[0].mxu0
    %v4879 = vadd.f32 %v4836, %v4878
    %v4880 = vpop.f32.mrb[0].mxu0
    %v4881 = vadd.f32 %v4838, %v4880
    %4882 = vdwg.mxu0
    %4883 = vmatprep.subr.bf16.mxu0 %v3576
    %4884 = vmatpush1.bf16.msra.mxu0 %v3575
    %4885 = vmatprep.subr.bf16.mxu0 %v3586
    %4886 = vmatpush1.bf16.msra.mxu0 %v3585
    %4887 = vmatprep.subr.bf16.mxu0 %v3596
    %4888 = vmatpush1.bf16.msra.mxu0 %v3595
    %4889 = vmatprep.subr.bf16.mxu0 %v3606
    %4890 = vmatpush1.bf16.msra.mxu0 %v3605
    %4891 = vmatprep.subr.bf16.mxu0 %v3616
    %4892 = vmatpush1.bf16.msra.mxu0 %v3615
    %4893 = vmatprep.subr.bf16.mxu0 %v3626
    %4894 = vmatpush1.bf16.msra.mxu0 %v3625
    %4895 = vmatprep.subr.bf16.mxu0 %v3636
    %4896 = vmatpush1.bf16.msra.mxu0 %v3635
    %4897 = vmatprep.subr.bf16.mxu0 %v3646
    %4898 = vmatpush1.bf16.msra.mxu0 %v3645
    %4899 = vmatprep.subr.bf16.mxu0 %v3656
    %4900 = vmatpush1.bf16.msra.mxu0 %v3655
    %4901 = vmatprep.subr.bf16.mxu0 %v3666
    %4902 = vmatpush1.bf16.msra.mxu0 %v3665
    %4903 = vmatprep.subr.bf16.mxu0 %v3676
    %4904 = vmatpush1.bf16.msra.mxu0 %v3675
    %4905 = vmatprep.subr.bf16.mxu0 %v3686
    %4906 = vmatpush1.bf16.msra.mxu0 %v3685
    %4907 = vmatprep.subr.bf16.mxu0 %v3696
    %4908 = vmatpush1.bf16.msra.mxu0 %v3695
    %4909 = vmatprep.subr.bf16.mxu0 %v3706
    %4910 = vmatpush1.bf16.msra.mxu0 %v3705
    %4911 = vmatprep.subr.bf16.mxu0 %v3716
    %4912 = vmatpush1.bf16.msra.mxu0 %v3715
    %4913 = vmatprep.subr.bf16.mxu0 %v3726
    %4914 = vmatpush1.bf16.msra.mxu0 %v3725
    %4915 = vmatprep.mubr.bf16.mxu0 %v1909
    %4916 = vmatmul.mubr.bf16.gmra.mrb[0].mxu0 %v1908
    %v4917 = vpop.f32.mrb[0].mxu0
    %v4918 = vadd.f32 %v2352, %v4917
    %v4919 = vpop.f32.mrb[0].mxu0
    %v4920 = vadd.f32 %v2356, %v4919
    %v4921 = vpop.f32.mrb[0].mxu0
    %v4922 = vadd.f32 %v2352, %v4921
    %v4923 = vpop.f32.mrb[0].mxu0
    %v4924 = vadd.f32 %v2356, %v4923
    %4925 = vdwg.mxu0
    %4926 = vmatprep.subr.bf16.mxu0 %v3736
    %4927 = vmatpush1.bf16.msra.mxu0 %v3735
    %4928 = vmatprep.subr.bf16.mxu0 %v3746
    %4929 = vmatpush1.bf16.msra.mxu0 %v3745
    %4930 = vmatprep.subr.bf16.mxu0 %v3756
    %4931 = vmatpush1.bf16.msra.mxu0 %v3755
    %4932 = vmatprep.subr.bf16.mxu0 %v3766
    %4933 = vmatpush1.bf16.msra.mxu0 %v3765
    %4934 = vmatprep.subr.bf16.mxu0 %v3776
    %4935 = vmatpush1.bf16.msra.mxu0 %v3775
    %4936 = vmatprep.subr.bf16.mxu0 %v3786
    %4937 = vmatpush1.bf16.msra.mxu0 %v3785
    %4938 = vmatprep.subr.bf16.mxu0 %v3796
    %4939 = vmatpush1.bf16.msra.mxu0 %v3795
    %4940 = vmatprep.subr.bf16.mxu0 %v3806
    %4941 = vmatpush1.bf16.msra.mxu0 %v3805
    %4942 = vmatprep.subr.bf16.mxu0 %v3816
    %4943 = vmatpush1.bf16.msra.mxu0 %v3815
    %4944 = vmatprep.subr.bf16.mxu0 %v3826
    %4945 = vmatpush1.bf16.msra.mxu0 %v3825
    %4946 = vmatprep.subr.bf16.mxu0 %v3836
    %4947 = vmatpush1.bf16.msra.mxu0 %v3835
    %4948 = vmatprep.subr.bf16.mxu0 %v3846
    %4949 = vmatpush1.bf16.msra.mxu0 %v3845
    %4950 = vmatprep.subr.bf16.mxu0 %v3856
    %4951 = vmatpush1.bf16.msra.mxu0 %v3855
    %4952 = vmatprep.subr.bf16.mxu0 %v3866
    %4953 = vmatpush1.bf16.msra.mxu0 %v3865
    %4954 = vmatprep.subr.bf16.mxu0 %v3876
    %4955 = vmatpush1.bf16.msra.mxu0 %v3875
    %4956 = vmatprep.subr.bf16.mxu0 %v3886
    %4957 = vmatpush1.bf16.msra.mxu0 %v3885
    %4958 = vmatprep.mubr.bf16.mxu0 %v1911
    %4959 = vmatmul.mubr.bf16.gmra.mrb[0].mxu0 %v1910
    %v4960 = vpop.f32.mrb[0].mxu0
    %v4961 = vadd.f32 %v4918, %v4960
    %v4962 = vpop.f32.mrb[0].mxu0
    %v4963 = vadd.f32 %v4920, %v4962
    %v4964 = vpop.f32.mrb[0].mxu0
    %v4965 = vadd.f32 %v4922, %v4964
    %v4966 = vpop.f32.mrb[0].mxu0
    %v4967 = vadd.f32 %v4924, %v4966
    %4968 = vdwg.mxu0
    %4969 = vmatprep.subr.bf16.mxu0 %v3896
    %4970 = vmatpush1.bf16.msra.mxu0 %v3895
    %4971 = vmatprep.subr.bf16.mxu0 %v3906
    %4972 = vmatpush1.bf16.msra.mxu0 %v3905
    %4973 = vmatprep.subr.bf16.mxu0 %v3916
    %4974 = vmatpush1.bf16.msra.mxu0 %v3915
    %4975 = vmatprep.subr.bf16.mxu0 %v3926
    %4976 = vmatpush1.bf16.msra.mxu0 %v3925
    %4977 = vmatprep.subr.bf16.mxu0 %v3936
    %4978 = vmatpush1.bf16.msra.mxu0 %v3935
    %4979 = vmatprep.subr.bf16.mxu0 %v3946
    %4980 = vmatpush1.bf16.msra.mxu0 %v3945
    %4981 = vmatprep.subr.bf16.mxu0 %v3956
    %4982 = vmatpush1.bf16.msra.mxu0 %v3955
    %4983 = vmatprep.subr.bf16.mxu0 %v3966
    %4984 = vmatpush1.bf16.msra.mxu0 %v3965
    %4985 = vmatprep.subr.bf16.mxu0 0
    %4986 = vmatpush1.bf16.msra.mxu0 0
    %4987 = vmatprep.subr.bf16.mxu0 0
    %4988 = vmatpush1.bf16.msra.mxu0 0
    %4989 = vmatprep.subr.bf16.mxu0 0
    %4990 = vmatpush1.bf16.msra.mxu0 0
    %4991 = vmatprep.subr.bf16.mxu0 0
    %4992 = vmatpush1.bf16.msra.mxu0 0
    %4993 = vmatprep.subr.bf16.mxu0 0
    %4994 = vmatpush1.bf16.msra.mxu0 0
    %4995 = vmatprep.subr.bf16.mxu0 0
    %4996 = vmatpush1.bf16.msra.mxu0 0
    %4997 = vmatprep.subr.bf16.mxu0 0
    %4998 = vmatpush1.bf16.msra.mxu0 0
    %4999 = vmatprep.subr.bf16.mxu0 0
    %5000 = vmatpush1.bf16.msra.mxu0 0
    %5001 = vmatprep.mubr.bf16.mxu0 0
    %5002 = vmatmul.mubr.bf16.gmra.mrb[0].mxu0 %v1912
    %v5003 = vpop.f32.mrb[0].mxu0
    %v5004 = vadd.f32 %v4961, %v5003
    %v5005 = vpop.f32.mrb[0].mxu0
    %v5006 = vadd.f32 %v4963, %v5005
    %v5007 = vpop.f32.mrb[0].mxu0
    %v5008 = vadd.f32 %v4965, %v5007
    %v5009 = vpop.f32.mrb[0].mxu0
    %v5010 = vadd.f32 %v4967, %v5009
    %5011 = vdwg.mxu0
    %v5012 = vmax.f32 %v4488, 0.0
    %v5013 = vmax.f32 %v4490, 0.0
    %v5014 = vmax.f32 %v4617, 0.0
    %v5015 = vmax.f32 %v4619, 0.0
    %v5016 = vmax.f32 %v4746, 0.0
    %v5017 = vmax.f32 %v4748, 0.0
    %v5018 = vmax.f32 %v4875, 0.0
    %v5019 = vmax.f32 %v4877, 0.0
    %v5020 = vmax.f32 %v5004, 0.0
    %v5021 = vmax.f32 %v5006, 0.0
    %v5022 = vmax.f32 %v4492, 0.0
    %v5023 = vmax.f32 %v4494, 0.0
    %v5024 = vmax.f32 %v4621, 0.0
    %v5025 = vmax.f32 %v4623, 0.0
    %v5026 = vmax.f32 %v4750, 0.0
    %v5027 = vmax.f32 %v4752, 0.0
    %v5028 = vmax.f32 %v4879, 0.0
    %v5029 = vmax.f32 %v4881, 0.0
    %v5030 = vmax.f32 %v5008, 0.0
    %v5031 = vmax.f32 %v5010, 0.0
    %v5032 = vpack.c.bf16 %v5022, %v5012
    %v5033 = vpack.c.bf16 %v5023, %v5013
    %v5034 = vpack.c.bf16 %v5024, %v5014
    %v5035 = vpack.c.bf16 %v5025, %v5015
    %v5036 = vpack.c.bf16 %v5026, %v5016
    %v5037 = vpack.c.bf16 %v5027, %v5017
    %v5038 = vpack.c.bf16 %v5028, %v5018
    %v5039 = vpack.c.bf16 %v5029, %v5019
    %v5040 = vpack.c.bf16 %v5030, %v5020
    %v5041 = vpack.c.bf16 %v5031, %v5021
    %v5042 = vld [vmem:[#allocation19] sm:$0xf]
    %v5043 = vld [vmem:[#allocation19 + $0x4] sm:$0xf]
    %v5044 = vld [vmem:[#allocation19 + $0x8] sm:$0xf]
    %v5045 = vld [vmem:[#allocation19 + $0xc] sm:$0xf]
    %v5046 = vld [vmem:[#allocation19 + $0x10] sm:$0xf]
    %v5047 = vld [vmem:[#allocation19 + $0x14] sm:$0xf]
    %v5048 = vld [vmem:[#allocation19 + $0x18] sm:$0xf]
    %v5049 = vld [vmem:[#allocation19 + $0x1c] sm:$0xf]
    %v5050 = vld [vmem:[#allocation19 + $0x20] sm:$0xf]
    %v5051 = vld [vmem:[#allocation19 + $0x24] sm:$0xf]
    %v5052 = vld [vmem:[#allocation19 + $0x28] sm:$0xf]
    %v5053 = vld [vmem:[#allocation19 + $0x2c] sm:$0xf]
    %v5054 = vld [vmem:[#allocation19 + $0x30] sm:$0xf]
    %v5055 = vld [vmem:[#allocation19 + $0x34] sm:$0xf]
    %v5056 = vld [vmem:[#allocation19 + $0x38] sm:$0xf]
    %v5057 = vld [vmem:[#allocation19 + $0x3c] sm:$0xf]
    %v5058 = vld [vmem:[#allocation19 + $0x40] sm:$0xf]
    %v5059 = vld [vmem:[#allocation19 + $0x44] sm:$0xf]
    %v5060 = vld [vmem:[#allocation19 + $0x48] sm:$0xf]
    %v5061 = vld [vmem:[#allocation19 + $0x4c] sm:$0xf]
    %v5062 = vld [vmem:[#allocation19 + $0x50] sm:$0xf]
    %v5063 = vld [vmem:[#allocation19 + $0x54] sm:$0xf]
    %v5064 = vld [vmem:[#allocation19 + $0x58] sm:$0xf]
    %v5065 = vld [vmem:[#allocation19 + $0x5c] sm:$0xf]
    %v5066 = vld [vmem:[#allocation19 + $0x60] sm:$0xf]
    %v5067 = vld [vmem:[#allocation19 + $0x64] sm:$0xf]
    %v5068 = vld [vmem:[#allocation19 + $0x68] sm:$0xf]
    %v5069 = vld [vmem:[#allocation19 + $0x6c] sm:$0xf]
    %v5070 = vld [vmem:[#allocation19 + $0x70] sm:$0xf]
    %v5071 = vld [vmem:[#allocation19 + $0x74] sm:$0xf]
    %v5072 = vld [vmem:[#allocation19 + $0x78] sm:$0xf]
    %v5073 = vld [vmem:[#allocation19 + $0x7c] sm:$0xf]
    %v5074 = vld [vmem:[#allocation19 + $0x80] sm:$0xf]
    %v5075 = vld [vmem:[#allocation19 + $0x84] sm:$0xf]
    %v5076 = vld [vmem:[#allocation19 + $0x88] sm:$0xf]
    %v5077 = vld [vmem:[#allocation19 + $0x8c] sm:$0xf]
    %v5078 = vld [vmem:[#allocation19 + $0x90] sm:$0xf]
    %v5079 = vld [vmem:[#allocation19 + $0x94] sm:$0xf]
    %v5080 = vld [vmem:[#allocation19 + $0x98] sm:$0xf]
    %v5081 = vld [vmem:[#allocation19 + $0x9c] sm:$0xf]
    %v5082 = vld [vmem:[#allocation19 + $0xa0] sm:$0xf]
    %v5083 = vld [vmem:[#allocation19 + $0xa4] sm:$0xf]
    %v5084 = vld [vmem:[#allocation19 + $0xa8] sm:$0xf]
    %v5085 = vld [vmem:[#allocation19 + $0xac] sm:$0xf]
    %v5086 = vld [vmem:[#allocation19 + $0xb0] sm:$0xf]
    %v5087 = vld [vmem:[#allocation19 + $0xb4] sm:$0xf]
    %v5088 = vld [vmem:[#allocation19 + $0xb8] sm:$0xf]
    %v5089 = vld [vmem:[#allocation19 + $0xbc] sm:$0xf]
    %v5090 = vld [vmem:[#allocation19 + $0xc0] sm:$0xf]
    %v5091 = vld [vmem:[#allocation19 + $0xc4] sm:$0xf]
    %v5092 = vld [vmem:[#allocation19 + $0xc8] sm:$0xf]
    %v5093 = vld [vmem:[#allocation19 + $0xcc] sm:$0xf]
    %v5094 = vld [vmem:[#allocation19 + $0xd0] sm:$0xf]
    %v5095 = vld [vmem:[#allocation19 + $0xd4] sm:$0xf]
    %v5096 = vld [vmem:[#allocation19 + $0xd8] sm:$0xf]
    %v5097 = vld [vmem:[#allocation19 + $0xdc] sm:$0xf]
    %v5098 = vld [vmem:[#allocation19 + $0xe0] sm:$0xf]
    %v5099 = vld [vmem:[#allocation19 + $0xe4] sm:$0xf]
    %v5100 = vld [vmem:[#allocation19 + $0xe8] sm:$0xf]
    %v5101 = vld [vmem:[#allocation19 + $0xec] sm:$0xf]
    %v5102 = vld [vmem:[#allocation19 + $0xf0] sm:$0xf]
    %v5103 = vld [vmem:[#allocation19 + $0xf4] sm:$0xf]
    %v5104 = vld [vmem:[#allocation19 + $0xf8] sm:$0xf]
    %v5105 = vld [vmem:[#allocation19 + $0xfc] sm:$0xf]
    %v5106 = vld [vmem:[#allocation19 + $0x100] sm:$0xf]
    %v5107 = vld [vmem:[#allocation19 + $0x104] sm:$0xf]
    %v5108 = vld [vmem:[#allocation19 + $0x108] sm:$0xf]
    %v5109 = vld [vmem:[#allocation19 + $0x10c] sm:$0xf]
    %v5110 = vld [vmem:[#allocation19 + $0x110] sm:$0xf]
    %v5111 = vld [vmem:[#allocation19 + $0x114] sm:$0xf]
    %v5112 = vld [vmem:[#allocation19 + $0x118] sm:$0xf]
    %v5113 = vld [vmem:[#allocation19 + $0x11c] sm:$0xf]
    %v5114 = vld [vmem:[#allocation19 + $0x120] sm:$0xf]
    %v5115 = vld [vmem:[#allocation19 + $0x124] sm:$0xf]
    %v5116 = vld [vmem:[#allocation19 + $0x128] sm:$0xf]
    %v5117 = vld [vmem:[#allocation19 + $0x12c] sm:$0xf]
    %v5118 = vld [vmem:[#allocation19 + $0x130] sm:$0xf]
    %v5119 = vld [vmem:[#allocation19 + $0x134] sm:$0xf]
    %v5120 = vld [vmem:[#allocation19 + $0x138] sm:$0xf]
    %v5121 = vld [vmem:[#allocation19 + $0x13c] sm:$0xf]
    %v5122 = vld [vmem:[#allocation19 + $0x140] sm:$0xf]
    %v5123 = vld [vmem:[#allocation19 + $0x144] sm:$0xf]
    %v5124 = vld [vmem:[#allocation19 + $0x148] sm:$0xf]
    %v5125 = vld [vmem:[#allocation19 + $0x14c] sm:$0xf]
    %v5126 = vld [vmem:[#allocation19 + $0x150] sm:$0xf]
    %v5127 = vld [vmem:[#allocation19 + $0x154] sm:$0xf]
    %v5128 = vld [vmem:[#allocation19 + $0x158] sm:$0xf]
    %v5129 = vld [vmem:[#allocation19 + $0x15c] sm:$0xf]
    %v5130 = vld [vmem:[#allocation19 + $0x160] sm:$0xf]
    %v5131 = vld [vmem:[#allocation19 + $0x164] sm:$0xf]
    %v5132 = vld [vmem:[#allocation19 + $0x168] sm:$0xf]
    %v5133 = vld [vmem:[#allocation19 + $0x16c] sm:$0xf]
    %v5134 = vld [vmem:[#allocation19 + $0x170] sm:$0xf]
    %v5135 = vld [vmem:[#allocation19 + $0x174] sm:$0xf]
    %v5136 = vld [vmem:[#allocation19 + $0x178] sm:$0xf]
    %v5137 = vld [vmem:[#allocation19 + $0x17c] sm:$0xf]
    %v5138 = vld [vmem:[#allocation19 + $0x180] sm:$0xf]
    %v5139 = vld [vmem:[#allocation19 + $0x184] sm:$0xf]
    %v5140 = vld [vmem:[#allocation19 + $0x188] sm:$0xf]
    %v5141 = vld [vmem:[#allocation19 + $0x18c] sm:$0xf]
    %v5142 = vld [vmem:[#allocation19 + $0x190] sm:$0xf]
    %v5143 = vld [vmem:[#allocation19 + $0x194] sm:$0xf]
    %v5144 = vld [vmem:[#allocation19 + $0x198] sm:$0xf]
    %v5145 = vld [vmem:[#allocation19 + $0x19c] sm:$0xf]
    %v5146 = vld [vmem:[#allocation19 + $0x1a0] sm:$0xf]
    %v5147 = vld [vmem:[#allocation19 + $0x1a4] sm:$0xf]
    %v5148 = vld [vmem:[#allocation19 + $0x1a8] sm:$0xf]
    %v5149 = vld [vmem:[#allocation19 + $0x1ac] sm:$0xf]
    %v5150 = vld [vmem:[#allocation19 + $0x1b0] sm:$0xf]
    %v5151 = vld [vmem:[#allocation19 + $0x1b4] sm:$0xf]
    %v5152 = vld [vmem:[#allocation19 + $0x1b8] sm:$0xf]
    %v5153 = vld [vmem:[#allocation19 + $0x1bc] sm:$0xf]
    %v5154 = vld [vmem:[#allocation19 + $0x1c0] sm:$0xf]
    %v5155 = vld [vmem:[#allocation19 + $0x1c4] sm:$0xf]
    %v5156 = vld [vmem:[#allocation19 + $0x1c8] sm:$0xf]
    %v5157 = vld [vmem:[#allocation19 + $0x1cc] sm:$0xf]
    %v5158 = vld [vmem:[#allocation19 + $0x1d0] sm:$0xf]
    %v5159 = vld [vmem:[#allocation19 + $0x1d4] sm:$0xf]
    %v5160 = vld [vmem:[#allocation19 + $0x1d8] sm:$0xf]
    %v5161 = vld [vmem:[#allocation19 + $0x1dc] sm:$0xf]
    %v5162 = vld [vmem:[#allocation19 + $0x1e0] sm:$0xf]
    %v5163 = vld [vmem:[#allocation19 + $0x1e4] sm:$0xf]
    %v5164 = vld [vmem:[#allocation19 + $0x1e8] sm:$0xf]
    %v5165 = vld [vmem:[#allocation19 + $0x1ec] sm:$0xf]
    %v5166 = vld [vmem:[#allocation19 + $0x1f0] sm:$0xf]
    %v5167 = vld [vmem:[#allocation19 + $0x1f4] sm:$0xf]
    %v5168 = vld [vmem:[#allocation19 + $0x1f8] sm:$0xf]
    %v5169 = vld [vmem:[#allocation19 + $0x1fc] sm:$0xf]
    %v5170 = vld [vmem:[#allocation19 + $0x200] sm:$0xf]
    %v5171 = vld [vmem:[#allocation19 + $0x204] sm:$0xf]
    %v5172 = vld [vmem:[#allocation19 + $0x208] sm:$0xf]
    %v5173 = vld [vmem:[#allocation19 + $0x20c] sm:$0xf]
    %v5174 = vld [vmem:[#allocation19 + $0x210] sm:$0xf]
    %v5175 = vld [vmem:[#allocation19 + $0x214] sm:$0xf]
    %v5176 = vld [vmem:[#allocation19 + $0x218] sm:$0xf]
    %v5177 = vld [vmem:[#allocation19 + $0x21c] sm:$0xf]
    %v5178 = vld [vmem:[#allocation19 + $0x220] sm:$0xf]
    %v5179 = vld [vmem:[#allocation19 + $0x224] sm:$0xf]
    %v5180 = vld [vmem:[#allocation19 + $0x228] sm:$0xf]
    %v5181 = vld [vmem:[#allocation19 + $0x22c] sm:$0xf]
    %v5182 = vld [vmem:[#allocation19 + $0x230] sm:$0xf]
    %v5183 = vld [vmem:[#allocation19 + $0x234] sm:$0xf]
    %v5184 = vld [vmem:[#allocation19 + $0x238] sm:$0xf]
    %v5185 = vld [vmem:[#allocation19 + $0x23c] sm:$0xf]
    %v5186 = vld [vmem:[#allocation19 + $0x240] sm:$0xf]
    %v5187 = vld [vmem:[#allocation19 + $0x244] sm:$0xf]
    %v5188 = vld [vmem:[#allocation19 + $0x248] sm:$0xf]
    %v5189 = vld [vmem:[#allocation19 + $0x24c] sm:$0xf]
    %v5190 = vld [vmem:[#allocation19 + $0x250] sm:$0xf]
    %v5191 = vld [vmem:[#allocation19 + $0x254] sm:$0xf]
    %v5192 = vld [vmem:[#allocation19 + $0x258] sm:$0xf]
    %v5193 = vld [vmem:[#allocation19 + $0x25c] sm:$0xf]
    %v5194 = vld [vmem:[#allocation19 + $0x260] sm:$0xf]
    %v5195 = vld [vmem:[#allocation19 + $0x264] sm:$0xf]
    %v5196 = vld [vmem:[#allocation19 + $0x268] sm:$0xf]
    %v5197 = vld [vmem:[#allocation19 + $0x26c] sm:$0xf]
    %v5198 = vld [vmem:[#allocation19 + $0x270] sm:$0xf]
    %v5199 = vld [vmem:[#allocation19 + $0x274] sm:$0xf]
    %v5200 = vld [vmem:[#allocation19 + $0x278] sm:$0xf]
    %v5201 = vld [vmem:[#allocation19 + $0x27c] sm:$0xf]
    %v5202 = vld [vmem:[#allocation20] sm:$0x1]
    %v5204 = vlaneseq
    %v5205 = vshrl.u32 %v5204, 7
    %v5206 = vsub.s32 0, %v5205
    %v5207 = vrot.slane %v5202, %v5206
    %v5369 = vunpack.c.l.b16 %v5042
    %v5370 = vunpack.c.l.b16 %v5043
    %v5371 = vunpack.c.l.b16 %v5044
    %v5372 = vunpack.c.l.b16 %v5045
    %v5373 = vunpack.c.l.b16 %v5046
    %v5374 = vunpack.c.l.b16 %v5047
    %v5375 = vunpack.c.l.b16 %v5048
    %v5376 = vunpack.c.l.b16 %v5049
    %v5377 = vunpack.c.l.b16 %v5050
    %v5378 = vunpack.c.l.b16 %v5051
    %v5379 = vunpack.c.l.b16 %v5052
    %v5380 = vunpack.c.l.b16 %v5053
    %v5381 = vunpack.c.l.b16 %v5054
    %v5382 = vunpack.c.l.b16 %v5055
    %v5383 = vunpack.c.l.b16 %v5056
    %v5384 = vunpack.c.l.b16 %v5057
    %v5385 = vunpack.c.l.b16 %v5058
    %v5386 = vunpack.c.l.b16 %v5059
    %v5387 = vunpack.c.l.b16 %v5060
    %v5388 = vunpack.c.l.b16 %v5061
    %v5389 = vunpack.c.l.b16 %v5062
    %v5390 = vunpack.c.l.b16 %v5063
    %v5391 = vunpack.c.l.b16 %v5064
    %v5392 = vunpack.c.l.b16 %v5065
    %v5393 = vunpack.c.l.b16 %v5066
    %v5394 = vunpack.c.l.b16 %v5067
    %v5395 = vunpack.c.l.b16 %v5068
    %v5396 = vunpack.c.l.b16 %v5069
    %v5397 = vunpack.c.l.b16 %v5070
    %v5398 = vunpack.c.l.b16 %v5071
    %v5399 = vunpack.c.l.b16 %v5072
    %v5400 = vunpack.c.l.b16 %v5073
    %v5401 = vunpack.c.l.b16 %v5074
    %v5402 = vunpack.c.l.b16 %v5075
    %v5403 = vunpack.c.l.b16 %v5076
    %v5404 = vunpack.c.l.b16 %v5077
    %v5405 = vunpack.c.l.b16 %v5078
    %v5406 = vunpack.c.l.b16 %v5079
    %v5407 = vunpack.c.l.b16 %v5080
    %v5408 = vunpack.c.l.b16 %v5081
    %v5409 = vunpack.c.l.b16 %v5082
    %v5410 = vunpack.c.l.b16 %v5083
    %v5411 = vunpack.c.l.b16 %v5084
    %v5412 = vunpack.c.l.b16 %v5085
    %v5413 = vunpack.c.l.b16 %v5086
    %v5414 = vunpack.c.l.b16 %v5087
    %v5415 = vunpack.c.l.b16 %v5088
    %v5416 = vunpack.c.l.b16 %v5089
    %v5417 = vunpack.c.l.b16 %v5090
    %v5418 = vunpack.c.l.b16 %v5091
    %v5419 = vunpack.c.l.b16 %v5092
    %v5420 = vunpack.c.l.b16 %v5093
    %v5421 = vunpack.c.l.b16 %v5094
    %v5422 = vunpack.c.l.b16 %v5095
    %v5423 = vunpack.c.l.b16 %v5096
    %v5424 = vunpack.c.l.b16 %v5097
    %v5425 = vunpack.c.l.b16 %v5098
    %v5426 = vunpack.c.l.b16 %v5099
    %v5427 = vunpack.c.l.b16 %v5100
    %v5428 = vunpack.c.l.b16 %v5101
    %v5429 = vunpack.c.l.b16 %v5102
    %v5430 = vunpack.c.l.b16 %v5103
    %v5431 = vunpack.c.l.b16 %v5104
    %v5432 = vunpack.c.l.b16 %v5105
    %v5433 = vunpack.c.l.b16 %v5106
    %v5434 = vunpack.c.l.b16 %v5107
    %v5435 = vunpack.c.l.b16 %v5108
    %v5436 = vunpack.c.l.b16 %v5109
    %v5437 = vunpack.c.l.b16 %v5110
    %v5438 = vunpack.c.l.b16 %v5111
    %v5439 = vunpack.c.l.b16 %v5112
    %v5440 = vunpack.c.l.b16 %v5113
    %v5441 = vunpack.c.l.b16 %v5114
    %v5442 = vunpack.c.l.b16 %v5115
    %v5443 = vunpack.c.l.b16 %v5116
    %v5444 = vunpack.c.l.b16 %v5117
    %v5445 = vunpack.c.l.b16 %v5118
    %v5446 = vunpack.c.l.b16 %v5119
    %v5447 = vunpack.c.l.b16 %v5120
    %v5448 = vunpack.c.l.b16 %v5121
    %v5449 = vunpack.c.l.b16 %v5122
    %v5450 = vunpack.c.l.b16 %v5123
    %v5451 = vunpack.c.l.b16 %v5124
    %v5452 = vunpack.c.l.b16 %v5125
    %v5453 = vunpack.c.l.b16 %v5126
    %v5454 = vunpack.c.l.b16 %v5127
    %v5455 = vunpack.c.l.b16 %v5128
    %v5456 = vunpack.c.l.b16 %v5129
    %v5457 = vunpack.c.l.b16 %v5130
    %v5458 = vunpack.c.l.b16 %v5131
    %v5459 = vunpack.c.l.b16 %v5132
    %v5460 = vunpack.c.l.b16 %v5133
    %v5461 = vunpack.c.l.b16 %v5134
    %v5462 = vunpack.c.l.b16 %v5135
    %v5463 = vunpack.c.l.b16 %v5136
    %v5464 = vunpack.c.l.b16 %v5137
    %v5465 = vunpack.c.l.b16 %v5138
    %v5466 = vunpack.c.l.b16 %v5139
    %v5467 = vunpack.c.l.b16 %v5140
    %v5468 = vunpack.c.l.b16 %v5141
    %v5469 = vunpack.c.l.b16 %v5142
    %v5470 = vunpack.c.l.b16 %v5143
    %v5471 = vunpack.c.l.b16 %v5144
    %v5472 = vunpack.c.l.b16 %v5145
    %v5473 = vunpack.c.l.b16 %v5146
    %v5474 = vunpack.c.l.b16 %v5147
    %v5475 = vunpack.c.l.b16 %v5148
    %v5476 = vunpack.c.l.b16 %v5149
    %v5477 = vunpack.c.l.b16 %v5150
    %v5478 = vunpack.c.l.b16 %v5151
    %v5479 = vunpack.c.l.b16 %v5152
    %v5480 = vunpack.c.l.b16 %v5153
    %v5481 = vunpack.c.l.b16 %v5154
    %v5482 = vunpack.c.l.b16 %v5155
    %v5483 = vunpack.c.l.b16 %v5156
    %v5484 = vunpack.c.l.b16 %v5157
    %v5485 = vunpack.c.l.b16 %v5158
    %v5486 = vunpack.c.l.b16 %v5159
    %v5487 = vunpack.c.l.b16 %v5160
    %v5488 = vunpack.c.l.b16 %v5161
    %v5489 = vunpack.c.l.b16 %v5162
    %v5490 = vunpack.c.l.b16 %v5163
    %v5491 = vunpack.c.l.b16 %v5164
    %v5492 = vunpack.c.l.b16 %v5165
    %v5493 = vunpack.c.l.b16 %v5166
    %v5494 = vunpack.c.l.b16 %v5167
    %v5495 = vunpack.c.l.b16 %v5168
    %v5496 = vunpack.c.l.b16 %v5169
    %v5497 = vunpack.c.l.b16 %v5170
    %v5498 = vunpack.c.l.b16 %v5171
    %v5499 = vunpack.c.l.b16 %v5172
    %v5500 = vunpack.c.l.b16 %v5173
    %v5501 = vunpack.c.l.b16 %v5174
    %v5502 = vunpack.c.l.b16 %v5175
    %v5503 = vunpack.c.l.b16 %v5176
    %v5504 = vunpack.c.l.b16 %v5177
    %v5505 = vunpack.c.l.b16 %v5178
    %v5506 = vunpack.c.l.b16 %v5179
    %v5507 = vunpack.c.l.b16 %v5180
    %v5508 = vunpack.c.l.b16 %v5181
    %v5509 = vunpack.c.l.b16 %v5182
    %v5510 = vunpack.c.l.b16 %v5183
    %v5511 = vunpack.c.l.b16 %v5184
    %v5512 = vunpack.c.l.b16 %v5185
    %v5513 = vunpack.c.l.b16 %v5186
    %v5514 = vunpack.c.l.b16 %v5187
    %v5515 = vunpack.c.l.b16 %v5188
    %v5516 = vunpack.c.l.b16 %v5189
    %v5517 = vunpack.c.l.b16 %v5190
    %v5518 = vunpack.c.l.b16 %v5191
    %v5519 = vunpack.c.l.b16 %v5192
    %v5520 = vunpack.c.l.b16 %v5193
    %v5521 = vunpack.c.l.b16 %v5194
    %v5522 = vunpack.c.l.b16 %v5195
    %v5523 = vunpack.c.l.b16 %v5196
    %v5524 = vunpack.c.l.b16 %v5197
    %v5525 = vunpack.c.l.b16 %v5198
    %v5526 = vunpack.c.l.b16 %v5199
    %v5527 = vunpack.c.l.b16 %v5200
    %v5528 = vunpack.c.l.b16 %v5201
    %v5529 = vpack.c.b16 %v5370, %v5369
    %v5530 = vpack.c.b16 %v5372, %v5371
    %v5531 = vpack.c.b16 %v5374, %v5373
    %v5532 = vpack.c.b16 %v5376, %v5375
    %v5533 = vpack.c.b16 %v5378, %v5377
    %v5534 = vpack.c.b16 %v5380, %v5379
    %v5535 = vpack.c.b16 %v5382, %v5381
    %v5536 = vpack.c.b16 %v5384, %v5383
    %v5537 = vpack.c.b16 %v5386, %v5385
    %v5538 = vpack.c.b16 %v5388, %v5387
    %v5539 = vpack.c.b16 %v5390, %v5389
    %v5540 = vpack.c.b16 %v5392, %v5391
    %v5541 = vpack.c.b16 %v5394, %v5393
    %v5542 = vpack.c.b16 %v5396, %v5395
    %v5543 = vpack.c.b16 %v5398, %v5397
    %v5544 = vpack.c.b16 %v5400, %v5399
    %v5545 = vpack.c.b16 %v5402, %v5401
    %v5546 = vpack.c.b16 %v5404, %v5403
    %v5547 = vpack.c.b16 %v5406, %v5405
    %v5548 = vpack.c.b16 %v5408, %v5407
    %v5549 = vpack.c.b16 %v5410, %v5409
    %v5550 = vpack.c.b16 %v5412, %v5411
    %v5551 = vpack.c.b16 %v5414, %v5413
    %v5552 = vpack.c.b16 %v5416, %v5415
    %v5553 = vpack.c.b16 %v5418, %v5417
    %v5554 = vpack.c.b16 %v5420, %v5419
    %v5555 = vpack.c.b16 %v5422, %v5421
    %v5556 = vpack.c.b16 %v5424, %v5423
    %v5557 = vpack.c.b16 %v5426, %v5425
    %v5558 = vpack.c.b16 %v5428, %v5427
    %v5559 = vpack.c.b16 %v5430, %v5429
    %v5560 = vpack.c.b16 %v5432, %v5431
    %v5561 = vpack.c.b16 %v5434, %v5433
    %v5562 = vpack.c.b16 %v5436, %v5435
    %v5563 = vpack.c.b16 %v5438, %v5437
    %v5564 = vpack.c.b16 %v5440, %v5439
    %v5565 = vpack.c.b16 %v5442, %v5441
    %v5566 = vpack.c.b16 %v5444, %v5443
    %v5567 = vpack.c.b16 %v5446, %v5445
    %v5568 = vpack.c.b16 %v5448, %v5447
    %v5569 = vpack.c.b16 %v5450, %v5449
    %v5570 = vpack.c.b16 %v5452, %v5451
    %v5571 = vpack.c.b16 %v5454, %v5453
    %v5572 = vpack.c.b16 %v5456, %v5455
    %v5573 = vpack.c.b16 %v5458, %v5457
    %v5574 = vpack.c.b16 %v5460, %v5459
    %v5575 = vpack.c.b16 %v5462, %v5461
    %v5576 = vpack.c.b16 %v5464, %v5463
    %v5577 = vpack.c.b16 %v5466, %v5465
    %v5578 = vpack.c.b16 %v5468, %v5467
    %v5579 = vpack.c.b16 %v5470, %v5469
    %v5580 = vpack.c.b16 %v5472, %v5471
    %v5581 = vpack.c.b16 %v5474, %v5473
    %v5582 = vpack.c.b16 %v5476, %v5475
    %v5583 = vpack.c.b16 %v5478, %v5477
    %v5584 = vpack.c.b16 %v5480, %v5479
    %v5585 = vpack.c.b16 %v5482, %v5481
    %v5586 = vpack.c.b16 %v5484, %v5483
    %v5587 = vpack.c.b16 %v5486, %v5485
    %v5588 = vpack.c.b16 %v5488, %v5487
    %v5589 = vpack.c.b16 %v5490, %v5489
    %v5590 = vpack.c.b16 %v5492, %v5491
    %v5591 = vpack.c.b16 %v5494, %v5493
    %v5592 = vpack.c.b16 %v5496, %v5495
    %v5593 = vpack.c.b16 %v5498, %v5497
    %v5594 = vpack.c.b16 %v5500, %v5499
    %v5595 = vpack.c.b16 %v5502, %v5501
    %v5596 = vpack.c.b16 %v5504, %v5503
    %v5597 = vpack.c.b16 %v5506, %v5505
    %v5598 = vpack.c.b16 %v5508, %v5507
    %v5599 = vpack.c.b16 %v5510, %v5509
    %v5600 = vpack.c.b16 %v5512, %v5511
    %v5601 = vpack.c.b16 %v5514, %v5513
    %v5602 = vpack.c.b16 %v5516, %v5515
    %v5603 = vpack.c.b16 %v5518, %v5517
    %v5604 = vpack.c.b16 %v5520, %v5519
    %v5605 = vpack.c.b16 %v5522, %v5521
    %v5606 = vpack.c.b16 %v5524, %v5523
    %v5607 = vpack.c.b16 %v5526, %v5525
    %v5608 = vpack.c.b16 %v5528, %v5527
    %5689 = vmatprep.subr.bf16.mxu0 0
    %5690 = vmatpush1.bf16.msra.mxu0 %v5529
    %5691 = vmatprep.subr.bf16.mxu0 0
    %5692 = vmatpush1.bf16.msra.mxu0 %v5530
    %5693 = vmatprep.subr.bf16.mxu0 0
    %5694 = vmatpush1.bf16.msra.mxu0 %v5531
    %5695 = vmatprep.subr.bf16.mxu0 0
    %5696 = vmatpush1.bf16.msra.mxu0 %v5532
    %5697 = vmatprep.subr.bf16.mxu0 0
    %5698 = vmatpush1.bf16.msra.mxu0 %v5533
    %5699 = vmatprep.subr.bf16.mxu0 0
    %5700 = vmatpush1.bf16.msra.mxu0 %v5534
    %5701 = vmatprep.subr.bf16.mxu0 0
    %5702 = vmatpush1.bf16.msra.mxu0 %v5535
    %5703 = vmatprep.subr.bf16.mxu0 0
    %5704 = vmatpush1.bf16.msra.mxu0 %v5536
    %5705 = vmatprep.subr.bf16.mxu0 0
    %5706 = vmatpush1.bf16.msra.mxu0 %v5537
    %5707 = vmatprep.subr.bf16.mxu0 0
    %5708 = vmatpush1.bf16.msra.mxu0 %v5538
    %5709 = vmatprep.subr.bf16.mxu0 0
    %5710 = vmatpush1.bf16.msra.mxu0 %v5539
    %5711 = vmatprep.subr.bf16.mxu0 0
    %5712 = vmatpush1.bf16.msra.mxu0 %v5540
    %5713 = vmatprep.subr.bf16.mxu0 0
    %5714 = vmatpush1.bf16.msra.mxu0 %v5541
    %5715 = vmatprep.subr.bf16.mxu0 0
    %5716 = vmatpush1.bf16.msra.mxu0 %v5542
    %5717 = vmatprep.subr.bf16.mxu0 0
    %5718 = vmatpush1.bf16.msra.mxu0 %v5543
    %5719 = vmatprep.subr.bf16.mxu0 0
    %5720 = vmatpush1.bf16.msra.mxu0 %v5544
    %5721 = vmatprep.mubr.bf16.mxu0 %v5033
    %5722 = vmatmul.mubr.bf16.gmra.mrb[0].mxu0 %v5032
    %v5723 = vpop.f32.mrb[0].mxu0
    %v5724 = vadd.f32 %v5207, %v5723
    %v5725 = vpop.f32.mrb[0].mxu0
    %v5726 = vpop.f32.mrb[0].mxu0
    %v5727 = vadd.f32 %v5207, %v5726
    %v5728 = vpop.f32.mrb[0].mxu0
    %5729 = vdwg.mxu0
    %5730 = vmatprep.subr.bf16.mxu0 0
    %5731 = vmatpush1.bf16.msra.mxu0 %v5545
    %5732 = vmatprep.subr.bf16.mxu0 0
    %5733 = vmatpush1.bf16.msra.mxu0 %v5546
    %5734 = vmatprep.subr.bf16.mxu0 0
    %5735 = vmatpush1.bf16.msra.mxu0 %v5547
    %5736 = vmatprep.subr.bf16.mxu0 0
    %5737 = vmatpush1.bf16.msra.mxu0 %v5548
    %5738 = vmatprep.subr.bf16.mxu0 0
    %5739 = vmatpush1.bf16.msra.mxu0 %v5549
    %5740 = vmatprep.subr.bf16.mxu0 0
    %5741 = vmatpush1.bf16.msra.mxu0 %v5550
    %5742 = vmatprep.subr.bf16.mxu0 0
    %5743 = vmatpush1.bf16.msra.mxu0 %v5551
    %5744 = vmatprep.subr.bf16.mxu0 0
    %5745 = vmatpush1.bf16.msra.mxu0 %v5552
    %5746 = vmatprep.subr.bf16.mxu0 0
    %5747 = vmatpush1.bf16.msra.mxu0 %v5553
    %5748 = vmatprep.subr.bf16.mxu0 0
    %5749 = vmatpush1.bf16.msra.mxu0 %v5554
    %5750 = vmatprep.subr.bf16.mxu0 0
    %5751 = vmatpush1.bf16.msra.mxu0 %v5555
    %5752 = vmatprep.subr.bf16.mxu0 0
    %5753 = vmatpush1.bf16.msra.mxu0 %v5556
    %5754 = vmatprep.subr.bf16.mxu0 0
    %5755 = vmatpush1.bf16.msra.mxu0 %v5557
    %5756 = vmatprep.subr.bf16.mxu0 0
    %5757 = vmatpush1.bf16.msra.mxu0 %v5558
    %5758 = vmatprep.subr.bf16.mxu0 0
    %5759 = vmatpush1.bf16.msra.mxu0 %v5559
    %5760 = vmatprep.subr.bf16.mxu0 0
    %5761 = vmatpush1.bf16.msra.mxu0 %v5560
    %5762 = vmatprep.mubr.bf16.mxu0 %v5035
    %5763 = vmatmul.mubr.bf16.gmra.mrb[0].mxu0 %v5034
    %v5764 = vpop.f32.mrb[0].mxu0
    %v5765 = vadd.f32 %v5724, %v5764
    %v5766 = vpop.f32.mrb[0].mxu0
    %v5767 = vpop.f32.mrb[0].mxu0
    %v5768 = vadd.f32 %v5727, %v5767
    %v5769 = vpop.f32.mrb[0].mxu0
    %5770 = vdwg.mxu0
    %5771 = vmatprep.subr.bf16.mxu0 0
    %5772 = vmatpush1.bf16.msra.mxu0 %v5561
    %5773 = vmatprep.subr.bf16.mxu0 0
    %5774 = vmatpush1.bf16.msra.mxu0 %v5562
    %5775 = vmatprep.subr.bf16.mxu0 0
    %5776 = vmatpush1.bf16.msra.mxu0 %v5563
    %5777 = vmatprep.subr.bf16.mxu0 0
    %5778 = vmatpush1.bf16.msra.mxu0 %v5564
    %5779 = vmatprep.subr.bf16.mxu0 0
    %5780 = vmatpush1.bf16.msra.mxu0 %v5565
    %5781 = vmatprep.subr.bf16.mxu0 0
    %5782 = vmatpush1.bf16.msra.mxu0 %v5566
    %5783 = vmatprep.subr.bf16.mxu0 0
    %5784 = vmatpush1.bf16.msra.mxu0 %v5567
    %5785 = vmatprep.subr.bf16.mxu0 0
    %5786 = vmatpush1.bf16.msra.mxu0 %v5568
    %5787 = vmatprep.subr.bf16.mxu0 0
    %5788 = vmatpush1.bf16.msra.mxu0 %v5569
    %5789 = vmatprep.subr.bf16.mxu0 0
    %5790 = vmatpush1.bf16.msra.mxu0 %v5570
    %5791 = vmatprep.subr.bf16.mxu0 0
    %5792 = vmatpush1.bf16.msra.mxu0 %v5571
    %5793 = vmatprep.subr.bf16.mxu0 0
    %5794 = vmatpush1.bf16.msra.mxu0 %v5572
    %5795 = vmatprep.subr.bf16.mxu0 0
    %5796 = vmatpush1.bf16.msra.mxu0 %v5573
    %5797 = vmatprep.subr.bf16.mxu0 0
    %5798 = vmatpush1.bf16.msra.mxu0 %v5574
    %5799 = vmatprep.subr.bf16.mxu0 0
    %5800 = vmatpush1.bf16.msra.mxu0 %v5575
    %5801 = vmatprep.subr.bf16.mxu0 0
    %5802 = vmatpush1.bf16.msra.mxu0 %v5576
    %5803 = vmatprep.mubr.bf16.mxu0 %v5037
    %5804 = vmatmul.mubr.bf16.gmra.mrb[0].mxu0 %v5036
    %v5805 = vpop.f32.mrb[0].mxu0
    %v5806 = vadd.f32 %v5765, %v5805
    %v5807 = vpop.f32.mrb[0].mxu0
    %v5808 = vpop.f32.mrb[0].mxu0
    %v5809 = vadd.f32 %v5768, %v5808
    %v5810 = vpop.f32.mrb[0].mxu0
    %5811 = vdwg.mxu0
    %5812 = vmatprep.subr.bf16.mxu0 0
    %5813 = vmatpush1.bf16.msra.mxu0 %v5577
    %5814 = vmatprep.subr.bf16.mxu0 0
    %5815 = vmatpush1.bf16.msra.mxu0 %v5578
    %5816 = vmatprep.subr.bf16.mxu0 0
    %5817 = vmatpush1.bf16.msra.mxu0 %v5579
    %5818 = vmatprep.subr.bf16.mxu0 0
    %5819 = vmatpush1.bf16.msra.mxu0 %v5580
    %5820 = vmatprep.subr.bf16.mxu0 0
    %5821 = vmatpush1.bf16.msra.mxu0 %v5581
    %5822 = vmatprep.subr.bf16.mxu0 0
    %5823 = vmatpush1.bf16.msra.mxu0 %v5582
    %5824 = vmatprep.subr.bf16.mxu0 0
    %5825 = vmatpush1.bf16.msra.mxu0 %v5583
    %5826 = vmatprep.subr.bf16.mxu0 0
    %5827 = vmatpush1.bf16.msra.mxu0 %v5584
    %5828 = vmatprep.subr.bf16.mxu0 0
    %5829 = vmatpush1.bf16.msra.mxu0 %v5585
    %5830 = vmatprep.subr.bf16.mxu0 0
    %5831 = vmatpush1.bf16.msra.mxu0 %v5586
    %5832 = vmatprep.subr.bf16.mxu0 0
    %5833 = vmatpush1.bf16.msra.mxu0 %v5587
    %5834 = vmatprep.subr.bf16.mxu0 0
    %5835 = vmatpush1.bf16.msra.mxu0 %v5588
    %5836 = vmatprep.subr.bf16.mxu0 0
    %5837 = vmatpush1.bf16.msra.mxu0 %v5589
    %5838 = vmatprep.subr.bf16.mxu0 0
    %5839 = vmatpush1.bf16.msra.mxu0 %v5590
    %5840 = vmatprep.subr.bf16.mxu0 0
    %5841 = vmatpush1.bf16.msra.mxu0 %v5591
    %5842 = vmatprep.subr.bf16.mxu0 0
    %5843 = vmatpush1.bf16.msra.mxu0 %v5592
    %5844 = vmatprep.mubr.bf16.mxu0 %v5039
    %5845 = vmatmul.mubr.bf16.gmra.mrb[0].mxu0 %v5038
    %v5846 = vpop.f32.mrb[0].mxu0
    %v5847 = vadd.f32 %v5806, %v5846
    %v5848 = vpop.f32.mrb[0].mxu0
    %v5849 = vpop.f32.mrb[0].mxu0
    %v5850 = vadd.f32 %v5809, %v5849
    %v5851 = vpop.f32.mrb[0].mxu0
    %5852 = vdwg.mxu0
    %5853 = vmatprep.subr.bf16.mxu0 0
    %5854 = vmatpush1.bf16.msra.mxu0 %v5593
    %5855 = vmatprep.subr.bf16.mxu0 0
    %5856 = vmatpush1.bf16.msra.mxu0 %v5594
    %5857 = vmatprep.subr.bf16.mxu0 0
    %5858 = vmatpush1.bf16.msra.mxu0 %v5595
    %5859 = vmatprep.subr.bf16.mxu0 0
    %5860 = vmatpush1.bf16.msra.mxu0 %v5596
    %5861 = vmatprep.subr.bf16.mxu0 0
    %5862 = vmatpush1.bf16.msra.mxu0 %v5597
    %5863 = vmatprep.subr.bf16.mxu0 0
    %5864 = vmatpush1.bf16.msra.mxu0 %v5598
    %5865 = vmatprep.subr.bf16.mxu0 0
    %5866 = vmatpush1.bf16.msra.mxu0 %v5599
    %5867 = vmatprep.subr.bf16.mxu0 0
    %5868 = vmatpush1.bf16.msra.mxu0 %v5600
    %5869 = vmatprep.subr.bf16.mxu0 0
    %5870 = vmatpush1.bf16.msra.mxu0 %v5601
    %5871 = vmatprep.subr.bf16.mxu0 0
    %5872 = vmatpush1.bf16.msra.mxu0 %v5602
    %5873 = vmatprep.subr.bf16.mxu0 0
    %5874 = vmatpush1.bf16.msra.mxu0 %v5603
    %5875 = vmatprep.subr.bf16.mxu0 0
    %5876 = vmatpush1.bf16.msra.mxu0 %v5604
    %5877 = vmatprep.subr.bf16.mxu0 0
    %5878 = vmatpush1.bf16.msra.mxu0 %v5605
    %5879 = vmatprep.subr.bf16.mxu0 0
    %5880 = vmatpush1.bf16.msra.mxu0 %v5606
    %5881 = vmatprep.subr.bf16.mxu0 0
    %5882 = vmatpush1.bf16.msra.mxu0 %v5607
    %5883 = vmatprep.subr.bf16.mxu0 0
    %5884 = vmatpush1.bf16.msra.mxu0 %v5608
    %5885 = vmatprep.mubr.bf16.mxu0 %v5041
    %5886 = vmatmul.mubr.bf16.gmra.mrb[0].mxu0 %v5040
    %v5887 = vpop.f32.mrb[0].mxu0
    %v5888 = vadd.f32 %v5847, %v5887
    %v5889 = vpop.f32.mrb[0].mxu0
    %v5890 = vpop.f32.mrb[0].mxu0
    %v5891 = vadd.f32 %v5850, %v5890
    %v5892 = vpop.f32.mrb[0].mxu0
    %5893 = vdwg.mxu0
    %v5894 = vmax.f32 %v5888, 0.0
    %v5895 = vmax.f32 %v5891, 0.0
    %5896 = vst [vmem:[#allocation22] sm:$0xff] %v5894
    %5897 = vst [vmem:[#allocation22 + $0x8] sm:$0xff] %v5895
    // Predicated region
    $region102: #{tpu_custom_call.1} parent=1 // pred_check
      _
    $region103: #{tpu_custom_call.1} parent=1 // pred_check_branch
      %5899 = sbr.rel (0) target = $region105
    $region104: #{tpu_custom_call.1} parent=1 // pred_region
      %s5901 = ssub.s32 256, 256
      %5902 = vsyncadd [#allocation4], %s5901
      %s5903 = sshll.u32 [#allocation22], 4
      %s5904 = int_to_ptr.vmem [resolvable:$true] %s5903
      %5909 = dma.vmem_to_hbm [thread:$0]  %s5904, 256, %s13, [#allocation4], 128, 128, 8
    $region105: #{tpu_custom_call.1} parent=1 // pred_fallthru
      _
    // Predicated region
    $region106: #{tpu_custom_call.1} parent=1 // pred_check
      _
    $region107: #{tpu_custom_call.1} parent=1 // pred_check_branch
      %5911 = sbr.rel (0) target = $region109
    $region108: #{tpu_custom_call.1} parent=1 // pred_region
      %5912 = dma.done [#allocation4], 256
    $region109: #{tpu_custom_call.1} parent=1 // pred_fallthru
      _
    %5913 = vsyncpa [#allocation3], 1
    %5914 = vsyncpa [#allocation6], 1
    %5915 = vsyncpa [#allocation9], 1
    %5916 = vsyncpa [#allocation12], 1
    %5917 = vsyncpa [#allocation15], 1
    %5918 = vsyncpa [#allocation18], 1
    %5919 = vsyncpa [#allocation21], 1
    %5920 = vsyncpa [#allocation4], 1

</llo_original>
